<compile_context>
chip_gen: v7x
topology: tpu7x:2x2x1
jax: 0.10.0
libtpu: 0.0.40
codegen_flags: <defaults>
</compile_context>

<pallas_src>
import functools

import jax
import jax.numpy as jnp
from jax import lax
from jax.experimental import pallas as pl
from jax.experimental.pallas import tpu as pltpu

F32 = jnp.float32

# ---------------- model config (small synthetic shapes) ----------------
VOCAB = 128
HIDDEN = 32
NUM_HEADS = 2
HEAD_DIM = HIDDEN // NUM_HEADS
INTERMEDIATE = 64
NUM_LAYERS = 2
MAX_POS = 32
TYPE_VOCAB = 2
N_GATE = 3
MAX_LEN = 4
PAD_IDX = 0
TOKENIZED_SLOT_META = [[5, 6], [7], [8, 9, 10]]   # J = 3 slots
J_SLOTS = len(TOKENIZED_SLOT_META)

# packed-parameter row strides
_RW = 3 * HIDDEN + INTERMEDIATE          # encoder weight-slab rows per layer
_RV = 8                                  # encoder bias/LN rows per layer


# ---------------------------- in-kernel helpers ----------------------------
def _layernorm(x, g, b):
    mu = jnp.mean(x, axis=-1, keepdims=True)
    var = jnp.mean((x - mu) ** 2, axis=-1, keepdims=True)
    return (x - mu) * lax.rsqrt(var + 1e-12) * g + b


def _softmax(x):
    # exact division (review: approx reciprocal can perturb p_final vs. the reference)
    m = jnp.max(x, axis=-1, keepdims=True)
    e = jnp.exp(x - m)
    return e / jnp.sum(e, axis=-1, keepdims=True)


def _erf(x):
    # Abramowitz & Stegun 7.1.26 (|err| < 1.5e-7) -- exact-GELU without relying on lax.erf.
    a1, a2, a3, a4, a5 = 0.254829592, -0.284496736, 1.421413741, -1.453152027, 1.061405429
    p = 0.3275911
    sgn = jnp.where(x >= 0.0, 1.0, -1.0)
    ax = jnp.abs(x)
    t = 1.0 / (1.0 + p * ax)
    poly = ((((a5 * t + a4) * t + a3) * t + a2) * t + a1) * t
    return sgn * (1.0 - poly * jnp.exp(-ax * ax))


def _gelu_exact(x):
    return 0.5 * x * (1.0 + _erf(x * 0.7071067811865476))


# ---------------------------- fused encoder + decoder kernel ----------------------------
def _trade_kernel(x_ref, am_ref, ids_ref, w0_ref, emb_ref, embT_ref,
                  encw_ref, encv_ref, decw_ref, decv_ref,
                  pfin_ref, gate_ref, scr,
                  *, num_layers, batch, seq, num_heads, head_dim, n_slots,
                  intermediate, max_len, n_gate):
    H = num_heads * head_dim
    I = intermediate
    B, S, J = batch, seq, n_slots
    V = emb_ref.shape[0]
    scale = 1.0 / (head_dim ** 0.5)

    am = am_ref[...]                               # (B, S) attention mask (1/0) as f32
    mbias = (1.0 - am) * (-10000.0)                # encoder additive attention bias

    # =============================== BERT encoder ===============================
    x = _layernorm(x_ref[...], encv_ref[0:1, :H], encv_ref[1:2, :H])      # (B*S, H)

    pooled_rows = []
    for l in range(num_layers):
        wb = l * _RW
        vb = 2 + l * _RV

        # fused QKV projection: one (BS,H) x (H,3H) matmul
        qkv = (jnp.dot(x, encw_ref[wb:wb + H, :3 * H], preferred_element_type=F32)
               + encv_ref[vb + 0:vb + 1, :3 * H])

        # per-(batch, head) attention; head outputs go into a VMEM scratch at static
        # row/lane offsets (no jnp.concatenate relayouts on the critical path)
        for b in range(B):
            mb_b = mbias[b:b + 1, :]
            for hh in range(num_heads):
                c0 = hh * head_dim
                q = qkv[b * S:(b + 1) * S, c0:c0 + head_dim]
                kk = qkv[b * S:(b + 1) * S, H + c0:H + c0 + head_dim]
                v = qkv[b * S:(b + 1) * S, 2 * H + c0:2 * H + c0 + head_dim]
                s = lax.dot_general(q, kk, (((1,), (1,)), ((), ())),
                                    preferred_element_type=F32) * scale + mb_b
                p = _softmax(s)
                scr[b * S:(b + 1) * S, c0:c0 + head_dim] = jnp.dot(
                    p, v, preferred_element_type=F32)
        ctx = scr[...]

        attn_out = (jnp.dot(ctx, encw_ref[wb + H:wb + 2 * H, :H],
                            preferred_element_type=F32)
                    + encv_ref[vb + 1:vb + 2, :H])
        h1 = _layernorm(attn_out + x,
                        encv_ref[vb + 2:vb + 3, :H], encv_ref[vb + 3:vb + 4, :H])
        inter = _gelu_exact(jnp.dot(h1, encw_ref[wb + 2 * H:wb + 3 * H, :I],
                                    preferred_element_type=F32)
                            + encv_ref[vb + 4:vb + 5, :I])
        ff = (jnp.dot(inter, encw_ref[wb + 3 * H:wb + 3 * H + I, :H],
                      preferred_element_type=F32)
              + encv_ref[vb + 5:vb + 6, :H])
        x = _layernorm(ff + h1,
                       encv_ref[vb + 6:vb + 7, :H], encv_ref[vb + 7:vb + 8, :H])

        if l == 0:
            # pooler = Linear(hidden_states[1][:, 0, :])  (reference module has no tanh).
            # Pooled output is only needed as the decoder GRU h0 -> compute per batch row.
            pw = encw_ref[num_layers * _RW:num_layers * _RW + H, :H]
            pb = encv_ref[2 + _RV * num_layers:3 + _RV * num_layers, :H]
            for b in range(B):
                pooled_rows.append(
                    jnp.dot(x[b * S:b * S + 1, :], pw, preferred_element_type=F32) + pb)

    enc = x                                                  # (B*S, H) last_hidden_state

    # =============================== TRADE decoder ===============================
    # loop-invariant per-batch prep (hoisted out of the decode steps)
    ids_col = ids_ref[...]                                   # (B*S, 1) token ids (f32)
    iota_sv = lax.broadcasted_iota(jnp.int32, (S, V), 1).astype(F32)
    iota_jv = lax.broadcasted_iota(jnp.int32, (J, V), 1)
    enc_b, encT_b, onehot_b, keep_b = [], [], [], []
    for b in range(B):
        e = enc[b * S:(b + 1) * S, :]
        enc_b.append(e)                                      # (S, H)
        encT_b.append(jnp.transpose(e))                      # (H, S) hoisted transpose
        onehot_b.append((ids_col[b * S:(b + 1) * S, :] == iota_sv).astype(F32))   # (S, V)
        keep_b.append(am[b:b + 1, :] == 1.0)                 # (1, S) keep mask

    # w_gen split into three VPU row-dots (avoids the [w; h; ctx] lane concat)
    wgen_w_x = decv_ref[2:3, 0:H]
    wgen_w_h = decv_ref[2:3, H:2 * H]
    wgen_w_c = decv_ref[2:3, 2 * H:3 * H]
    wgen_bias = decv_ref[3:4, 0:1]
    wgate_bias = decv_ref[3:4, 1:1 + n_gate]

    # initial decoder state: w = summed slot embeddings, h = pooled repeated J per batch
    w = w0_ref[...]                                          # (B*J, H)
    h = jnp.concatenate(
        [jnp.broadcast_to(pooled_rows[b], (J, H)) for b in range(B)], axis=0)   # (B*J, H)

    for k in range(max_len):                                 # unrolled single-kernel decode
        # ---- GRU cell (PyTorch semantics), batched (H,3H) matmuls ----
        gi = jnp.dot(w, decw_ref[0:H, :], preferred_element_type=F32) + decv_ref[0:1, :]
        gh = jnp.dot(h, decw_ref[H:2 * H, :], preferred_element_type=F32) + decv_ref[1:2, :]
        r = jax.nn.sigmoid(gi[:, :H] + gh[:, :H])
        z = jax.nn.sigmoid(gi[:, H:2 * H] + gh[:, H:2 * H])
        n = jnp.tanh(gi[:, 2 * H:] + r * gh[:, 2 * H:])
        h_new = (1.0 - z) * n + z * h                        # (B*J, H)

        # ---- vocab attention against the pre-transposed tied embedding ----
        attn_vocab = _softmax(jnp.dot(h_new, embT_ref[...],
                                      preferred_element_type=F32))          # (B*J, V)

        # ---- w_gen contribution that does not depend on the context ----
        pg_wh = (jnp.sum(w * wgen_w_x, axis=-1, keepdims=True)
                 + jnp.sum(h_new * wgen_w_h, axis=-1, keepdims=True)
                 + wgen_bias)                                 # (B*J, 1)

        onehot_next = []
        for b in range(B):
            r0 = b * J
            h_j = h_new[r0:r0 + J, :]

            # history attention over this batch row's encoder output
            ae = jnp.dot(h_j, encT_b[b], preferred_element_type=F32)        # (J, S)
            ae = jnp.where(keep_b[b], ae, -10000.0)                         # masked_fill
            a_hist = _softmax(ae)
            context = jnp.dot(a_hist, enc_b[b], preferred_element_type=F32)  # (J, H)

            # pointer distribution (scatter_add) on the VPU via the hoisted one-hot
            p_ctx = jnp.sum(a_hist[:, :, None] * onehot_b[b][None, :, :], axis=1)  # (J, V)

            p_gen = jax.nn.sigmoid(
                pg_wh[r0:r0 + J, :]
                + jnp.sum(context * wgen_w_c, axis=-1, keepdims=True))      # (J, 1)
            p_final = p_gen * attn_vocab[r0:r0 + J, :] + (1.0 - p_gen) * p_ctx

            # written directly in the final (B, J, max_len, V) layout (V=128 lane-dense)
            pfin_ref[b, :, k, :] = p_final

            if k == 0:
                gate_ref[b] = (jnp.dot(context, decw_ref[2 * H:3 * H, :n_gate],
                                       preferred_element_type=F32) + wgate_bias)

            # greedy argmax -> one-hot (first maximal index, like torch.max)
            pmax = jnp.max(p_final, axis=-1, keepdims=True)
            idx = jnp.min(jnp.where(p_final == pmax, iota_jv, V), axis=-1, keepdims=True)
            onehot_next.append((iota_jv == idx).astype(F32))

        h = h_new
        if k + 1 < max_len:
            # next-step input embedding via one (BJ,V)x(V,H) one-hot gather matmul
            w = jnp.dot(jnp.concatenate(onehot_next, axis=0), emb_ref[...],
                        preferred_element_type=F32)


# ---------------------------- host wrapper ----------------------------
def trade_bert_forward(params, input_ids, token_type_ids, attention_mask, max_len=MAX_LEN):
    B, S = input_ids.shape
    H, V, J, G = HIDDEN, VOCAB, J_SLOTS, N_GATE

    emb_tab = params["word_emb"].astype(F32)
    # host-side glue is reduced to the embedding gathers + trivial casts
    x = (emb_tab[input_ids]
         + params["pos_emb"][jnp.arange(S)][None, :, :]
         + params["type_emb"][token_type_ids]).reshape(B * S, H).astype(F32)
    am = attention_mask.astype(F32)
    ids_col = input_ids.reshape(B * S, 1).astype(F32)
    slot_e = emb_tab[params["slot_embed_idx"]].sum(axis=1)       # (J, H), tied embedding
    w0 = jnp.tile(slot_e, (B, 1))                                # (B*J, H)
    emb_T = emb_tab.T                    # hoisted transpose for the vocab-attention matmul

    inputs = [x, am, ids_col, w0, emb_tab, emb_T,
              params["enc_w"], params["enc_v"], params["dec_w"], params["dec_v"]]

    def _spec(t):
        return pl.BlockSpec(t.shape, lambda *_, _nd=t.ndim: (0,) * _nd)

    kern = functools.partial(
        _trade_kernel, num_layers=NUM_LAYERS, batch=B, seq=S, num_heads=NUM_HEADS,
        head_dim=HEAD_DIM, n_slots=J, intermediate=INTERMEDIATE,
        max_len=max_len, n_gate=G)

    all_point, all_gate = pl.pallas_call(
        kern,
        out_shape=(jax.ShapeDtypeStruct((B, J, max_len, V), F32),
                   jax.ShapeDtypeStruct((B, J, G), F32)),
        grid=(1,),
        in_specs=[_spec(t) for t in inputs],
        out_specs=(pl.BlockSpec((B, J, max_len, V), lambda i: (0, 0, 0, 0)),
                   pl.BlockSpec((B, J, G), lambda i: (0, 0, 0))),
        scratch_shapes=[pltpu.VMEM((B * S, H), F32)],     # attention-head assembly scratch
    )(*inputs)
    return all_point, all_gate


# ---------------------------- parameter init (packed) ----------------------------
def init_params(key):
    keys = jax.random.split(key, 64)
    kit = iter(keys)

    def nrm(shape, scale=0.02):
        return scale * jax.random.normal(next(kit), shape, dtype=F32)

    H, V, I, G, L = HIDDEN, VOCAB, INTERMEDIATE, N_GATE, NUM_LAYERS

    word_emb = nrm((V, H)).at[PAD_IDX].set(0.0)            # nn.Embedding(padding_idx=0)

    # packed encoder weight slab: per layer rows [qkv_w | ao_w | i_w | o2_w], then pooler_w
    enc_w = jnp.zeros((L * _RW + H, 3 * H), F32)
    # packed encoder vector slab (biases + LN params), lane width 3H
    enc_v = jnp.zeros((2 + _RV * L + 1, 3 * H), F32)
    enc_v = enc_v.at[0, :H].set(1.0)                                       # emb LN gamma
    for l in range(L):
        wb, vb = l * _RW, 2 + l * _RV
        enc_w = enc_w.at[wb:wb + H, :3 * H].set(nrm((H, 3 * H)))           # qkv_w (q|k|v)
        enc_w = enc_w.at[wb + H:wb + 2 * H, :H].set(nrm((H, H)))           # attn out proj
        enc_w = enc_w.at[wb + 2 * H:wb + 3 * H, :I].set(nrm((H, I)))       # intermediate
        enc_w = enc_w.at[wb + 3 * H:wb + 3 * H + I, :H].set(nrm((I, H)))   # ffn output
        enc_v = enc_v.at[vb + 0, :3 * H].set(nrm((3 * H,)))                # qkv_b
        enc_v = enc_v.at[vb + 1, :H].set(nrm((H,)))                        # ao_b
        enc_v = enc_v.at[vb + 2, :H].set(1.0)                              # ln1 gamma
        enc_v = enc_v.at[vb + 4, :I].set(nrm((I,)))                        # i_b
        enc_v = enc_v.at[vb + 5, :H].set(nrm((H,)))                        # o2_b
        enc_v = enc_v.at[vb + 6, :H].set(1.0)                              # ln2 gamma
    enc_w = enc_w.at[L * _RW:L * _RW + H, :H].set(nrm((H, H)))             # pooler_w
    enc_v = enc_v.at[2 + _RV * L, :H].set(nrm((H,)))                       # pooler_b

    # packed decoder weights: rows [gru W_ih^T | gru W_hh^T | w_gate^T]
    dec_w = jnp.zeros((3 * H, 3 * H), F32)
    dec_w = dec_w.at[0:H, :].set(nrm((H, 3 * H)))
    dec_w = dec_w.at[H:2 * H, :].set(nrm((H, 3 * H)))
    dec_w = dec_w.at[2 * H:3 * H, :G].set(nrm((H, G)))
    # packed decoder vectors: [gru b_ih; gru b_hh; w_gen weight row; (w_gen b | w_gate b)]
    dec_v = jnp.zeros((4, 3 * H), F32)
    dec_v = dec_v.at[0, :].set(nrm((3 * H,)))
    dec_v = dec_v.at[1, :].set(nrm((3 * H,)))
    dec_v = dec_v.at[2, :].set(nrm((3 * H,)))
    dec_v = dec_v.at[3, 0].set(nrm(()))
    dec_v = dec_v.at[3, 1:1 + G].set(nrm((G,)))

    # set_slot_idx: pad slot token lists to max length with pad_idx
    max_l = max(len(s) for s in TOKENIZED_SLOT_META)
    slot_idx = [s + [PAD_IDX] * (max_l - len(s)) for s in TOKENIZED_SLOT_META]

    return {
        "word_emb": word_emb,
        "pos_emb": nrm((MAX_POS, H)),
        "type_emb": nrm((TYPE_VOCAB, H)),
        "enc_w": enc_w, "enc_v": enc_v,
        "dec_w": dec_w, "dec_v": dec_v,
        "slot_embed_idx": jnp.array(slot_idx, dtype=jnp.int32),
    }


# ---------------------------------- main ----------------------------------
if __name__ == "__main__":
    B, S = 2, 8
    key = jax.random.PRNGKey(0)
    k_ids, k_params = jax.random.split(key, 2)

    input_ids = jax.random.randint(k_ids, (B, S), 1, VOCAB, dtype=jnp.int32)
    token_type_ids = jnp.concatenate(
        [jnp.zeros((B, S // 2), jnp.int32), jnp.ones((B, S // 2), jnp.int32)], axis=1)
    attention_mask = jnp.array([[1, 1, 1, 1, 1, 1, 0, 0],
                                [1, 1, 1, 1, 1, 1, 1, 1]], dtype=jnp.int32)

    params = init_params(k_params)

    fwd = jax.jit(trade_bert_forward, static_argnames=("max_len",))
    all_point_outputs, all_gate_outputs = fwd(
        params, input_ids, token_type_ids, attention_mask, max_len=MAX_LEN)
    jax.block_until_ready((all_point_outputs, all_gate_outputs))

    assert all_point_outputs.shape == (B, J_SLOTS, MAX_LEN, VOCAB)
    assert all_gate_outputs.shape == (B, J_SLOTS, N_GATE)
    assert bool(jnp.all(jnp.isfinite(all_point_outputs)))
    assert bool(jnp.all(jnp.isfinite(all_gate_outputs)))
    print("KERNEL_OK")
</pallas_src>

<mosaic_0001>
module attributes {stable_mosaic.version = 11 : i64} {
  func.func @_trade_kernel(%arg0: i32, %arg1: memref<16x32xf32, #tpu.memory_space<vmem>>, %arg2: memref<2x8xf32, #tpu.memory_space<vmem>>, %arg3: memref<16x1xf32, #tpu.memory_space<vmem>>, %arg4: memref<6x32xf32, #tpu.memory_space<vmem>>, %arg5: memref<128x32xf32, #tpu.memory_space<vmem>>, %arg6: memref<32x128xf32, #tpu.memory_space<vmem>>, %arg7: memref<352x96xf32, #tpu.memory_space<vmem>>, %arg8: memref<19x96xf32, #tpu.memory_space<vmem>>, %arg9: memref<96x96xf32, #tpu.memory_space<vmem>>, %arg10: memref<4x96xf32, #tpu.memory_space<vmem>>, %arg11: memref<2x3x4x128xf32, #tpu.memory_space<vmem>>, %arg12: memref<2x3x3xf32, #tpu.memory_space<vmem>>, %arg13: memref<16x32xf32, #tpu.memory_space<vmem>>) attributes {dimension_semantics = [#tpu.dimension_semantics<arbitrary>], iteration_bounds = array<i64: 1>, scalar_prefetch = 0 : i64, scratch_operands = 1 : i64, tpu.core_type = #tpu.core_type<tc>, window_params = [{pipeline_mode = #tpu.pipeline_mode<synchronous>, transform_indices = @transform_0, window_bounds = array<i64: 16, 32>}, {pipeline_mode = #tpu.pipeline_mode<synchronous>, transform_indices = @transform_1, window_bounds = array<i64: 2, 8>}, {pipeline_mode = #tpu.pipeline_mode<synchronous>, transform_indices = @transform_2, window_bounds = array<i64: 16, 1>}, {pipeline_mode = #tpu.pipeline_mode<synchronous>, transform_indices = @transform_3, window_bounds = array<i64: 6, 32>}, {pipeline_mode = #tpu.pipeline_mode<synchronous>, transform_indices = @transform_4, window_bounds = array<i64: 128, 32>}, {pipeline_mode = #tpu.pipeline_mode<synchronous>, transform_indices = @transform_5, window_bounds = array<i64: 32, 128>}, {pipeline_mode = #tpu.pipeline_mode<synchronous>, transform_indices = @transform_6, window_bounds = array<i64: 352, 96>}, {pipeline_mode = #tpu.pipeline_mode<synchronous>, transform_indices = @transform_7, window_bounds = array<i64: 19, 96>}, {pipeline_mode = #tpu.pipeline_mode<synchronous>, transform_indices = @transform_8, window_bounds = array<i64: 96, 96>}, {pipeline_mode = #tpu.pipeline_mode<synchronous>, transform_indices = @transform_9, window_bounds = array<i64: 4, 96>}, {pipeline_mode = #tpu.pipeline_mode<synchronous>, transform_indices = @transform_10, window_bounds = array<i64: 2, 3, 4, 128>}, {pipeline_mode = #tpu.pipeline_mode<synchronous>, transform_indices = @transform_11, window_bounds = array<i64: 2, 3, 3>}]} {
    %c0 = arith.constant 0 : index
    %c0_0 = arith.constant 0 : index
    %0 = vector.load %arg2[%c0, %c0_0] : memref<2x8xf32, #tpu.memory_space<vmem>>, vector<2x8xf32>
    %cst = arith.constant 1.000000e+00 : f32
    %1 = vector.broadcast %cst : f32 to vector<2x8xf32>
    %2 = arith.subf %1, %0 : vector<2x8xf32>
    %cst_1 = arith.constant -1.000000e+04 : f32
    %3 = vector.broadcast %cst_1 : f32 to vector<2x8xf32>
    %4 = arith.mulf %2, %3 : vector<2x8xf32>
    %c0_2 = arith.constant 0 : index
    %c0_3 = arith.constant 0 : index
    %5 = vector.load %arg1[%c0_2, %c0_3] : memref<16x32xf32, #tpu.memory_space<vmem>>, vector<16x32xf32>
    %c0_4 = arith.constant 0 : index
    %c0_5 = arith.constant 0 : index
    %6 = vector.load %arg8[%c0_4, %c0_5] : memref<19x96xf32, #tpu.memory_space<vmem>>, vector<1x32xf32>
    %c1 = arith.constant 1 : index
    %c0_6 = arith.constant 0 : index
    %7 = vector.load %arg8[%c1, %c0_6] : memref<19x96xf32, #tpu.memory_space<vmem>>, vector<1x32xf32>
    %cst_7 = arith.constant dense<0.000000e+00> : vector<16xf32>
    %8 = vector.multi_reduction <add>, %5, %cst_7 [1] : vector<16x32xf32> to vector<16xf32>
    %9 = vector.shape_cast %8 : vector<16xf32> to vector<16x1xf32>
    %cst_8 = arith.constant 3.200000e+01 : f32
    %10 = vector.broadcast %cst_8 : f32 to vector<16x1xf32>
    %11 = arith.divf %9, %10 : vector<16x1xf32>
    %12 = vector.broadcast %11 : vector<16x1xf32> to vector<16x32xf32>
    %13 = arith.subf %5, %12 : vector<16x32xf32>
    %14 = arith.mulf %13, %13 : vector<16x32xf32>
    %cst_9 = arith.constant dense<0.000000e+00> : vector<16xf32>
    %15 = vector.multi_reduction <add>, %14, %cst_9 [1] : vector<16x32xf32> to vector<16xf32>
    %16 = vector.shape_cast %15 : vector<16xf32> to vector<16x1xf32>
    %cst_10 = arith.constant 3.200000e+01 : f32
    %17 = vector.broadcast %cst_10 : f32 to vector<16x1xf32>
    %18 = arith.divf %16, %17 : vector<16x1xf32>
    %19 = vector.broadcast %11 : vector<16x1xf32> to vector<16x32xf32>
    %20 = arith.subf %5, %19 : vector<16x32xf32>
    %cst_11 = arith.constant 9.99999996E-13 : f32
    %21 = vector.broadcast %cst_11 : f32 to vector<16x1xf32>
    %22 = arith.addf %18, %21 : vector<16x1xf32>
    %23 = math.rsqrt %22 : vector<16x1xf32>
    %24 = vector.broadcast %23 : vector<16x1xf32> to vector<16x32xf32>
    %25 = arith.mulf %20, %24 : vector<16x32xf32>
    %26 = vector.broadcast %6 : vector<1x32xf32> to vector<16x32xf32>
    %27 = arith.mulf %25, %26 : vector<16x32xf32>
    %28 = vector.broadcast %7 : vector<1x32xf32> to vector<16x32xf32>
    %29 = arith.addf %27, %28 : vector<16x32xf32>
    %c0_12 = arith.constant 0 : index
    %c0_13 = arith.constant 0 : index
    %30 = vector.load %arg7[%c0_12, %c0_13] : memref<352x96xf32, #tpu.memory_space<vmem>>, vector<32x96xf32>
    %cst_14 = arith.constant dense<0.000000e+00> : vector<16x96xf32>
    %31 = tpu.matmul %29, %30, %cst_14 {dimension_numbers = #tpu.dot_dimension_numbers<[1], [0], [0], [1], [0, 0, 1, 1], [], []>} : vector<16x32xf32>, vector<32x96xf32>, vector<16x96xf32> -> vector<16x96xf32>
    %c2 = arith.constant 2 : index
    %c0_15 = arith.constant 0 : index
    %32 = vector.load %arg8[%c2, %c0_15] : memref<19x96xf32, #tpu.memory_space<vmem>>, vector<1x96xf32>
    %33 = vector.broadcast %32 : vector<1x96xf32> to vector<16x96xf32>
    %34 = arith.addf %31, %33 : vector<16x96xf32>
    %35 = vector.extract_strided_slice %4 {offsets = [0, 0], sizes = [1, 8], strides = [1, 1]} : vector<2x8xf32> to vector<1x8xf32>
    %36 = vector.extract_strided_slice %34 {offsets = [0, 0], sizes = [8, 16], strides = [1, 1]} : vector<16x96xf32> to vector<8x16xf32>
    %37 = vector.extract_strided_slice %34 {offsets = [0, 32], sizes = [8, 16], strides = [1, 1]} : vector<16x96xf32> to vector<8x16xf32>
    %38 = vector.extract_strided_slice %34 {offsets = [0, 64], sizes = [8, 16], strides = [1, 1]} : vector<16x96xf32> to vector<8x16xf32>
    %cst_16 = arith.constant dense<0.000000e+00> : vector<8x8xf32>
    %39 = tpu.matmul %36, %37, %cst_16 {dimension_numbers = #tpu.dot_dimension_numbers<[1], [1], [0], [0], [0, 0, 1, 0], [], []>} : vector<8x16xf32>, vector<8x16xf32>, vector<8x8xf32> -> vector<8x8xf32>
    %cst_17 = arith.constant 2.500000e-01 : f32
    %40 = vector.broadcast %cst_17 : f32 to vector<8x8xf32>
    %41 = arith.mulf %39, %40 : vector<8x8xf32>
    %42 = vector.broadcast %35 : vector<1x8xf32> to vector<8x8xf32>
    %43 = arith.addf %41, %42 : vector<8x8xf32>
    %cst_18 = arith.constant dense<0xFF800000> : vector<8xf32>
    %44 = vector.multi_reduction <maximumf>, %43, %cst_18 [1] : vector<8x8xf32> to vector<8xf32>
    %45 = vector.shape_cast %44 : vector<8xf32> to vector<8x1xf32>
    %46 = vector.broadcast %45 : vector<8x1xf32> to vector<8x8xf32>
    %47 = arith.subf %43, %46 : vector<8x8xf32>
    %48 = math.exp %47 : vector<8x8xf32>
    %cst_19 = arith.constant dense<0.000000e+00> : vector<8xf32>
    %49 = vector.multi_reduction <add>, %48, %cst_19 [1] : vector<8x8xf32> to vector<8xf32>
    %50 = vector.shape_cast %49 : vector<8xf32> to vector<8x1xf32>
    %51 = vector.broadcast %50 : vector<8x1xf32> to vector<8x8xf32>
    %52 = arith.divf %48, %51 : vector<8x8xf32>
    %cst_20 = arith.constant dense<0.000000e+00> : vector<8x16xf32>
    %53 = tpu.matmul %52, %38, %cst_20 {dimension_numbers = #tpu.dot_dimension_numbers<[1], [0], [0], [1], [0, 0, 1, 1], [], []>} : vector<8x8xf32>, vector<8x16xf32>, vector<8x16xf32> -> vector<8x16xf32>
    %c0_21 = arith.constant 0 : index
    %c0_22 = arith.constant 0 : index
    %54 = vector.load %arg13[%c0_21, %c0_22] : memref<16x32xf32, #tpu.memory_space<vmem>>, vector<8x16xf32>
    tpu.vector_store %arg13[%c0_21, %c0_22], %53 {strides = array<i32>} : memref<16x32xf32, #tpu.memory_space<vmem>>, vector<8x16xf32>,
    %55 = vector.extract_strided_slice %34 {offsets = [0, 16], sizes = [8, 16], strides = [1, 1]} : vector<16x96xf32> to vector<8x16xf32>
    %56 = vector.extract_strided_slice %34 {offsets = [0, 48], sizes = [8, 16], strides = [1, 1]} : vector<16x96xf32> to vector<8x16xf32>
    %57 = vector.extract_strided_slice %34 {offsets = [0, 80], sizes = [8, 16], strides = [1, 1]} : vector<16x96xf32> to vector<8x16xf32>
    %cst_23 = arith.constant dense<0.000000e+00> : vector<8x8xf32>
    %58 = tpu.matmul %55, %56, %cst_23 {dimension_numbers = #tpu.dot_dimension_numbers<[1], [1], [0], [0], [0, 0, 1, 0], [], []>} : vector<8x16xf32>, vector<8x16xf32>, vector<8x8xf32> -> vector<8x8xf32>
    %cst_24 = arith.constant 2.500000e-01 : f32
    %59 = vector.broadcast %cst_24 : f32 to vector<8x8xf32>
    %60 = arith.mulf %58, %59 : vector<8x8xf32>
    %61 = vector.broadcast %35 : vector<1x8xf32> to vector<8x8xf32>
    %62 = arith.addf %60, %61 : vector<8x8xf32>
    %cst_25 = arith.constant dense<0xFF800000> : vector<8xf32>
    %63 = vector.multi_reduction <maximumf>, %62, %cst_25 [1] : vector<8x8xf32> to vector<8xf32>
    %64 = vector.shape_cast %63 : vector<8xf32> to vector<8x1xf32>
    %65 = vector.broadcast %64 : vector<8x1xf32> to vector<8x8xf32>
    %66 = arith.subf %62, %65 : vector<8x8xf32>
    %67 = math.exp %66 : vector<8x8xf32>
    %cst_26 = arith.constant dense<0.000000e+00> : vector<8xf32>
    %68 = vector.multi_reduction <add>, %67, %cst_26 [1] : vector<8x8xf32> to vector<8xf32>
    %69 = vector.shape_cast %68 : vector<8xf32> to vector<8x1xf32>
    %70 = vector.broadcast %69 : vector<8x1xf32> to vector<8x8xf32>
    %71 = arith.divf %67, %70 : vector<8x8xf32>
    %cst_27 = arith.constant dense<0.000000e+00> : vector<8x16xf32>
    %72 = tpu.matmul %71, %57, %cst_27 {dimension_numbers = #tpu.dot_dimension_numbers<[1], [0], [0], [1], [0, 0, 1, 1], [], []>} : vector<8x8xf32>, vector<8x16xf32>, vector<8x16xf32> -> vector<8x16xf32>
    %c0_28 = arith.constant 0 : index
    %c16 = arith.constant 16 : index
    %73 = vector.load %arg13[%c0_28, %c16] : memref<16x32xf32, #tpu.memory_space<vmem>>, vector<8x16xf32>
    tpu.vector_store %arg13[%c0_28, %c16], %72 {strides = array<i32>} : memref<16x32xf32, #tpu.memory_space<vmem>>, vector<8x16xf32>,
    %74 = vector.extract_strided_slice %4 {offsets = [1, 0], sizes = [1, 8], strides = [1, 1]} : vector<2x8xf32> to vector<1x8xf32>
    %75 = vector.extract_strided_slice %34 {offsets = [8, 0], sizes = [8, 16], strides = [1, 1]} : vector<16x96xf32> to vector<8x16xf32>
    %76 = vector.extract_strided_slice %34 {offsets = [8, 32], sizes = [8, 16], strides = [1, 1]} : vector<16x96xf32> to vector<8x16xf32>
    %77 = vector.extract_strided_slice %34 {offsets = [8, 64], sizes = [8, 16], strides = [1, 1]} : vector<16x96xf32> to vector<8x16xf32>
    %cst_29 = arith.constant dense<0.000000e+00> : vector<8x8xf32>
    %78 = tpu.matmul %75, %76, %cst_29 {dimension_numbers = #tpu.dot_dimension_numbers<[1], [1], [0], [0], [0, 0, 1, 0], [], []>} : vector<8x16xf32>, vector<8x16xf32>, vector<8x8xf32> -> vector<8x8xf32>
    %cst_30 = arith.constant 2.500000e-01 : f32
    %79 = vector.broadcast %cst_30 : f32 to vector<8x8xf32>
    %80 = arith.mulf %78, %79 : vector<8x8xf32>
    %81 = vector.broadcast %74 : vector<1x8xf32> to vector<8x8xf32>
    %82 = arith.addf %80, %81 : vector<8x8xf32>
    %cst_31 = arith.constant dense<0xFF800000> : vector<8xf32>
    %83 = vector.multi_reduction <maximumf>, %82, %cst_31 [1] : vector<8x8xf32> to vector<8xf32>
    %84 = vector.shape_cast %83 : vector<8xf32> to vector<8x1xf32>
    %85 = vector.broadcast %84 : vector<8x1xf32> to vector<8x8xf32>
    %86 = arith.subf %82, %85 : vector<8x8xf32>
    %87 = math.exp %86 : vector<8x8xf32>
    %cst_32 = arith.constant dense<0.000000e+00> : vector<8xf32>
    %88 = vector.multi_reduction <add>, %87, %cst_32 [1] : vector<8x8xf32> to vector<8xf32>
    %89 = vector.shape_cast %88 : vector<8xf32> to vector<8x1xf32>
    %90 = vector.broadcast %89 : vector<8x1xf32> to vector<8x8xf32>
    %91 = arith.divf %87, %90 : vector<8x8xf32>
    %cst_33 = arith.constant dense<0.000000e+00> : vector<8x16xf32>
    %92 = tpu.matmul %91, %77, %cst_33 {dimension_numbers = #tpu.dot_dimension_numbers<[1], [0], [0], [1], [0, 0, 1, 1], [], []>} : vector<8x8xf32>, vector<8x16xf32>, vector<8x16xf32> -> vector<8x16xf32>
    %c8 = arith.constant 8 : index
    %c0_34 = arith.constant 0 : index
    %93 = vector.load %arg13[%c8, %c0_34] : memref<16x32xf32, #tpu.memory_space<vmem>>, vector<8x16xf32>
    tpu.vector_store %arg13[%c8, %c0_34], %92 {strides = array<i32>} : memref<16x32xf32, #tpu.memory_space<vmem>>, vector<8x16xf32>,
    %94 = vector.extract_strided_slice %34 {offsets = [8, 16], sizes = [8, 16], strides = [1, 1]} : vector<16x96xf32> to vector<8x16xf32>
    %95 = vector.extract_strided_slice %34 {offsets = [8, 48], sizes = [8, 16], strides = [1, 1]} : vector<16x96xf32> to vector<8x16xf32>
    %96 = vector.extract_strided_slice %34 {offsets = [8, 80], sizes = [8, 16], strides = [1, 1]} : vector<16x96xf32> to vector<8x16xf32>
    %cst_35 = arith.constant dense<0.000000e+00> : vector<8x8xf32>
    %97 = tpu.matmul %94, %95, %cst_35 {dimension_numbers = #tpu.dot_dimension_numbers<[1], [1], [0], [0], [0, 0, 1, 0], [], []>} : vector<8x16xf32>, vector<8x16xf32>, vector<8x8xf32> -> vector<8x8xf32>
    %cst_36 = arith.constant 2.500000e-01 : f32
    %98 = vector.broadcast %cst_36 : f32 to vector<8x8xf32>
    %99 = arith.mulf %97, %98 : vector<8x8xf32>
    %100 = vector.broadcast %74 : vector<1x8xf32> to vector<8x8xf32>
    %101 = arith.addf %99, %100 : vector<8x8xf32>
    %cst_37 = arith.constant dense<0xFF800000> : vector<8xf32>
    %102 = vector.multi_reduction <maximumf>, %101, %cst_37 [1] : vector<8x8xf32> to vector<8xf32>
    %103 = vector.shape_cast %102 : vector<8xf32> to vector<8x1xf32>
    %104 = vector.broadcast %103 : vector<8x1xf32> to vector<8x8xf32>
    %105 = arith.subf %101, %104 : vector<8x8xf32>
    %106 = math.exp %105 : vector<8x8xf32>
    %cst_38 = arith.constant dense<0.000000e+00> : vector<8xf32>
    %107 = vector.multi_reduction <add>, %106, %cst_38 [1] : vector<8x8xf32> to vector<8xf32>
    %108 = vector.shape_cast %107 : vector<8xf32> to vector<8x1xf32>
    %109 = vector.broadcast %108 : vector<8x1xf32> to vector<8x8xf32>
    %110 = arith.divf %106, %109 : vector<8x8xf32>
    %cst_39 = arith.constant dense<0.000000e+00> : vector<8x16xf32>
    %111 = tpu.matmul %110, %96, %cst_39 {dimension_numbers = #tpu.dot_dimension_numbers<[1], [0], [0], [1], [0, 0, 1, 1], [], []>} : vector<8x8xf32>, vector<8x16xf32>, vector<8x16xf32> -> vector<8x16xf32>
    %c8_40 = arith.constant 8 : index
    %c16_41 = arith.constant 16 : index
    %112 = vector.load %arg13[%c8_40, %c16_41] : memref<16x32xf32, #tpu.memory_space<vmem>>, vector<8x16xf32>
    tpu.vector_store %arg13[%c8_40, %c16_41], %111 {strides = array<i32>} : memref<16x32xf32, #tpu.memory_space<vmem>>, vector<8x16xf32>,
    %c0_42 = arith.constant 0 : index
    %c0_43 = arith.constant 0 : index
    %113 = vector.load %arg13[%c0_42, %c0_43] : memref<16x32xf32, #tpu.memory_space<vmem>>, vector<16x32xf32>
    %c32 = arith.constant 32 : index
    %c0_44 = arith.constant 0 : index
    %114 = vector.load %arg7[%c32, %c0_44] : memref<352x96xf32, #tpu.memory_space<vmem>>, vector<32x32xf32>
    %cst_45 = arith.constant dense<0.000000e+00> : vector<16x32xf32>
    %115 = tpu.matmul %113, %114, %cst_45 {dimension_numbers = #tpu.dot_dimension_numbers<[1], [0], [0], [1], [0, 0, 1, 1], [], []>} : vector<16x32xf32>, vector<32x32xf32>, vector<16x32xf32> -> vector<16x32xf32>
    %c3 = arith.constant 3 : index
    %c0_46 = arith.constant 0 : index
    %116 = vector.load %arg8[%c3, %c0_46] : memref<19x96xf32, #tpu.memory_space<vmem>>, vector<1x32xf32>
    %117 = vector.broadcast %116 : vector<1x32xf32> to vector<16x32xf32>
    %118 = arith.addf %115, %117 : vector<16x32xf32>
    %119 = arith.addf %118, %29 : vector<16x32xf32>
    %c4 = arith.constant 4 : index
    %c0_47 = arith.constant 0 : index
    %120 = vector.load %arg8[%c4, %c0_47] : memref<19x96xf32, #tpu.memory_space<vmem>>, vector<1x32xf32>
    %c5 = arith.constant 5 : index
    %c0_48 = arith.constant 0 : index
    %121 = vector.load %arg8[%c5, %c0_48] : memref<19x96xf32, #tpu.memory_space<vmem>>, vector<1x32xf32>
    %cst_49 = arith.constant dense<0.000000e+00> : vector<16xf32>
    %122 = vector.multi_reduction <add>, %119, %cst_49 [1] : vector<16x32xf32> to vector<16xf32>
    %123 = vector.shape_cast %122 : vector<16xf32> to vector<16x1xf32>
    %cst_50 = arith.constant 3.200000e+01 : f32
    %124 = vector.broadcast %cst_50 : f32 to vector<16x1xf32>
    %125 = arith.divf %123, %124 : vector<16x1xf32>
    %126 = vector.broadcast %125 : vector<16x1xf32> to vector<16x32xf32>
    %127 = arith.subf %119, %126 : vector<16x32xf32>
    %128 = arith.mulf %127, %127 : vector<16x32xf32>
    %cst_51 = arith.constant dense<0.000000e+00> : vector<16xf32>
    %129 = vector.multi_reduction <add>, %128, %cst_51 [1] : vector<16x32xf32> to vector<16xf32>
    %130 = vector.shape_cast %129 : vector<16xf32> to vector<16x1xf32>
    %cst_52 = arith.constant 3.200000e+01 : f32
    %131 = vector.broadcast %cst_52 : f32 to vector<16x1xf32>
    %132 = arith.divf %130, %131 : vector<16x1xf32>
    %133 = vector.broadcast %125 : vector<16x1xf32> to vector<16x32xf32>
    %134 = arith.subf %119, %133 : vector<16x32xf32>
    %cst_53 = arith.constant 9.99999996E-13 : f32
    %135 = vector.broadcast %cst_53 : f32 to vector<16x1xf32>
    %136 = arith.addf %132, %135 : vector<16x1xf32>
    %137 = math.rsqrt %136 : vector<16x1xf32>
    %138 = vector.broadcast %137 : vector<16x1xf32> to vector<16x32xf32>
    %139 = arith.mulf %134, %138 : vector<16x32xf32>
    %140 = vector.broadcast %120 : vector<1x32xf32> to vector<16x32xf32>
    %141 = arith.mulf %139, %140 : vector<16x32xf32>
    %142 = vector.broadcast %121 : vector<1x32xf32> to vector<16x32xf32>
    %143 = arith.addf %141, %142 : vector<16x32xf32>
    %c64 = arith.constant 64 : index
    %c0_54 = arith.constant 0 : index
    %144 = vector.load %arg7[%c64, %c0_54] : memref<352x96xf32, #tpu.memory_space<vmem>>, vector<32x64xf32>
    %cst_55 = arith.constant dense<0.000000e+00> : vector<16x64xf32>
    %145 = tpu.matmul %143, %144, %cst_55 {dimension_numbers = #tpu.dot_dimension_numbers<[1], [0], [0], [1], [0, 0, 1, 1], [], []>} : vector<16x32xf32>, vector<32x64xf32>, vector<16x64xf32> -> vector<16x64xf32>
    %c6 = arith.constant 6 : index
    %c0_56 = arith.constant 0 : index
    %146 = vector.load %arg8[%c6, %c0_56] : memref<19x96xf32, #tpu.memory_space<vmem>>, vector<1x64xf32>
    %147 = vector.broadcast %146 : vector<1x64xf32> to vector<16x64xf32>
    %148 = arith.addf %145, %147 : vector<16x64xf32>
    %cst_57 = arith.constant 5.000000e-01 : f32
    %149 = vector.broadcast %cst_57 : f32 to vector<16x64xf32>
    %150 = arith.mulf %149, %148 : vector<16x64xf32>
    %cst_58 = arith.constant 0.707106769 : f32
    %151 = vector.broadcast %cst_58 : f32 to vector<16x64xf32>
    %152 = arith.mulf %148, %151 : vector<16x64xf32>
    %cst_59 = arith.constant 0.000000e+00 : f32
    %153 = vector.broadcast %cst_59 : f32 to vector<16x64xf32>
    %154 = arith.cmpf oge, %152, %153 : vector<16x64xf32>
    %cst_60 = arith.constant 1.000000e+00 : f32
    %cst_61 = arith.constant -1.000000e+00 : f32
    %155 = vector.broadcast %cst_60 : f32 to vector<16x64xf32>
    %156 = vector.broadcast %cst_61 : f32 to vector<16x64xf32>
    %157 = arith.select %154, %155, %156 : vector<16x64xi1>, vector<16x64xf32>
    %158 = math.absf %152 : vector<16x64xf32>
    %cst_62 = arith.constant 0.327591091 : f32
    %159 = vector.broadcast %cst_62 : f32 to vector<16x64xf32>
    %160 = arith.mulf %159, %158 : vector<16x64xf32>
    %cst_63 = arith.constant 1.000000e+00 : f32
    %161 = vector.broadcast %cst_63 : f32 to vector<16x64xf32>
    %162 = arith.addf %161, %160 : vector<16x64xf32>
    %cst_64 = arith.constant 1.000000e+00 : f32
    %163 = vector.broadcast %cst_64 : f32 to vector<16x64xf32>
    %164 = arith.divf %163, %162 : vector<16x64xf32>
    %cst_65 = arith.constant 1.06140542 : f32
    %165 = vector.broadcast %cst_65 : f32 to vector<16x64xf32>
    %166 = arith.mulf %165, %164 : vector<16x64xf32>
    %cst_66 = arith.constant -1.45315206 : f32
    %167 = vector.broadcast %cst_66 : f32 to vector<16x64xf32>
    %168 = arith.addf %166, %167 : vector<16x64xf32>
    %169 = arith.mulf %168, %164 : vector<16x64xf32>
    %cst_67 = arith.constant 1.42141378 : f32
    %170 = vector.broadcast %cst_67 : f32 to vector<16x64xf32>
    %171 = arith.addf %169, %170 : vector<16x64xf32>
    %172 = arith.mulf %171, %164 : vector<16x64xf32>
    %cst_68 = arith.constant -0.284496725 : f32
    %173 = vector.broadcast %cst_68 : f32 to vector<16x64xf32>
    %174 = arith.addf %172, %173 : vector<16x64xf32>
    %175 = arith.mulf %174, %164 : vector<16x64xf32>
    %cst_69 = arith.constant 0.254829586 : f32
    %176 = vector.broadcast %cst_69 : f32 to vector<16x64xf32>
    %177 = arith.addf %175, %176 : vector<16x64xf32>
    %178 = arith.mulf %177, %164 : vector<16x64xf32>
    %cst_70 = arith.constant 0.000000e+00 : f32
    %179 = vector.broadcast %cst_70 : f32 to vector<16x64xf32>
    %180 = arith.subf %179, %158 : vector<16x64xf32>
    %181 = arith.mulf %180, %158 : vector<16x64xf32>
    %182 = math.exp %181 : vector<16x64xf32>
    %183 = arith.mulf %178, %182 : vector<16x64xf32>
    %cst_71 = arith.constant 1.000000e+00 : f32
    %184 = vector.broadcast %cst_71 : f32 to vector<16x64xf32>
    %185 = arith.subf %184, %183 : vector<16x64xf32>
    %186 = arith.mulf %157, %185 : vector<16x64xf32>
    %cst_72 = arith.constant 1.000000e+00 : f32
    %187 = vector.broadcast %cst_72 : f32 to vector<16x64xf32>
    %188 = arith.addf %187, %186 : vector<16x64xf32>
    %189 = arith.mulf %150, %188 : vector<16x64xf32>
    %c96 = arith.constant 96 : index
    %c0_73 = arith.constant 0 : index
    %190 = vector.load %arg7[%c96, %c0_73] : memref<352x96xf32, #tpu.memory_space<vmem>>, vector<64x32xf32>
    %cst_74 = arith.constant dense<0.000000e+00> : vector<16x32xf32>
    %191 = tpu.matmul %189, %190, %cst_74 {dimension_numbers = #tpu.dot_dimension_numbers<[1], [0], [0], [1], [0, 0, 1, 1], [], []>} : vector<16x64xf32>, vector<64x32xf32>, vector<16x32xf32> -> vector<16x32xf32>
    %c7 = arith.constant 7 : index
    %c0_75 = arith.constant 0 : index
    %192 = vector.load %arg8[%c7, %c0_75] : memref<19x96xf32, #tpu.memory_space<vmem>>, vector<1x32xf32>
    %193 = vector.broadcast %192 : vector<1x32xf32> to vector<16x32xf32>
    %194 = arith.addf %191, %193 : vector<16x32xf32>
    %195 = arith.addf %194, %143 : vector<16x32xf32>
    %c8_76 = arith.constant 8 : index
    %c0_77 = arith.constant 0 : index
    %196 = vector.load %arg8[%c8_76, %c0_77] : memref<19x96xf32, #tpu.memory_space<vmem>>, vector<1x32xf32>
    %c9 = arith.constant 9 : index
    %c0_78 = arith.constant 0 : index
    %197 = vector.load %arg8[%c9, %c0_78] : memref<19x96xf32, #tpu.memory_space<vmem>>, vector<1x32xf32>
    %cst_79 = arith.constant dense<0.000000e+00> : vector<16xf32>
    %198 = vector.multi_reduction <add>, %195, %cst_79 [1] : vector<16x32xf32> to vector<16xf32>
    %199 = vector.shape_cast %198 : vector<16xf32> to vector<16x1xf32>
    %cst_80 = arith.constant 3.200000e+01 : f32
    %200 = vector.broadcast %cst_80 : f32 to vector<16x1xf32>
    %201 = arith.divf %199, %200 : vector<16x1xf32>
    %202 = vector.broadcast %201 : vector<16x1xf32> to vector<16x32xf32>
    %203 = arith.subf %195, %202 : vector<16x32xf32>
    %204 = arith.mulf %203, %203 : vector<16x32xf32>
    %cst_81 = arith.constant dense<0.000000e+00> : vector<16xf32>
    %205 = vector.multi_reduction <add>, %204, %cst_81 [1] : vector<16x32xf32> to vector<16xf32>
    %206 = vector.shape_cast %205 : vector<16xf32> to vector<16x1xf32>
    %cst_82 = arith.constant 3.200000e+01 : f32
    %207 = vector.broadcast %cst_82 : f32 to vector<16x1xf32>
    %208 = arith.divf %206, %207 : vector<16x1xf32>
    %209 = vector.broadcast %201 : vector<16x1xf32> to vector<16x32xf32>
    %210 = arith.subf %195, %209 : vector<16x32xf32>
    %cst_83 = arith.constant 9.99999996E-13 : f32
    %211 = vector.broadcast %cst_83 : f32 to vector<16x1xf32>
    %212 = arith.addf %208, %211 : vector<16x1xf32>
    %213 = math.rsqrt %212 : vector<16x1xf32>
    %214 = vector.broadcast %213 : vector<16x1xf32> to vector<16x32xf32>
    %215 = arith.mulf %210, %214 : vector<16x32xf32>
    %216 = vector.broadcast %196 : vector<1x32xf32> to vector<16x32xf32>
    %217 = arith.mulf %215, %216 : vector<16x32xf32>
    %218 = vector.broadcast %197 : vector<1x32xf32> to vector<16x32xf32>
    %219 = arith.addf %217, %218 : vector<16x32xf32>
    %c320 = arith.constant 320 : index
    %c0_84 = arith.constant 0 : index
    %220 = vector.load %arg7[%c320, %c0_84] : memref<352x96xf32, #tpu.memory_space<vmem>>, vector<32x32xf32>
    %c18 = arith.constant 18 : index
    %c0_85 = arith.constant 0 : index
    %221 = vector.load %arg8[%c18, %c0_85] : memref<19x96xf32, #tpu.memory_space<vmem>>, vector<1x32xf32>
    %222 = vector.extract_strided_slice %219 {offsets = [0, 0], sizes = [1, 32], strides = [1, 1]} : vector<16x32xf32> to vector<1x32xf32>
    %cst_86 = arith.constant dense<0.000000e+00> : vector<1x32xf32>
    %223 = tpu.matmul %222, %220, %cst_86 {dimension_numbers = #tpu.dot_dimension_numbers<[1], [0], [0], [1], [0, 0, 1, 1], [], []>} : vector<1x32xf32>, vector<32x32xf32>, vector<1x32xf32> -> vector<1x32xf32>
    %224 = arith.addf %223, %221 : vector<1x32xf32>
    %225 = vector.extract_strided_slice %219 {offsets = [8, 0], sizes = [1, 32], strides = [1, 1]} : vector<16x32xf32> to vector<1x32xf32>
    %cst_87 = arith.constant dense<0.000000e+00> : vector<1x32xf32>
    %226 = tpu.matmul %225, %220, %cst_87 {dimension_numbers = #tpu.dot_dimension_numbers<[1], [0], [0], [1], [0, 0, 1, 1], [], []>} : vector<1x32xf32>, vector<32x32xf32>, vector<1x32xf32> -> vector<1x32xf32>
    %227 = arith.addf %226, %221 : vector<1x32xf32>
    %c160 = arith.constant 160 : index
    %c0_88 = arith.constant 0 : index
    %228 = vector.load %arg7[%c160, %c0_88] : memref<352x96xf32, #tpu.memory_space<vmem>>, vector<32x96xf32>
    %cst_89 = arith.constant dense<0.000000e+00> : vector<16x96xf32>
    %229 = tpu.matmul %219, %228, %cst_89 {dimension_numbers = #tpu.dot_dimension_numbers<[1], [0], [0], [1], [0, 0, 1, 1], [], []>} : vector<16x32xf32>, vector<32x96xf32>, vector<16x96xf32> -> vector<16x96xf32>
    %c10 = arith.constant 10 : index
    %c0_90 = arith.constant 0 : index
    %230 = vector.load %arg8[%c10, %c0_90] : memref<19x96xf32, #tpu.memory_space<vmem>>, vector<1x96xf32>
    %231 = vector.broadcast %230 : vector<1x96xf32> to vector<16x96xf32>
    %232 = arith.addf %229, %231 : vector<16x96xf32>
    %233 = vector.extract_strided_slice %4 {offsets = [0, 0], sizes = [1, 8], strides = [1, 1]} : vector<2x8xf32> to vector<1x8xf32>
    %234 = vector.extract_strided_slice %232 {offsets = [0, 0], sizes = [8, 16], strides = [1, 1]} : vector<16x96xf32> to vector<8x16xf32>
    %235 = vector.extract_strided_slice %232 {offsets = [0, 32], sizes = [8, 16], strides = [1, 1]} : vector<16x96xf32> to vector<8x16xf32>
    %236 = vector.extract_strided_slice %232 {offsets = [0, 64], sizes = [8, 16], strides = [1, 1]} : vector<16x96xf32> to vector<8x16xf32>
    %cst_91 = arith.constant dense<0.000000e+00> : vector<8x8xf32>
    %237 = tpu.matmul %234, %235, %cst_91 {dimension_numbers = #tpu.dot_dimension_numbers<[1], [1], [0], [0], [0, 0, 1, 0], [], []>} : vector<8x16xf32>, vector<8x16xf32>, vector<8x8xf32> -> vector<8x8xf32>
    %cst_92 = arith.constant 2.500000e-01 : f32
    %238 = vector.broadcast %cst_92 : f32 to vector<8x8xf32>
    %239 = arith.mulf %237, %238 : vector<8x8xf32>
    %240 = vector.broadcast %233 : vector<1x8xf32> to vector<8x8xf32>
    %241 = arith.addf %239, %240 : vector<8x8xf32>
    %cst_93 = arith.constant dense<0xFF800000> : vector<8xf32>
    %242 = vector.multi_reduction <maximumf>, %241, %cst_93 [1] : vector<8x8xf32> to vector<8xf32>
    %243 = vector.shape_cast %242 : vector<8xf32> to vector<8x1xf32>
    %244 = vector.broadcast %243 : vector<8x1xf32> to vector<8x8xf32>
    %245 = arith.subf %241, %244 : vector<8x8xf32>
    %246 = math.exp %245 : vector<8x8xf32>
    %cst_94 = arith.constant dense<0.000000e+00> : vector<8xf32>
    %247 = vector.multi_reduction <add>, %246, %cst_94 [1] : vector<8x8xf32> to vector<8xf32>
    %248 = vector.shape_cast %247 : vector<8xf32> to vector<8x1xf32>
    %249 = vector.broadcast %248 : vector<8x1xf32> to vector<8x8xf32>
    %250 = arith.divf %246, %249 : vector<8x8xf32>
    %cst_95 = arith.constant dense<0.000000e+00> : vector<8x16xf32>
    %251 = tpu.matmul %250, %236, %cst_95 {dimension_numbers = #tpu.dot_dimension_numbers<[1], [0], [0], [1], [0, 0, 1, 1], [], []>} : vector<8x8xf32>, vector<8x16xf32>, vector<8x16xf32> -> vector<8x16xf32>
    %c0_96 = arith.constant 0 : index
    %c0_97 = arith.constant 0 : index
    %252 = vector.load %arg13[%c0_96, %c0_97] : memref<16x32xf32, #tpu.memory_space<vmem>>, vector<8x16xf32>
    tpu.vector_store %arg13[%c0_96, %c0_97], %251 {strides = array<i32>} : memref<16x32xf32, #tpu.memory_space<vmem>>, vector<8x16xf32>,
    %253 = vector.extract_strided_slice %232 {offsets = [0, 16], sizes = [8, 16], strides = [1, 1]} : vector<16x96xf32> to vector<8x16xf32>
    %254 = vector.extract_strided_slice %232 {offsets = [0, 48], sizes = [8, 16], strides = [1, 1]} : vector<16x96xf32> to vector<8x16xf32>
    %255 = vector.extract_strided_slice %232 {offsets = [0, 80], sizes = [8, 16], strides = [1, 1]} : vector<16x96xf32> to vector<8x16xf32>
    %cst_98 = arith.constant dense<0.000000e+00> : vector<8x8xf32>
    %256 = tpu.matmul %253, %254, %cst_98 {dimension_numbers = #tpu.dot_dimension_numbers<[1], [1], [0], [0], [0, 0, 1, 0], [], []>} : vector<8x16xf32>, vector<8x16xf32>, vector<8x8xf32> -> vector<8x8xf32>
    %cst_99 = arith.constant 2.500000e-01 : f32
    %257 = vector.broadcast %cst_99 : f32 to vector<8x8xf32>
    %258 = arith.mulf %256, %257 : vector<8x8xf32>
    %259 = vector.broadcast %233 : vector<1x8xf32> to vector<8x8xf32>
    %260 = arith.addf %258, %259 : vector<8x8xf32>
    %cst_100 = arith.constant dense<0xFF800000> : vector<8xf32>
    %261 = vector.multi_reduction <maximumf>, %260, %cst_100 [1] : vector<8x8xf32> to vector<8xf32>
    %262 = vector.shape_cast %261 : vector<8xf32> to vector<8x1xf32>
    %263 = vector.broadcast %262 : vector<8x1xf32> to vector<8x8xf32>
    %264 = arith.subf %260, %263 : vector<8x8xf32>
    %265 = math.exp %264 : vector<8x8xf32>
    %cst_101 = arith.constant dense<0.000000e+00> : vector<8xf32>
    %266 = vector.multi_reduction <add>, %265, %cst_101 [1] : vector<8x8xf32> to vector<8xf32>
    %267 = vector.shape_cast %266 : vector<8xf32> to vector<8x1xf32>
    %268 = vector.broadcast %267 : vector<8x1xf32> to vector<8x8xf32>
    %269 = arith.divf %265, %268 : vector<8x8xf32>
    %cst_102 = arith.constant dense<0.000000e+00> : vector<8x16xf32>
    %270 = tpu.matmul %269, %255, %cst_102 {dimension_numbers = #tpu.dot_dimension_numbers<[1], [0], [0], [1], [0, 0, 1, 1], [], []>} : vector<8x8xf32>, vector<8x16xf32>, vector<8x16xf32> -> vector<8x16xf32>
    %c0_103 = arith.constant 0 : index
    %c16_104 = arith.constant 16 : index
    %271 = vector.load %arg13[%c0_103, %c16_104] : memref<16x32xf32, #tpu.memory_space<vmem>>, vector<8x16xf32>
    tpu.vector_store %arg13[%c0_103, %c16_104], %270 {strides = array<i32>} : memref<16x32xf32, #tpu.memory_space<vmem>>, vector<8x16xf32>,
    %272 = vector.extract_strided_slice %4 {offsets = [1, 0], sizes = [1, 8], strides = [1, 1]} : vector<2x8xf32> to vector<1x8xf32>
    %273 = vector.extract_strided_slice %232 {offsets = [8, 0], sizes = [8, 16], strides = [1, 1]} : vector<16x96xf32> to vector<8x16xf32>
    %274 = vector.extract_strided_slice %232 {offsets = [8, 32], sizes = [8, 16], strides = [1, 1]} : vector<16x96xf32> to vector<8x16xf32>
    %275 = vector.extract_strided_slice %232 {offsets = [8, 64], sizes = [8, 16], strides = [1, 1]} : vector<16x96xf32> to vector<8x16xf32>
    %cst_105 = arith.constant dense<0.000000e+00> : vector<8x8xf32>
    %276 = tpu.matmul %273, %274, %cst_105 {dimension_numbers = #tpu.dot_dimension_numbers<[1], [1], [0], [0], [0, 0, 1, 0], [], []>} : vector<8x16xf32>, vector<8x16xf32>, vector<8x8xf32> -> vector<8x8xf32>
    %cst_106 = arith.constant 2.500000e-01 : f32
    %277 = vector.broadcast %cst_106 : f32 to vector<8x8xf32>
    %278 = arith.mulf %276, %277 : vector<8x8xf32>
    %279 = vector.broadcast %272 : vector<1x8xf32> to vector<8x8xf32>
    %280 = arith.addf %278, %279 : vector<8x8xf32>
    %cst_107 = arith.constant dense<0xFF800000> : vector<8xf32>
    %281 = vector.multi_reduction <maximumf>, %280, %cst_107 [1] : vector<8x8xf32> to vector<8xf32>
    %282 = vector.shape_cast %281 : vector<8xf32> to vector<8x1xf32>
    %283 = vector.broadcast %282 : vector<8x1xf32> to vector<8x8xf32>
    %284 = arith.subf %280, %283 : vector<8x8xf32>
    %285 = math.exp %284 : vector<8x8xf32>
    %cst_108 = arith.constant dense<0.000000e+00> : vector<8xf32>
    %286 = vector.multi_reduction <add>, %285, %cst_108 [1] : vector<8x8xf32> to vector<8xf32>
    %287 = vector.shape_cast %286 : vector<8xf32> to vector<8x1xf32>
    %288 = vector.broadcast %287 : vector<8x1xf32> to vector<8x8xf32>
    %289 = arith.divf %285, %288 : vector<8x8xf32>
    %cst_109 = arith.constant dense<0.000000e+00> : vector<8x16xf32>
    %290 = tpu.matmul %289, %275, %cst_109 {dimension_numbers = #tpu.dot_dimension_numbers<[1], [0], [0], [1], [0, 0, 1, 1], [], []>} : vector<8x8xf32>, vector<8x16xf32>, vector<8x16xf32> -> vector<8x16xf32>
    %c8_110 = arith.constant 8 : index
    %c0_111 = arith.constant 0 : index
    %291 = vector.load %arg13[%c8_110, %c0_111] : memref<16x32xf32, #tpu.memory_space<vmem>>, vector<8x16xf32>
    tpu.vector_store %arg13[%c8_110, %c0_111], %290 {strides = array<i32>} : memref<16x32xf32, #tpu.memory_space<vmem>>, vector<8x16xf32>,
    %292 = vector.extract_strided_slice %232 {offsets = [8, 16], sizes = [8, 16], strides = [1, 1]} : vector<16x96xf32> to vector<8x16xf32>
    %293 = vector.extract_strided_slice %232 {offsets = [8, 48], sizes = [8, 16], strides = [1, 1]} : vector<16x96xf32> to vector<8x16xf32>
    %294 = vector.extract_strided_slice %232 {offsets = [8, 80], sizes = [8, 16], strides = [1, 1]} : vector<16x96xf32> to vector<8x16xf32>
    %cst_112 = arith.constant dense<0.000000e+00> : vector<8x8xf32>
    %295 = tpu.matmul %292, %293, %cst_112 {dimension_numbers = #tpu.dot_dimension_numbers<[1], [1], [0], [0], [0, 0, 1, 0], [], []>} : vector<8x16xf32>, vector<8x16xf32>, vector<8x8xf32> -> vector<8x8xf32>
    %cst_113 = arith.constant 2.500000e-01 : f32
    %296 = vector.broadcast %cst_113 : f32 to vector<8x8xf32>
    %297 = arith.mulf %295, %296 : vector<8x8xf32>
    %298 = vector.broadcast %272 : vector<1x8xf32> to vector<8x8xf32>
    %299 = arith.addf %297, %298 : vector<8x8xf32>
    %cst_114 = arith.constant dense<0xFF800000> : vector<8xf32>
    %300 = vector.multi_reduction <maximumf>, %299, %cst_114 [1] : vector<8x8xf32> to vector<8xf32>
    %301 = vector.shape_cast %300 : vector<8xf32> to vector<8x1xf32>
    %302 = vector.broadcast %301 : vector<8x1xf32> to vector<8x8xf32>
    %303 = arith.subf %299, %302 : vector<8x8xf32>
    %304 = math.exp %303 : vector<8x8xf32>
    %cst_115 = arith.constant dense<0.000000e+00> : vector<8xf32>
    %305 = vector.multi_reduction <add>, %304, %cst_115 [1] : vector<8x8xf32> to vector<8xf32>
    %306 = vector.shape_cast %305 : vector<8xf32> to vector<8x1xf32>
    %307 = vector.broadcast %306 : vector<8x1xf32> to vector<8x8xf32>
    %308 = arith.divf %304, %307 : vector<8x8xf32>
    %cst_116 = arith.constant dense<0.000000e+00> : vector<8x16xf32>
    %309 = tpu.matmul %308, %294, %cst_116 {dimension_numbers = #tpu.dot_dimension_numbers<[1], [0], [0], [1], [0, 0, 1, 1], [], []>} : vector<8x8xf32>, vector<8x16xf32>, vector<8x16xf32> -> vector<8x16xf32>
    %c8_117 = arith.constant 8 : index
    %c16_118 = arith.constant 16 : index
    %310 = vector.load %arg13[%c8_117, %c16_118] : memref<16x32xf32, #tpu.memory_space<vmem>>, vector<8x16xf32>
    tpu.vector_store %arg13[%c8_117, %c16_118], %309 {strides = array<i32>} : memref<16x32xf32, #tpu.memory_space<vmem>>, vector<8x16xf32>,
    %c0_119 = arith.constant 0 : index
    %c0_120 = arith.constant 0 : index
    %311 = vector.load %arg13[%c0_119, %c0_120] : memref<16x32xf32, #tpu.memory_space<vmem>>, vector<16x32xf32>
    %c192 = arith.constant 192 : index
    %c0_121 = arith.constant 0 : index
    %312 = vector.load %arg7[%c192, %c0_121] : memref<352x96xf32, #tpu.memory_space<vmem>>, vector<32x32xf32>
    %cst_122 = arith.constant dense<0.000000e+00> : vector<16x32xf32>
    %313 = tpu.matmul %311, %312, %cst_122 {dimension_numbers = #tpu.dot_dimension_numbers<[1], [0], [0], [1], [0, 0, 1, 1], [], []>} : vector<16x32xf32>, vector<32x32xf32>, vector<16x32xf32> -> vector<16x32xf32>
    %c11 = arith.constant 11 : index
    %c0_123 = arith.constant 0 : index
    %314 = vector.load %arg8[%c11, %c0_123] : memref<19x96xf32, #tpu.memory_space<vmem>>, vector<1x32xf32>
    %315 = vector.broadcast %314 : vector<1x32xf32> to vector<16x32xf32>
    %316 = arith.addf %313, %315 : vector<16x32xf32>
    %317 = arith.addf %316, %219 : vector<16x32xf32>
    %c12 = arith.constant 12 : index
    %c0_124 = arith.constant 0 : index
    %318 = vector.load %arg8[%c12, %c0_124] : memref<19x96xf32, #tpu.memory_space<vmem>>, vector<1x32xf32>
    %c13 = arith.constant 13 : index
    %c0_125 = arith.constant 0 : index
    %319 = vector.load %arg8[%c13, %c0_125] : memref<19x96xf32, #tpu.memory_space<vmem>>, vector<1x32xf32>
    %cst_126 = arith.constant dense<0.000000e+00> : vector<16xf32>
    %320 = vector.multi_reduction <add>, %317, %cst_126 [1] : vector<16x32xf32> to vector<16xf32>
    %321 = vector.shape_cast %320 : vector<16xf32> to vector<16x1xf32>
    %cst_127 = arith.constant 3.200000e+01 : f32
    %322 = vector.broadcast %cst_127 : f32 to vector<16x1xf32>
    %323 = arith.divf %321, %322 : vector<16x1xf32>
    %324 = vector.broadcast %323 : vector<16x1xf32> to vector<16x32xf32>
    %325 = arith.subf %317, %324 : vector<16x32xf32>
    %326 = arith.mulf %325, %325 : vector<16x32xf32>
    %cst_128 = arith.constant dense<0.000000e+00> : vector<16xf32>
    %327 = vector.multi_reduction <add>, %326, %cst_128 [1] : vector<16x32xf32> to vector<16xf32>
    %328 = vector.shape_cast %327 : vector<16xf32> to vector<16x1xf32>
    %cst_129 = arith.constant 3.200000e+01 : f32
    %329 = vector.broadcast %cst_129 : f32 to vector<16x1xf32>
    %330 = arith.divf %328, %329 : vector<16x1xf32>
    %331 = vector.broadcast %323 : vector<16x1xf32> to vector<16x32xf32>
    %332 = arith.subf %317, %331 : vector<16x32xf32>
    %cst_130 = arith.constant 9.99999996E-13 : f32
    %333 = vector.broadcast %cst_130 : f32 to vector<16x1xf32>
    %334 = arith.addf %330, %333 : vector<16x1xf32>
    %335 = math.rsqrt %334 : vector<16x1xf32>
    %336 = vector.broadcast %335 : vector<16x1xf32> to vector<16x32xf32>
    %337 = arith.mulf %332, %336 : vector<16x32xf32>
    %338 = vector.broadcast %318 : vector<1x32xf32> to vector<16x32xf32>
    %339 = arith.mulf %337, %338 : vector<16x32xf32>
    %340 = vector.broadcast %319 : vector<1x32xf32> to vector<16x32xf32>
    %341 = arith.addf %339, %340 : vector<16x32xf32>
    %c224 = arith.constant 224 : index
    %c0_131 = arith.constant 0 : index
    %342 = vector.load %arg7[%c224, %c0_131] : memref<352x96xf32, #tpu.memory_space<vmem>>, vector<32x64xf32>
    %cst_132 = arith.constant dense<0.000000e+00> : vector<16x64xf32>
    %343 = tpu.matmul %341, %342, %cst_132 {dimension_numbers = #tpu.dot_dimension_numbers<[1], [0], [0], [1], [0, 0, 1, 1], [], []>} : vector<16x32xf32>, vector<32x64xf32>, vector<16x64xf32> -> vector<16x64xf32>
    %c14 = arith.constant 14 : index
    %c0_133 = arith.constant 0 : index
    %344 = vector.load %arg8[%c14, %c0_133] : memref<19x96xf32, #tpu.memory_space<vmem>>, vector<1x64xf32>
    %345 = vector.broadcast %344 : vector<1x64xf32> to vector<16x64xf32>
    %346 = arith.addf %343, %345 : vector<16x64xf32>
    %cst_134 = arith.constant 5.000000e-01 : f32
    %347 = vector.broadcast %cst_134 : f32 to vector<16x64xf32>
    %348 = arith.mulf %347, %346 : vector<16x64xf32>
    %cst_135 = arith.constant 0.707106769 : f32
    %349 = vector.broadcast %cst_135 : f32 to vector<16x64xf32>
    %350 = arith.mulf %346, %349 : vector<16x64xf32>
    %cst_136 = arith.constant 0.000000e+00 : f32
    %351 = vector.broadcast %cst_136 : f32 to vector<16x64xf32>
    %352 = arith.cmpf oge, %350, %351 : vector<16x64xf32>
    %cst_137 = arith.constant 1.000000e+00 : f32
    %cst_138 = arith.constant -1.000000e+00 : f32
    %353 = vector.broadcast %cst_137 : f32 to vector<16x64xf32>
    %354 = vector.broadcast %cst_138 : f32 to vector<16x64xf32>
    %355 = arith.select %352, %353, %354 : vector<16x64xi1>, vector<16x64xf32>
    %356 = math.absf %350 : vector<16x64xf32>
    %cst_139 = arith.constant 0.327591091 : f32
    %357 = vector.broadcast %cst_139 : f32 to vector<16x64xf32>
    %358 = arith.mulf %357, %356 : vector<16x64xf32>
    %cst_140 = arith.constant 1.000000e+00 : f32
    %359 = vector.broadcast %cst_140 : f32 to vector<16x64xf32>
    %360 = arith.addf %359, %358 : vector<16x64xf32>
    %cst_141 = arith.constant 1.000000e+00 : f32
    %361 = vector.broadcast %cst_141 : f32 to vector<16x64xf32>
    %362 = arith.divf %361, %360 : vector<16x64xf32>
    %cst_142 = arith.constant 1.06140542 : f32
    %363 = vector.broadcast %cst_142 : f32 to vector<16x64xf32>
    %364 = arith.mulf %363, %362 : vector<16x64xf32>
    %cst_143 = arith.constant -1.45315206 : f32
    %365 = vector.broadcast %cst_143 : f32 to vector<16x64xf32>
    %366 = arith.addf %364, %365 : vector<16x64xf32>
    %367 = arith.mulf %366, %362 : vector<16x64xf32>
    %cst_144 = arith.constant 1.42141378 : f32
    %368 = vector.broadcast %cst_144 : f32 to vector<16x64xf32>
    %369 = arith.addf %367, %368 : vector<16x64xf32>
    %370 = arith.mulf %369, %362 : vector<16x64xf32>
    %cst_145 = arith.constant -0.284496725 : f32
    %371 = vector.broadcast %cst_145 : f32 to vector<16x64xf32>
    %372 = arith.addf %370, %371 : vector<16x64xf32>
    %373 = arith.mulf %372, %362 : vector<16x64xf32>
    %cst_146 = arith.constant 0.254829586 : f32
    %374 = vector.broadcast %cst_146 : f32 to vector<16x64xf32>
    %375 = arith.addf %373, %374 : vector<16x64xf32>
    %376 = arith.mulf %375, %362 : vector<16x64xf32>
    %cst_147 = arith.constant 0.000000e+00 : f32
    %377 = vector.broadcast %cst_147 : f32 to vector<16x64xf32>
    %378 = arith.subf %377, %356 : vector<16x64xf32>
    %379 = arith.mulf %378, %356 : vector<16x64xf32>
    %380 = math.exp %379 : vector<16x64xf32>
    %381 = arith.mulf %376, %380 : vector<16x64xf32>
    %cst_148 = arith.constant 1.000000e+00 : f32
    %382 = vector.broadcast %cst_148 : f32 to vector<16x64xf32>
    %383 = arith.subf %382, %381 : vector<16x64xf32>
    %384 = arith.mulf %355, %383 : vector<16x64xf32>
    %cst_149 = arith.constant 1.000000e+00 : f32
    %385 = vector.broadcast %cst_149 : f32 to vector<16x64xf32>
    %386 = arith.addf %385, %384 : vector<16x64xf32>
    %387 = arith.mulf %348, %386 : vector<16x64xf32>
    %c256 = arith.constant 256 : index
    %c0_150 = arith.constant 0 : index
    %388 = vector.load %arg7[%c256, %c0_150] : memref<352x96xf32, #tpu.memory_space<vmem>>, vector<64x32xf32>
    %cst_151 = arith.constant dense<0.000000e+00> : vector<16x32xf32>
    %389 = tpu.matmul %387, %388, %cst_151 {dimension_numbers = #tpu.dot_dimension_numbers<[1], [0], [0], [1], [0, 0, 1, 1], [], []>} : vector<16x64xf32>, vector<64x32xf32>, vector<16x32xf32> -> vector<16x32xf32>
    %c15 = arith.constant 15 : index
    %c0_152 = arith.constant 0 : index
    %390 = vector.load %arg8[%c15, %c0_152] : memref<19x96xf32, #tpu.memory_space<vmem>>, vector<1x32xf32>
    %391 = vector.broadcast %390 : vector<1x32xf32> to vector<16x32xf32>
    %392 = arith.addf %389, %391 : vector<16x32xf32>
    %393 = arith.addf %392, %341 : vector<16x32xf32>
    %c16_153 = arith.constant 16 : index
    %c0_154 = arith.constant 0 : index
    %394 = vector.load %arg8[%c16_153, %c0_154] : memref<19x96xf32, #tpu.memory_space<vmem>>, vector<1x32xf32>
    %c17 = arith.constant 17 : index
    %c0_155 = arith.constant 0 : index
    %395 = vector.load %arg8[%c17, %c0_155] : memref<19x96xf32, #tpu.memory_space<vmem>>, vector<1x32xf32>
    %cst_156 = arith.constant dense<0.000000e+00> : vector<16xf32>
    %396 = vector.multi_reduction <add>, %393, %cst_156 [1] : vector<16x32xf32> to vector<16xf32>
    %397 = vector.shape_cast %396 : vector<16xf32> to vector<16x1xf32>
    %cst_157 = arith.constant 3.200000e+01 : f32
    %398 = vector.broadcast %cst_157 : f32 to vector<16x1xf32>
    %399 = arith.divf %397, %398 : vector<16x1xf32>
    %400 = vector.broadcast %399 : vector<16x1xf32> to vector<16x32xf32>
    %401 = arith.subf %393, %400 : vector<16x32xf32>
    %402 = arith.mulf %401, %401 : vector<16x32xf32>
    %cst_158 = arith.constant dense<0.000000e+00> : vector<16xf32>
    %403 = vector.multi_reduction <add>, %402, %cst_158 [1] : vector<16x32xf32> to vector<16xf32>
    %404 = vector.shape_cast %403 : vector<16xf32> to vector<16x1xf32>
    %cst_159 = arith.constant 3.200000e+01 : f32
    %405 = vector.broadcast %cst_159 : f32 to vector<16x1xf32>
    %406 = arith.divf %404, %405 : vector<16x1xf32>
    %407 = vector.broadcast %399 : vector<16x1xf32> to vector<16x32xf32>
    %408 = arith.subf %393, %407 : vector<16x32xf32>
    %cst_160 = arith.constant 9.99999996E-13 : f32
    %409 = vector.broadcast %cst_160 : f32 to vector<16x1xf32>
    %410 = arith.addf %406, %409 : vector<16x1xf32>
    %411 = math.rsqrt %410 : vector<16x1xf32>
    %412 = vector.broadcast %411 : vector<16x1xf32> to vector<16x32xf32>
    %413 = arith.mulf %408, %412 : vector<16x32xf32>
    %414 = vector.broadcast %394 : vector<1x32xf32> to vector<16x32xf32>
    %415 = arith.mulf %413, %414 : vector<16x32xf32>
    %416 = vector.broadcast %395 : vector<1x32xf32> to vector<16x32xf32>
    %417 = arith.addf %415, %416 : vector<16x32xf32>
    %c0_161 = arith.constant 0 : index
    %c0_162 = arith.constant 0 : index
    %418 = vector.load %arg3[%c0_161, %c0_162] : memref<16x1xf32, #tpu.memory_space<vmem>>, vector<16x1xf32>
    %419 = tpu.iota {dimensions = array<i32: 1>} : vector<8x128xi32>
    %420 = arith.sitofp %419 : vector<8x128xi32> to vector<8x128xf32>
    %421 = tpu.iota {dimensions = array<i32: 1>} : vector<3x128xi32>
    %422 = vector.extract_strided_slice %417 {offsets = [0, 0], sizes = [8, 32], strides = [1, 1]} : vector<16x32xf32> to vector<8x32xf32>
    %423 = tpu.transpose %422, [1, 0] : vector<8x32xf32> -> vector<32x8xf32>
    %424 = vector.extract_strided_slice %418 {offsets = [0, 0], sizes = [8, 1], strides = [1, 1]} : vector<16x1xf32> to vector<8x1xf32>
    %425 = vector.broadcast %424 : vector<8x1xf32> to vector<8x128xf32>
    %426 = arith.cmpf oeq, %425, %420 : vector<8x128xf32>
    %427 = arith.extui %426 : vector<8x128xi1> to vector<8x128xi32>
    %428 = arith.sitofp %427 : vector<8x128xi32> to vector<8x128xf32>
    %429 = vector.extract_strided_slice %0 {offsets = [0, 0], sizes = [1, 8], strides = [1, 1]} : vector<2x8xf32> to vector<1x8xf32>
    %cst_163 = arith.constant 1.000000e+00 : f32
    %430 = vector.broadcast %cst_163 : f32 to vector<1x8xf32>
    %431 = arith.cmpf oeq, %429, %430 : vector<1x8xf32>
    %432 = vector.extract_strided_slice %417 {offsets = [8, 0], sizes = [8, 32], strides = [1, 1]} : vector<16x32xf32> to vector<8x32xf32>
    %433 = tpu.transpose %432, [1, 0] : vector<8x32xf32> -> vector<32x8xf32>
    %434 = vector.extract_strided_slice %418 {offsets = [8, 0], sizes = [8, 1], strides = [1, 1]} : vector<16x1xf32> to vector<8x1xf32>
    %435 = vector.broadcast %434 : vector<8x1xf32> to vector<8x128xf32>
    %436 = arith.cmpf oeq, %435, %420 : vector<8x128xf32>
    %437 = arith.extui %436 : vector<8x128xi1> to vector<8x128xi32>
    %438 = arith.sitofp %437 : vector<8x128xi32> to vector<8x128xf32>
    %439 = vector.extract_strided_slice %0 {offsets = [1, 0], sizes = [1, 8], strides = [1, 1]} : vector<2x8xf32> to vector<1x8xf32>
    %cst_164 = arith.constant 1.000000e+00 : f32
    %440 = vector.broadcast %cst_164 : f32 to vector<1x8xf32>
    %441 = arith.cmpf oeq, %439, %440 : vector<1x8xf32>
    %c2_165 = arith.constant 2 : index
    %c0_166 = arith.constant 0 : index
    %442 = vector.load %arg10[%c2_165, %c0_166] : memref<4x96xf32, #tpu.memory_space<vmem>>, vector<1x32xf32>
    %c2_167 = arith.constant 2 : index
    %c32_168 = arith.constant 32 : index
    %443 = vector.load %arg10[%c2_167, %c32_168] : memref<4x96xf32, #tpu.memory_space<vmem>>, vector<1x32xf32>
    %c2_169 = arith.constant 2 : index
    %c64_170 = arith.constant 64 : index
    %444 = vector.load %arg10[%c2_169, %c64_170] : memref<4x96xf32, #tpu.memory_space<vmem>>, vector<1x32xf32>
    %c3_171 = arith.constant 3 : index
    %c0_172 = arith.constant 0 : index
    %445 = vector.load %arg10[%c3_171, %c0_172] : memref<4x96xf32, #tpu.memory_space<vmem>>, vector<1x1xf32>
    %c3_173 = arith.constant 3 : index
    %c1_174 = arith.constant 1 : index
    %446 = vector.load %arg10[%c3_173, %c1_174] : memref<4x96xf32, #tpu.memory_space<vmem>>, vector<1x3xf32>
    %c0_175 = arith.constant 0 : index
    %c0_176 = arith.constant 0 : index
    %447 = vector.load %arg4[%c0_175, %c0_176] : memref<6x32xf32, #tpu.memory_space<vmem>>, vector<6x32xf32>
    %448 = vector.shape_cast %224 : vector<1x32xf32> to vector<1x32xf32>
    %449 = vector.broadcast %448 : vector<1x32xf32> to vector<3x32xf32>
    %450 = vector.shape_cast %227 : vector<1x32xf32> to vector<1x32xf32>
    %451 = vector.broadcast %450 : vector<1x32xf32> to vector<3x32xf32>
    %452 = tpu.concatenate %449, %451 in 0 : vector<3x32xf32>, vector<3x32xf32> -> vector<6x32xf32>
    %c0_177 = arith.constant 0 : index
    %c0_178 = arith.constant 0 : index
    %453 = vector.load %arg9[%c0_177, %c0_178] : memref<96x96xf32, #tpu.memory_space<vmem>>, vector<32x96xf32>
    %cst_179 = arith.constant dense<0.000000e+00> : vector<6x96xf32>
    %454 = tpu.matmul %447, %453, %cst_179 {dimension_numbers = #tpu.dot_dimension_numbers<[1], [0], [0], [1], [0, 0, 1, 1], [], []>} : vector<6x32xf32>, vector<32x96xf32>, vector<6x96xf32> -> vector<6x96xf32>
    %c0_180 = arith.constant 0 : index
    %c0_181 = arith.constant 0 : index
    %455 = vector.load %arg10[%c0_180, %c0_181] : memref<4x96xf32, #tpu.memory_space<vmem>>, vector<1x96xf32>
    %456 = vector.broadcast %455 : vector<1x96xf32> to vector<6x96xf32>
    %457 = arith.addf %454, %456 : vector<6x96xf32>
    %c32_182 = arith.constant 32 : index
    %c0_183 = arith.constant 0 : index
    %458 = vector.load %arg9[%c32_182, %c0_183] : memref<96x96xf32, #tpu.memory_space<vmem>>, vector<32x96xf32>
    %cst_184 = arith.constant dense<0.000000e+00> : vector<6x96xf32>
    %459 = tpu.matmul %452, %458, %cst_184 {dimension_numbers = #tpu.dot_dimension_numbers<[1], [0], [0], [1], [0, 0, 1, 1], [], []>} : vector<6x32xf32>, vector<32x96xf32>, vector<6x96xf32> -> vector<6x96xf32>
    %c1_185 = arith.constant 1 : index
    %c0_186 = arith.constant 0 : index
    %460 = vector.load %arg10[%c1_185, %c0_186] : memref<4x96xf32, #tpu.memory_space<vmem>>, vector<1x96xf32>
    %461 = vector.broadcast %460 : vector<1x96xf32> to vector<6x96xf32>
    %462 = arith.addf %459, %461 : vector<6x96xf32>
    %463 = vector.extract_strided_slice %457 {offsets = [0, 0], sizes = [6, 32], strides = [1, 1]} : vector<6x96xf32> to vector<6x32xf32>
    %464 = vector.extract_strided_slice %462 {offsets = [0, 0], sizes = [6, 32], strides = [1, 1]} : vector<6x96xf32> to vector<6x32xf32>
    %465 = arith.addf %463, %464 : vector<6x32xf32>
    %466 = arith.negf %465 : vector<6x32xf32>
    %467 = math.exp %466 : vector<6x32xf32>
    %cst_187 = arith.constant 1.000000e+00 : f32
    %468 = vector.broadcast %cst_187 : f32 to vector<6x32xf32>
    %469 = arith.addf %468, %467 : vector<6x32xf32>
    %470 = arith.divf %468, %469 : vector<6x32xf32>
    %471 = vector.extract_strided_slice %457 {offsets = [0, 32], sizes = [6, 32], strides = [1, 1]} : vector<6x96xf32> to vector<6x32xf32>
    %472 = vector.extract_strided_slice %462 {offsets = [0, 32], sizes = [6, 32], strides = [1, 1]} : vector<6x96xf32> to vector<6x32xf32>
    %473 = arith.addf %471, %472 : vector<6x32xf32>
    %474 = arith.negf %473 : vector<6x32xf32>
    %475 = math.exp %474 : vector<6x32xf32>
    %cst_188 = arith.constant 1.000000e+00 : f32
    %476 = vector.broadcast %cst_188 : f32 to vector<6x32xf32>
    %477 = arith.addf %476, %475 : vector<6x32xf32>
    %478 = arith.divf %476, %477 : vector<6x32xf32>
    %479 = vector.extract_strided_slice %457 {offsets = [0, 64], sizes = [6, 32], strides = [1, 1]} : vector<6x96xf32> to vector<6x32xf32>
    %480 = vector.extract_strided_slice %462 {offsets = [0, 64], sizes = [6, 32], strides = [1, 1]} : vector<6x96xf32> to vector<6x32xf32>
    %481 = arith.mulf %470, %480 : vector<6x32xf32>
    %482 = arith.addf %479, %481 : vector<6x32xf32>
    %483 = math.tanh %482 : vector<6x32xf32>
    %cst_189 = arith.constant 1.000000e+00 : f32
    %484 = vector.broadcast %cst_189 : f32 to vector<6x32xf32>
    %485 = arith.subf %484, %478 : vector<6x32xf32>
    %486 = arith.mulf %485, %483 : vector<6x32xf32>
    %487 = arith.mulf %478, %452 : vector<6x32xf32>
    %488 = arith.addf %486, %487 : vector<6x32xf32>
    %c0_190 = arith.constant 0 : index
    %c0_191 = arith.constant 0 : index
    %489 = vector.load %arg6[%c0_190, %c0_191] : memref<32x128xf32, #tpu.memory_space<vmem>>, vector<32x128xf32>
    %cst_192 = arith.constant dense<0.000000e+00> : vector<6x128xf32>
    %490 = tpu.matmul %488, %489, %cst_192 {dimension_numbers = #tpu.dot_dimension_numbers<[1], [0], [0], [1], [0, 0, 1, 1], [], []>} : vector<6x32xf32>, vector<32x128xf32>, vector<6x128xf32> -> vector<6x128xf32>
    %cst_193 = arith.constant dense<0xFF800000> : vector<6xf32>
    %491 = vector.multi_reduction <maximumf>, %490, %cst_193 [1] : vector<6x128xf32> to vector<6xf32>
    %492 = vector.shape_cast %491 : vector<6xf32> to vector<6x1xf32>
    %493 = vector.broadcast %492 : vector<6x1xf32> to vector<6x128xf32>
    %494 = arith.subf %490, %493 : vector<6x128xf32>
    %495 = math.exp %494 : vector<6x128xf32>
    %cst_194 = arith.constant dense<0.000000e+00> : vector<6xf32>
    %496 = vector.multi_reduction <add>, %495, %cst_194 [1] : vector<6x128xf32> to vector<6xf32>
    %497 = vector.shape_cast %496 : vector<6xf32> to vector<6x1xf32>
    %498 = vector.broadcast %497 : vector<6x1xf32> to vector<6x128xf32>
    %499 = arith.divf %495, %498 : vector<6x128xf32>
    %500 = vector.broadcast %442 : vector<1x32xf32> to vector<6x32xf32>
    %501 = arith.mulf %447, %500 : vector<6x32xf32>
    %cst_195 = arith.constant dense<0.000000e+00> : vector<6xf32>
    %502 = vector.multi_reduction <add>, %501, %cst_195 [1] : vector<6x32xf32> to vector<6xf32>
    %503 = vector.shape_cast %502 : vector<6xf32> to vector<6x1xf32>
    %504 = vector.broadcast %443 : vector<1x32xf32> to vector<6x32xf32>
    %505 = arith.mulf %488, %504 : vector<6x32xf32>
    %cst_196 = arith.constant dense<0.000000e+00> : vector<6xf32>
    %506 = vector.multi_reduction <add>, %505, %cst_196 [1] : vector<6x32xf32> to vector<6xf32>
    %507 = vector.shape_cast %506 : vector<6xf32> to vector<6x1xf32>
    %508 = arith.addf %503, %507 : vector<6x1xf32>
    %509 = vector.broadcast %445 : vector<1x1xf32> to vector<6x1xf32>
    %510 = arith.addf %508, %509 : vector<6x1xf32>
    %511 = vector.extract_strided_slice %488 {offsets = [0, 0], sizes = [3, 32], strides = [1, 1]} : vector<6x32xf32> to vector<3x32xf32>
    %cst_197 = arith.constant dense<0.000000e+00> : vector<3x8xf32>
    %512 = tpu.matmul %511, %423, %cst_197 {dimension_numbers = #tpu.dot_dimension_numbers<[1], [0], [0], [1], [0, 0, 1, 1], [], []>} : vector<3x32xf32>, vector<32x8xf32>, vector<3x8xf32> -> vector<3x8xf32>
    %cst_198 = arith.constant -1.000000e+04 : f32
    %513 = vector.shape_cast %431 : vector<1x8xi1> to vector<1x8xi1>
    %514 = vector.broadcast %513 : vector<1x8xi1> to vector<3x8xi1>
    %515 = vector.broadcast %cst_198 : f32 to vector<3x8xf32>
    %516 = arith.select %514, %512, %515 : vector<3x8xi1>, vector<3x8xf32>
    %cst_199 = arith.constant dense<0xFF800000> : vector<3xf32>
    %517 = vector.multi_reduction <maximumf>, %516, %cst_199 [1] : vector<3x8xf32> to vector<3xf32>
    %518 = vector.shape_cast %517 : vector<3xf32> to vector<3x1xf32>
    %519 = vector.broadcast %518 : vector<3x1xf32> to vector<3x8xf32>
    %520 = arith.subf %516, %519 : vector<3x8xf32>
    %521 = math.exp %520 : vector<3x8xf32>
    %cst_200 = arith.constant dense<0.000000e+00> : vector<3xf32>
    %522 = vector.multi_reduction <add>, %521, %cst_200 [1] : vector<3x8xf32> to vector<3xf32>
    %523 = vector.shape_cast %522 : vector<3xf32> to vector<3x1xf32>
    %524 = vector.broadcast %523 : vector<3x1xf32> to vector<3x8xf32>
    %525 = arith.divf %521, %524 : vector<3x8xf32>
    %cst_201 = arith.constant dense<0.000000e+00> : vector<3x32xf32>
    %526 = tpu.matmul %525, %422, %cst_201 {dimension_numbers = #tpu.dot_dimension_numbers<[1], [0], [0], [1], [0, 0, 1, 1], [], []>} : vector<3x8xf32>, vector<8x32xf32>, vector<3x32xf32> -> vector<3x32xf32>
    %527 = vector.shape_cast %525 : vector<3x8xf32> to vector<3x8x1xf32>
    %528 = vector.shape_cast %428 : vector<8x128xf32> to vector<1x8x128xf32>
    %529 = vector.broadcast %527 : vector<3x8x1xf32> to vector<3x8x128xf32>
    %530 = vector.broadcast %528 : vector<1x8x128xf32> to vector<3x8x128xf32>
    %531 = arith.mulf %529, %530 : vector<3x8x128xf32>
    %cst_202 = arith.constant dense<0.000000e+00> : vector<3x128xf32>
    %532 = vector.multi_reduction <add>, %531, %cst_202 [1] : vector<3x8x128xf32> to vector<3x128xf32>
    %533 = vector.extract_strided_slice %510 {offsets = [0, 0], sizes = [3, 1], strides = [1, 1]} : vector<6x1xf32> to vector<3x1xf32>
    %534 = vector.broadcast %444 : vector<1x32xf32> to vector<3x32xf32>
    %535 = arith.mulf %526, %534 : vector<3x32xf32>
    %cst_203 = arith.constant dense<0.000000e+00> : vector<3xf32>
    %536 = vector.multi_reduction <add>, %535, %cst_203 [1] : vector<3x32xf32> to vector<3xf32>
    %537 = vector.shape_cast %536 : vector<3xf32> to vector<3x1xf32>
    %538 = arith.addf %533, %537 : vector<3x1xf32>
    %539 = arith.negf %538 : vector<3x1xf32>
    %540 = math.exp %539 : vector<3x1xf32>
    %cst_204 = arith.constant 1.000000e+00 : f32
    %541 = vector.broadcast %cst_204 : f32 to vector<3x1xf32>
    %542 = arith.addf %541, %540 : vector<3x1xf32>
    %543 = arith.divf %541, %542 : vector<3x1xf32>
    %544 = vector.extract_strided_slice %499 {offsets = [0, 0], sizes = [3, 128], strides = [1, 1]} : vector<6x128xf32> to vector<3x128xf32>
    %545 = vector.broadcast %543 : vector<3x1xf32> to vector<3x128xf32>
    %546 = arith.mulf %545, %544 : vector<3x128xf32>
    %cst_205 = arith.constant 1.000000e+00 : f32
    %547 = vector.broadcast %cst_205 : f32 to vector<3x1xf32>
    %548 = arith.subf %547, %543 : vector<3x1xf32>
    %549 = vector.broadcast %548 : vector<3x1xf32> to vector<3x128xf32>
    %550 = arith.mulf %549, %532 : vector<3x128xf32>
    %551 = arith.addf %546, %550 : vector<3x128xf32>
    %c0_206 = arith.constant 0 : index
    %c0_207 = arith.constant 0 : index
    %c0_208 = arith.constant 0 : index
    %c0_209 = arith.constant 0 : index
    %552 = vector.load %arg11[%c0_206, %c0_207, %c0_208, %c0_209] : memref<2x3x4x128xf32, #tpu.memory_space<vmem>>, vector<1x3x1x128xf32>
    %553 = vector.shape_cast %552 : vector<1x3x1x128xf32> to vector<3x128xf32>
    %554 = vector.shape_cast %551 : vector<3x128xf32> to vector<1x3x1x128xf32>
    tpu.vector_store %arg11[%c0_206, %c0_207, %c0_208, %c0_209], %554 {strides = array<i32>} : memref<2x3x4x128xf32, #tpu.memory_space<vmem>>, vector<1x3x1x128xf32>,
    %c64_210 = arith.constant 64 : index
    %c0_211 = arith.constant 0 : index
    %555 = vector.load %arg9[%c64_210, %c0_211] : memref<96x96xf32, #tpu.memory_space<vmem>>, vector<32x3xf32>
    %cst_212 = arith.constant dense<0.000000e+00> : vector<3x3xf32>
    %556 = tpu.matmul %526, %555, %cst_212 {dimension_numbers = #tpu.dot_dimension_numbers<[1], [0], [0], [1], [0, 0, 1, 1], [], []>} : vector<3x32xf32>, vector<32x3xf32>, vector<3x3xf32> -> vector<3x3xf32>
    %557 = vector.broadcast %446 : vector<1x3xf32> to vector<3x3xf32>
    %558 = arith.addf %556, %557 : vector<3x3xf32>
    %c0_213 = arith.constant 0 : index
    %c0_214 = arith.constant 0 : index
    %c0_215 = arith.constant 0 : index
    %559 = vector.load %arg12[%c0_213, %c0_214, %c0_215] : memref<2x3x3xf32, #tpu.memory_space<vmem>>, vector<1x3x3xf32>
    %560 = vector.shape_cast %559 : vector<1x3x3xf32> to vector<3x3xf32>
    %561 = vector.shape_cast %558 : vector<3x3xf32> to vector<1x3x3xf32>
    tpu.vector_store %arg12[%c0_213, %c0_214, %c0_215], %561 {strides = array<i32>} : memref<2x3x3xf32, #tpu.memory_space<vmem>>, vector<1x3x3xf32>,
    %cst_216 = arith.constant dense<0xFF800000> : vector<3xf32>
    %562 = vector.multi_reduction <maximumf>, %551, %cst_216 [1] : vector<3x128xf32> to vector<3xf32>
    %563 = vector.shape_cast %562 : vector<3xf32> to vector<3x1xf32>
    %564 = vector.broadcast %563 : vector<3x1xf32> to vector<3x128xf32>
    %565 = arith.cmpf oeq, %551, %564 : vector<3x128xf32>
    %c128_i32 = arith.constant 128 : i32
    %566 = vector.broadcast %c128_i32 : i32 to vector<3x128xi32>
    %567 = arith.select %565, %421, %566 : vector<3x128xi1>, vector<3x128xi32>
    %cst_217 = arith.constant dense<2147483647> : vector<3xi32>
    %568 = vector.multi_reduction <minsi>, %567, %cst_217 [1] : vector<3x128xi32> to vector<3xi32>
    %569 = vector.shape_cast %568 : vector<3xi32> to vector<3x1xi32>
    %570 = vector.broadcast %569 : vector<3x1xi32> to vector<3x128xi32>
    %571 = arith.cmpi eq, %421, %570 : vector<3x128xi32>
    %572 = arith.extui %571 : vector<3x128xi1> to vector<3x128xi32>
    %573 = arith.sitofp %572 : vector<3x128xi32> to vector<3x128xf32>
    %574 = vector.extract_strided_slice %488 {offsets = [3, 0], sizes = [3, 32], strides = [1, 1]} : vector<6x32xf32> to vector<3x32xf32>
    %cst_218 = arith.constant dense<0.000000e+00> : vector<3x8xf32>
    %575 = tpu.matmul %574, %433, %cst_218 {dimension_numbers = #tpu.dot_dimension_numbers<[1], [0], [0], [1], [0, 0, 1, 1], [], []>} : vector<3x32xf32>, vector<32x8xf32>, vector<3x8xf32> -> vector<3x8xf32>
    %cst_219 = arith.constant -1.000000e+04 : f32
    %576 = vector.shape_cast %441 : vector<1x8xi1> to vector<1x8xi1>
    %577 = vector.broadcast %576 : vector<1x8xi1> to vector<3x8xi1>
    %578 = vector.broadcast %cst_219 : f32 to vector<3x8xf32>
    %579 = arith.select %577, %575, %578 : vector<3x8xi1>, vector<3x8xf32>
    %cst_220 = arith.constant dense<0xFF800000> : vector<3xf32>
    %580 = vector.multi_reduction <maximumf>, %579, %cst_220 [1] : vector<3x8xf32> to vector<3xf32>
    %581 = vector.shape_cast %580 : vector<3xf32> to vector<3x1xf32>
    %582 = vector.broadcast %581 : vector<3x1xf32> to vector<3x8xf32>
    %583 = arith.subf %579, %582 : vector<3x8xf32>
    %584 = math.exp %583 : vector<3x8xf32>
    %cst_221 = arith.constant dense<0.000000e+00> : vector<3xf32>
    %585 = vector.multi_reduction <add>, %584, %cst_221 [1] : vector<3x8xf32> to vector<3xf32>
    %586 = vector.shape_cast %585 : vector<3xf32> to vector<3x1xf32>
    %587 = vector.broadcast %586 : vector<3x1xf32> to vector<3x8xf32>
    %588 = arith.divf %584, %587 : vector<3x8xf32>
    %cst_222 = arith.constant dense<0.000000e+00> : vector<3x32xf32>
    %589 = tpu.matmul %588, %432, %cst_222 {dimension_numbers = #tpu.dot_dimension_numbers<[1], [0], [0], [1], [0, 0, 1, 1], [], []>} : vector<3x8xf32>, vector<8x32xf32>, vector<3x32xf32> -> vector<3x32xf32>
    %590 = vector.shape_cast %588 : vector<3x8xf32> to vector<3x8x1xf32>
    %591 = vector.shape_cast %438 : vector<8x128xf32> to vector<1x8x128xf32>
    %592 = vector.broadcast %590 : vector<3x8x1xf32> to vector<3x8x128xf32>
    %593 = vector.broadcast %591 : vector<1x8x128xf32> to vector<3x8x128xf32>
    %594 = arith.mulf %592, %593 : vector<3x8x128xf32>
    %cst_223 = arith.constant dense<0.000000e+00> : vector<3x128xf32>
    %595 = vector.multi_reduction <add>, %594, %cst_223 [1] : vector<3x8x128xf32> to vector<3x128xf32>
    %596 = vector.extract_strided_slice %510 {offsets = [3, 0], sizes = [3, 1], strides = [1, 1]} : vector<6x1xf32> to vector<3x1xf32>
    %597 = vector.broadcast %444 : vector<1x32xf32> to vector<3x32xf32>
    %598 = arith.mulf %589, %597 : vector<3x32xf32>
    %cst_224 = arith.constant dense<0.000000e+00> : vector<3xf32>
    %599 = vector.multi_reduction <add>, %598, %cst_224 [1] : vector<3x32xf32> to vector<3xf32>
    %600 = vector.shape_cast %599 : vector<3xf32> to vector<3x1xf32>
    %601 = arith.addf %596, %600 : vector<3x1xf32>
    %602 = arith.negf %601 : vector<3x1xf32>
    %603 = math.exp %602 : vector<3x1xf32>
    %cst_225 = arith.constant 1.000000e+00 : f32
    %604 = vector.broadcast %cst_225 : f32 to vector<3x1xf32>
    %605 = arith.addf %604, %603 : vector<3x1xf32>
    %606 = arith.divf %604, %605 : vector<3x1xf32>
    %607 = vector.extract_strided_slice %499 {offsets = [3, 0], sizes = [3, 128], strides = [1, 1]} : vector<6x128xf32> to vector<3x128xf32>
    %608 = vector.broadcast %606 : vector<3x1xf32> to vector<3x128xf32>
    %609 = arith.mulf %608, %607 : vector<3x128xf32>
    %cst_226 = arith.constant 1.000000e+00 : f32
    %610 = vector.broadcast %cst_226 : f32 to vector<3x1xf32>
    %611 = arith.subf %610, %606 : vector<3x1xf32>
    %612 = vector.broadcast %611 : vector<3x1xf32> to vector<3x128xf32>
    %613 = arith.mulf %612, %595 : vector<3x128xf32>
    %614 = arith.addf %609, %613 : vector<3x128xf32>
    %c1_227 = arith.constant 1 : index
    %c0_228 = arith.constant 0 : index
    %c0_229 = arith.constant 0 : index
    %c0_230 = arith.constant 0 : index
    %615 = vector.load %arg11[%c1_227, %c0_228, %c0_229, %c0_230] : memref<2x3x4x128xf32, #tpu.memory_space<vmem>>, vector<1x3x1x128xf32>
    %616 = vector.shape_cast %615 : vector<1x3x1x128xf32> to vector<3x128xf32>
    %617 = vector.shape_cast %614 : vector<3x128xf32> to vector<1x3x1x128xf32>
    tpu.vector_store %arg11[%c1_227, %c0_228, %c0_229, %c0_230], %617 {strides = array<i32>} : memref<2x3x4x128xf32, #tpu.memory_space<vmem>>, vector<1x3x1x128xf32>,
    %c64_231 = arith.constant 64 : index
    %c0_232 = arith.constant 0 : index
    %618 = vector.load %arg9[%c64_231, %c0_232] : memref<96x96xf32, #tpu.memory_space<vmem>>, vector<32x3xf32>
    %cst_233 = arith.constant dense<0.000000e+00> : vector<3x3xf32>
    %619 = tpu.matmul %589, %618, %cst_233 {dimension_numbers = #tpu.dot_dimension_numbers<[1], [0], [0], [1], [0, 0, 1, 1], [], []>} : vector<3x32xf32>, vector<32x3xf32>, vector<3x3xf32> -> vector<3x3xf32>
    %620 = vector.broadcast %446 : vector<1x3xf32> to vector<3x3xf32>
    %621 = arith.addf %619, %620 : vector<3x3xf32>
    %c1_234 = arith.constant 1 : index
    %c0_235 = arith.constant 0 : index
    %c0_236 = arith.constant 0 : index
    %622 = vector.load %arg12[%c1_234, %c0_235, %c0_236] : memref<2x3x3xf32, #tpu.memory_space<vmem>>, vector<1x3x3xf32>
    %623 = vector.shape_cast %622 : vector<1x3x3xf32> to vector<3x3xf32>
    %624 = vector.shape_cast %621 : vector<3x3xf32> to vector<1x3x3xf32>
    tpu.vector_store %arg12[%c1_234, %c0_235, %c0_236], %624 {strides = array<i32>} : memref<2x3x3xf32, #tpu.memory_space<vmem>>, vector<1x3x3xf32>,
    %cst_237 = arith.constant dense<0xFF800000> : vector<3xf32>
    %625 = vector.multi_reduction <maximumf>, %614, %cst_237 [1] : vector<3x128xf32> to vector<3xf32>
    %626 = vector.shape_cast %625 : vector<3xf32> to vector<3x1xf32>
    %627 = vector.broadcast %626 : vector<3x1xf32> to vector<3x128xf32>
    %628 = arith.cmpf oeq, %614, %627 : vector<3x128xf32>
    %c128_i32_238 = arith.constant 128 : i32
    %629 = vector.broadcast %c128_i32_238 : i32 to vector<3x128xi32>
    %630 = arith.select %628, %421, %629 : vector<3x128xi1>, vector<3x128xi32>
    %cst_239 = arith.constant dense<2147483647> : vector<3xi32>
    %631 = vector.multi_reduction <minsi>, %630, %cst_239 [1] : vector<3x128xi32> to vector<3xi32>
    %632 = vector.shape_cast %631 : vector<3xi32> to vector<3x1xi32>
    %633 = vector.broadcast %632 : vector<3x1xi32> to vector<3x128xi32>
    %634 = arith.cmpi eq, %421, %633 : vector<3x128xi32>
    %635 = arith.extui %634 : vector<3x128xi1> to vector<3x128xi32>
    %636 = arith.sitofp %635 : vector<3x128xi32> to vector<3x128xf32>
    %637 = tpu.concatenate %573, %636 in 0 : vector<3x128xf32>, vector<3x128xf32> -> vector<6x128xf32>
    %c0_240 = arith.constant 0 : index
    %c0_241 = arith.constant 0 : index
    %638 = vector.load %arg5[%c0_240, %c0_241] : memref<128x32xf32, #tpu.memory_space<vmem>>, vector<128x32xf32>
    %cst_242 = arith.constant dense<0.000000e+00> : vector<6x32xf32>
    %639 = tpu.matmul %637, %638, %cst_242 {dimension_numbers = #tpu.dot_dimension_numbers<[1], [0], [0], [1], [0, 0, 1, 1], [], []>} : vector<6x128xf32>, vector<128x32xf32>, vector<6x32xf32> -> vector<6x32xf32>
    %c0_243 = arith.constant 0 : index
    %c0_244 = arith.constant 0 : index
    %640 = vector.load %arg9[%c0_243, %c0_244] : memref<96x96xf32, #tpu.memory_space<vmem>>, vector<32x96xf32>
    %cst_245 = arith.constant dense<0.000000e+00> : vector<6x96xf32>
    %641 = tpu.matmul %639, %640, %cst_245 {dimension_numbers = #tpu.dot_dimension_numbers<[1], [0], [0], [1], [0, 0, 1, 1], [], []>} : vector<6x32xf32>, vector<32x96xf32>, vector<6x96xf32> -> vector<6x96xf32>
    %c0_246 = arith.constant 0 : index
    %c0_247 = arith.constant 0 : index
    %642 = vector.load %arg10[%c0_246, %c0_247] : memref<4x96xf32, #tpu.memory_space<vmem>>, vector<1x96xf32>
    %643 = vector.broadcast %642 : vector<1x96xf32> to vector<6x96xf32>
    %644 = arith.addf %641, %643 : vector<6x96xf32>
    %c32_248 = arith.constant 32 : index
    %c0_249 = arith.constant 0 : index
    %645 = vector.load %arg9[%c32_248, %c0_249] : memref<96x96xf32, #tpu.memory_space<vmem>>, vector<32x96xf32>
    %cst_250 = arith.constant dense<0.000000e+00> : vector<6x96xf32>
    %646 = tpu.matmul %488, %645, %cst_250 {dimension_numbers = #tpu.dot_dimension_numbers<[1], [0], [0], [1], [0, 0, 1, 1], [], []>} : vector<6x32xf32>, vector<32x96xf32>, vector<6x96xf32> -> vector<6x96xf32>
    %c1_251 = arith.constant 1 : index
    %c0_252 = arith.constant 0 : index
    %647 = vector.load %arg10[%c1_251, %c0_252] : memref<4x96xf32, #tpu.memory_space<vmem>>, vector<1x96xf32>
    %648 = vector.broadcast %647 : vector<1x96xf32> to vector<6x96xf32>
    %649 = arith.addf %646, %648 : vector<6x96xf32>
    %650 = vector.extract_strided_slice %644 {offsets = [0, 0], sizes = [6, 32], strides = [1, 1]} : vector<6x96xf32> to vector<6x32xf32>
    %651 = vector.extract_strided_slice %649 {offsets = [0, 0], sizes = [6, 32], strides = [1, 1]} : vector<6x96xf32> to vector<6x32xf32>
    %652 = arith.addf %650, %651 : vector<6x32xf32>
    %653 = arith.negf %652 : vector<6x32xf32>
    %654 = math.exp %653 : vector<6x32xf32>
    %cst_253 = arith.constant 1.000000e+00 : f32
    %655 = vector.broadcast %cst_253 : f32 to vector<6x32xf32>
    %656 = arith.addf %655, %654 : vector<6x32xf32>
    %657 = arith.divf %655, %656 : vector<6x32xf32>
    %658 = vector.extract_strided_slice %644 {offsets = [0, 32], sizes = [6, 32], strides = [1, 1]} : vector<6x96xf32> to vector<6x32xf32>
    %659 = vector.extract_strided_slice %649 {offsets = [0, 32], sizes = [6, 32], strides = [1, 1]} : vector<6x96xf32> to vector<6x32xf32>
    %660 = arith.addf %658, %659 : vector<6x32xf32>
    %661 = arith.negf %660 : vector<6x32xf32>
    %662 = math.exp %661 : vector<6x32xf32>
    %cst_254 = arith.constant 1.000000e+00 : f32
    %663 = vector.broadcast %cst_254 : f32 to vector<6x32xf32>
    %664 = arith.addf %663, %662 : vector<6x32xf32>
    %665 = arith.divf %663, %664 : vector<6x32xf32>
    %666 = vector.extract_strided_slice %644 {offsets = [0, 64], sizes = [6, 32], strides = [1, 1]} : vector<6x96xf32> to vector<6x32xf32>
    %667 = vector.extract_strided_slice %649 {offsets = [0, 64], sizes = [6, 32], strides = [1, 1]} : vector<6x96xf32> to vector<6x32xf32>
    %668 = arith.mulf %657, %667 : vector<6x32xf32>
    %669 = arith.addf %666, %668 : vector<6x32xf32>
    %670 = math.tanh %669 : vector<6x32xf32>
    %cst_255 = arith.constant 1.000000e+00 : f32
    %671 = vector.broadcast %cst_255 : f32 to vector<6x32xf32>
    %672 = arith.subf %671, %665 : vector<6x32xf32>
    %673 = arith.mulf %672, %670 : vector<6x32xf32>
    %674 = arith.mulf %665, %488 : vector<6x32xf32>
    %675 = arith.addf %673, %674 : vector<6x32xf32>
    %c0_256 = arith.constant 0 : index
    %c0_257 = arith.constant 0 : index
    %676 = vector.load %arg6[%c0_256, %c0_257] : memref<32x128xf32, #tpu.memory_space<vmem>>, vector<32x128xf32>
    %cst_258 = arith.constant dense<0.000000e+00> : vector<6x128xf32>
    %677 = tpu.matmul %675, %676, %cst_258 {dimension_numbers = #tpu.dot_dimension_numbers<[1], [0], [0], [1], [0, 0, 1, 1], [], []>} : vector<6x32xf32>, vector<32x128xf32>, vector<6x128xf32> -> vector<6x128xf32>
    %cst_259 = arith.constant dense<0xFF800000> : vector<6xf32>
    %678 = vector.multi_reduction <maximumf>, %677, %cst_259 [1] : vector<6x128xf32> to vector<6xf32>
    %679 = vector.shape_cast %678 : vector<6xf32> to vector<6x1xf32>
    %680 = vector.broadcast %679 : vector<6x1xf32> to vector<6x128xf32>
    %681 = arith.subf %677, %680 : vector<6x128xf32>
    %682 = math.exp %681 : vector<6x128xf32>
    %cst_260 = arith.constant dense<0.000000e+00> : vector<6xf32>
    %683 = vector.multi_reduction <add>, %682, %cst_260 [1] : vector<6x128xf32> to vector<6xf32>
    %684 = vector.shape_cast %683 : vector<6xf32> to vector<6x1xf32>
    %685 = vector.broadcast %684 : vector<6x1xf32> to vector<6x128xf32>
    %686 = arith.divf %682, %685 : vector<6x128xf32>
    %687 = vector.broadcast %442 : vector<1x32xf32> to vector<6x32xf32>
    %688 = arith.mulf %639, %687 : vector<6x32xf32>
    %cst_261 = arith.constant dense<0.000000e+00> : vector<6xf32>
    %689 = vector.multi_reduction <add>, %688, %cst_261 [1] : vector<6x32xf32> to vector<6xf32>
    %690 = vector.shape_cast %689 : vector<6xf32> to vector<6x1xf32>
    %691 = vector.broadcast %443 : vector<1x32xf32> to vector<6x32xf32>
    %692 = arith.mulf %675, %691 : vector<6x32xf32>
    %cst_262 = arith.constant dense<0.000000e+00> : vector<6xf32>
    %693 = vector.multi_reduction <add>, %692, %cst_262 [1] : vector<6x32xf32> to vector<6xf32>
    %694 = vector.shape_cast %693 : vector<6xf32> to vector<6x1xf32>
    %695 = arith.addf %690, %694 : vector<6x1xf32>
    %696 = vector.broadcast %445 : vector<1x1xf32> to vector<6x1xf32>
    %697 = arith.addf %695, %696 : vector<6x1xf32>
    %698 = vector.extract_strided_slice %675 {offsets = [0, 0], sizes = [3, 32], strides = [1, 1]} : vector<6x32xf32> to vector<3x32xf32>
    %cst_263 = arith.constant dense<0.000000e+00> : vector<3x8xf32>
    %699 = tpu.matmul %698, %423, %cst_263 {dimension_numbers = #tpu.dot_dimension_numbers<[1], [0], [0], [1], [0, 0, 1, 1], [], []>} : vector<3x32xf32>, vector<32x8xf32>, vector<3x8xf32> -> vector<3x8xf32>
    %cst_264 = arith.constant -1.000000e+04 : f32
    %700 = vector.shape_cast %431 : vector<1x8xi1> to vector<1x8xi1>
    %701 = vector.broadcast %700 : vector<1x8xi1> to vector<3x8xi1>
    %702 = vector.broadcast %cst_264 : f32 to vector<3x8xf32>
    %703 = arith.select %701, %699, %702 : vector<3x8xi1>, vector<3x8xf32>
    %cst_265 = arith.constant dense<0xFF800000> : vector<3xf32>
    %704 = vector.multi_reduction <maximumf>, %703, %cst_265 [1] : vector<3x8xf32> to vector<3xf32>
    %705 = vector.shape_cast %704 : vector<3xf32> to vector<3x1xf32>
    %706 = vector.broadcast %705 : vector<3x1xf32> to vector<3x8xf32>
    %707 = arith.subf %703, %706 : vector<3x8xf32>
    %708 = math.exp %707 : vector<3x8xf32>
    %cst_266 = arith.constant dense<0.000000e+00> : vector<3xf32>
    %709 = vector.multi_reduction <add>, %708, %cst_266 [1] : vector<3x8xf32> to vector<3xf32>
    %710 = vector.shape_cast %709 : vector<3xf32> to vector<3x1xf32>
    %711 = vector.broadcast %710 : vector<3x1xf32> to vector<3x8xf32>
    %712 = arith.divf %708, %711 : vector<3x8xf32>
    %cst_267 = arith.constant dense<0.000000e+00> : vector<3x32xf32>
    %713 = tpu.matmul %712, %422, %cst_267 {dimension_numbers = #tpu.dot_dimension_numbers<[1], [0], [0], [1], [0, 0, 1, 1], [], []>} : vector<3x8xf32>, vector<8x32xf32>, vector<3x32xf32> -> vector<3x32xf32>
    %714 = vector.shape_cast %712 : vector<3x8xf32> to vector<3x8x1xf32>
    %715 = vector.shape_cast %428 : vector<8x128xf32> to vector<1x8x128xf32>
    %716 = vector.broadcast %714 : vector<3x8x1xf32> to vector<3x8x128xf32>
    %717 = vector.broadcast %715 : vector<1x8x128xf32> to vector<3x8x128xf32>
    %718 = arith.mulf %716, %717 : vector<3x8x128xf32>
    %cst_268 = arith.constant dense<0.000000e+00> : vector<3x128xf32>
    %719 = vector.multi_reduction <add>, %718, %cst_268 [1] : vector<3x8x128xf32> to vector<3x128xf32>
    %720 = vector.extract_strided_slice %697 {offsets = [0, 0], sizes = [3, 1], strides = [1, 1]} : vector<6x1xf32> to vector<3x1xf32>
    %721 = vector.broadcast %444 : vector<1x32xf32> to vector<3x32xf32>
    %722 = arith.mulf %713, %721 : vector<3x32xf32>
    %cst_269 = arith.constant dense<0.000000e+00> : vector<3xf32>
    %723 = vector.multi_reduction <add>, %722, %cst_269 [1] : vector<3x32xf32> to vector<3xf32>
    %724 = vector.shape_cast %723 : vector<3xf32> to vector<3x1xf32>
    %725 = arith.addf %720, %724 : vector<3x1xf32>
    %726 = arith.negf %725 : vector<3x1xf32>
    %727 = math.exp %726 : vector<3x1xf32>
    %cst_270 = arith.constant 1.000000e+00 : f32
    %728 = vector.broadcast %cst_270 : f32 to vector<3x1xf32>
    %729 = arith.addf %728, %727 : vector<3x1xf32>
    %730 = arith.divf %728, %729 : vector<3x1xf32>
    %731 = vector.extract_strided_slice %686 {offsets = [0, 0], sizes = [3, 128], strides = [1, 1]} : vector<6x128xf32> to vector<3x128xf32>
    %732 = vector.broadcast %730 : vector<3x1xf32> to vector<3x128xf32>
    %733 = arith.mulf %732, %731 : vector<3x128xf32>
    %cst_271 = arith.constant 1.000000e+00 : f32
    %734 = vector.broadcast %cst_271 : f32 to vector<3x1xf32>
    %735 = arith.subf %734, %730 : vector<3x1xf32>
    %736 = vector.broadcast %735 : vector<3x1xf32> to vector<3x128xf32>
    %737 = arith.mulf %736, %719 : vector<3x128xf32>
    %738 = arith.addf %733, %737 : vector<3x128xf32>
    %c0_272 = arith.constant 0 : index
    %c0_273 = arith.constant 0 : index
    %c1_274 = arith.constant 1 : index
    %c0_275 = arith.constant 0 : index
    %739 = vector.load %arg11[%c0_272, %c0_273, %c1_274, %c0_275] : memref<2x3x4x128xf32, #tpu.memory_space<vmem>>, vector<1x3x1x128xf32>
    %740 = vector.shape_cast %739 : vector<1x3x1x128xf32> to vector<3x128xf32>
    %741 = vector.shape_cast %738 : vector<3x128xf32> to vector<1x3x1x128xf32>
    tpu.vector_store %arg11[%c0_272, %c0_273, %c1_274, %c0_275], %741 {strides = array<i32>} : memref<2x3x4x128xf32, #tpu.memory_space<vmem>>, vector<1x3x1x128xf32>,
    %cst_276 = arith.constant dense<0xFF800000> : vector<3xf32>
    %742 = vector.multi_reduction <maximumf>, %738, %cst_276 [1] : vector<3x128xf32> to vector<3xf32>
    %743 = vector.shape_cast %742 : vector<3xf32> to vector<3x1xf32>
    %744 = vector.broadcast %743 : vector<3x1xf32> to vector<3x128xf32>
    %745 = arith.cmpf oeq, %738, %744 : vector<3x128xf32>
    %c128_i32_277 = arith.constant 128 : i32
    %746 = vector.broadcast %c128_i32_277 : i32 to vector<3x128xi32>
    %747 = arith.select %745, %421, %746 : vector<3x128xi1>, vector<3x128xi32>
    %cst_278 = arith.constant dense<2147483647> : vector<3xi32>
    %748 = vector.multi_reduction <minsi>, %747, %cst_278 [1] : vector<3x128xi32> to vector<3xi32>
    %749 = vector.shape_cast %748 : vector<3xi32> to vector<3x1xi32>
    %750 = vector.broadcast %749 : vector<3x1xi32> to vector<3x128xi32>
    %751 = arith.cmpi eq, %421, %750 : vector<3x128xi32>
    %752 = arith.extui %751 : vector<3x128xi1> to vector<3x128xi32>
    %753 = arith.sitofp %752 : vector<3x128xi32> to vector<3x128xf32>
    %754 = vector.extract_strided_slice %675 {offsets = [3, 0], sizes = [3, 32], strides = [1, 1]} : vector<6x32xf32> to vector<3x32xf32>
    %cst_279 = arith.constant dense<0.000000e+00> : vector<3x8xf32>
    %755 = tpu.matmul %754, %433, %cst_279 {dimension_numbers = #tpu.dot_dimension_numbers<[1], [0], [0], [1], [0, 0, 1, 1], [], []>} : vector<3x32xf32>, vector<32x8xf32>, vector<3x8xf32> -> vector<3x8xf32>
    %cst_280 = arith.constant -1.000000e+04 : f32
    %756 = vector.shape_cast %441 : vector<1x8xi1> to vector<1x8xi1>
    %757 = vector.broadcast %756 : vector<1x8xi1> to vector<3x8xi1>
    %758 = vector.broadcast %cst_280 : f32 to vector<3x8xf32>
    %759 = arith.select %757, %755, %758 : vector<3x8xi1>, vector<3x8xf32>
    %cst_281 = arith.constant dense<0xFF800000> : vector<3xf32>
    %760 = vector.multi_reduction <maximumf>, %759, %cst_281 [1] : vector<3x8xf32> to vector<3xf32>
    %761 = vector.shape_cast %760 : vector<3xf32> to vector<3x1xf32>
    %762 = vector.broadcast %761 : vector<3x1xf32> to vector<3x8xf32>
    %763 = arith.subf %759, %762 : vector<3x8xf32>
    %764 = math.exp %763 : vector<3x8xf32>
    %cst_282 = arith.constant dense<0.000000e+00> : vector<3xf32>
    %765 = vector.multi_reduction <add>, %764, %cst_282 [1] : vector<3x8xf32> to vector<3xf32>
    %766 = vector.shape_cast %765 : vector<3xf32> to vector<3x1xf32>
    %767 = vector.broadcast %766 : vector<3x1xf32> to vector<3x8xf32>
    %768 = arith.divf %764, %767 : vector<3x8xf32>
    %cst_283 = arith.constant dense<0.000000e+00> : vector<3x32xf32>
    %769 = tpu.matmul %768, %432, %cst_283 {dimension_numbers = #tpu.dot_dimension_numbers<[1], [0], [0], [1], [0, 0, 1, 1], [], []>} : vector<3x8xf32>, vector<8x32xf32>, vector<3x32xf32> -> vector<3x32xf32>
    %770 = vector.shape_cast %768 : vector<3x8xf32> to vector<3x8x1xf32>
    %771 = vector.shape_cast %438 : vector<8x128xf32> to vector<1x8x128xf32>
    %772 = vector.broadcast %770 : vector<3x8x1xf32> to vector<3x8x128xf32>
    %773 = vector.broadcast %771 : vector<1x8x128xf32> to vector<3x8x128xf32>
    %774 = arith.mulf %772, %773 : vector<3x8x128xf32>
    %cst_284 = arith.constant dense<0.000000e+00> : vector<3x128xf32>
    %775 = vector.multi_reduction <add>, %774, %cst_284 [1] : vector<3x8x128xf32> to vector<3x128xf32>
    %776 = vector.extract_strided_slice %697 {offsets = [3, 0], sizes = [3, 1], strides = [1, 1]} : vector<6x1xf32> to vector<3x1xf32>
    %777 = vector.broadcast %444 : vector<1x32xf32> to vector<3x32xf32>
    %778 = arith.mulf %769, %777 : vector<3x32xf32>
    %cst_285 = arith.constant dense<0.000000e+00> : vector<3xf32>
    %779 = vector.multi_reduction <add>, %778, %cst_285 [1] : vector<3x32xf32> to vector<3xf32>
    %780 = vector.shape_cast %779 : vector<3xf32> to vector<3x1xf32>
    %781 = arith.addf %776, %780 : vector<3x1xf32>
    %782 = arith.negf %781 : vector<3x1xf32>
    %783 = math.exp %782 : vector<3x1xf32>
    %cst_286 = arith.constant 1.000000e+00 : f32
    %784 = vector.broadcast %cst_286 : f32 to vector<3x1xf32>
    %785 = arith.addf %784, %783 : vector<3x1xf32>
    %786 = arith.divf %784, %785 : vector<3x1xf32>
    %787 = vector.extract_strided_slice %686 {offsets = [3, 0], sizes = [3, 128], strides = [1, 1]} : vector<6x128xf32> to vector<3x128xf32>
    %788 = vector.broadcast %786 : vector<3x1xf32> to vector<3x128xf32>
    %789 = arith.mulf %788, %787 : vector<3x128xf32>
    %cst_287 = arith.constant 1.000000e+00 : f32
    %790 = vector.broadcast %cst_287 : f32 to vector<3x1xf32>
    %791 = arith.subf %790, %786 : vector<3x1xf32>
    %792 = vector.broadcast %791 : vector<3x1xf32> to vector<3x128xf32>
    %793 = arith.mulf %792, %775 : vector<3x128xf32>
    %794 = arith.addf %789, %793 : vector<3x128xf32>
    %c1_288 = arith.constant 1 : index
    %c0_289 = arith.constant 0 : index
    %c1_290 = arith.constant 1 : index
    %c0_291 = arith.constant 0 : index
    %795 = vector.load %arg11[%c1_288, %c0_289, %c1_290, %c0_291] : memref<2x3x4x128xf32, #tpu.memory_space<vmem>>, vector<1x3x1x128xf32>
    %796 = vector.shape_cast %795 : vector<1x3x1x128xf32> to vector<3x128xf32>
    %797 = vector.shape_cast %794 : vector<3x128xf32> to vector<1x3x1x128xf32>
    tpu.vector_store %arg11[%c1_288, %c0_289, %c1_290, %c0_291], %797 {strides = array<i32>} : memref<2x3x4x128xf32, #tpu.memory_space<vmem>>, vector<1x3x1x128xf32>,
    %cst_292 = arith.constant dense<0xFF800000> : vector<3xf32>
    %798 = vector.multi_reduction <maximumf>, %794, %cst_292 [1] : vector<3x128xf32> to vector<3xf32>
    %799 = vector.shape_cast %798 : vector<3xf32> to vector<3x1xf32>
    %800 = vector.broadcast %799 : vector<3x1xf32> to vector<3x128xf32>
    %801 = arith.cmpf oeq, %794, %800 : vector<3x128xf32>
    %c128_i32_293 = arith.constant 128 : i32
    %802 = vector.broadcast %c128_i32_293 : i32 to vector<3x128xi32>
    %803 = arith.select %801, %421, %802 : vector<3x128xi1>, vector<3x128xi32>
    %cst_294 = arith.constant dense<2147483647> : vector<3xi32>
    %804 = vector.multi_reduction <minsi>, %803, %cst_294 [1] : vector<3x128xi32> to vector<3xi32>
    %805 = vector.shape_cast %804 : vector<3xi32> to vector<3x1xi32>
    %806 = vector.broadcast %805 : vector<3x1xi32> to vector<3x128xi32>
    %807 = arith.cmpi eq, %421, %806 : vector<3x128xi32>
    %808 = arith.extui %807 : vector<3x128xi1> to vector<3x128xi32>
    %809 = arith.sitofp %808 : vector<3x128xi32> to vector<3x128xf32>
    %810 = tpu.concatenate %753, %809 in 0 : vector<3x128xf32>, vector<3x128xf32> -> vector<6x128xf32>
    %c0_295 = arith.constant 0 : index
    %c0_296 = arith.constant 0 : index
    %811 = vector.load %arg5[%c0_295, %c0_296] : memref<128x32xf32, #tpu.memory_space<vmem>>, vector<128x32xf32>
    %cst_297 = arith.constant dense<0.000000e+00> : vector<6x32xf32>
    %812 = tpu.matmul %810, %811, %cst_297 {dimension_numbers = #tpu.dot_dimension_numbers<[1], [0], [0], [1], [0, 0, 1, 1], [], []>} : vector<6x128xf32>, vector<128x32xf32>, vector<6x32xf32> -> vector<6x32xf32>
    %c0_298 = arith.constant 0 : index
    %c0_299 = arith.constant 0 : index
    %813 = vector.load %arg9[%c0_298, %c0_299] : memref<96x96xf32, #tpu.memory_space<vmem>>, vector<32x96xf32>
    %cst_300 = arith.constant dense<0.000000e+00> : vector<6x96xf32>
    %814 = tpu.matmul %812, %813, %cst_300 {dimension_numbers = #tpu.dot_dimension_numbers<[1], [0], [0], [1], [0, 0, 1, 1], [], []>} : vector<6x32xf32>, vector<32x96xf32>, vector<6x96xf32> -> vector<6x96xf32>
    %c0_301 = arith.constant 0 : index
    %c0_302 = arith.constant 0 : index
    %815 = vector.load %arg10[%c0_301, %c0_302] : memref<4x96xf32, #tpu.memory_space<vmem>>, vector<1x96xf32>
    %816 = vector.broadcast %815 : vector<1x96xf32> to vector<6x96xf32>
    %817 = arith.addf %814, %816 : vector<6x96xf32>
    %c32_303 = arith.constant 32 : index
    %c0_304 = arith.constant 0 : index
    %818 = vector.load %arg9[%c32_303, %c0_304] : memref<96x96xf32, #tpu.memory_space<vmem>>, vector<32x96xf32>
    %cst_305 = arith.constant dense<0.000000e+00> : vector<6x96xf32>
    %819 = tpu.matmul %675, %818, %cst_305 {dimension_numbers = #tpu.dot_dimension_numbers<[1], [0], [0], [1], [0, 0, 1, 1], [], []>} : vector<6x32xf32>, vector<32x96xf32>, vector<6x96xf32> -> vector<6x96xf32>
    %c1_306 = arith.constant 1 : index
    %c0_307 = arith.constant 0 : index
    %820 = vector.load %arg10[%c1_306, %c0_307] : memref<4x96xf32, #tpu.memory_space<vmem>>, vector<1x96xf32>
    %821 = vector.broadcast %820 : vector<1x96xf32> to vector<6x96xf32>
    %822 = arith.addf %819, %821 : vector<6x96xf32>
    %823 = vector.extract_strided_slice %817 {offsets = [0, 0], sizes = [6, 32], strides = [1, 1]} : vector<6x96xf32> to vector<6x32xf32>
    %824 = vector.extract_strided_slice %822 {offsets = [0, 0], sizes = [6, 32], strides = [1, 1]} : vector<6x96xf32> to vector<6x32xf32>
    %825 = arith.addf %823, %824 : vector<6x32xf32>
    %826 = arith.negf %825 : vector<6x32xf32>
    %827 = math.exp %826 : vector<6x32xf32>
    %cst_308 = arith.constant 1.000000e+00 : f32
    %828 = vector.broadcast %cst_308 : f32 to vector<6x32xf32>
    %829 = arith.addf %828, %827 : vector<6x32xf32>
    %830 = arith.divf %828, %829 : vector<6x32xf32>
    %831 = vector.extract_strided_slice %817 {offsets = [0, 32], sizes = [6, 32], strides = [1, 1]} : vector<6x96xf32> to vector<6x32xf32>
    %832 = vector.extract_strided_slice %822 {offsets = [0, 32], sizes = [6, 32], strides = [1, 1]} : vector<6x96xf32> to vector<6x32xf32>
    %833 = arith.addf %831, %832 : vector<6x32xf32>
    %834 = arith.negf %833 : vector<6x32xf32>
    %835 = math.exp %834 : vector<6x32xf32>
    %cst_309 = arith.constant 1.000000e+00 : f32
    %836 = vector.broadcast %cst_309 : f32 to vector<6x32xf32>
    %837 = arith.addf %836, %835 : vector<6x32xf32>
    %838 = arith.divf %836, %837 : vector<6x32xf32>
    %839 = vector.extract_strided_slice %817 {offsets = [0, 64], sizes = [6, 32], strides = [1, 1]} : vector<6x96xf32> to vector<6x32xf32>
    %840 = vector.extract_strided_slice %822 {offsets = [0, 64], sizes = [6, 32], strides = [1, 1]} : vector<6x96xf32> to vector<6x32xf32>
    %841 = arith.mulf %830, %840 : vector<6x32xf32>
    %842 = arith.addf %839, %841 : vector<6x32xf32>
    %843 = math.tanh %842 : vector<6x32xf32>
    %cst_310 = arith.constant 1.000000e+00 : f32
    %844 = vector.broadcast %cst_310 : f32 to vector<6x32xf32>
    %845 = arith.subf %844, %838 : vector<6x32xf32>
    %846 = arith.mulf %845, %843 : vector<6x32xf32>
    %847 = arith.mulf %838, %675 : vector<6x32xf32>
    %848 = arith.addf %846, %847 : vector<6x32xf32>
    %c0_311 = arith.constant 0 : index
    %c0_312 = arith.constant 0 : index
    %849 = vector.load %arg6[%c0_311, %c0_312] : memref<32x128xf32, #tpu.memory_space<vmem>>, vector<32x128xf32>
    %cst_313 = arith.constant dense<0.000000e+00> : vector<6x128xf32>
    %850 = tpu.matmul %848, %849, %cst_313 {dimension_numbers = #tpu.dot_dimension_numbers<[1], [0], [0], [1], [0, 0, 1, 1], [], []>} : vector<6x32xf32>, vector<32x128xf32>, vector<6x128xf32> -> vector<6x128xf32>
    %cst_314 = arith.constant dense<0xFF800000> : vector<6xf32>
    %851 = vector.multi_reduction <maximumf>, %850, %cst_314 [1] : vector<6x128xf32> to vector<6xf32>
    %852 = vector.shape_cast %851 : vector<6xf32> to vector<6x1xf32>
    %853 = vector.broadcast %852 : vector<6x1xf32> to vector<6x128xf32>
    %854 = arith.subf %850, %853 : vector<6x128xf32>
    %855 = math.exp %854 : vector<6x128xf32>
    %cst_315 = arith.constant dense<0.000000e+00> : vector<6xf32>
    %856 = vector.multi_reduction <add>, %855, %cst_315 [1] : vector<6x128xf32> to vector<6xf32>
    %857 = vector.shape_cast %856 : vector<6xf32> to vector<6x1xf32>
    %858 = vector.broadcast %857 : vector<6x1xf32> to vector<6x128xf32>
    %859 = arith.divf %855, %858 : vector<6x128xf32>
    %860 = vector.broadcast %442 : vector<1x32xf32> to vector<6x32xf32>
    %861 = arith.mulf %812, %860 : vector<6x32xf32>
    %cst_316 = arith.constant dense<0.000000e+00> : vector<6xf32>
    %862 = vector.multi_reduction <add>, %861, %cst_316 [1] : vector<6x32xf32> to vector<6xf32>
    %863 = vector.shape_cast %862 : vector<6xf32> to vector<6x1xf32>
    %864 = vector.broadcast %443 : vector<1x32xf32> to vector<6x32xf32>
    %865 = arith.mulf %848, %864 : vector<6x32xf32>
    %cst_317 = arith.constant dense<0.000000e+00> : vector<6xf32>
    %866 = vector.multi_reduction <add>, %865, %cst_317 [1] : vector<6x32xf32> to vector<6xf32>
    %867 = vector.shape_cast %866 : vector<6xf32> to vector<6x1xf32>
    %868 = arith.addf %863, %867 : vector<6x1xf32>
    %869 = vector.broadcast %445 : vector<1x1xf32> to vector<6x1xf32>
    %870 = arith.addf %868, %869 : vector<6x1xf32>
    %871 = vector.extract_strided_slice %848 {offsets = [0, 0], sizes = [3, 32], strides = [1, 1]} : vector<6x32xf32> to vector<3x32xf32>
    %cst_318 = arith.constant dense<0.000000e+00> : vector<3x8xf32>
    %872 = tpu.matmul %871, %423, %cst_318 {dimension_numbers = #tpu.dot_dimension_numbers<[1], [0], [0], [1], [0, 0, 1, 1], [], []>} : vector<3x32xf32>, vector<32x8xf32>, vector<3x8xf32> -> vector<3x8xf32>
    %cst_319 = arith.constant -1.000000e+04 : f32
    %873 = vector.shape_cast %431 : vector<1x8xi1> to vector<1x8xi1>
    %874 = vector.broadcast %873 : vector<1x8xi1> to vector<3x8xi1>
    %875 = vector.broadcast %cst_319 : f32 to vector<3x8xf32>
    %876 = arith.select %874, %872, %875 : vector<3x8xi1>, vector<3x8xf32>
    %cst_320 = arith.constant dense<0xFF800000> : vector<3xf32>
    %877 = vector.multi_reduction <maximumf>, %876, %cst_320 [1] : vector<3x8xf32> to vector<3xf32>
    %878 = vector.shape_cast %877 : vector<3xf32> to vector<3x1xf32>
    %879 = vector.broadcast %878 : vector<3x1xf32> to vector<3x8xf32>
    %880 = arith.subf %876, %879 : vector<3x8xf32>
    %881 = math.exp %880 : vector<3x8xf32>
    %cst_321 = arith.constant dense<0.000000e+00> : vector<3xf32>
    %882 = vector.multi_reduction <add>, %881, %cst_321 [1] : vector<3x8xf32> to vector<3xf32>
    %883 = vector.shape_cast %882 : vector<3xf32> to vector<3x1xf32>
    %884 = vector.broadcast %883 : vector<3x1xf32> to vector<3x8xf32>
    %885 = arith.divf %881, %884 : vector<3x8xf32>
    %cst_322 = arith.constant dense<0.000000e+00> : vector<3x32xf32>
    %886 = tpu.matmul %885, %422, %cst_322 {dimension_numbers = #tpu.dot_dimension_numbers<[1], [0], [0], [1], [0, 0, 1, 1], [], []>} : vector<3x8xf32>, vector<8x32xf32>, vector<3x32xf32> -> vector<3x32xf32>
    %887 = vector.shape_cast %885 : vector<3x8xf32> to vector<3x8x1xf32>
    %888 = vector.shape_cast %428 : vector<8x128xf32> to vector<1x8x128xf32>
    %889 = vector.broadcast %887 : vector<3x8x1xf32> to vector<3x8x128xf32>
    %890 = vector.broadcast %888 : vector<1x8x128xf32> to vector<3x8x128xf32>
    %891 = arith.mulf %889, %890 : vector<3x8x128xf32>
    %cst_323 = arith.constant dense<0.000000e+00> : vector<3x128xf32>
    %892 = vector.multi_reduction <add>, %891, %cst_323 [1] : vector<3x8x128xf32> to vector<3x128xf32>
    %893 = vector.extract_strided_slice %870 {offsets = [0, 0], sizes = [3, 1], strides = [1, 1]} : vector<6x1xf32> to vector<3x1xf32>
    %894 = vector.broadcast %444 : vector<1x32xf32> to vector<3x32xf32>
    %895 = arith.mulf %886, %894 : vector<3x32xf32>
    %cst_324 = arith.constant dense<0.000000e+00> : vector<3xf32>
    %896 = vector.multi_reduction <add>, %895, %cst_324 [1] : vector<3x32xf32> to vector<3xf32>
    %897 = vector.shape_cast %896 : vector<3xf32> to vector<3x1xf32>
    %898 = arith.addf %893, %897 : vector<3x1xf32>
    %899 = arith.negf %898 : vector<3x1xf32>
    %900 = math.exp %899 : vector<3x1xf32>
    %cst_325 = arith.constant 1.000000e+00 : f32
    %901 = vector.broadcast %cst_325 : f32 to vector<3x1xf32>
    %902 = arith.addf %901, %900 : vector<3x1xf32>
    %903 = arith.divf %901, %902 : vector<3x1xf32>
    %904 = vector.extract_strided_slice %859 {offsets = [0, 0], sizes = [3, 128], strides = [1, 1]} : vector<6x128xf32> to vector<3x128xf32>
    %905 = vector.broadcast %903 : vector<3x1xf32> to vector<3x128xf32>
    %906 = arith.mulf %905, %904 : vector<3x128xf32>
    %cst_326 = arith.constant 1.000000e+00 : f32
    %907 = vector.broadcast %cst_326 : f32 to vector<3x1xf32>
    %908 = arith.subf %907, %903 : vector<3x1xf32>
    %909 = vector.broadcast %908 : vector<3x1xf32> to vector<3x128xf32>
    %910 = arith.mulf %909, %892 : vector<3x128xf32>
    %911 = arith.addf %906, %910 : vector<3x128xf32>
    %c0_327 = arith.constant 0 : index
    %c0_328 = arith.constant 0 : index
    %c2_329 = arith.constant 2 : index
    %c0_330 = arith.constant 0 : index
    %912 = vector.load %arg11[%c0_327, %c0_328, %c2_329, %c0_330] : memref<2x3x4x128xf32, #tpu.memory_space<vmem>>, vector<1x3x1x128xf32>
    %913 = vector.shape_cast %912 : vector<1x3x1x128xf32> to vector<3x128xf32>
    %914 = vector.shape_cast %911 : vector<3x128xf32> to vector<1x3x1x128xf32>
    tpu.vector_store %arg11[%c0_327, %c0_328, %c2_329, %c0_330], %914 {strides = array<i32>} : memref<2x3x4x128xf32, #tpu.memory_space<vmem>>, vector<1x3x1x128xf32>,
    %cst_331 = arith.constant dense<0xFF800000> : vector<3xf32>
    %915 = vector.multi_reduction <maximumf>, %911, %cst_331 [1] : vector<3x128xf32> to vector<3xf32>
    %916 = vector.shape_cast %915 : vector<3xf32> to vector<3x1xf32>
    %917 = vector.broadcast %916 : vector<3x1xf32> to vector<3x128xf32>
    %918 = arith.cmpf oeq, %911, %917 : vector<3x128xf32>
    %c128_i32_332 = arith.constant 128 : i32
    %919 = vector.broadcast %c128_i32_332 : i32 to vector<3x128xi32>
    %920 = arith.select %918, %421, %919 : vector<3x128xi1>, vector<3x128xi32>
    %cst_333 = arith.constant dense<2147483647> : vector<3xi32>
    %921 = vector.multi_reduction <minsi>, %920, %cst_333 [1] : vector<3x128xi32> to vector<3xi32>
    %922 = vector.shape_cast %921 : vector<3xi32> to vector<3x1xi32>
    %923 = vector.broadcast %922 : vector<3x1xi32> to vector<3x128xi32>
    %924 = arith.cmpi eq, %421, %923 : vector<3x128xi32>
    %925 = arith.extui %924 : vector<3x128xi1> to vector<3x128xi32>
    %926 = arith.sitofp %925 : vector<3x128xi32> to vector<3x128xf32>
    %927 = vector.extract_strided_slice %848 {offsets = [3, 0], sizes = [3, 32], strides = [1, 1]} : vector<6x32xf32> to vector<3x32xf32>
    %cst_334 = arith.constant dense<0.000000e+00> : vector<3x8xf32>
    %928 = tpu.matmul %927, %433, %cst_334 {dimension_numbers = #tpu.dot_dimension_numbers<[1], [0], [0], [1], [0, 0, 1, 1], [], []>} : vector<3x32xf32>, vector<32x8xf32>, vector<3x8xf32> -> vector<3x8xf32>
    %cst_335 = arith.constant -1.000000e+04 : f32
    %929 = vector.shape_cast %441 : vector<1x8xi1> to vector<1x8xi1>
    %930 = vector.broadcast %929 : vector<1x8xi1> to vector<3x8xi1>
    %931 = vector.broadcast %cst_335 : f32 to vector<3x8xf32>
    %932 = arith.select %930, %928, %931 : vector<3x8xi1>, vector<3x8xf32>
    %cst_336 = arith.constant dense<0xFF800000> : vector<3xf32>
    %933 = vector.multi_reduction <maximumf>, %932, %cst_336 [1] : vector<3x8xf32> to vector<3xf32>
    %934 = vector.shape_cast %933 : vector<3xf32> to vector<3x1xf32>
    %935 = vector.broadcast %934 : vector<3x1xf32> to vector<3x8xf32>
    %936 = arith.subf %932, %935 : vector<3x8xf32>
    %937 = math.exp %936 : vector<3x8xf32>
    %cst_337 = arith.constant dense<0.000000e+00> : vector<3xf32>
    %938 = vector.multi_reduction <add>, %937, %cst_337 [1] : vector<3x8xf32> to vector<3xf32>
    %939 = vector.shape_cast %938 : vector<3xf32> to vector<3x1xf32>
    %940 = vector.broadcast %939 : vector<3x1xf32> to vector<3x8xf32>
    %941 = arith.divf %937, %940 : vector<3x8xf32>
    %cst_338 = arith.constant dense<0.000000e+00> : vector<3x32xf32>
    %942 = tpu.matmul %941, %432, %cst_338 {dimension_numbers = #tpu.dot_dimension_numbers<[1], [0], [0], [1], [0, 0, 1, 1], [], []>} : vector<3x8xf32>, vector<8x32xf32>, vector<3x32xf32> -> vector<3x32xf32>
    %943 = vector.shape_cast %941 : vector<3x8xf32> to vector<3x8x1xf32>
    %944 = vector.shape_cast %438 : vector<8x128xf32> to vector<1x8x128xf32>
    %945 = vector.broadcast %943 : vector<3x8x1xf32> to vector<3x8x128xf32>
    %946 = vector.broadcast %944 : vector<1x8x128xf32> to vector<3x8x128xf32>
    %947 = arith.mulf %945, %946 : vector<3x8x128xf32>
    %cst_339 = arith.constant dense<0.000000e+00> : vector<3x128xf32>
    %948 = vector.multi_reduction <add>, %947, %cst_339 [1] : vector<3x8x128xf32> to vector<3x128xf32>
    %949 = vector.extract_strided_slice %870 {offsets = [3, 0], sizes = [3, 1], strides = [1, 1]} : vector<6x1xf32> to vector<3x1xf32>
    %950 = vector.broadcast %444 : vector<1x32xf32> to vector<3x32xf32>
    %951 = arith.mulf %942, %950 : vector<3x32xf32>
    %cst_340 = arith.constant dense<0.000000e+00> : vector<3xf32>
    %952 = vector.multi_reduction <add>, %951, %cst_340 [1] : vector<3x32xf32> to vector<3xf32>
    %953 = vector.shape_cast %952 : vector<3xf32> to vector<3x1xf32>
    %954 = arith.addf %949, %953 : vector<3x1xf32>
    %955 = arith.negf %954 : vector<3x1xf32>
    %956 = math.exp %955 : vector<3x1xf32>
    %cst_341 = arith.constant 1.000000e+00 : f32
    %957 = vector.broadcast %cst_341 : f32 to vector<3x1xf32>
    %958 = arith.addf %957, %956 : vector<3x1xf32>
    %959 = arith.divf %957, %958 : vector<3x1xf32>
    %960 = vector.extract_strided_slice %859 {offsets = [3, 0], sizes = [3, 128], strides = [1, 1]} : vector<6x128xf32> to vector<3x128xf32>
    %961 = vector.broadcast %959 : vector<3x1xf32> to vector<3x128xf32>
    %962 = arith.mulf %961, %960 : vector<3x128xf32>
    %cst_342 = arith.constant 1.000000e+00 : f32
    %963 = vector.broadcast %cst_342 : f32 to vector<3x1xf32>
    %964 = arith.subf %963, %959 : vector<3x1xf32>
    %965 = vector.broadcast %964 : vector<3x1xf32> to vector<3x128xf32>
    %966 = arith.mulf %965, %948 : vector<3x128xf32>
    %967 = arith.addf %962, %966 : vector<3x128xf32>
    %c1_343 = arith.constant 1 : index
    %c0_344 = arith.constant 0 : index
    %c2_345 = arith.constant 2 : index
    %c0_346 = arith.constant 0 : index
    %968 = vector.load %arg11[%c1_343, %c0_344, %c2_345, %c0_346] : memref<2x3x4x128xf32, #tpu.memory_space<vmem>>, vector<1x3x1x128xf32>
    %969 = vector.shape_cast %968 : vector<1x3x1x128xf32> to vector<3x128xf32>
    %970 = vector.shape_cast %967 : vector<3x128xf32> to vector<1x3x1x128xf32>
    tpu.vector_store %arg11[%c1_343, %c0_344, %c2_345, %c0_346], %970 {strides = array<i32>} : memref<2x3x4x128xf32, #tpu.memory_space<vmem>>, vector<1x3x1x128xf32>,
    %cst_347 = arith.constant dense<0xFF800000> : vector<3xf32>
    %971 = vector.multi_reduction <maximumf>, %967, %cst_347 [1] : vector<3x128xf32> to vector<3xf32>
    %972 = vector.shape_cast %971 : vector<3xf32> to vector<3x1xf32>
    %973 = vector.broadcast %972 : vector<3x1xf32> to vector<3x128xf32>
    %974 = arith.cmpf oeq, %967, %973 : vector<3x128xf32>
    %c128_i32_348 = arith.constant 128 : i32
    %975 = vector.broadcast %c128_i32_348 : i32 to vector<3x128xi32>
    %976 = arith.select %974, %421, %975 : vector<3x128xi1>, vector<3x128xi32>
    %cst_349 = arith.constant dense<2147483647> : vector<3xi32>
    %977 = vector.multi_reduction <minsi>, %976, %cst_349 [1] : vector<3x128xi32> to vector<3xi32>
    %978 = vector.shape_cast %977 : vector<3xi32> to vector<3x1xi32>
    %979 = vector.broadcast %978 : vector<3x1xi32> to vector<3x128xi32>
    %980 = arith.cmpi eq, %421, %979 : vector<3x128xi32>
    %981 = arith.extui %980 : vector<3x128xi1> to vector<3x128xi32>
    %982 = arith.sitofp %981 : vector<3x128xi32> to vector<3x128xf32>
    %983 = tpu.concatenate %926, %982 in 0 : vector<3x128xf32>, vector<3x128xf32> -> vector<6x128xf32>
    %c0_350 = arith.constant 0 : index
    %c0_351 = arith.constant 0 : index
    %984 = vector.load %arg5[%c0_350, %c0_351] : memref<128x32xf32, #tpu.memory_space<vmem>>, vector<128x32xf32>
    %cst_352 = arith.constant dense<0.000000e+00> : vector<6x32xf32>
    %985 = tpu.matmul %983, %984, %cst_352 {dimension_numbers = #tpu.dot_dimension_numbers<[1], [0], [0], [1], [0, 0, 1, 1], [], []>} : vector<6x128xf32>, vector<128x32xf32>, vector<6x32xf32> -> vector<6x32xf32>
    %c0_353 = arith.constant 0 : index
    %c0_354 = arith.constant 0 : index
    %986 = vector.load %arg9[%c0_353, %c0_354] : memref<96x96xf32, #tpu.memory_space<vmem>>, vector<32x96xf32>
    %cst_355 = arith.constant dense<0.000000e+00> : vector<6x96xf32>
    %987 = tpu.matmul %985, %986, %cst_355 {dimension_numbers = #tpu.dot_dimension_numbers<[1], [0], [0], [1], [0, 0, 1, 1], [], []>} : vector<6x32xf32>, vector<32x96xf32>, vector<6x96xf32> -> vector<6x96xf32>
    %c0_356 = arith.constant 0 : index
    %c0_357 = arith.constant 0 : index
    %988 = vector.load %arg10[%c0_356, %c0_357] : memref<4x96xf32, #tpu.memory_space<vmem>>, vector<1x96xf32>
    %989 = vector.broadcast %988 : vector<1x96xf32> to vector<6x96xf32>
    %990 = arith.addf %987, %989 : vector<6x96xf32>
    %c32_358 = arith.constant 32 : index
    %c0_359 = arith.constant 0 : index
    %991 = vector.load %arg9[%c32_358, %c0_359] : memref<96x96xf32, #tpu.memory_space<vmem>>, vector<32x96xf32>
    %cst_360 = arith.constant dense<0.000000e+00> : vector<6x96xf32>
    %992 = tpu.matmul %848, %991, %cst_360 {dimension_numbers = #tpu.dot_dimension_numbers<[1], [0], [0], [1], [0, 0, 1, 1], [], []>} : vector<6x32xf32>, vector<32x96xf32>, vector<6x96xf32> -> vector<6x96xf32>
    %c1_361 = arith.constant 1 : index
    %c0_362 = arith.constant 0 : index
    %993 = vector.load %arg10[%c1_361, %c0_362] : memref<4x96xf32, #tpu.memory_space<vmem>>, vector<1x96xf32>
    %994 = vector.broadcast %993 : vector<1x96xf32> to vector<6x96xf32>
    %995 = arith.addf %992, %994 : vector<6x96xf32>
    %996 = vector.extract_strided_slice %990 {offsets = [0, 0], sizes = [6, 32], strides = [1, 1]} : vector<6x96xf32> to vector<6x32xf32>
    %997 = vector.extract_strided_slice %995 {offsets = [0, 0], sizes = [6, 32], strides = [1, 1]} : vector<6x96xf32> to vector<6x32xf32>
    %998 = arith.addf %996, %997 : vector<6x32xf32>
    %999 = arith.negf %998 : vector<6x32xf32>
    %1000 = math.exp %999 : vector<6x32xf32>
    %cst_363 = arith.constant 1.000000e+00 : f32
    %1001 = vector.broadcast %cst_363 : f32 to vector<6x32xf32>
    %1002 = arith.addf %1001, %1000 : vector<6x32xf32>
    %1003 = arith.divf %1001, %1002 : vector<6x32xf32>
    %1004 = vector.extract_strided_slice %990 {offsets = [0, 32], sizes = [6, 32], strides = [1, 1]} : vector<6x96xf32> to vector<6x32xf32>
    %1005 = vector.extract_strided_slice %995 {offsets = [0, 32], sizes = [6, 32], strides = [1, 1]} : vector<6x96xf32> to vector<6x32xf32>
    %1006 = arith.addf %1004, %1005 : vector<6x32xf32>
    %1007 = arith.negf %1006 : vector<6x32xf32>
    %1008 = math.exp %1007 : vector<6x32xf32>
    %cst_364 = arith.constant 1.000000e+00 : f32
    %1009 = vector.broadcast %cst_364 : f32 to vector<6x32xf32>
    %1010 = arith.addf %1009, %1008 : vector<6x32xf32>
    %1011 = arith.divf %1009, %1010 : vector<6x32xf32>
    %1012 = vector.extract_strided_slice %990 {offsets = [0, 64], sizes = [6, 32], strides = [1, 1]} : vector<6x96xf32> to vector<6x32xf32>
    %1013 = vector.extract_strided_slice %995 {offsets = [0, 64], sizes = [6, 32], strides = [1, 1]} : vector<6x96xf32> to vector<6x32xf32>
    %1014 = arith.mulf %1003, %1013 : vector<6x32xf32>
    %1015 = arith.addf %1012, %1014 : vector<6x32xf32>
    %1016 = math.tanh %1015 : vector<6x32xf32>
    %cst_365 = arith.constant 1.000000e+00 : f32
    %1017 = vector.broadcast %cst_365 : f32 to vector<6x32xf32>
    %1018 = arith.subf %1017, %1011 : vector<6x32xf32>
    %1019 = arith.mulf %1018, %1016 : vector<6x32xf32>
    %1020 = arith.mulf %1011, %848 : vector<6x32xf32>
    %1021 = arith.addf %1019, %1020 : vector<6x32xf32>
    %c0_366 = arith.constant 0 : index
    %c0_367 = arith.constant 0 : index
    %1022 = vector.load %arg6[%c0_366, %c0_367] : memref<32x128xf32, #tpu.memory_space<vmem>>, vector<32x128xf32>
    %cst_368 = arith.constant dense<0.000000e+00> : vector<6x128xf32>
    %1023 = tpu.matmul %1021, %1022, %cst_368 {dimension_numbers = #tpu.dot_dimension_numbers<[1], [0], [0], [1], [0, 0, 1, 1], [], []>} : vector<6x32xf32>, vector<32x128xf32>, vector<6x128xf32> -> vector<6x128xf32>
    %cst_369 = arith.constant dense<0xFF800000> : vector<6xf32>
    %1024 = vector.multi_reduction <maximumf>, %1023, %cst_369 [1] : vector<6x128xf32> to vector<6xf32>
    %1025 = vector.shape_cast %1024 : vector<6xf32> to vector<6x1xf32>
    %1026 = vector.broadcast %1025 : vector<6x1xf32> to vector<6x128xf32>
    %1027 = arith.subf %1023, %1026 : vector<6x128xf32>
    %1028 = math.exp %1027 : vector<6x128xf32>
    %cst_370 = arith.constant dense<0.000000e+00> : vector<6xf32>
    %1029 = vector.multi_reduction <add>, %1028, %cst_370 [1] : vector<6x128xf32> to vector<6xf32>
    %1030 = vector.shape_cast %1029 : vector<6xf32> to vector<6x1xf32>
    %1031 = vector.broadcast %1030 : vector<6x1xf32> to vector<6x128xf32>
    %1032 = arith.divf %1028, %1031 : vector<6x128xf32>
    %1033 = vector.broadcast %442 : vector<1x32xf32> to vector<6x32xf32>
    %1034 = arith.mulf %985, %1033 : vector<6x32xf32>
    %cst_371 = arith.constant dense<0.000000e+00> : vector<6xf32>
    %1035 = vector.multi_reduction <add>, %1034, %cst_371 [1] : vector<6x32xf32> to vector<6xf32>
    %1036 = vector.shape_cast %1035 : vector<6xf32> to vector<6x1xf32>
    %1037 = vector.broadcast %443 : vector<1x32xf32> to vector<6x32xf32>
    %1038 = arith.mulf %1021, %1037 : vector<6x32xf32>
    %cst_372 = arith.constant dense<0.000000e+00> : vector<6xf32>
    %1039 = vector.multi_reduction <add>, %1038, %cst_372 [1] : vector<6x32xf32> to vector<6xf32>
    %1040 = vector.shape_cast %1039 : vector<6xf32> to vector<6x1xf32>
    %1041 = arith.addf %1036, %1040 : vector<6x1xf32>
    %1042 = vector.broadcast %445 : vector<1x1xf32> to vector<6x1xf32>
    %1043 = arith.addf %1041, %1042 : vector<6x1xf32>
    %1044 = vector.extract_strided_slice %1021 {offsets = [0, 0], sizes = [3, 32], strides = [1, 1]} : vector<6x32xf32> to vector<3x32xf32>
    %cst_373 = arith.constant dense<0.000000e+00> : vector<3x8xf32>
    %1045 = tpu.matmul %1044, %423, %cst_373 {dimension_numbers = #tpu.dot_dimension_numbers<[1], [0], [0], [1], [0, 0, 1, 1], [], []>} : vector<3x32xf32>, vector<32x8xf32>, vector<3x8xf32> -> vector<3x8xf32>
    %cst_374 = arith.constant -1.000000e+04 : f32
    %1046 = vector.shape_cast %431 : vector<1x8xi1> to vector<1x8xi1>
    %1047 = vector.broadcast %1046 : vector<1x8xi1> to vector<3x8xi1>
    %1048 = vector.broadcast %cst_374 : f32 to vector<3x8xf32>
    %1049 = arith.select %1047, %1045, %1048 : vector<3x8xi1>, vector<3x8xf32>
    %cst_375 = arith.constant dense<0xFF800000> : vector<3xf32>
    %1050 = vector.multi_reduction <maximumf>, %1049, %cst_375 [1] : vector<3x8xf32> to vector<3xf32>
    %1051 = vector.shape_cast %1050 : vector<3xf32> to vector<3x1xf32>
    %1052 = vector.broadcast %1051 : vector<3x1xf32> to vector<3x8xf32>
    %1053 = arith.subf %1049, %1052 : vector<3x8xf32>
    %1054 = math.exp %1053 : vector<3x8xf32>
    %cst_376 = arith.constant dense<0.000000e+00> : vector<3xf32>
    %1055 = vector.multi_reduction <add>, %1054, %cst_376 [1] : vector<3x8xf32> to vector<3xf32>
    %1056 = vector.shape_cast %1055 : vector<3xf32> to vector<3x1xf32>
    %1057 = vector.broadcast %1056 : vector<3x1xf32> to vector<3x8xf32>
    %1058 = arith.divf %1054, %1057 : vector<3x8xf32>
    %cst_377 = arith.constant dense<0.000000e+00> : vector<3x32xf32>
    %1059 = tpu.matmul %1058, %422, %cst_377 {dimension_numbers = #tpu.dot_dimension_numbers<[1], [0], [0], [1], [0, 0, 1, 1], [], []>} : vector<3x8xf32>, vector<8x32xf32>, vector<3x32xf32> -> vector<3x32xf32>
    %1060 = vector.shape_cast %1058 : vector<3x8xf32> to vector<3x8x1xf32>
    %1061 = vector.shape_cast %428 : vector<8x128xf32> to vector<1x8x128xf32>
    %1062 = vector.broadcast %1060 : vector<3x8x1xf32> to vector<3x8x128xf32>
    %1063 = vector.broadcast %1061 : vector<1x8x128xf32> to vector<3x8x128xf32>
    %1064 = arith.mulf %1062, %1063 : vector<3x8x128xf32>
    %cst_378 = arith.constant dense<0.000000e+00> : vector<3x128xf32>
    %1065 = vector.multi_reduction <add>, %1064, %cst_378 [1] : vector<3x8x128xf32> to vector<3x128xf32>
    %1066 = vector.extract_strided_slice %1043 {offsets = [0, 0], sizes = [3, 1], strides = [1, 1]} : vector<6x1xf32> to vector<3x1xf32>
    %1067 = vector.broadcast %444 : vector<1x32xf32> to vector<3x32xf32>
    %1068 = arith.mulf %1059, %1067 : vector<3x32xf32>
    %cst_379 = arith.constant dense<0.000000e+00> : vector<3xf32>
    %1069 = vector.multi_reduction <add>, %1068, %cst_379 [1] : vector<3x32xf32> to vector<3xf32>
    %1070 = vector.shape_cast %1069 : vector<3xf32> to vector<3x1xf32>
    %1071 = arith.addf %1066, %1070 : vector<3x1xf32>
    %1072 = arith.negf %1071 : vector<3x1xf32>
    %1073 = math.exp %1072 : vector<3x1xf32>
    %cst_380 = arith.constant 1.000000e+00 : f32
    %1074 = vector.broadcast %cst_380 : f32 to vector<3x1xf32>
    %1075 = arith.addf %1074, %1073 : vector<3x1xf32>
    %1076 = arith.divf %1074, %1075 : vector<3x1xf32>
    %1077 = vector.extract_strided_slice %1032 {offsets = [0, 0], sizes = [3, 128], strides = [1, 1]} : vector<6x128xf32> to vector<3x128xf32>
    %1078 = vector.broadcast %1076 : vector<3x1xf32> to vector<3x128xf32>
    %1079 = arith.mulf %1078, %1077 : vector<3x128xf32>
    %cst_381 = arith.constant 1.000000e+00 : f32
    %1080 = vector.broadcast %cst_381 : f32 to vector<3x1xf32>
    %1081 = arith.subf %1080, %1076 : vector<3x1xf32>
    %1082 = vector.broadcast %1081 : vector<3x1xf32> to vector<3x128xf32>
    %1083 = arith.mulf %1082, %1065 : vector<3x128xf32>
    %1084 = arith.addf %1079, %1083 : vector<3x128xf32>
    %c0_382 = arith.constant 0 : index
    %c0_383 = arith.constant 0 : index
    %c3_384 = arith.constant 3 : index
    %c0_385 = arith.constant 0 : index
    %1085 = vector.load %arg11[%c0_382, %c0_383, %c3_384, %c0_385] : memref<2x3x4x128xf32, #tpu.memory_space<vmem>>, vector<1x3x1x128xf32>
    %1086 = vector.shape_cast %1085 : vector<1x3x1x128xf32> to vector<3x128xf32>
    %1087 = vector.shape_cast %1084 : vector<3x128xf32> to vector<1x3x1x128xf32>
    tpu.vector_store %arg11[%c0_382, %c0_383, %c3_384, %c0_385], %1087 {strides = array<i32>} : memref<2x3x4x128xf32, #tpu.memory_space<vmem>>, vector<1x3x1x128xf32>,
    %1088 = vector.extract_strided_slice %1021 {offsets = [3, 0], sizes = [3, 32], strides = [1, 1]} : vector<6x32xf32> to vector<3x32xf32>
    %cst_386 = arith.constant dense<0.000000e+00> : vector<3x8xf32>
    %1089 = tpu.matmul %1088, %433, %cst_386 {dimension_numbers = #tpu.dot_dimension_numbers<[1], [0], [0], [1], [0, 0, 1, 1], [], []>} : vector<3x32xf32>, vector<32x8xf32>, vector<3x8xf32> -> vector<3x8xf32>
    %cst_387 = arith.constant -1.000000e+04 : f32
    %1090 = vector.shape_cast %441 : vector<1x8xi1> to vector<1x8xi1>
    %1091 = vector.broadcast %1090 : vector<1x8xi1> to vector<3x8xi1>
    %1092 = vector.broadcast %cst_387 : f32 to vector<3x8xf32>
    %1093 = arith.select %1091, %1089, %1092 : vector<3x8xi1>, vector<3x8xf32>
    %cst_388 = arith.constant dense<0xFF800000> : vector<3xf32>
    %1094 = vector.multi_reduction <maximumf>, %1093, %cst_388 [1] : vector<3x8xf32> to vector<3xf32>
    %1095 = vector.shape_cast %1094 : vector<3xf32> to vector<3x1xf32>
    %1096 = vector.broadcast %1095 : vector<3x1xf32> to vector<3x8xf32>
    %1097 = arith.subf %1093, %1096 : vector<3x8xf32>
    %1098 = math.exp %1097 : vector<3x8xf32>
    %cst_389 = arith.constant dense<0.000000e+00> : vector<3xf32>
    %1099 = vector.multi_reduction <add>, %1098, %cst_389 [1] : vector<3x8xf32> to vector<3xf32>
    %1100 = vector.shape_cast %1099 : vector<3xf32> to vector<3x1xf32>
    %1101 = vector.broadcast %1100 : vector<3x1xf32> to vector<3x8xf32>
    %1102 = arith.divf %1098, %1101 : vector<3x8xf32>
    %cst_390 = arith.constant dense<0.000000e+00> : vector<3x32xf32>
    %1103 = tpu.matmul %1102, %432, %cst_390 {dimension_numbers = #tpu.dot_dimension_numbers<[1], [0], [0], [1], [0, 0, 1, 1], [], []>} : vector<3x8xf32>, vector<8x32xf32>, vector<3x32xf32> -> vector<3x32xf32>
    %1104 = vector.shape_cast %1102 : vector<3x8xf32> to vector<3x8x1xf32>
    %1105 = vector.shape_cast %438 : vector<8x128xf32> to vector<1x8x128xf32>
    %1106 = vector.broadcast %1104 : vector<3x8x1xf32> to vector<3x8x128xf32>
    %1107 = vector.broadcast %1105 : vector<1x8x128xf32> to vector<3x8x128xf32>
    %1108 = arith.mulf %1106, %1107 : vector<3x8x128xf32>
    %cst_391 = arith.constant dense<0.000000e+00> : vector<3x128xf32>
    %1109 = vector.multi_reduction <add>, %1108, %cst_391 [1] : vector<3x8x128xf32> to vector<3x128xf32>
    %1110 = vector.extract_strided_slice %1043 {offsets = [3, 0], sizes = [3, 1], strides = [1, 1]} : vector<6x1xf32> to vector<3x1xf32>
    %1111 = vector.broadcast %444 : vector<1x32xf32> to vector<3x32xf32>
    %1112 = arith.mulf %1103, %1111 : vector<3x32xf32>
    %cst_392 = arith.constant dense<0.000000e+00> : vector<3xf32>
    %1113 = vector.multi_reduction <add>, %1112, %cst_392 [1] : vector<3x32xf32> to vector<3xf32>
    %1114 = vector.shape_cast %1113 : vector<3xf32> to vector<3x1xf32>
    %1115 = arith.addf %1110, %1114 : vector<3x1xf32>
    %1116 = arith.negf %1115 : vector<3x1xf32>
    %1117 = math.exp %1116 : vector<3x1xf32>
    %cst_393 = arith.constant 1.000000e+00 : f32
    %1118 = vector.broadcast %cst_393 : f32 to vector<3x1xf32>
    %1119 = arith.addf %1118, %1117 : vector<3x1xf32>
    %1120 = arith.divf %1118, %1119 : vector<3x1xf32>
    %1121 = vector.extract_strided_slice %1032 {offsets = [3, 0], sizes = [3, 128], strides = [1, 1]} : vector<6x128xf32> to vector<3x128xf32>
    %1122 = vector.broadcast %1120 : vector<3x1xf32> to vector<3x128xf32>
    %1123 = arith.mulf %1122, %1121 : vector<3x128xf32>
    %cst_394 = arith.constant 1.000000e+00 : f32
    %1124 = vector.broadcast %cst_394 : f32 to vector<3x1xf32>
    %1125 = arith.subf %1124, %1120 : vector<3x1xf32>
    %1126 = vector.broadcast %1125 : vector<3x1xf32> to vector<3x128xf32>
    %1127 = arith.mulf %1126, %1109 : vector<3x128xf32>
    %1128 = arith.addf %1123, %1127 : vector<3x128xf32>
    %c1_395 = arith.constant 1 : index
    %c0_396 = arith.constant 0 : index
    %c3_397 = arith.constant 3 : index
    %c0_398 = arith.constant 0 : index
    %1129 = vector.load %arg11[%c1_395, %c0_396, %c3_397, %c0_398] : memref<2x3x4x128xf32, #tpu.memory_space<vmem>>, vector<1x3x1x128xf32>
    %1130 = vector.shape_cast %1129 : vector<1x3x1x128xf32> to vector<3x128xf32>
    %1131 = vector.shape_cast %1128 : vector<3x128xf32> to vector<1x3x1x128xf32>
    tpu.vector_store %arg11[%c1_395, %c0_396, %c3_397, %c0_398], %1131 {strides = array<i32>} : memref<2x3x4x128xf32, #tpu.memory_space<vmem>>, vector<1x3x1x128xf32>,
    return
  }
  func.func @transform_0(%arg0: i32) -> (i32, i32) {
    %c0_i32 = arith.constant 0 : i32
    %c0_i32_0 = arith.constant 0 : i32
    %c0_i32_1 = arith.constant 0 : i32
    return %c0_i32, %c0_i32_0 : i32, i32
  }
  func.func @transform_1(%arg0: i32) -> (i32, i32) {
    %c0_i32 = arith.constant 0 : i32
    %c0_i32_0 = arith.constant 0 : i32
    %c0_i32_1 = arith.constant 0 : i32
    return %c0_i32, %c0_i32_0 : i32, i32
  }
  func.func @transform_2(%arg0: i32) -> (i32, i32) {
    %c0_i32 = arith.constant 0 : i32
    %c0_i32_0 = arith.constant 0 : i32
    %c0_i32_1 = arith.constant 0 : i32
    return %c0_i32, %c0_i32_0 : i32, i32
  }
  func.func @transform_3(%arg0: i32) -> (i32, i32) {
    %c0_i32 = arith.constant 0 : i32
    %c0_i32_0 = arith.constant 0 : i32
    %c0_i32_1 = arith.constant 0 : i32
    return %c0_i32, %c0_i32_0 : i32, i32
  }
  func.func @transform_4(%arg0: i32) -> (i32, i32) {
    %c0_i32 = arith.constant 0 : i32
    %c0_i32_0 = arith.constant 0 : i32
    %c0_i32_1 = arith.constant 0 : i32
    return %c0_i32, %c0_i32_0 : i32, i32
  }
  func.func @transform_5(%arg0: i32) -> (i32, i32) {
    %c0_i32 = arith.constant 0 : i32
    %c0_i32_0 = arith.constant 0 : i32
    %c0_i32_1 = arith.constant 0 : i32
    return %c0_i32, %c0_i32_0 : i32, i32
  }
  func.func @transform_6(%arg0: i32) -> (i32, i32) {
    %c0_i32 = arith.constant 0 : i32
    %c0_i32_0 = arith.constant 0 : i32
    %c0_i32_1 = arith.constant 0 : i32
    return %c0_i32, %c0_i32_0 : i32, i32
  }
  func.func @transform_7(%arg0: i32) -> (i32, i32) {
    %c0_i32 = arith.constant 0 : i32
    %c0_i32_0 = arith.constant 0 : i32
    %c0_i32_1 = arith.constant 0 : i32
    return %c0_i32, %c0_i32_0 : i32, i32
  }
  func.func @transform_8(%arg0: i32) -> (i32, i32) {
    %c0_i32 = arith.constant 0 : i32
    %c0_i32_0 = arith.constant 0 : i32
    %c0_i32_1 = arith.constant 0 : i32
    return %c0_i32, %c0_i32_0 : i32, i32
  }
  func.func @transform_9(%arg0: i32) -> (i32, i32) {
    %c0_i32 = arith.constant 0 : i32
    %c0_i32_0 = arith.constant 0 : i32
    %c0_i32_1 = arith.constant 0 : i32
    return %c0_i32, %c0_i32_0 : i32, i32
  }
  func.func @transform_10(%arg0: i32) -> (i32, i32, i32, i32) {
    %c0_i32 = arith.constant 0 : i32
    %c0_i32_0 = arith.constant 0 : i32
    %c0_i32_1 = arith.constant 0 : i32
    %c0_i32_2 = arith.constant 0 : i32
    %c0_i32_3 = arith.constant 0 : i32
    return %c0_i32, %c0_i32_0, %c0_i32_1, %c0_i32_2 : i32, i32, i32, i32
  }
  func.func @transform_11(%arg0: i32) -> (i32, i32, i32) {
    %c0_i32 = arith.constant 0 : i32
    %c0_i32_0 = arith.constant 0 : i32
    %c0_i32_1 = arith.constant 0 : i32
    %c0_i32_2 = arith.constant 0 : i32
    return %c0_i32, %c0_i32_0, %c0_i32_1 : i32, i32, i32
  }
}

</mosaic_0001>

<llo_original>
// kernel: tile.9
$region0: #{tile.9}
  %s0 = inlined_call_operand.vmem [shape: f32[2,3,32], index: 0, kind: input, shape index: {}]
  %s1 = inlined_call_operand.vmem [shape: f32[6,32], index: 1, kind: output, shape index: {}]
  $region1: #{tile.9} parent=0
    #allocation0 [shape = 'u8[8192]{0}', space=vmem, size = 0x2000, scoped, tag = 'scoped mem for input reshape']
    %s3 = sshllo.u32 0, 4
    %s4 = scalar_lea.vmem %s0, 4
    %v5 = vld [vmem:[%s4] sm:%s3]
    %s6 = scalar_lea.vmem [#allocation0], 8
    %7 = vst [vmem:[%s6] sm:%s3] %v5
    %v8 = vld [vmem:[%s0] sm:%s3]
    %9 = vst [vmem:[#allocation0] sm:%s3] %v8
    %v10 = vld [vmem:[#allocation0] sm:$0x7]
    %vm11 = vcmask 261120
    %12 = vst.msk [vmem:[%s1] sm:$0x7] %vm11, %v10
    %s13 = scalar_lea.vmem [#allocation0], 8
    %v14 = vld [vmem:[%s13] sm:$0x7]
    %vm15 = vcmask 261120
    %s16 = scalar_lea.vmem %s1, 3
    %17 = vst.msk [vmem:[%s16] sm:$0x7] %vm15, %v14

// kernel: trade_bert_forward.1
$region0: #{trade_bert_forward.1}
  #allocation0 [shape = 'u32[]', space=smem, size = 0x4, offset = 0x4, fixed_abs, tag = 'smem constant byte address 0x4 - core index']
  #allocation1 [shape = 'u32[144,128]{1,0:T(1,128)}', space=vmem, size = 0x12000, scoped, tag = 'internal scratch']
  #allocation2 [shape = 'f32[16,32]{1,0:T(8,128)}', space=vmem, size = 0x2000, scoped, tag = 'scratch operand']
  %s0 = inlined_call_operand.vmem [shape: f32[16,32], index: 0, kind: input, shape index: {}]
  %s1 = inlined_call_operand.vmem [shape: f32[2,8], index: 1, kind: input, shape index: {}]
  %s2 = inlined_call_operand.vmem [shape: f32[16,1], index: 2, kind: input, shape index: {}]
  %s3 = inlined_call_operand.vmem [shape: f32[6,32], index: 3, kind: input, shape index: {}]
  %s4 = inlined_call_operand.vmem [shape: f32[128,32], index: 4, kind: input, shape index: {}]
  %s5 = inlined_call_operand.vmem [shape: f32[32,128], index: 5, kind: input, shape index: {}]
  %s6 = inlined_call_operand.vmem [shape: f32[352,96], index: 6, kind: input, shape index: {}]
  %s7 = inlined_call_operand.vmem [shape: f32[19,96], index: 7, kind: input, shape index: {}]
  %s8 = inlined_call_operand.vmem [shape: f32[96,96], index: 8, kind: input, shape index: {}]
  %s9 = inlined_call_operand.vmem [shape: f32[4,96], index: 9, kind: input, shape index: {}]
  %s10 = inlined_call_operand.hbm [shape: f32[2,3,4,128], index: 10, kind: output, shape index: {0}]
  %s11 = inlined_call_operand.vmem [shape: f32[2,3,3], index: 11, kind: output, shape index: {1}]
  %12 = xla_tuple %s10, %s11
  %s13 = sld [smem:[#allocation0]]
  $region58: #{trade_bert_forward.1} parent=0
    _
  %s15 = ssub.s32 1, %s13
  %s16 = scalar_select 0, %s15, %s13
  $region1: #{trade_bert_forward.1} parent=0
    #allocation3 [shape = 'u8[12288]{0}', space=vmem, size = 0x3000, scoped, tag = 'output window, operand 0, single buffered']
    #allocation4 [shape = 's32[1]{0}', space=sflag, size = 0x4, scoped, tag = 'scoped memory for trade_bert_forward.1']
    %17 = vsyncpa [#allocation4], 0
    // Predicated region
    $region2: #{trade_bert_forward.1} parent=1 // pred_check
      _
    $region3: #{trade_bert_forward.1} parent=1 // pred_check_branch
      %19 = sbr.rel (0) target = $region5
    $region4: #{trade_bert_forward.1} parent=1 // pred_region
      _
    $region5: #{trade_bert_forward.1} parent=1 // pred_fallthru
      _
    // Predicated region
    $region6: #{trade_bert_forward.1} parent=1 // pred_check
      _
    $region7: #{trade_bert_forward.1} parent=1 // pred_check_branch
      %21 = sbr.rel (0) target = $region9
    $region8: #{trade_bert_forward.1} parent=1 // pred_region
      _
    $region9: #{trade_bert_forward.1} parent=1 // pred_fallthru
      _
    // Predicated region
    $region10: #{trade_bert_forward.1} parent=1 // pred_check
      _
    $region11: #{trade_bert_forward.1} parent=1 // pred_check_branch
      %23 = sbr.rel (0) target = $region13
    $region12: #{trade_bert_forward.1} parent=1 // pred_region
      _
    $region13: #{trade_bert_forward.1} parent=1 // pred_fallthru
      _
    // Predicated region
    $region14: #{trade_bert_forward.1} parent=1 // pred_check
      _
    $region15: #{trade_bert_forward.1} parent=1 // pred_check_branch
      %25 = sbr.rel (0) target = $region17
    $region16: #{trade_bert_forward.1} parent=1 // pred_region
      _
    $region17: #{trade_bert_forward.1} parent=1 // pred_fallthru
      _
    // Predicated region
    $region18: #{trade_bert_forward.1} parent=1 // pred_check
      _
    $region19: #{trade_bert_forward.1} parent=1 // pred_check_branch
      %27 = sbr.rel (0) target = $region21
    $region20: #{trade_bert_forward.1} parent=1 // pred_region
      _
    $region21: #{trade_bert_forward.1} parent=1 // pred_fallthru
      _
    // Predicated region
    $region22: #{trade_bert_forward.1} parent=1 // pred_check
      _
    $region23: #{trade_bert_forward.1} parent=1 // pred_check_branch
      %29 = sbr.rel (0) target = $region25
    $region24: #{trade_bert_forward.1} parent=1 // pred_region
      _
    $region25: #{trade_bert_forward.1} parent=1 // pred_fallthru
      _
    // Predicated region
    $region26: #{trade_bert_forward.1} parent=1 // pred_check
      _
    $region27: #{trade_bert_forward.1} parent=1 // pred_check_branch
      %31 = sbr.rel (0) target = $region29
    $region28: #{trade_bert_forward.1} parent=1 // pred_region
      _
    $region29: #{trade_bert_forward.1} parent=1 // pred_fallthru
      _
    // Predicated region
    $region30: #{trade_bert_forward.1} parent=1 // pred_check
      _
    $region31: #{trade_bert_forward.1} parent=1 // pred_check_branch
      %33 = sbr.rel (0) target = $region33
    $region32: #{trade_bert_forward.1} parent=1 // pred_region
      _
    $region33: #{trade_bert_forward.1} parent=1 // pred_fallthru
      _
    // Predicated region
    $region34: #{trade_bert_forward.1} parent=1 // pred_check
      _
    $region35: #{trade_bert_forward.1} parent=1 // pred_check_branch
      %35 = sbr.rel (0) target = $region37
    $region36: #{trade_bert_forward.1} parent=1 // pred_region
      _
    $region37: #{trade_bert_forward.1} parent=1 // pred_fallthru
      _
    // Predicated region
    $region38: #{trade_bert_forward.1} parent=1 // pred_check
      _
    $region39: #{trade_bert_forward.1} parent=1 // pred_check_branch
      %37 = sbr.rel (0) target = $region41
    $region40: #{trade_bert_forward.1} parent=1 // pred_region
      _
    $region41: #{trade_bert_forward.1} parent=1 // pred_fallthru
      _
    %v38 = vld [vmem:[%s1] sm:$0x3]
    %v39 = vsub.f32 1.0, %v38
    %v40 = vmul.f32 %v39, -10000.0
    %v41 = vld [vmem:[%s0] sm:$0xff]
    %v42 = vld [vmem:[%s0 + $0x8] sm:$0xff]
    %v43 = vld [vmem:[%s7] sm:$0x1]
    %v44 = vld [vmem:[%s7 + $0x1] sm:$0x1]
    %vm45 = vcmask 261120
    %v46 = vsel %vm45, %v41, 0.0
    %47 = vadd.xlane.f32.xlu0 %v46
    %v48 = vpop.xlane.xlu0 %47
    %v49 = vsel %vm45, %v42, 0.0
    %50 = vadd.xlane.f32.xlu0 %v49
    %v51 = vpop.xlane.xlu0 %50
    %v52 = vrcp.pop 32.0
    %v53 = vmul.f32 %v48, %v52
    %v54 = vmul.f32 %v51, %v52
    %v55 = vsub.f32 %v41, %v53
    %v56 = vsub.f32 %v42, %v54
    %v57 = vmul.f32 %v55, %v55
    %v58 = vmul.f32 %v56, %v56
    %v59 = vsel %vm45, %v57, 0.0
    %60 = vadd.xlane.f32.xlu0 %v59
    %v61 = vpop.xlane.xlu0 %60
    %v62 = vsel %vm45, %v58, 0.0
    %63 = vadd.xlane.f32.xlu0 %v62
    %v64 = vpop.xlane.xlu0 %63
    %v65 = vmul.f32 %v61, %v52
    %v66 = vmul.f32 %v64, %v52
    %v67 = vadd.f32 %v65, 1e-12
    %v68 = vadd.f32 %v66, 1e-12
    %v69 = vrsqrt.pop %v67
    %v70 = vrsqrt.pop %v68
    %v71 = vmul.f32 %v55, %v69
    %v72 = vmul.f32 %v56, %v70
    %v73 = vlaneseq
    %v74 = vshrl.u32 %v73, 7
    %v75 = vsub.s32 0, %v74
    %v76 = vrot.slane %v43, %v75
    %v77 = vmul.f32 %v71, %v76
    %v78 = vmul.f32 %v72, %v76
    %v79 = vlaneseq
    %v80 = vshrl.u32 %v79, 7
    %v81 = vsub.s32 0, %v80
    %v82 = vrot.slane %v44, %v81
    %v83 = vadd.f32 %v77, %v82
    %v84 = vadd.f32 %v78, %v82
    %v85 = vld [vmem:[%s6] sm:$0xff]
    %v86 = vld [vmem:[%s6 + $0x8] sm:$0xff]
    %v87 = vld [vmem:[%s6 + $0x10] sm:$0xff]
    %v88 = vld [vmem:[%s6 + $0x18] sm:$0xff]
    %v89 = vld [vmem:[%s7 + $0x2] sm:$0x1]
    %v90 = vlaneseq
    %v91 = vshrl.u32 %v90, 7
    %v92 = vsub.s32 0, %v91
    %v93 = vrot.slane %v89, %v92
    %v95 = vsel %vm45, %v83, 0
    %v98 = vsel %vm45, %v84, 0
    %100 = vmatprep.subr.mxu0 0.0
    %101 = vmatpush1.msra.mxu0 %v85
    %102 = vmatprep.subr.mxu0 0.0
    %103 = vmatpush1.msra.mxu0 %v86
    %104 = vmatprep.subr.mxu0 0.0
    %105 = vmatpush1.msra.mxu0 %v87
    %106 = vmatprep.subr.mxu0 0.0
    %107 = vmatpush1.msra.mxu0 %v88
    %108 = vmatprep.subr.mxu0 0.0
    %109 = vmatpush1.msra.mxu0 0.0
    %110 = vmatprep.subr.mxu0 0.0
    %111 = vmatpush1.msra.mxu0 0.0
    %112 = vmatprep.subr.mxu0 0.0
    %113 = vmatpush1.msra.mxu0 0.0
    %114 = vmatprep.subr.mxu0 0.0
    %115 = vmatpush1.msra.mxu0 0.0
    %116 = vmatprep.subr.mxu0 0.0
    %117 = vmatpush1.msra.mxu0 0.0
    %118 = vmatprep.subr.mxu0 0.0
    %119 = vmatpush1.msra.mxu0 0.0
    %120 = vmatprep.subr.mxu0 0.0
    %121 = vmatpush1.msra.mxu0 0.0
    %122 = vmatprep.subr.mxu0 0.0
    %123 = vmatpush1.msra.mxu0 0.0
    %124 = vmatprep.subr.mxu0 0.0
    %125 = vmatpush1.msra.mxu0 0.0
    %126 = vmatprep.subr.mxu0 0.0
    %127 = vmatpush1.msra.mxu0 0.0
    %128 = vmatprep.subr.mxu0 0.0
    %129 = vmatpush1.msra.mxu0 0.0
    %130 = vmatprep.subr.mxu0 0.0
    %131 = vmatpush1.msra.mxu0 0.0
    %132 = vmatprep.subr.mxu0 0.0
    %133 = vmatpush1.msra.mxu0 0.0
    %134 = vmatprep.subr.mxu0 0.0
    %135 = vmatpush1.msra.mxu0 0.0
    %136 = vmatprep.subr.mxu0 0.0
    %137 = vmatpush1.msra.mxu0 0.0
    %138 = vmatprep.subr.mxu0 0.0
    %139 = vmatpush1.msra.mxu0 0.0
    %140 = vmatprep.subr.mxu0 0.0
    %141 = vmatpush1.msra.mxu0 0.0
    %142 = vmatprep.subr.mxu0 0.0
    %143 = vmatpush1.msra.mxu0 0.0
    %144 = vmatprep.subr.mxu0 0.0
    %145 = vmatpush1.msra.mxu0 0.0
    %146 = vmatprep.subr.mxu0 0.0
    %147 = vmatpush1.msra.mxu0 0.0
    %148 = vmatprep.subr.mxu0 0.0
    %149 = vmatpush1.msra.mxu0 0.0
    %150 = vmatprep.subr.mxu0 0.0
    %151 = vmatpush1.msra.mxu0 0.0
    %152 = vmatprep.subr.mxu0 0.0
    %153 = vmatpush1.msra.mxu0 0.0
    %154 = vmatprep.subr.mxu0 0.0
    %155 = vmatpush1.msra.mxu0 0.0
    %156 = vmatprep.subr.mxu0 0.0
    %157 = vmatpush1.msra.mxu0 0.0
    %158 = vmatprep.subr.mxu0 0.0
    %159 = vmatpush1.msra.mxu0 0.0
    %160 = vmatprep.subr.mxu0 0.0
    %161 = vmatpush1.msra.mxu0 0.0
    %162 = vmatprep.subr.mxu0 0.0
    %163 = vmatpush1.msra.mxu0 0.0
    %164 = vmatprep.mubr.f32.mxu0 0.0
    %165 = vmatmul.mubr.f32.gmra.mrb[0].mxu0 %v95
    %v166 = vpop.f32.mrb[0].mxu0
    %v167 = vadd.f32 %v93, %v166
    %v168 = vpop.f32.mrb[0].mxu0
    %169 = vmatprep.mubr.f32.mxu0 0.0
    %170 = vmatmul.mubr.f32.gmra.mrb[0].mxu0 %v98
    %v171 = vpop.f32.mrb[0].mxu0
    %v172 = vadd.f32 %v93, %v171
    %v173 = vpop.f32.mrb[0].mxu0
    %174 = vdwg.mxu0
    %176 = vrot.lane.b32.xlu0 %v167, 96
    %v177 = vpop.permute.xlu0 %176
    %vm178 = vcmask 130048
    %v179 = vsel %vm178, %v167, 0
    %v181 = vsel %vm178, %v177, 0
    %183 = vmatprep.subr.mxu0 0.0
    %184 = vmatpush1.xpose.msra.mxu0 %v181
    %185 = vmatprep.subr.mxu0 0.0
    %186 = vmatpush1.xpose.msra.mxu0 0.0
    %187 = vmatprep.subr.mxu0 0.0
    %188 = vmatpush1.xpose.msra.mxu0 0.0
    %189 = vmatprep.subr.mxu0 0.0
    %190 = vmatpush1.xpose.msra.mxu0 0.0
    %191 = vmatprep.subr.mxu0 0.0
    %192 = vmatpush1.xpose.msra.mxu0 0.0
    %193 = vmatprep.subr.mxu0 0.0
    %194 = vmatpush1.xpose.msra.mxu0 0.0
    %195 = vmatprep.subr.mxu0 0.0
    %196 = vmatpush1.xpose.msra.mxu0 0.0
    %197 = vmatprep.subr.mxu0 0.0
    %198 = vmatpush1.xpose.msra.mxu0 0.0
    %199 = vmatprep.subr.mxu0 0.0
    %200 = vmatpush1.xpose.msra.mxu0 0.0
    %201 = vmatprep.subr.mxu0 0.0
    %202 = vmatpush1.xpose.msra.mxu0 0.0
    %203 = vmatprep.subr.mxu0 0.0
    %204 = vmatpush1.xpose.msra.mxu0 0.0
    %205 = vmatprep.subr.mxu0 0.0
    %206 = vmatpush1.xpose.msra.mxu0 0.0
    %207 = vmatprep.subr.mxu0 0.0
    %208 = vmatpush1.xpose.msra.mxu0 0.0
    %209 = vmatprep.subr.mxu0 0.0
    %210 = vmatpush1.xpose.msra.mxu0 0.0
    %211 = vmatprep.subr.mxu0 0.0
    %212 = vmatpush1.xpose.msra.mxu0 0.0
    %213 = vmatprep.subr.mxu0 0.0
    %214 = vmatpush1.xpose.msra.mxu0 0.0
    %215 = vmatprep.subr.mxu0 0.0
    %216 = vmatpush1.xpose.msra.mxu0 0.0
    %217 = vmatprep.subr.mxu0 0.0
    %218 = vmatpush1.xpose.msra.mxu0 0.0
    %219 = vmatprep.subr.mxu0 0.0
    %220 = vmatpush1.xpose.msra.mxu0 0.0
    %221 = vmatprep.subr.mxu0 0.0
    %222 = vmatpush1.xpose.msra.mxu0 0.0
    %223 = vmatprep.subr.mxu0 0.0
    %224 = vmatpush1.xpose.msra.mxu0 0.0
    %225 = vmatprep.subr.mxu0 0.0
    %226 = vmatpush1.xpose.msra.mxu0 0.0
    %227 = vmatprep.subr.mxu0 0.0
    %228 = vmatpush1.xpose.msra.mxu0 0.0
    %229 = vmatprep.subr.mxu0 0.0
    %230 = vmatpush1.xpose.msra.mxu0 0.0
    %231 = vmatprep.subr.mxu0 0.0
    %232 = vmatpush1.xpose.msra.mxu0 0.0
    %233 = vmatprep.subr.mxu0 0.0
    %234 = vmatpush1.xpose.msra.mxu0 0.0
    %235 = vmatprep.subr.mxu0 0.0
    %236 = vmatpush1.xpose.msra.mxu0 0.0
    %237 = vmatprep.subr.mxu0 0.0
    %238 = vmatpush1.xpose.msra.mxu0 0.0
    %239 = vmatprep.subr.mxu0 0.0
    %240 = vmatpush1.xpose.msra.mxu0 0.0
    %241 = vmatprep.subr.mxu0 0.0
    %242 = vmatpush1.xpose.msra.mxu0 0.0
    %243 = vmatprep.subr.mxu0 0.0
    %244 = vmatpush1.xpose.msra.mxu0 0.0
    %245 = vmatprep.subr.mxu0 0.0
    %246 = vmatpush1.xpose.msra.mxu0 0.0
    %247 = vmatprep.mubr.f32.mxu0 0.0
    %248 = vmatmul.mubr.f32.gmra.mrb[0].mxu0 %v179
    %v249 = vpop.f32.mrb[0].mxu0
    %v250 = vadd.f32 0.0, %v249
    %v251 = vpop.f32.mrb[0].mxu0
    %252 = vdwg.mxu0
    %v253 = vmul.f32 %v250, 0.25
    %v254 = vlaneseq
    %v255 = vshrl.u32 %v254, 7
    %v256 = vsub.s32 0, %v255
    %v257 = vrot.slane %v40, %v256
    %v258 = vadd.f32 %v253, %v257
    %vm259 = vcmask 64512
    %v260 = vsel %vm259, %v258, -inf
    %261 = vmax.xlane.f32.xlu0 %v260
    %v262 = vpop.xlane.xlu0 %261
    %v263 = vsub.f32 %v258, %v262
    %v264 = vmul.f32 %v263, 1.442695
    %v265 = vpow.pop %v264
    %v266 = vsel %vm259, %v265, 0.0
    %267 = vadd.xlane.f32.xlu0 %v266
    %v268 = vpop.xlane.xlu0 %267
    %v269 = vrcp.pop %v268
    %v270 = vmul.f32 %v265, %v269
    %271 = vrot.lane.b32.xlu0 %v167, 64
    %v272 = vpop.permute.xlu0 %271
    %v275 = vsel %vm259, %v270, 0
    %277 = vmatprep.subr.mxu0 0.0
    %278 = vmatpush1.msra.mxu0 %v272
    %279 = vmatprep.subr.mxu0 0.0
    %280 = vmatpush1.msra.mxu0 0.0
    %281 = vmatprep.subr.mxu0 0.0
    %282 = vmatpush1.msra.mxu0 0.0
    %283 = vmatprep.subr.mxu0 0.0
    %284 = vmatpush1.msra.mxu0 0.0
    %285 = vmatprep.subr.mxu0 0.0
    %286 = vmatpush1.msra.mxu0 0.0
    %287 = vmatprep.subr.mxu0 0.0
    %288 = vmatpush1.msra.mxu0 0.0
    %289 = vmatprep.subr.mxu0 0.0
    %290 = vmatpush1.msra.mxu0 0.0
    %291 = vmatprep.subr.mxu0 0.0
    %292 = vmatpush1.msra.mxu0 0.0
    %293 = vmatprep.subr.mxu0 0.0
    %294 = vmatpush1.msra.mxu0 0.0
    %295 = vmatprep.subr.mxu0 0.0
    %296 = vmatpush1.msra.mxu0 0.0
    %297 = vmatprep.subr.mxu0 0.0
    %298 = vmatpush1.msra.mxu0 0.0
    %299 = vmatprep.subr.mxu0 0.0
    %300 = vmatpush1.msra.mxu0 0.0
    %301 = vmatprep.subr.mxu0 0.0
    %302 = vmatpush1.msra.mxu0 0.0
    %303 = vmatprep.subr.mxu0 0.0
    %304 = vmatpush1.msra.mxu0 0.0
    %305 = vmatprep.subr.mxu0 0.0
    %306 = vmatpush1.msra.mxu0 0.0
    %307 = vmatprep.subr.mxu0 0.0
    %308 = vmatpush1.msra.mxu0 0.0
    %309 = vmatprep.subr.mxu0 0.0
    %310 = vmatpush1.msra.mxu0 0.0
    %311 = vmatprep.subr.mxu0 0.0
    %312 = vmatpush1.msra.mxu0 0.0
    %313 = vmatprep.subr.mxu0 0.0
    %314 = vmatpush1.msra.mxu0 0.0
    %315 = vmatprep.subr.mxu0 0.0
    %316 = vmatpush1.msra.mxu0 0.0
    %317 = vmatprep.subr.mxu0 0.0
    %318 = vmatpush1.msra.mxu0 0.0
    %319 = vmatprep.subr.mxu0 0.0
    %320 = vmatpush1.msra.mxu0 0.0
    %321 = vmatprep.subr.mxu0 0.0
    %322 = vmatpush1.msra.mxu0 0.0
    %323 = vmatprep.subr.mxu0 0.0
    %324 = vmatpush1.msra.mxu0 0.0
    %325 = vmatprep.subr.mxu0 0.0
    %326 = vmatpush1.msra.mxu0 0.0
    %327 = vmatprep.subr.mxu0 0.0
    %328 = vmatpush1.msra.mxu0 0.0
    %329 = vmatprep.subr.mxu0 0.0
    %330 = vmatpush1.msra.mxu0 0.0
    %331 = vmatprep.subr.mxu0 0.0
    %332 = vmatpush1.msra.mxu0 0.0
    %333 = vmatprep.subr.mxu0 0.0
    %334 = vmatpush1.msra.mxu0 0.0
    %335 = vmatprep.subr.mxu0 0.0
    %336 = vmatpush1.msra.mxu0 0.0
    %337 = vmatprep.subr.mxu0 0.0
    %338 = vmatpush1.msra.mxu0 0.0
    %339 = vmatprep.subr.mxu0 0.0
    %340 = vmatpush1.msra.mxu0 0.0
    %341 = vmatprep.mubr.f32.mxu0 0.0
    %342 = vmatmul.mubr.f32.gmra.mrb[0].mxu0 %v275
    %v343 = vpop.f32.mrb[0].mxu0
    %v344 = vadd.f32 0.0, %v343
    %v345 = vpop.f32.mrb[0].mxu0
    %346 = vdwg.mxu0
    %347 = vst.msk [vmem:[#allocation2] sm:$0xff] %vm178, %v344
    %348 = vrot.lane.b32.xlu0 %v167, 112
    %v349 = vpop.permute.xlu0 %348
    %350 = vrot.lane.b32.xlu0 %v167, 80
    %v351 = vpop.permute.xlu0 %350
    %v352 = vsel %vm178, %v349, 0
    %v354 = vsel %vm178, %v351, 0
    %356 = vmatprep.subr.mxu0 0.0
    %357 = vmatpush1.xpose.msra.mxu0 %v354
    %358 = vmatprep.subr.mxu0 0.0
    %359 = vmatpush1.xpose.msra.mxu0 0.0
    %360 = vmatprep.subr.mxu0 0.0
    %361 = vmatpush1.xpose.msra.mxu0 0.0
    %362 = vmatprep.subr.mxu0 0.0
    %363 = vmatpush1.xpose.msra.mxu0 0.0
    %364 = vmatprep.subr.mxu0 0.0
    %365 = vmatpush1.xpose.msra.mxu0 0.0
    %366 = vmatprep.subr.mxu0 0.0
    %367 = vmatpush1.xpose.msra.mxu0 0.0
    %368 = vmatprep.subr.mxu0 0.0
    %369 = vmatpush1.xpose.msra.mxu0 0.0
    %370 = vmatprep.subr.mxu0 0.0
    %371 = vmatpush1.xpose.msra.mxu0 0.0
    %372 = vmatprep.subr.mxu0 0.0
    %373 = vmatpush1.xpose.msra.mxu0 0.0
    %374 = vmatprep.subr.mxu0 0.0
    %375 = vmatpush1.xpose.msra.mxu0 0.0
    %376 = vmatprep.subr.mxu0 0.0
    %377 = vmatpush1.xpose.msra.mxu0 0.0
    %378 = vmatprep.subr.mxu0 0.0
    %379 = vmatpush1.xpose.msra.mxu0 0.0
    %380 = vmatprep.subr.mxu0 0.0
    %381 = vmatpush1.xpose.msra.mxu0 0.0
    %382 = vmatprep.subr.mxu0 0.0
    %383 = vmatpush1.xpose.msra.mxu0 0.0
    %384 = vmatprep.subr.mxu0 0.0
    %385 = vmatpush1.xpose.msra.mxu0 0.0
    %386 = vmatprep.subr.mxu0 0.0
    %387 = vmatpush1.xpose.msra.mxu0 0.0
    %388 = vmatprep.subr.mxu0 0.0
    %389 = vmatpush1.xpose.msra.mxu0 0.0
    %390 = vmatprep.subr.mxu0 0.0
    %391 = vmatpush1.xpose.msra.mxu0 0.0
    %392 = vmatprep.subr.mxu0 0.0
    %393 = vmatpush1.xpose.msra.mxu0 0.0
    %394 = vmatprep.subr.mxu0 0.0
    %395 = vmatpush1.xpose.msra.mxu0 0.0
    %396 = vmatprep.subr.mxu0 0.0
    %397 = vmatpush1.xpose.msra.mxu0 0.0
    %398 = vmatprep.subr.mxu0 0.0
    %399 = vmatpush1.xpose.msra.mxu0 0.0
    %400 = vmatprep.subr.mxu0 0.0
    %401 = vmatpush1.xpose.msra.mxu0 0.0
    %402 = vmatprep.subr.mxu0 0.0
    %403 = vmatpush1.xpose.msra.mxu0 0.0
    %404 = vmatprep.subr.mxu0 0.0
    %405 = vmatpush1.xpose.msra.mxu0 0.0
    %406 = vmatprep.subr.mxu0 0.0
    %407 = vmatpush1.xpose.msra.mxu0 0.0
    %408 = vmatprep.subr.mxu0 0.0
    %409 = vmatpush1.xpose.msra.mxu0 0.0
    %410 = vmatprep.subr.mxu0 0.0
    %411 = vmatpush1.xpose.msra.mxu0 0.0
    %412 = vmatprep.subr.mxu0 0.0
    %413 = vmatpush1.xpose.msra.mxu0 0.0
    %414 = vmatprep.subr.mxu0 0.0
    %415 = vmatpush1.xpose.msra.mxu0 0.0
    %416 = vmatprep.subr.mxu0 0.0
    %417 = vmatpush1.xpose.msra.mxu0 0.0
    %418 = vmatprep.subr.mxu0 0.0
    %419 = vmatpush1.xpose.msra.mxu0 0.0
    %420 = vmatprep.mubr.f32.mxu0 0.0
    %421 = vmatmul.mubr.f32.gmra.mrb[0].mxu0 %v352
    %v422 = vpop.f32.mrb[0].mxu0
    %v423 = vadd.f32 0.0, %v422
    %v424 = vpop.f32.mrb[0].mxu0
    %425 = vdwg.mxu0
    %v426 = vmul.f32 %v423, 0.25
    %v427 = vadd.f32 %v426, %v257
    %v428 = vsel %vm259, %v427, -inf
    %429 = vmax.xlane.f32.xlu0 %v428
    %v430 = vpop.xlane.xlu0 %429
    %v431 = vsub.f32 %v427, %v430
    %v432 = vmul.f32 %v431, 1.442695
    %v433 = vpow.pop %v432
    %v434 = vsel %vm259, %v433, 0.0
    %435 = vadd.xlane.f32.xlu0 %v434
    %v436 = vpop.xlane.xlu0 %435
    %v437 = vrcp.pop %v436
    %v438 = vmul.f32 %v433, %v437
    %439 = vrot.lane.b32.xlu0 %v167, 48
    %v440 = vpop.permute.xlu0 %439
    %v443 = vsel %vm259, %v438, 0
    %445 = vmatprep.subr.mxu0 0.0
    %446 = vmatpush1.msra.mxu0 %v440
    %447 = vmatprep.subr.mxu0 0.0
    %448 = vmatpush1.msra.mxu0 0.0
    %449 = vmatprep.subr.mxu0 0.0
    %450 = vmatpush1.msra.mxu0 0.0
    %451 = vmatprep.subr.mxu0 0.0
    %452 = vmatpush1.msra.mxu0 0.0
    %453 = vmatprep.subr.mxu0 0.0
    %454 = vmatpush1.msra.mxu0 0.0
    %455 = vmatprep.subr.mxu0 0.0
    %456 = vmatpush1.msra.mxu0 0.0
    %457 = vmatprep.subr.mxu0 0.0
    %458 = vmatpush1.msra.mxu0 0.0
    %459 = vmatprep.subr.mxu0 0.0
    %460 = vmatpush1.msra.mxu0 0.0
    %461 = vmatprep.subr.mxu0 0.0
    %462 = vmatpush1.msra.mxu0 0.0
    %463 = vmatprep.subr.mxu0 0.0
    %464 = vmatpush1.msra.mxu0 0.0
    %465 = vmatprep.subr.mxu0 0.0
    %466 = vmatpush1.msra.mxu0 0.0
    %467 = vmatprep.subr.mxu0 0.0
    %468 = vmatpush1.msra.mxu0 0.0
    %469 = vmatprep.subr.mxu0 0.0
    %470 = vmatpush1.msra.mxu0 0.0
    %471 = vmatprep.subr.mxu0 0.0
    %472 = vmatpush1.msra.mxu0 0.0
    %473 = vmatprep.subr.mxu0 0.0
    %474 = vmatpush1.msra.mxu0 0.0
    %475 = vmatprep.subr.mxu0 0.0
    %476 = vmatpush1.msra.mxu0 0.0
    %477 = vmatprep.subr.mxu0 0.0
    %478 = vmatpush1.msra.mxu0 0.0
    %479 = vmatprep.subr.mxu0 0.0
    %480 = vmatpush1.msra.mxu0 0.0
    %481 = vmatprep.subr.mxu0 0.0
    %482 = vmatpush1.msra.mxu0 0.0
    %483 = vmatprep.subr.mxu0 0.0
    %484 = vmatpush1.msra.mxu0 0.0
    %485 = vmatprep.subr.mxu0 0.0
    %486 = vmatpush1.msra.mxu0 0.0
    %487 = vmatprep.subr.mxu0 0.0
    %488 = vmatpush1.msra.mxu0 0.0
    %489 = vmatprep.subr.mxu0 0.0
    %490 = vmatpush1.msra.mxu0 0.0
    %491 = vmatprep.subr.mxu0 0.0
    %492 = vmatpush1.msra.mxu0 0.0
    %493 = vmatprep.subr.mxu0 0.0
    %494 = vmatpush1.msra.mxu0 0.0
    %495 = vmatprep.subr.mxu0 0.0
    %496 = vmatpush1.msra.mxu0 0.0
    %497 = vmatprep.subr.mxu0 0.0
    %498 = vmatpush1.msra.mxu0 0.0
    %499 = vmatprep.subr.mxu0 0.0
    %500 = vmatpush1.msra.mxu0 0.0
    %501 = vmatprep.subr.mxu0 0.0
    %502 = vmatpush1.msra.mxu0 0.0
    %503 = vmatprep.subr.mxu0 0.0
    %504 = vmatpush1.msra.mxu0 0.0
    %505 = vmatprep.subr.mxu0 0.0
    %506 = vmatpush1.msra.mxu0 0.0
    %507 = vmatprep.subr.mxu0 0.0
    %508 = vmatpush1.msra.mxu0 0.0
    %509 = vmatprep.mubr.f32.mxu0 0.0
    %510 = vmatmul.mubr.f32.gmra.mrb[0].mxu0 %v443
    %v511 = vpop.f32.mrb[0].mxu0
    %v512 = vadd.f32 0.0, %v511
    %v513 = vpop.f32.mrb[0].mxu0
    %514 = vdwg.mxu0
    %516 = vrot.lane.b32.xlu0 %v512, 16
    %v517 = vpop.permute.xlu0 %516
    %vm519 = vcmask 261248
    %520 = vst.msk [vmem:[#allocation2] sm:$0xff] %vm519, %v517
    %522 = vrot.lane.b32.xlu0 %v172, 96
    %v523 = vpop.permute.xlu0 %522
    %v524 = vsel %vm178, %v172, 0
    %v526 = vsel %vm178, %v523, 0
    %528 = vmatprep.subr.mxu0 0.0
    %529 = vmatpush1.xpose.msra.mxu0 %v526
    %530 = vmatprep.subr.mxu0 0.0
    %531 = vmatpush1.xpose.msra.mxu0 0.0
    %532 = vmatprep.subr.mxu0 0.0
    %533 = vmatpush1.xpose.msra.mxu0 0.0
    %534 = vmatprep.subr.mxu0 0.0
    %535 = vmatpush1.xpose.msra.mxu0 0.0
    %536 = vmatprep.subr.mxu0 0.0
    %537 = vmatpush1.xpose.msra.mxu0 0.0
    %538 = vmatprep.subr.mxu0 0.0
    %539 = vmatpush1.xpose.msra.mxu0 0.0
    %540 = vmatprep.subr.mxu0 0.0
    %541 = vmatpush1.xpose.msra.mxu0 0.0
    %542 = vmatprep.subr.mxu0 0.0
    %543 = vmatpush1.xpose.msra.mxu0 0.0
    %544 = vmatprep.subr.mxu0 0.0
    %545 = vmatpush1.xpose.msra.mxu0 0.0
    %546 = vmatprep.subr.mxu0 0.0
    %547 = vmatpush1.xpose.msra.mxu0 0.0
    %548 = vmatprep.subr.mxu0 0.0
    %549 = vmatpush1.xpose.msra.mxu0 0.0
    %550 = vmatprep.subr.mxu0 0.0
    %551 = vmatpush1.xpose.msra.mxu0 0.0
    %552 = vmatprep.subr.mxu0 0.0
    %553 = vmatpush1.xpose.msra.mxu0 0.0
    %554 = vmatprep.subr.mxu0 0.0
    %555 = vmatpush1.xpose.msra.mxu0 0.0
    %556 = vmatprep.subr.mxu0 0.0
    %557 = vmatpush1.xpose.msra.mxu0 0.0
    %558 = vmatprep.subr.mxu0 0.0
    %559 = vmatpush1.xpose.msra.mxu0 0.0
    %560 = vmatprep.subr.mxu0 0.0
    %561 = vmatpush1.xpose.msra.mxu0 0.0
    %562 = vmatprep.subr.mxu0 0.0
    %563 = vmatpush1.xpose.msra.mxu0 0.0
    %564 = vmatprep.subr.mxu0 0.0
    %565 = vmatpush1.xpose.msra.mxu0 0.0
    %566 = vmatprep.subr.mxu0 0.0
    %567 = vmatpush1.xpose.msra.mxu0 0.0
    %568 = vmatprep.subr.mxu0 0.0
    %569 = vmatpush1.xpose.msra.mxu0 0.0
    %570 = vmatprep.subr.mxu0 0.0
    %571 = vmatpush1.xpose.msra.mxu0 0.0
    %572 = vmatprep.subr.mxu0 0.0
    %573 = vmatpush1.xpose.msra.mxu0 0.0
    %574 = vmatprep.subr.mxu0 0.0
    %575 = vmatpush1.xpose.msra.mxu0 0.0
    %576 = vmatprep.subr.mxu0 0.0
    %577 = vmatpush1.xpose.msra.mxu0 0.0
    %578 = vmatprep.subr.mxu0 0.0
    %579 = vmatpush1.xpose.msra.mxu0 0.0
    %580 = vmatprep.subr.mxu0 0.0
    %581 = vmatpush1.xpose.msra.mxu0 0.0
    %582 = vmatprep.subr.mxu0 0.0
    %583 = vmatpush1.xpose.msra.mxu0 0.0
    %584 = vmatprep.subr.mxu0 0.0
    %585 = vmatpush1.xpose.msra.mxu0 0.0
    %586 = vmatprep.subr.mxu0 0.0
    %587 = vmatpush1.xpose.msra.mxu0 0.0
    %588 = vmatprep.subr.mxu0 0.0
    %589 = vmatpush1.xpose.msra.mxu0 0.0
    %590 = vmatprep.subr.mxu0 0.0
    %591 = vmatpush1.xpose.msra.mxu0 0.0
    %592 = vmatprep.mubr.f32.mxu0 0.0
    %593 = vmatmul.mubr.f32.gmra.mrb[0].mxu0 %v524
    %v594 = vpop.f32.mrb[0].mxu0
    %v595 = vadd.f32 0.0, %v594
    %v596 = vpop.f32.mrb[0].mxu0
    %597 = vdwg.mxu0
    %v598 = vmul.f32 %v595, 0.25
    %v599 = vlaneseq
    %v600 = vshrl.u32 %v599, 7
    %v601 = vsub.s32 1, %v600
    %v602 = vrot.slane %v40, %v601
    %v603 = vadd.f32 %v598, %v602
    %v604 = vsel %vm259, %v603, -inf
    %605 = vmax.xlane.f32.xlu0 %v604
    %v606 = vpop.xlane.xlu0 %605
    %v607 = vsub.f32 %v603, %v606
    %v608 = vmul.f32 %v607, 1.442695
    %v609 = vpow.pop %v608
    %v610 = vsel %vm259, %v609, 0.0
    %611 = vadd.xlane.f32.xlu0 %v610
    %v612 = vpop.xlane.xlu0 %611
    %v613 = vrcp.pop %v612
    %v614 = vmul.f32 %v609, %v613
    %615 = vrot.lane.b32.xlu0 %v172, 64
    %v616 = vpop.permute.xlu0 %615
    %v619 = vsel %vm259, %v614, 0
    %621 = vmatprep.subr.mxu0 0.0
    %622 = vmatpush1.msra.mxu0 %v616
    %623 = vmatprep.subr.mxu0 0.0
    %624 = vmatpush1.msra.mxu0 0.0
    %625 = vmatprep.subr.mxu0 0.0
    %626 = vmatpush1.msra.mxu0 0.0
    %627 = vmatprep.subr.mxu0 0.0
    %628 = vmatpush1.msra.mxu0 0.0
    %629 = vmatprep.subr.mxu0 0.0
    %630 = vmatpush1.msra.mxu0 0.0
    %631 = vmatprep.subr.mxu0 0.0
    %632 = vmatpush1.msra.mxu0 0.0
    %633 = vmatprep.subr.mxu0 0.0
    %634 = vmatpush1.msra.mxu0 0.0
    %635 = vmatprep.subr.mxu0 0.0
    %636 = vmatpush1.msra.mxu0 0.0
    %637 = vmatprep.subr.mxu0 0.0
    %638 = vmatpush1.msra.mxu0 0.0
    %639 = vmatprep.subr.mxu0 0.0
    %640 = vmatpush1.msra.mxu0 0.0
    %641 = vmatprep.subr.mxu0 0.0
    %642 = vmatpush1.msra.mxu0 0.0
    %643 = vmatprep.subr.mxu0 0.0
    %644 = vmatpush1.msra.mxu0 0.0
    %645 = vmatprep.subr.mxu0 0.0
    %646 = vmatpush1.msra.mxu0 0.0
    %647 = vmatprep.subr.mxu0 0.0
    %648 = vmatpush1.msra.mxu0 0.0
    %649 = vmatprep.subr.mxu0 0.0
    %650 = vmatpush1.msra.mxu0 0.0
    %651 = vmatprep.subr.mxu0 0.0
    %652 = vmatpush1.msra.mxu0 0.0
    %653 = vmatprep.subr.mxu0 0.0
    %654 = vmatpush1.msra.mxu0 0.0
    %655 = vmatprep.subr.mxu0 0.0
    %656 = vmatpush1.msra.mxu0 0.0
    %657 = vmatprep.subr.mxu0 0.0
    %658 = vmatpush1.msra.mxu0 0.0
    %659 = vmatprep.subr.mxu0 0.0
    %660 = vmatpush1.msra.mxu0 0.0
    %661 = vmatprep.subr.mxu0 0.0
    %662 = vmatpush1.msra.mxu0 0.0
    %663 = vmatprep.subr.mxu0 0.0
    %664 = vmatpush1.msra.mxu0 0.0
    %665 = vmatprep.subr.mxu0 0.0
    %666 = vmatpush1.msra.mxu0 0.0
    %667 = vmatprep.subr.mxu0 0.0
    %668 = vmatpush1.msra.mxu0 0.0
    %669 = vmatprep.subr.mxu0 0.0
    %670 = vmatpush1.msra.mxu0 0.0
    %671 = vmatprep.subr.mxu0 0.0
    %672 = vmatpush1.msra.mxu0 0.0
    %673 = vmatprep.subr.mxu0 0.0
    %674 = vmatpush1.msra.mxu0 0.0
    %675 = vmatprep.subr.mxu0 0.0
    %676 = vmatpush1.msra.mxu0 0.0
    %677 = vmatprep.subr.mxu0 0.0
    %678 = vmatpush1.msra.mxu0 0.0
    %679 = vmatprep.subr.mxu0 0.0
    %680 = vmatpush1.msra.mxu0 0.0
    %681 = vmatprep.subr.mxu0 0.0
    %682 = vmatpush1.msra.mxu0 0.0
    %683 = vmatprep.subr.mxu0 0.0
    %684 = vmatpush1.msra.mxu0 0.0
    %685 = vmatprep.mubr.f32.mxu0 0.0
    %686 = vmatmul.mubr.f32.gmra.mrb[0].mxu0 %v619
    %v687 = vpop.f32.mrb[0].mxu0
    %v688 = vadd.f32 0.0, %v687
    %v689 = vpop.f32.mrb[0].mxu0
    %690 = vdwg.mxu0
    %691 = vst.msk [vmem:[#allocation2 + $0x8] sm:$0xff] %vm178, %v688
    %692 = vrot.lane.b32.xlu0 %v172, 112
    %v693 = vpop.permute.xlu0 %692
    %694 = vrot.lane.b32.xlu0 %v172, 80
    %v695 = vpop.permute.xlu0 %694
    %v696 = vsel %vm178, %v693, 0
    %v698 = vsel %vm178, %v695, 0
    %700 = vmatprep.subr.mxu0 0.0
    %701 = vmatpush1.xpose.msra.mxu0 %v698
    %702 = vmatprep.subr.mxu0 0.0
    %703 = vmatpush1.xpose.msra.mxu0 0.0
    %704 = vmatprep.subr.mxu0 0.0
    %705 = vmatpush1.xpose.msra.mxu0 0.0
    %706 = vmatprep.subr.mxu0 0.0
    %707 = vmatpush1.xpose.msra.mxu0 0.0
    %708 = vmatprep.subr.mxu0 0.0
    %709 = vmatpush1.xpose.msra.mxu0 0.0
    %710 = vmatprep.subr.mxu0 0.0
    %711 = vmatpush1.xpose.msra.mxu0 0.0
    %712 = vmatprep.subr.mxu0 0.0
    %713 = vmatpush1.xpose.msra.mxu0 0.0
    %714 = vmatprep.subr.mxu0 0.0
    %715 = vmatpush1.xpose.msra.mxu0 0.0
    %716 = vmatprep.subr.mxu0 0.0
    %717 = vmatpush1.xpose.msra.mxu0 0.0
    %718 = vmatprep.subr.mxu0 0.0
    %719 = vmatpush1.xpose.msra.mxu0 0.0
    %720 = vmatprep.subr.mxu0 0.0
    %721 = vmatpush1.xpose.msra.mxu0 0.0
    %722 = vmatprep.subr.mxu0 0.0
    %723 = vmatpush1.xpose.msra.mxu0 0.0
    %724 = vmatprep.subr.mxu0 0.0
    %725 = vmatpush1.xpose.msra.mxu0 0.0
    %726 = vmatprep.subr.mxu0 0.0
    %727 = vmatpush1.xpose.msra.mxu0 0.0
    %728 = vmatprep.subr.mxu0 0.0
    %729 = vmatpush1.xpose.msra.mxu0 0.0
    %730 = vmatprep.subr.mxu0 0.0
    %731 = vmatpush1.xpose.msra.mxu0 0.0
    %732 = vmatprep.subr.mxu0 0.0
    %733 = vmatpush1.xpose.msra.mxu0 0.0
    %734 = vmatprep.subr.mxu0 0.0
    %735 = vmatpush1.xpose.msra.mxu0 0.0
    %736 = vmatprep.subr.mxu0 0.0
    %737 = vmatpush1.xpose.msra.mxu0 0.0
    %738 = vmatprep.subr.mxu0 0.0
    %739 = vmatpush1.xpose.msra.mxu0 0.0
    %740 = vmatprep.subr.mxu0 0.0
    %741 = vmatpush1.xpose.msra.mxu0 0.0
    %742 = vmatprep.subr.mxu0 0.0
    %743 = vmatpush1.xpose.msra.mxu0 0.0
    %744 = vmatprep.subr.mxu0 0.0
    %745 = vmatpush1.xpose.msra.mxu0 0.0
    %746 = vmatprep.subr.mxu0 0.0
    %747 = vmatpush1.xpose.msra.mxu0 0.0
    %748 = vmatprep.subr.mxu0 0.0
    %749 = vmatpush1.xpose.msra.mxu0 0.0
    %750 = vmatprep.subr.mxu0 0.0
    %751 = vmatpush1.xpose.msra.mxu0 0.0
    %752 = vmatprep.subr.mxu0 0.0
    %753 = vmatpush1.xpose.msra.mxu0 0.0
    %754 = vmatprep.subr.mxu0 0.0
    %755 = vmatpush1.xpose.msra.mxu0 0.0
    %756 = vmatprep.subr.mxu0 0.0
    %757 = vmatpush1.xpose.msra.mxu0 0.0
    %758 = vmatprep.subr.mxu0 0.0
    %759 = vmatpush1.xpose.msra.mxu0 0.0
    %760 = vmatprep.subr.mxu0 0.0
    %761 = vmatpush1.xpose.msra.mxu0 0.0
    %762 = vmatprep.subr.mxu0 0.0
    %763 = vmatpush1.xpose.msra.mxu0 0.0
    %764 = vmatprep.mubr.f32.mxu0 0.0
    %765 = vmatmul.mubr.f32.gmra.mrb[0].mxu0 %v696
    %v766 = vpop.f32.mrb[0].mxu0
    %v767 = vadd.f32 0.0, %v766
    %v768 = vpop.f32.mrb[0].mxu0
    %769 = vdwg.mxu0
    %v770 = vmul.f32 %v767, 0.25
    %v771 = vadd.f32 %v770, %v602
    %v772 = vsel %vm259, %v771, -inf
    %773 = vmax.xlane.f32.xlu0 %v772
    %v774 = vpop.xlane.xlu0 %773
    %v775 = vsub.f32 %v771, %v774
    %v776 = vmul.f32 %v775, 1.442695
    %v777 = vpow.pop %v776
    %v778 = vsel %vm259, %v777, 0.0
    %779 = vadd.xlane.f32.xlu0 %v778
    %v780 = vpop.xlane.xlu0 %779
    %v781 = vrcp.pop %v780
    %v782 = vmul.f32 %v777, %v781
    %783 = vrot.lane.b32.xlu0 %v172, 48
    %v784 = vpop.permute.xlu0 %783
    %v787 = vsel %vm259, %v782, 0
    %789 = vmatprep.subr.mxu0 0.0
    %790 = vmatpush1.msra.mxu0 %v784
    %791 = vmatprep.subr.mxu0 0.0
    %792 = vmatpush1.msra.mxu0 0.0
    %793 = vmatprep.subr.mxu0 0.0
    %794 = vmatpush1.msra.mxu0 0.0
    %795 = vmatprep.subr.mxu0 0.0
    %796 = vmatpush1.msra.mxu0 0.0
    %797 = vmatprep.subr.mxu0 0.0
    %798 = vmatpush1.msra.mxu0 0.0
    %799 = vmatprep.subr.mxu0 0.0
    %800 = vmatpush1.msra.mxu0 0.0
    %801 = vmatprep.subr.mxu0 0.0
    %802 = vmatpush1.msra.mxu0 0.0
    %803 = vmatprep.subr.mxu0 0.0
    %804 = vmatpush1.msra.mxu0 0.0
    %805 = vmatprep.subr.mxu0 0.0
    %806 = vmatpush1.msra.mxu0 0.0
    %807 = vmatprep.subr.mxu0 0.0
    %808 = vmatpush1.msra.mxu0 0.0
    %809 = vmatprep.subr.mxu0 0.0
    %810 = vmatpush1.msra.mxu0 0.0
    %811 = vmatprep.subr.mxu0 0.0
    %812 = vmatpush1.msra.mxu0 0.0
    %813 = vmatprep.subr.mxu0 0.0
    %814 = vmatpush1.msra.mxu0 0.0
    %815 = vmatprep.subr.mxu0 0.0
    %816 = vmatpush1.msra.mxu0 0.0
    %817 = vmatprep.subr.mxu0 0.0
    %818 = vmatpush1.msra.mxu0 0.0
    %819 = vmatprep.subr.mxu0 0.0
    %820 = vmatpush1.msra.mxu0 0.0
    %821 = vmatprep.subr.mxu0 0.0
    %822 = vmatpush1.msra.mxu0 0.0
    %823 = vmatprep.subr.mxu0 0.0
    %824 = vmatpush1.msra.mxu0 0.0
    %825 = vmatprep.subr.mxu0 0.0
    %826 = vmatpush1.msra.mxu0 0.0
    %827 = vmatprep.subr.mxu0 0.0
    %828 = vmatpush1.msra.mxu0 0.0
    %829 = vmatprep.subr.mxu0 0.0
    %830 = vmatpush1.msra.mxu0 0.0
    %831 = vmatprep.subr.mxu0 0.0
    %832 = vmatpush1.msra.mxu0 0.0
    %833 = vmatprep.subr.mxu0 0.0
    %834 = vmatpush1.msra.mxu0 0.0
    %835 = vmatprep.subr.mxu0 0.0
    %836 = vmatpush1.msra.mxu0 0.0
    %837 = vmatprep.subr.mxu0 0.0
    %838 = vmatpush1.msra.mxu0 0.0
    %839 = vmatprep.subr.mxu0 0.0
    %840 = vmatpush1.msra.mxu0 0.0
    %841 = vmatprep.subr.mxu0 0.0
    %842 = vmatpush1.msra.mxu0 0.0
    %843 = vmatprep.subr.mxu0 0.0
    %844 = vmatpush1.msra.mxu0 0.0
    %845 = vmatprep.subr.mxu0 0.0
    %846 = vmatpush1.msra.mxu0 0.0
    %847 = vmatprep.subr.mxu0 0.0
    %848 = vmatpush1.msra.mxu0 0.0
    %849 = vmatprep.subr.mxu0 0.0
    %850 = vmatpush1.msra.mxu0 0.0
    %851 = vmatprep.subr.mxu0 0.0
    %852 = vmatpush1.msra.mxu0 0.0
    %853 = vmatprep.mubr.f32.mxu0 0.0
    %854 = vmatmul.mubr.f32.gmra.mrb[0].mxu0 %v787
    %v855 = vpop.f32.mrb[0].mxu0
    %v856 = vadd.f32 0.0, %v855
    %v857 = vpop.f32.mrb[0].mxu0
    %858 = vdwg.mxu0
    %860 = vrot.lane.b32.xlu0 %v856, 16
    %v861 = vpop.permute.xlu0 %860
    %863 = vst.msk [vmem:[#allocation2 + $0x8] sm:$0xff] %vm519, %v861
    %v864 = vld [vmem:[#allocation2] sm:$0xff]
    %v865 = vld [vmem:[#allocation2 + $0x8] sm:$0xff]
    %v866 = vld [vmem:[%s6 + $0x20] sm:$0xff]
    %v867 = vld [vmem:[%s6 + $0x28] sm:$0xff]
    %v868 = vld [vmem:[%s6 + $0x30] sm:$0xff]
    %v869 = vld [vmem:[%s6 + $0x38] sm:$0xff]
    %v870 = vld [vmem:[%s7 + $0x3] sm:$0x1]
    %v871 = vlaneseq
    %v872 = vshrl.u32 %v871, 7
    %v873 = vsub.s32 0, %v872
    %v874 = vrot.slane %v870, %v873
    %v876 = vsel %vm45, %v864, 0
    %v879 = vsel %vm45, %v865, 0
    %881 = vmatprep.subr.mxu0 0.0
    %882 = vmatpush1.msra.mxu0 %v866
    %883 = vmatprep.subr.mxu0 0.0
    %884 = vmatpush1.msra.mxu0 %v867
    %885 = vmatprep.subr.mxu0 0.0
    %886 = vmatpush1.msra.mxu0 %v868
    %887 = vmatprep.subr.mxu0 0.0
    %888 = vmatpush1.msra.mxu0 %v869
    %889 = vmatprep.subr.mxu0 0.0
    %890 = vmatpush1.msra.mxu0 0.0
    %891 = vmatprep.subr.mxu0 0.0
    %892 = vmatpush1.msra.mxu0 0.0
    %893 = vmatprep.subr.mxu0 0.0
    %894 = vmatpush1.msra.mxu0 0.0
    %895 = vmatprep.subr.mxu0 0.0
    %896 = vmatpush1.msra.mxu0 0.0
    %897 = vmatprep.subr.mxu0 0.0
    %898 = vmatpush1.msra.mxu0 0.0
    %899 = vmatprep.subr.mxu0 0.0
    %900 = vmatpush1.msra.mxu0 0.0
    %901 = vmatprep.subr.mxu0 0.0
    %902 = vmatpush1.msra.mxu0 0.0
    %903 = vmatprep.subr.mxu0 0.0
    %904 = vmatpush1.msra.mxu0 0.0
    %905 = vmatprep.subr.mxu0 0.0
    %906 = vmatpush1.msra.mxu0 0.0
    %907 = vmatprep.subr.mxu0 0.0
    %908 = vmatpush1.msra.mxu0 0.0
    %909 = vmatprep.subr.mxu0 0.0
    %910 = vmatpush1.msra.mxu0 0.0
    %911 = vmatprep.subr.mxu0 0.0
    %912 = vmatpush1.msra.mxu0 0.0
    %913 = vmatprep.subr.mxu0 0.0
    %914 = vmatpush1.msra.mxu0 0.0
    %915 = vmatprep.subr.mxu0 0.0
    %916 = vmatpush1.msra.mxu0 0.0
    %917 = vmatprep.subr.mxu0 0.0
    %918 = vmatpush1.msra.mxu0 0.0
    %919 = vmatprep.subr.mxu0 0.0
    %920 = vmatpush1.msra.mxu0 0.0
    %921 = vmatprep.subr.mxu0 0.0
    %922 = vmatpush1.msra.mxu0 0.0
    %923 = vmatprep.subr.mxu0 0.0
    %924 = vmatpush1.msra.mxu0 0.0
    %925 = vmatprep.subr.mxu0 0.0
    %926 = vmatpush1.msra.mxu0 0.0
    %927 = vmatprep.subr.mxu0 0.0
    %928 = vmatpush1.msra.mxu0 0.0
    %929 = vmatprep.subr.mxu0 0.0
    %930 = vmatpush1.msra.mxu0 0.0
    %931 = vmatprep.subr.mxu0 0.0
    %932 = vmatpush1.msra.mxu0 0.0
    %933 = vmatprep.subr.mxu0 0.0
    %934 = vmatpush1.msra.mxu0 0.0
    %935 = vmatprep.subr.mxu0 0.0
    %936 = vmatpush1.msra.mxu0 0.0
    %937 = vmatprep.subr.mxu0 0.0
    %938 = vmatpush1.msra.mxu0 0.0
    %939 = vmatprep.subr.mxu0 0.0
    %940 = vmatpush1.msra.mxu0 0.0
    %941 = vmatprep.subr.mxu0 0.0
    %942 = vmatpush1.msra.mxu0 0.0
    %943 = vmatprep.subr.mxu0 0.0
    %944 = vmatpush1.msra.mxu0 0.0
    %945 = vmatprep.mubr.f32.mxu0 0.0
    %946 = vmatmul.mubr.f32.gmra.mrb[0].mxu0 %v876
    %v947 = vpop.f32.mrb[0].mxu0
    %v948 = vadd.f32 %v874, %v947
    %v949 = vpop.f32.mrb[0].mxu0
    %950 = vmatprep.mubr.f32.mxu0 0.0
    %951 = vmatmul.mubr.f32.gmra.mrb[0].mxu0 %v879
    %v952 = vpop.f32.mrb[0].mxu0
    %v953 = vadd.f32 %v874, %v952
    %v954 = vpop.f32.mrb[0].mxu0
    %955 = vdwg.mxu0
    %v956 = vadd.f32 %v948, %v83
    %v957 = vadd.f32 %v953, %v84
    %v958 = vld [vmem:[%s7 + $0x4] sm:$0x1]
    %v959 = vld [vmem:[%s7 + $0x5] sm:$0x1]
    %v960 = vsel %vm45, %v956, 0.0
    %961 = vadd.xlane.f32.xlu0 %v960
    %v962 = vpop.xlane.xlu0 %961
    %v963 = vsel %vm45, %v957, 0.0
    %964 = vadd.xlane.f32.xlu0 %v963
    %v965 = vpop.xlane.xlu0 %964
    %v966 = vmul.f32 %v962, %v52
    %v967 = vmul.f32 %v965, %v52
    %v968 = vsub.f32 %v956, %v966
    %v969 = vsub.f32 %v957, %v967
    %v970 = vmul.f32 %v968, %v968
    %v971 = vmul.f32 %v969, %v969
    %v972 = vsel %vm45, %v970, 0.0
    %973 = vadd.xlane.f32.xlu0 %v972
    %v974 = vpop.xlane.xlu0 %973
    %v975 = vsel %vm45, %v971, 0.0
    %976 = vadd.xlane.f32.xlu0 %v975
    %v977 = vpop.xlane.xlu0 %976
    %v978 = vmul.f32 %v974, %v52
    %v979 = vmul.f32 %v977, %v52
    %v980 = vadd.f32 %v978, 1e-12
    %v981 = vadd.f32 %v979, 1e-12
    %v982 = vrsqrt.pop %v980
    %v983 = vrsqrt.pop %v981
    %v984 = vmul.f32 %v968, %v982
    %v985 = vmul.f32 %v969, %v983
    %v986 = vlaneseq
    %v987 = vshrl.u32 %v986, 7
    %v988 = vsub.s32 0, %v987
    %v989 = vrot.slane %v958, %v988
    %v990 = vmul.f32 %v984, %v989
    %v991 = vmul.f32 %v985, %v989
    %v992 = vlaneseq
    %v993 = vshrl.u32 %v992, 7
    %v994 = vsub.s32 0, %v993
    %v995 = vrot.slane %v959, %v994
    %v996 = vadd.f32 %v990, %v995
    %v997 = vadd.f32 %v991, %v995
    %v998 = vld [vmem:[%s6 + $0x40] sm:$0xff]
    %v999 = vld [vmem:[%s6 + $0x48] sm:$0xff]
    %v1000 = vld [vmem:[%s6 + $0x50] sm:$0xff]
    %v1001 = vld [vmem:[%s6 + $0x58] sm:$0xff]
    %v1002 = vld [vmem:[%s7 + $0x6] sm:$0x1]
    %v1003 = vlaneseq
    %v1004 = vshrl.u32 %v1003, 7
    %v1005 = vsub.s32 0, %v1004
    %v1006 = vrot.slane %v1002, %v1005
    %v1008 = vsel %vm45, %v996, 0
    %v1011 = vsel %vm45, %v997, 0
    %1013 = vmatprep.subr.mxu0 0.0
    %1014 = vmatpush1.msra.mxu0 %v998
    %1015 = vmatprep.subr.mxu0 0.0
    %1016 = vmatpush1.msra.mxu0 %v999
    %1017 = vmatprep.subr.mxu0 0.0
    %1018 = vmatpush1.msra.mxu0 %v1000
    %1019 = vmatprep.subr.mxu0 0.0
    %1020 = vmatpush1.msra.mxu0 %v1001
    %1021 = vmatprep.subr.mxu0 0.0
    %1022 = vmatpush1.msra.mxu0 0.0
    %1023 = vmatprep.subr.mxu0 0.0
    %1024 = vmatpush1.msra.mxu0 0.0
    %1025 = vmatprep.subr.mxu0 0.0
    %1026 = vmatpush1.msra.mxu0 0.0
    %1027 = vmatprep.subr.mxu0 0.0
    %1028 = vmatpush1.msra.mxu0 0.0
    %1029 = vmatprep.subr.mxu0 0.0
    %1030 = vmatpush1.msra.mxu0 0.0
    %1031 = vmatprep.subr.mxu0 0.0
    %1032 = vmatpush1.msra.mxu0 0.0
    %1033 = vmatprep.subr.mxu0 0.0
    %1034 = vmatpush1.msra.mxu0 0.0
    %1035 = vmatprep.subr.mxu0 0.0
    %1036 = vmatpush1.msra.mxu0 0.0
    %1037 = vmatprep.subr.mxu0 0.0
    %1038 = vmatpush1.msra.mxu0 0.0
    %1039 = vmatprep.subr.mxu0 0.0
    %1040 = vmatpush1.msra.mxu0 0.0
    %1041 = vmatprep.subr.mxu0 0.0
    %1042 = vmatpush1.msra.mxu0 0.0
    %1043 = vmatprep.subr.mxu0 0.0
    %1044 = vmatpush1.msra.mxu0 0.0
    %1045 = vmatprep.subr.mxu0 0.0
    %1046 = vmatpush1.msra.mxu0 0.0
    %1047 = vmatprep.subr.mxu0 0.0
    %1048 = vmatpush1.msra.mxu0 0.0
    %1049 = vmatprep.subr.mxu0 0.0
    %1050 = vmatpush1.msra.mxu0 0.0
    %1051 = vmatprep.subr.mxu0 0.0
    %1052 = vmatpush1.msra.mxu0 0.0
    %1053 = vmatprep.subr.mxu0 0.0
    %1054 = vmatpush1.msra.mxu0 0.0
    %1055 = vmatprep.subr.mxu0 0.0
    %1056 = vmatpush1.msra.mxu0 0.0
    %1057 = vmatprep.subr.mxu0 0.0
    %1058 = vmatpush1.msra.mxu0 0.0
    %1059 = vmatprep.subr.mxu0 0.0
    %1060 = vmatpush1.msra.mxu0 0.0
    %1061 = vmatprep.subr.mxu0 0.0
    %1062 = vmatpush1.msra.mxu0 0.0
    %1063 = vmatprep.subr.mxu0 0.0
    %1064 = vmatpush1.msra.mxu0 0.0
    %1065 = vmatprep.subr.mxu0 0.0
    %1066 = vmatpush1.msra.mxu0 0.0
    %1067 = vmatprep.subr.mxu0 0.0
    %1068 = vmatpush1.msra.mxu0 0.0
    %1069 = vmatprep.subr.mxu0 0.0
    %1070 = vmatpush1.msra.mxu0 0.0
    %1071 = vmatprep.subr.mxu0 0.0
    %1072 = vmatpush1.msra.mxu0 0.0
    %1073 = vmatprep.subr.mxu0 0.0
    %1074 = vmatpush1.msra.mxu0 0.0
    %1075 = vmatprep.subr.mxu0 0.0
    %1076 = vmatpush1.msra.mxu0 0.0
    %1077 = vmatprep.mubr.f32.mxu0 0.0
    %1078 = vmatmul.mubr.f32.gmra.mrb[0].mxu0 %v1008
    %v1079 = vpop.f32.mrb[0].mxu0
    %v1080 = vadd.f32 %v1006, %v1079
    %v1081 = vpop.f32.mrb[0].mxu0
    %1082 = vmatprep.mubr.f32.mxu0 0.0
    %1083 = vmatmul.mubr.f32.gmra.mrb[0].mxu0 %v1011
    %v1084 = vpop.f32.mrb[0].mxu0
    %v1085 = vadd.f32 %v1006, %v1084
    %v1086 = vpop.f32.mrb[0].mxu0
    %1087 = vdwg.mxu0
    %v1088 = vmul.f32 %v1080, 0.5
    %v1089 = vmul.f32 %v1085, 0.5
    %v1090 = vmul.f32 %v1080, 0.70710677
    %v1091 = vmul.f32 %v1085, 0.70710677
    %vm1092 = vcmp.ge.f32.partialorder %v1090, 0.0
    %vm1093 = vcmp.ge.f32.partialorder %v1091, 0.0
    %v1094 = vsel %vm1092, 1.0, -1.0
    %v1095 = vsel %vm1093, 1.0, -1.0
    %v1096 = vand.u32 2147483647, %v1090
    %v1097 = vand.u32 2147483647, %v1091
    %v1098 = vmul.f32 %v1096, 0.3275911
    %v1099 = vmul.f32 %v1097, 0.3275911
    %v1100 = vadd.f32 %v1098, 1.0
    %v1101 = vadd.f32 %v1099, 1.0
    %v1102 = vrcp.pop %v1100
    %v1103 = vmul.f32 1.0, %v1102
    %v1104 = vrcp.pop %v1101
    %v1105 = vmul.f32 1.0, %v1104
    %v1106 = vmul.f32 %v1103, 1.0614054
    %v1107 = vmul.f32 %v1105, 1.0614054
    %v1108 = vadd.f32 %v1106, -1.4531521
    %v1109 = vadd.f32 %v1107, -1.4531521
    %v1110 = vmul.f32 %v1108, %v1103
    %v1111 = vmul.f32 %v1109, %v1105
    %v1112 = vadd.f32 %v1110, 1.4214138
    %v1113 = vadd.f32 %v1111, 1.4214138
    %v1114 = vmul.f32 %v1112, %v1103
    %v1115 = vmul.f32 %v1113, %v1105
    %v1116 = vadd.f32 %v1114, -0.28449672
    %v1117 = vadd.f32 %v1115, -0.28449672
    %v1118 = vmul.f32 %v1116, %v1103
    %v1119 = vmul.f32 %v1117, %v1105
    %v1120 = vadd.f32 %v1118, 0.2548296
    %v1121 = vadd.f32 %v1119, 0.2548296
    %v1122 = vmul.f32 %v1120, %v1103
    %v1123 = vmul.f32 %v1121, %v1105
    %v1124 = vsub.f32 0.0, %v1096
    %v1125 = vsub.f32 0.0, %v1097
    %v1126 = vmul.f32 %v1124, %v1096
    %v1127 = vmul.f32 %v1125, %v1097
    %v1128 = vmul.f32 %v1126, 1.442695
    %v1129 = vpow.pop %v1128
    %v1130 = vmul.f32 %v1127, 1.442695
    %v1131 = vpow.pop %v1130
    %v1132 = vmul.f32 %v1122, %v1129
    %v1133 = vmul.f32 %v1123, %v1131
    %v1134 = vsub.f32 1.0, %v1132
    %v1135 = vsub.f32 1.0, %v1133
    %v1136 = vmul.f32 %v1094, %v1134
    %v1137 = vmul.f32 %v1095, %v1135
    %v1138 = vadd.f32 %v1136, 1.0
    %v1139 = vadd.f32 %v1137, 1.0
    %v1140 = vmul.f32 %v1088, %v1138
    %v1141 = vmul.f32 %v1089, %v1139
    %v1142 = vld [vmem:[%s6 + $0x60] sm:$0xff]
    %v1143 = vld [vmem:[%s6 + $0x68] sm:$0xff]
    %v1144 = vld [vmem:[%s6 + $0x70] sm:$0xff]
    %v1145 = vld [vmem:[%s6 + $0x78] sm:$0xff]
    %v1146 = vld [vmem:[%s6 + $0x80] sm:$0xff]
    %v1147 = vld [vmem:[%s6 + $0x88] sm:$0xff]
    %v1148 = vld [vmem:[%s6 + $0x90] sm:$0xff]
    %v1149 = vld [vmem:[%s6 + $0x98] sm:$0xff]
    %v1150 = vld [vmem:[%s7 + $0x7] sm:$0x1]
    %v1151 = vlaneseq
    %v1152 = vshrl.u32 %v1151, 7
    %v1153 = vsub.s32 0, %v1152
    %v1154 = vrot.slane %v1150, %v1153
    %vm1155 = vcmask 523264
    %v1157 = vsel %vm1155, %v1140, 0
    %v1160 = vsel %vm1155, %v1141, 0
    %1162 = vmatprep.subr.mxu0 0.0
    %1163 = vmatpush1.msra.mxu0 %v1142
    %1164 = vmatprep.subr.mxu0 0.0
    %1165 = vmatpush1.msra.mxu0 %v1143
    %1166 = vmatprep.subr.mxu0 0.0
    %1167 = vmatpush1.msra.mxu0 %v1144
    %1168 = vmatprep.subr.mxu0 0.0
    %1169 = vmatpush1.msra.mxu0 %v1145
    %1170 = vmatprep.subr.mxu0 0.0
    %1171 = vmatpush1.msra.mxu0 %v1146
    %1172 = vmatprep.subr.mxu0 0.0
    %1173 = vmatpush1.msra.mxu0 %v1147
    %1174 = vmatprep.subr.mxu0 0.0
    %1175 = vmatpush1.msra.mxu0 %v1148
    %1176 = vmatprep.subr.mxu0 0.0
    %1177 = vmatpush1.msra.mxu0 %v1149
    %1178 = vmatprep.subr.mxu0 0.0
    %1179 = vmatpush1.msra.mxu0 0.0
    %1180 = vmatprep.subr.mxu0 0.0
    %1181 = vmatpush1.msra.mxu0 0.0
    %1182 = vmatprep.subr.mxu0 0.0
    %1183 = vmatpush1.msra.mxu0 0.0
    %1184 = vmatprep.subr.mxu0 0.0
    %1185 = vmatpush1.msra.mxu0 0.0
    %1186 = vmatprep.subr.mxu0 0.0
    %1187 = vmatpush1.msra.mxu0 0.0
    %1188 = vmatprep.subr.mxu0 0.0
    %1189 = vmatpush1.msra.mxu0 0.0
    %1190 = vmatprep.subr.mxu0 0.0
    %1191 = vmatpush1.msra.mxu0 0.0
    %1192 = vmatprep.subr.mxu0 0.0
    %1193 = vmatpush1.msra.mxu0 0.0
    %1194 = vmatprep.subr.mxu0 0.0
    %1195 = vmatpush1.msra.mxu0 0.0
    %1196 = vmatprep.subr.mxu0 0.0
    %1197 = vmatpush1.msra.mxu0 0.0
    %1198 = vmatprep.subr.mxu0 0.0
    %1199 = vmatpush1.msra.mxu0 0.0
    %1200 = vmatprep.subr.mxu0 0.0
    %1201 = vmatpush1.msra.mxu0 0.0
    %1202 = vmatprep.subr.mxu0 0.0
    %1203 = vmatpush1.msra.mxu0 0.0
    %1204 = vmatprep.subr.mxu0 0.0
    %1205 = vmatpush1.msra.mxu0 0.0
    %1206 = vmatprep.subr.mxu0 0.0
    %1207 = vmatpush1.msra.mxu0 0.0
    %1208 = vmatprep.subr.mxu0 0.0
    %1209 = vmatpush1.msra.mxu0 0.0
    %1210 = vmatprep.subr.mxu0 0.0
    %1211 = vmatpush1.msra.mxu0 0.0
    %1212 = vmatprep.subr.mxu0 0.0
    %1213 = vmatpush1.msra.mxu0 0.0
    %1214 = vmatprep.subr.mxu0 0.0
    %1215 = vmatpush1.msra.mxu0 0.0
    %1216 = vmatprep.subr.mxu0 0.0
    %1217 = vmatpush1.msra.mxu0 0.0
    %1218 = vmatprep.subr.mxu0 0.0
    %1219 = vmatpush1.msra.mxu0 0.0
    %1220 = vmatprep.subr.mxu0 0.0
    %1221 = vmatpush1.msra.mxu0 0.0
    %1222 = vmatprep.subr.mxu0 0.0
    %1223 = vmatpush1.msra.mxu0 0.0
    %1224 = vmatprep.subr.mxu0 0.0
    %1225 = vmatpush1.msra.mxu0 0.0
    %1226 = vmatprep.mubr.f32.mxu0 0.0
    %1227 = vmatmul.mubr.f32.gmra.mrb[0].mxu0 %v1157
    %v1228 = vpop.f32.mrb[0].mxu0
    %v1229 = vadd.f32 %v1154, %v1228
    %v1230 = vpop.f32.mrb[0].mxu0
    %1231 = vmatprep.mubr.f32.mxu0 0.0
    %1232 = vmatmul.mubr.f32.gmra.mrb[0].mxu0 %v1160
    %v1233 = vpop.f32.mrb[0].mxu0
    %v1234 = vadd.f32 %v1154, %v1233
    %v1235 = vpop.f32.mrb[0].mxu0
    %1236 = vdwg.mxu0
    %v1237 = vadd.f32 %v1229, %v996
    %v1238 = vadd.f32 %v1234, %v997
    %v1239 = vld [vmem:[%s7 + $0x8] sm:$0x1]
    %v1240 = vld [vmem:[%s7 + $0x9] sm:$0x1]
    %v1241 = vsel %vm45, %v1237, 0.0
    %1242 = vadd.xlane.f32.xlu0 %v1241
    %v1243 = vpop.xlane.xlu0 %1242
    %v1244 = vsel %vm45, %v1238, 0.0
    %1245 = vadd.xlane.f32.xlu0 %v1244
    %v1246 = vpop.xlane.xlu0 %1245
    %v1247 = vmul.f32 %v1243, %v52
    %v1248 = vmul.f32 %v1246, %v52
    %v1249 = vsub.f32 %v1237, %v1247
    %v1250 = vsub.f32 %v1238, %v1248
    %v1251 = vmul.f32 %v1249, %v1249
    %v1252 = vmul.f32 %v1250, %v1250
    %v1253 = vsel %vm45, %v1251, 0.0
    %1254 = vadd.xlane.f32.xlu0 %v1253
    %v1255 = vpop.xlane.xlu0 %1254
    %v1256 = vsel %vm45, %v1252, 0.0
    %1257 = vadd.xlane.f32.xlu0 %v1256
    %v1258 = vpop.xlane.xlu0 %1257
    %v1259 = vmul.f32 %v1255, %v52
    %v1260 = vmul.f32 %v1258, %v52
    %v1261 = vadd.f32 %v1259, 1e-12
    %v1262 = vadd.f32 %v1260, 1e-12
    %v1263 = vrsqrt.pop %v1261
    %v1264 = vrsqrt.pop %v1262
    %v1265 = vmul.f32 %v1249, %v1263
    %v1266 = vmul.f32 %v1250, %v1264
    %v1267 = vlaneseq
    %v1268 = vshrl.u32 %v1267, 7
    %v1269 = vsub.s32 0, %v1268
    %v1270 = vrot.slane %v1239, %v1269
    %v1271 = vmul.f32 %v1265, %v1270
    %v1272 = vmul.f32 %v1266, %v1270
    %v1273 = vlaneseq
    %v1274 = vshrl.u32 %v1273, 7
    %v1275 = vsub.s32 0, %v1274
    %v1276 = vrot.slane %v1240, %v1275
    %v1277 = vadd.f32 %v1271, %v1276
    %v1278 = vadd.f32 %v1272, %v1276
    %v1279 = vld [vmem:[%s6 + $0x140] sm:$0xff]
    %v1280 = vld [vmem:[%s6 + $0x148] sm:$0xff]
    %v1281 = vld [vmem:[%s6 + $0x150] sm:$0xff]
    %v1282 = vld [vmem:[%s6 + $0x158] sm:$0xff]
    %v1283 = vld [vmem:[%s7 + $0x12] sm:$0x1]
    %v1285 = vsel %vm45, %v1277, 0
    %1287 = vmatprep.subr.mxu0 0.0
    %1288 = vmatpush1.msra.mxu0 %v1279
    %1289 = vmatprep.subr.mxu0 0.0
    %1290 = vmatpush1.msra.mxu0 %v1280
    %1291 = vmatprep.subr.mxu0 0.0
    %1292 = vmatpush1.msra.mxu0 %v1281
    %1293 = vmatprep.subr.mxu0 0.0
    %1294 = vmatpush1.msra.mxu0 %v1282
    %1295 = vmatprep.subr.mxu0 0.0
    %1296 = vmatpush1.msra.mxu0 0.0
    %1297 = vmatprep.subr.mxu0 0.0
    %1298 = vmatpush1.msra.mxu0 0.0
    %1299 = vmatprep.subr.mxu0 0.0
    %1300 = vmatpush1.msra.mxu0 0.0
    %1301 = vmatprep.subr.mxu0 0.0
    %1302 = vmatpush1.msra.mxu0 0.0
    %1303 = vmatprep.subr.mxu0 0.0
    %1304 = vmatpush1.msra.mxu0 0.0
    %1305 = vmatprep.subr.mxu0 0.0
    %1306 = vmatpush1.msra.mxu0 0.0
    %1307 = vmatprep.subr.mxu0 0.0
    %1308 = vmatpush1.msra.mxu0 0.0
    %1309 = vmatprep.subr.mxu0 0.0
    %1310 = vmatpush1.msra.mxu0 0.0
    %1311 = vmatprep.subr.mxu0 0.0
    %1312 = vmatpush1.msra.mxu0 0.0
    %1313 = vmatprep.subr.mxu0 0.0
    %1314 = vmatpush1.msra.mxu0 0.0
    %1315 = vmatprep.subr.mxu0 0.0
    %1316 = vmatpush1.msra.mxu0 0.0
    %1317 = vmatprep.subr.mxu0 0.0
    %1318 = vmatpush1.msra.mxu0 0.0
    %1319 = vmatprep.subr.mxu0 0.0
    %1320 = vmatpush1.msra.mxu0 0.0
    %1321 = vmatprep.subr.mxu0 0.0
    %1322 = vmatpush1.msra.mxu0 0.0
    %1323 = vmatprep.subr.mxu0 0.0
    %1324 = vmatpush1.msra.mxu0 0.0
    %1325 = vmatprep.subr.mxu0 0.0
    %1326 = vmatpush1.msra.mxu0 0.0
    %1327 = vmatprep.subr.mxu0 0.0
    %1328 = vmatpush1.msra.mxu0 0.0
    %1329 = vmatprep.subr.mxu0 0.0
    %1330 = vmatpush1.msra.mxu0 0.0
    %1331 = vmatprep.subr.mxu0 0.0
    %1332 = vmatpush1.msra.mxu0 0.0
    %1333 = vmatprep.subr.mxu0 0.0
    %1334 = vmatpush1.msra.mxu0 0.0
    %1335 = vmatprep.subr.mxu0 0.0
    %1336 = vmatpush1.msra.mxu0 0.0
    %1337 = vmatprep.subr.mxu0 0.0
    %1338 = vmatpush1.msra.mxu0 0.0
    %1339 = vmatprep.subr.mxu0 0.0
    %1340 = vmatpush1.msra.mxu0 0.0
    %1341 = vmatprep.subr.mxu0 0.0
    %1342 = vmatpush1.msra.mxu0 0.0
    %1343 = vmatprep.subr.mxu0 0.0
    %1344 = vmatpush1.msra.mxu0 0.0
    %1345 = vmatprep.subr.mxu0 0.0
    %1346 = vmatpush1.msra.mxu0 0.0
    %1347 = vmatprep.subr.mxu0 0.0
    %1348 = vmatpush1.msra.mxu0 0.0
    %1349 = vmatprep.subr.mxu0 0.0
    %1350 = vmatpush1.msra.mxu0 0.0
    %1351 = vmatprep.mubr.f32.mxu0 0.0
    %1352 = vmatmul.mubr.f32.gmra.mrb[0].mxu0 %v1285
    %v1353 = vpop.f32.mrb[0].mxu0
    %v1354 = vadd.f32 %v1283, %v1353
    %v1355 = vpop.f32.mrb[0].mxu0
    %1356 = vdwg.mxu0
    %v1358 = vsel %vm45, %v1278, 0
    %1360 = vmatprep.subr.mxu0 0.0
    %1361 = vmatpush1.msra.mxu0 %v1279
    %1362 = vmatprep.subr.mxu0 0.0
    %1363 = vmatpush1.msra.mxu0 %v1280
    %1364 = vmatprep.subr.mxu0 0.0
    %1365 = vmatpush1.msra.mxu0 %v1281
    %1366 = vmatprep.subr.mxu0 0.0
    %1367 = vmatpush1.msra.mxu0 %v1282
    %1368 = vmatprep.subr.mxu0 0.0
    %1369 = vmatpush1.msra.mxu0 0.0
    %1370 = vmatprep.subr.mxu0 0.0
    %1371 = vmatpush1.msra.mxu0 0.0
    %1372 = vmatprep.subr.mxu0 0.0
    %1373 = vmatpush1.msra.mxu0 0.0
    %1374 = vmatprep.subr.mxu0 0.0
    %1375 = vmatpush1.msra.mxu0 0.0
    %1376 = vmatprep.subr.mxu0 0.0
    %1377 = vmatpush1.msra.mxu0 0.0
    %1378 = vmatprep.subr.mxu0 0.0
    %1379 = vmatpush1.msra.mxu0 0.0
    %1380 = vmatprep.subr.mxu0 0.0
    %1381 = vmatpush1.msra.mxu0 0.0
    %1382 = vmatprep.subr.mxu0 0.0
    %1383 = vmatpush1.msra.mxu0 0.0
    %1384 = vmatprep.subr.mxu0 0.0
    %1385 = vmatpush1.msra.mxu0 0.0
    %1386 = vmatprep.subr.mxu0 0.0
    %1387 = vmatpush1.msra.mxu0 0.0
    %1388 = vmatprep.subr.mxu0 0.0
    %1389 = vmatpush1.msra.mxu0 0.0
    %1390 = vmatprep.subr.mxu0 0.0
    %1391 = vmatpush1.msra.mxu0 0.0
    %1392 = vmatprep.subr.mxu0 0.0
    %1393 = vmatpush1.msra.mxu0 0.0
    %1394 = vmatprep.subr.mxu0 0.0
    %1395 = vmatpush1.msra.mxu0 0.0
    %1396 = vmatprep.subr.mxu0 0.0
    %1397 = vmatpush1.msra.mxu0 0.0
    %1398 = vmatprep.subr.mxu0 0.0
    %1399 = vmatpush1.msra.mxu0 0.0
    %1400 = vmatprep.subr.mxu0 0.0
    %1401 = vmatpush1.msra.mxu0 0.0
    %1402 = vmatprep.subr.mxu0 0.0
    %1403 = vmatpush1.msra.mxu0 0.0
    %1404 = vmatprep.subr.mxu0 0.0
    %1405 = vmatpush1.msra.mxu0 0.0
    %1406 = vmatprep.subr.mxu0 0.0
    %1407 = vmatpush1.msra.mxu0 0.0
    %1408 = vmatprep.subr.mxu0 0.0
    %1409 = vmatpush1.msra.mxu0 0.0
    %1410 = vmatprep.subr.mxu0 0.0
    %1411 = vmatpush1.msra.mxu0 0.0
    %1412 = vmatprep.subr.mxu0 0.0
    %1413 = vmatpush1.msra.mxu0 0.0
    %1414 = vmatprep.subr.mxu0 0.0
    %1415 = vmatpush1.msra.mxu0 0.0
    %1416 = vmatprep.subr.mxu0 0.0
    %1417 = vmatpush1.msra.mxu0 0.0
    %1418 = vmatprep.subr.mxu0 0.0
    %1419 = vmatpush1.msra.mxu0 0.0
    %1420 = vmatprep.subr.mxu0 0.0
    %1421 = vmatpush1.msra.mxu0 0.0
    %1422 = vmatprep.subr.mxu0 0.0
    %1423 = vmatpush1.msra.mxu0 0.0
    %1424 = vmatprep.mubr.f32.mxu0 0.0
    %1425 = vmatmul.mubr.f32.gmra.mrb[0].mxu0 %v1358
    %v1426 = vpop.f32.mrb[0].mxu0
    %v1427 = vadd.f32 %v1283, %v1426
    %v1428 = vpop.f32.mrb[0].mxu0
    %1429 = vdwg.mxu0
    %v1430 = vld [vmem:[%s6 + $0xa0] sm:$0xff]
    %v1431 = vld [vmem:[%s6 + $0xa8] sm:$0xff]
    %v1432 = vld [vmem:[%s6 + $0xb0] sm:$0xff]
    %v1433 = vld [vmem:[%s6 + $0xb8] sm:$0xff]
    %v1434 = vld [vmem:[%s7 + $0xa] sm:$0x1]
    %v1435 = vlaneseq
    %v1436 = vshrl.u32 %v1435, 7
    %v1437 = vsub.s32 0, %v1436
    %v1438 = vrot.slane %v1434, %v1437
    %1439 = vmatprep.subr.mxu0 0.0
    %1440 = vmatpush1.msra.mxu0 %v1430
    %1441 = vmatprep.subr.mxu0 0.0
    %1442 = vmatpush1.msra.mxu0 %v1431
    %1443 = vmatprep.subr.mxu0 0.0
    %1444 = vmatpush1.msra.mxu0 %v1432
    %1445 = vmatprep.subr.mxu0 0.0
    %1446 = vmatpush1.msra.mxu0 %v1433
    %1447 = vmatprep.subr.mxu0 0.0
    %1448 = vmatpush1.msra.mxu0 0.0
    %1449 = vmatprep.subr.mxu0 0.0
    %1450 = vmatpush1.msra.mxu0 0.0
    %1451 = vmatprep.subr.mxu0 0.0
    %1452 = vmatpush1.msra.mxu0 0.0
    %1453 = vmatprep.subr.mxu0 0.0
    %1454 = vmatpush1.msra.mxu0 0.0
    %1455 = vmatprep.subr.mxu0 0.0
    %1456 = vmatpush1.msra.mxu0 0.0
    %1457 = vmatprep.subr.mxu0 0.0
    %1458 = vmatpush1.msra.mxu0 0.0
    %1459 = vmatprep.subr.mxu0 0.0
    %1460 = vmatpush1.msra.mxu0 0.0
    %1461 = vmatprep.subr.mxu0 0.0
    %1462 = vmatpush1.msra.mxu0 0.0
    %1463 = vmatprep.subr.mxu0 0.0
    %1464 = vmatpush1.msra.mxu0 0.0
    %1465 = vmatprep.subr.mxu0 0.0
    %1466 = vmatpush1.msra.mxu0 0.0
    %1467 = vmatprep.subr.mxu0 0.0
    %1468 = vmatpush1.msra.mxu0 0.0
    %1469 = vmatprep.subr.mxu0 0.0
    %1470 = vmatpush1.msra.mxu0 0.0
    %1471 = vmatprep.subr.mxu0 0.0
    %1472 = vmatpush1.msra.mxu0 0.0
    %1473 = vmatprep.subr.mxu0 0.0
    %1474 = vmatpush1.msra.mxu0 0.0
    %1475 = vmatprep.subr.mxu0 0.0
    %1476 = vmatpush1.msra.mxu0 0.0
    %1477 = vmatprep.subr.mxu0 0.0
    %1478 = vmatpush1.msra.mxu0 0.0
    %1479 = vmatprep.subr.mxu0 0.0
    %1480 = vmatpush1.msra.mxu0 0.0
    %1481 = vmatprep.subr.mxu0 0.0
    %1482 = vmatpush1.msra.mxu0 0.0
    %1483 = vmatprep.subr.mxu0 0.0
    %1484 = vmatpush1.msra.mxu0 0.0
    %1485 = vmatprep.subr.mxu0 0.0
    %1486 = vmatpush1.msra.mxu0 0.0
    %1487 = vmatprep.subr.mxu0 0.0
    %1488 = vmatpush1.msra.mxu0 0.0
    %1489 = vmatprep.subr.mxu0 0.0
    %1490 = vmatpush1.msra.mxu0 0.0
    %1491 = vmatprep.subr.mxu0 0.0
    %1492 = vmatpush1.msra.mxu0 0.0
    %1493 = vmatprep.subr.mxu0 0.0
    %1494 = vmatpush1.msra.mxu0 0.0
    %1495 = vmatprep.subr.mxu0 0.0
    %1496 = vmatpush1.msra.mxu0 0.0
    %1497 = vmatprep.subr.mxu0 0.0
    %1498 = vmatpush1.msra.mxu0 0.0
    %1499 = vmatprep.subr.mxu0 0.0
    %1500 = vmatpush1.msra.mxu0 0.0
    %1501 = vmatprep.subr.mxu0 0.0
    %1502 = vmatpush1.msra.mxu0 0.0
    %1503 = vmatprep.mubr.f32.mxu0 0.0
    %1504 = vmatmul.mubr.f32.gmra.mrb[0].mxu0 %v1285
    %v1505 = vpop.f32.mrb[0].mxu0
    %v1506 = vadd.f32 %v1438, %v1505
    %v1507 = vpop.f32.mrb[0].mxu0
    %1508 = vmatprep.mubr.f32.mxu0 0.0
    %1509 = vmatmul.mubr.f32.gmra.mrb[0].mxu0 %v1358
    %v1510 = vpop.f32.mrb[0].mxu0
    %v1511 = vadd.f32 %v1438, %v1510
    %v1512 = vpop.f32.mrb[0].mxu0
    %1513 = vdwg.mxu0
    %1515 = vrot.lane.b32.xlu0 %v1506, 96
    %v1516 = vpop.permute.xlu0 %1515
    %v1517 = vsel %vm178, %v1506, 0
    %v1519 = vsel %vm178, %v1516, 0
    %1521 = vmatprep.subr.mxu0 0.0
    %1522 = vmatpush1.xpose.msra.mxu0 %v1519
    %1523 = vmatprep.subr.mxu0 0.0
    %1524 = vmatpush1.xpose.msra.mxu0 0.0
    %1525 = vmatprep.subr.mxu0 0.0
    %1526 = vmatpush1.xpose.msra.mxu0 0.0
    %1527 = vmatprep.subr.mxu0 0.0
    %1528 = vmatpush1.xpose.msra.mxu0 0.0
    %1529 = vmatprep.subr.mxu0 0.0
    %1530 = vmatpush1.xpose.msra.mxu0 0.0
    %1531 = vmatprep.subr.mxu0 0.0
    %1532 = vmatpush1.xpose.msra.mxu0 0.0
    %1533 = vmatprep.subr.mxu0 0.0
    %1534 = vmatpush1.xpose.msra.mxu0 0.0
    %1535 = vmatprep.subr.mxu0 0.0
    %1536 = vmatpush1.xpose.msra.mxu0 0.0
    %1537 = vmatprep.subr.mxu0 0.0
    %1538 = vmatpush1.xpose.msra.mxu0 0.0
    %1539 = vmatprep.subr.mxu0 0.0
    %1540 = vmatpush1.xpose.msra.mxu0 0.0
    %1541 = vmatprep.subr.mxu0 0.0
    %1542 = vmatpush1.xpose.msra.mxu0 0.0
    %1543 = vmatprep.subr.mxu0 0.0
    %1544 = vmatpush1.xpose.msra.mxu0 0.0
    %1545 = vmatprep.subr.mxu0 0.0
    %1546 = vmatpush1.xpose.msra.mxu0 0.0
    %1547 = vmatprep.subr.mxu0 0.0
    %1548 = vmatpush1.xpose.msra.mxu0 0.0
    %1549 = vmatprep.subr.mxu0 0.0
    %1550 = vmatpush1.xpose.msra.mxu0 0.0
    %1551 = vmatprep.subr.mxu0 0.0
    %1552 = vmatpush1.xpose.msra.mxu0 0.0
    %1553 = vmatprep.subr.mxu0 0.0
    %1554 = vmatpush1.xpose.msra.mxu0 0.0
    %1555 = vmatprep.subr.mxu0 0.0
    %1556 = vmatpush1.xpose.msra.mxu0 0.0
    %1557 = vmatprep.subr.mxu0 0.0
    %1558 = vmatpush1.xpose.msra.mxu0 0.0
    %1559 = vmatprep.subr.mxu0 0.0
    %1560 = vmatpush1.xpose.msra.mxu0 0.0
    %1561 = vmatprep.subr.mxu0 0.0
    %1562 = vmatpush1.xpose.msra.mxu0 0.0
    %1563 = vmatprep.subr.mxu0 0.0
    %1564 = vmatpush1.xpose.msra.mxu0 0.0
    %1565 = vmatprep.subr.mxu0 0.0
    %1566 = vmatpush1.xpose.msra.mxu0 0.0
    %1567 = vmatprep.subr.mxu0 0.0
    %1568 = vmatpush1.xpose.msra.mxu0 0.0
    %1569 = vmatprep.subr.mxu0 0.0
    %1570 = vmatpush1.xpose.msra.mxu0 0.0
    %1571 = vmatprep.subr.mxu0 0.0
    %1572 = vmatpush1.xpose.msra.mxu0 0.0
    %1573 = vmatprep.subr.mxu0 0.0
    %1574 = vmatpush1.xpose.msra.mxu0 0.0
    %1575 = vmatprep.subr.mxu0 0.0
    %1576 = vmatpush1.xpose.msra.mxu0 0.0
    %1577 = vmatprep.subr.mxu0 0.0
    %1578 = vmatpush1.xpose.msra.mxu0 0.0
    %1579 = vmatprep.subr.mxu0 0.0
    %1580 = vmatpush1.xpose.msra.mxu0 0.0
    %1581 = vmatprep.subr.mxu0 0.0
    %1582 = vmatpush1.xpose.msra.mxu0 0.0
    %1583 = vmatprep.subr.mxu0 0.0
    %1584 = vmatpush1.xpose.msra.mxu0 0.0
    %1585 = vmatprep.mubr.f32.mxu0 0.0
    %1586 = vmatmul.mubr.f32.gmra.mrb[0].mxu0 %v1517
    %v1587 = vpop.f32.mrb[0].mxu0
    %v1588 = vadd.f32 0.0, %v1587
    %v1589 = vpop.f32.mrb[0].mxu0
    %1590 = vdwg.mxu0
    %v1591 = vmul.f32 %v1588, 0.25
    %v1592 = vadd.f32 %v1591, %v257
    %v1593 = vsel %vm259, %v1592, -inf
    %1594 = vmax.xlane.f32.xlu0 %v1593
    %v1595 = vpop.xlane.xlu0 %1594
    %v1596 = vsub.f32 %v1592, %v1595
    %v1597 = vmul.f32 %v1596, 1.442695
    %v1598 = vpow.pop %v1597
    %v1599 = vsel %vm259, %v1598, 0.0
    %1600 = vadd.xlane.f32.xlu0 %v1599
    %v1601 = vpop.xlane.xlu0 %1600
    %v1602 = vrcp.pop %v1601
    %v1603 = vmul.f32 %v1598, %v1602
    %1604 = vrot.lane.b32.xlu0 %v1506, 64
    %v1605 = vpop.permute.xlu0 %1604
    %v1608 = vsel %vm259, %v1603, 0
    %1610 = vmatprep.subr.mxu0 0.0
    %1611 = vmatpush1.msra.mxu0 %v1605
    %1612 = vmatprep.subr.mxu0 0.0
    %1613 = vmatpush1.msra.mxu0 0.0
    %1614 = vmatprep.subr.mxu0 0.0
    %1615 = vmatpush1.msra.mxu0 0.0
    %1616 = vmatprep.subr.mxu0 0.0
    %1617 = vmatpush1.msra.mxu0 0.0
    %1618 = vmatprep.subr.mxu0 0.0
    %1619 = vmatpush1.msra.mxu0 0.0
    %1620 = vmatprep.subr.mxu0 0.0
    %1621 = vmatpush1.msra.mxu0 0.0
    %1622 = vmatprep.subr.mxu0 0.0
    %1623 = vmatpush1.msra.mxu0 0.0
    %1624 = vmatprep.subr.mxu0 0.0
    %1625 = vmatpush1.msra.mxu0 0.0
    %1626 = vmatprep.subr.mxu0 0.0
    %1627 = vmatpush1.msra.mxu0 0.0
    %1628 = vmatprep.subr.mxu0 0.0
    %1629 = vmatpush1.msra.mxu0 0.0
    %1630 = vmatprep.subr.mxu0 0.0
    %1631 = vmatpush1.msra.mxu0 0.0
    %1632 = vmatprep.subr.mxu0 0.0
    %1633 = vmatpush1.msra.mxu0 0.0
    %1634 = vmatprep.subr.mxu0 0.0
    %1635 = vmatpush1.msra.mxu0 0.0
    %1636 = vmatprep.subr.mxu0 0.0
    %1637 = vmatpush1.msra.mxu0 0.0
    %1638 = vmatprep.subr.mxu0 0.0
    %1639 = vmatpush1.msra.mxu0 0.0
    %1640 = vmatprep.subr.mxu0 0.0
    %1641 = vmatpush1.msra.mxu0 0.0
    %1642 = vmatprep.subr.mxu0 0.0
    %1643 = vmatpush1.msra.mxu0 0.0
    %1644 = vmatprep.subr.mxu0 0.0
    %1645 = vmatpush1.msra.mxu0 0.0
    %1646 = vmatprep.subr.mxu0 0.0
    %1647 = vmatpush1.msra.mxu0 0.0
    %1648 = vmatprep.subr.mxu0 0.0
    %1649 = vmatpush1.msra.mxu0 0.0
    %1650 = vmatprep.subr.mxu0 0.0
    %1651 = vmatpush1.msra.mxu0 0.0
    %1652 = vmatprep.subr.mxu0 0.0
    %1653 = vmatpush1.msra.mxu0 0.0
    %1654 = vmatprep.subr.mxu0 0.0
    %1655 = vmatpush1.msra.mxu0 0.0
    %1656 = vmatprep.subr.mxu0 0.0
    %1657 = vmatpush1.msra.mxu0 0.0
    %1658 = vmatprep.subr.mxu0 0.0
    %1659 = vmatpush1.msra.mxu0 0.0
    %1660 = vmatprep.subr.mxu0 0.0
    %1661 = vmatpush1.msra.mxu0 0.0
    %1662 = vmatprep.subr.mxu0 0.0
    %1663 = vmatpush1.msra.mxu0 0.0
    %1664 = vmatprep.subr.mxu0 0.0
    %1665 = vmatpush1.msra.mxu0 0.0
    %1666 = vmatprep.subr.mxu0 0.0
    %1667 = vmatpush1.msra.mxu0 0.0
    %1668 = vmatprep.subr.mxu0 0.0
    %1669 = vmatpush1.msra.mxu0 0.0
    %1670 = vmatprep.subr.mxu0 0.0
    %1671 = vmatpush1.msra.mxu0 0.0
    %1672 = vmatprep.subr.mxu0 0.0
    %1673 = vmatpush1.msra.mxu0 0.0
    %1674 = vmatprep.mubr.f32.mxu0 0.0
    %1675 = vmatmul.mubr.f32.gmra.mrb[0].mxu0 %v1608
    %v1676 = vpop.f32.mrb[0].mxu0
    %v1677 = vadd.f32 0.0, %v1676
    %v1678 = vpop.f32.mrb[0].mxu0
    %1679 = vdwg.mxu0
    %1680 = vst.msk [vmem:[#allocation2] sm:$0xff] %vm178, %v1677
    %1681 = vrot.lane.b32.xlu0 %v1506, 112
    %v1682 = vpop.permute.xlu0 %1681
    %1683 = vrot.lane.b32.xlu0 %v1506, 80
    %v1684 = vpop.permute.xlu0 %1683
    %v1685 = vsel %vm178, %v1682, 0
    %v1687 = vsel %vm178, %v1684, 0
    %1689 = vmatprep.subr.mxu0 0.0
    %1690 = vmatpush1.xpose.msra.mxu0 %v1687
    %1691 = vmatprep.subr.mxu0 0.0
    %1692 = vmatpush1.xpose.msra.mxu0 0.0
    %1693 = vmatprep.subr.mxu0 0.0
    %1694 = vmatpush1.xpose.msra.mxu0 0.0
    %1695 = vmatprep.subr.mxu0 0.0
    %1696 = vmatpush1.xpose.msra.mxu0 0.0
    %1697 = vmatprep.subr.mxu0 0.0
    %1698 = vmatpush1.xpose.msra.mxu0 0.0
    %1699 = vmatprep.subr.mxu0 0.0
    %1700 = vmatpush1.xpose.msra.mxu0 0.0
    %1701 = vmatprep.subr.mxu0 0.0
    %1702 = vmatpush1.xpose.msra.mxu0 0.0
    %1703 = vmatprep.subr.mxu0 0.0
    %1704 = vmatpush1.xpose.msra.mxu0 0.0
    %1705 = vmatprep.subr.mxu0 0.0
    %1706 = vmatpush1.xpose.msra.mxu0 0.0
    %1707 = vmatprep.subr.mxu0 0.0
    %1708 = vmatpush1.xpose.msra.mxu0 0.0
    %1709 = vmatprep.subr.mxu0 0.0
    %1710 = vmatpush1.xpose.msra.mxu0 0.0
    %1711 = vmatprep.subr.mxu0 0.0
    %1712 = vmatpush1.xpose.msra.mxu0 0.0
    %1713 = vmatprep.subr.mxu0 0.0
    %1714 = vmatpush1.xpose.msra.mxu0 0.0
    %1715 = vmatprep.subr.mxu0 0.0
    %1716 = vmatpush1.xpose.msra.mxu0 0.0
    %1717 = vmatprep.subr.mxu0 0.0
    %1718 = vmatpush1.xpose.msra.mxu0 0.0
    %1719 = vmatprep.subr.mxu0 0.0
    %1720 = vmatpush1.xpose.msra.mxu0 0.0
    %1721 = vmatprep.subr.mxu0 0.0
    %1722 = vmatpush1.xpose.msra.mxu0 0.0
    %1723 = vmatprep.subr.mxu0 0.0
    %1724 = vmatpush1.xpose.msra.mxu0 0.0
    %1725 = vmatprep.subr.mxu0 0.0
    %1726 = vmatpush1.xpose.msra.mxu0 0.0
    %1727 = vmatprep.subr.mxu0 0.0
    %1728 = vmatpush1.xpose.msra.mxu0 0.0
    %1729 = vmatprep.subr.mxu0 0.0
    %1730 = vmatpush1.xpose.msra.mxu0 0.0
    %1731 = vmatprep.subr.mxu0 0.0
    %1732 = vmatpush1.xpose.msra.mxu0 0.0
    %1733 = vmatprep.subr.mxu0 0.0
    %1734 = vmatpush1.xpose.msra.mxu0 0.0
    %1735 = vmatprep.subr.mxu0 0.0
    %1736 = vmatpush1.xpose.msra.mxu0 0.0
    %1737 = vmatprep.subr.mxu0 0.0
    %1738 = vmatpush1.xpose.msra.mxu0 0.0
    %1739 = vmatprep.subr.mxu0 0.0
    %1740 = vmatpush1.xpose.msra.mxu0 0.0
    %1741 = vmatprep.subr.mxu0 0.0
    %1742 = vmatpush1.xpose.msra.mxu0 0.0
    %1743 = vmatprep.subr.mxu0 0.0
    %1744 = vmatpush1.xpose.msra.mxu0 0.0
    %1745 = vmatprep.subr.mxu0 0.0
    %1746 = vmatpush1.xpose.msra.mxu0 0.0
    %1747 = vmatprep.subr.mxu0 0.0
    %1748 = vmatpush1.xpose.msra.mxu0 0.0
    %1749 = vmatprep.subr.mxu0 0.0
    %1750 = vmatpush1.xpose.msra.mxu0 0.0
    %1751 = vmatprep.subr.mxu0 0.0
    %1752 = vmatpush1.xpose.msra.mxu0 0.0
    %1753 = vmatprep.mubr.f32.mxu0 0.0
    %1754 = vmatmul.mubr.f32.gmra.mrb[0].mxu0 %v1685
    %v1755 = vpop.f32.mrb[0].mxu0
    %v1756 = vadd.f32 0.0, %v1755
    %v1757 = vpop.f32.mrb[0].mxu0
    %1758 = vdwg.mxu0
    %v1759 = vmul.f32 %v1756, 0.25
    %v1760 = vadd.f32 %v1759, %v257
    %v1761 = vsel %vm259, %v1760, -inf
    %1762 = vmax.xlane.f32.xlu0 %v1761
    %v1763 = vpop.xlane.xlu0 %1762
    %v1764 = vsub.f32 %v1760, %v1763
    %v1765 = vmul.f32 %v1764, 1.442695
    %v1766 = vpow.pop %v1765
    %v1767 = vsel %vm259, %v1766, 0.0
    %1768 = vadd.xlane.f32.xlu0 %v1767
    %v1769 = vpop.xlane.xlu0 %1768
    %v1770 = vrcp.pop %v1769
    %v1771 = vmul.f32 %v1766, %v1770
    %1772 = vrot.lane.b32.xlu0 %v1506, 48
    %v1773 = vpop.permute.xlu0 %1772
    %v1776 = vsel %vm259, %v1771, 0
    %1778 = vmatprep.subr.mxu0 0.0
    %1779 = vmatpush1.msra.mxu0 %v1773
    %1780 = vmatprep.subr.mxu0 0.0
    %1781 = vmatpush1.msra.mxu0 0.0
    %1782 = vmatprep.subr.mxu0 0.0
    %1783 = vmatpush1.msra.mxu0 0.0
    %1784 = vmatprep.subr.mxu0 0.0
    %1785 = vmatpush1.msra.mxu0 0.0
    %1786 = vmatprep.subr.mxu0 0.0
    %1787 = vmatpush1.msra.mxu0 0.0
    %1788 = vmatprep.subr.mxu0 0.0
    %1789 = vmatpush1.msra.mxu0 0.0
    %1790 = vmatprep.subr.mxu0 0.0
    %1791 = vmatpush1.msra.mxu0 0.0
    %1792 = vmatprep.subr.mxu0 0.0
    %1793 = vmatpush1.msra.mxu0 0.0
    %1794 = vmatprep.subr.mxu0 0.0
    %1795 = vmatpush1.msra.mxu0 0.0
    %1796 = vmatprep.subr.mxu0 0.0
    %1797 = vmatpush1.msra.mxu0 0.0
    %1798 = vmatprep.subr.mxu0 0.0
    %1799 = vmatpush1.msra.mxu0 0.0
    %1800 = vmatprep.subr.mxu0 0.0
    %1801 = vmatpush1.msra.mxu0 0.0
    %1802 = vmatprep.subr.mxu0 0.0
    %1803 = vmatpush1.msra.mxu0 0.0
    %1804 = vmatprep.subr.mxu0 0.0
    %1805 = vmatpush1.msra.mxu0 0.0
    %1806 = vmatprep.subr.mxu0 0.0
    %1807 = vmatpush1.msra.mxu0 0.0
    %1808 = vmatprep.subr.mxu0 0.0
    %1809 = vmatpush1.msra.mxu0 0.0
    %1810 = vmatprep.subr.mxu0 0.0
    %1811 = vmatpush1.msra.mxu0 0.0
    %1812 = vmatprep.subr.mxu0 0.0
    %1813 = vmatpush1.msra.mxu0 0.0
    %1814 = vmatprep.subr.mxu0 0.0
    %1815 = vmatpush1.msra.mxu0 0.0
    %1816 = vmatprep.subr.mxu0 0.0
    %1817 = vmatpush1.msra.mxu0 0.0
    %1818 = vmatprep.subr.mxu0 0.0
    %1819 = vmatpush1.msra.mxu0 0.0
    %1820 = vmatprep.subr.mxu0 0.0
    %1821 = vmatpush1.msra.mxu0 0.0
    %1822 = vmatprep.subr.mxu0 0.0
    %1823 = vmatpush1.msra.mxu0 0.0
    %1824 = vmatprep.subr.mxu0 0.0
    %1825 = vmatpush1.msra.mxu0 0.0
    %1826 = vmatprep.subr.mxu0 0.0
    %1827 = vmatpush1.msra.mxu0 0.0
    %1828 = vmatprep.subr.mxu0 0.0
    %1829 = vmatpush1.msra.mxu0 0.0
    %1830 = vmatprep.subr.mxu0 0.0
    %1831 = vmatpush1.msra.mxu0 0.0
    %1832 = vmatprep.subr.mxu0 0.0
    %1833 = vmatpush1.msra.mxu0 0.0
    %1834 = vmatprep.subr.mxu0 0.0
    %1835 = vmatpush1.msra.mxu0 0.0
    %1836 = vmatprep.subr.mxu0 0.0
    %1837 = vmatpush1.msra.mxu0 0.0
    %1838 = vmatprep.subr.mxu0 0.0
    %1839 = vmatpush1.msra.mxu0 0.0
    %1840 = vmatprep.subr.mxu0 0.0
    %1841 = vmatpush1.msra.mxu0 0.0
    %1842 = vmatprep.mubr.f32.mxu0 0.0
    %1843 = vmatmul.mubr.f32.gmra.mrb[0].mxu0 %v1776
    %v1844 = vpop.f32.mrb[0].mxu0
    %v1845 = vadd.f32 0.0, %v1844
    %v1846 = vpop.f32.mrb[0].mxu0
    %1847 = vdwg.mxu0
    %1849 = vrot.lane.b32.xlu0 %v1845, 16
    %v1850 = vpop.permute.xlu0 %1849
    %1852 = vst.msk [vmem:[#allocation2] sm:$0xff] %vm519, %v1850
    %1854 = vrot.lane.b32.xlu0 %v1511, 96
    %v1855 = vpop.permute.xlu0 %1854
    %v1856 = vsel %vm178, %v1511, 0
    %v1858 = vsel %vm178, %v1855, 0
    %1860 = vmatprep.subr.mxu0 0.0
    %1861 = vmatpush1.xpose.msra.mxu0 %v1858
    %1862 = vmatprep.subr.mxu0 0.0
    %1863 = vmatpush1.xpose.msra.mxu0 0.0
    %1864 = vmatprep.subr.mxu0 0.0
    %1865 = vmatpush1.xpose.msra.mxu0 0.0
    %1866 = vmatprep.subr.mxu0 0.0
    %1867 = vmatpush1.xpose.msra.mxu0 0.0
    %1868 = vmatprep.subr.mxu0 0.0
    %1869 = vmatpush1.xpose.msra.mxu0 0.0
    %1870 = vmatprep.subr.mxu0 0.0
    %1871 = vmatpush1.xpose.msra.mxu0 0.0
    %1872 = vmatprep.subr.mxu0 0.0
    %1873 = vmatpush1.xpose.msra.mxu0 0.0
    %1874 = vmatprep.subr.mxu0 0.0
    %1875 = vmatpush1.xpose.msra.mxu0 0.0
    %1876 = vmatprep.subr.mxu0 0.0
    %1877 = vmatpush1.xpose.msra.mxu0 0.0
    %1878 = vmatprep.subr.mxu0 0.0
    %1879 = vmatpush1.xpose.msra.mxu0 0.0
    %1880 = vmatprep.subr.mxu0 0.0
    %1881 = vmatpush1.xpose.msra.mxu0 0.0
    %1882 = vmatprep.subr.mxu0 0.0
    %1883 = vmatpush1.xpose.msra.mxu0 0.0
    %1884 = vmatprep.subr.mxu0 0.0
    %1885 = vmatpush1.xpose.msra.mxu0 0.0
    %1886 = vmatprep.subr.mxu0 0.0
    %1887 = vmatpush1.xpose.msra.mxu0 0.0
    %1888 = vmatprep.subr.mxu0 0.0
    %1889 = vmatpush1.xpose.msra.mxu0 0.0
    %1890 = vmatprep.subr.mxu0 0.0
    %1891 = vmatpush1.xpose.msra.mxu0 0.0
    %1892 = vmatprep.subr.mxu0 0.0
    %1893 = vmatpush1.xpose.msra.mxu0 0.0
    %1894 = vmatprep.subr.mxu0 0.0
    %1895 = vmatpush1.xpose.msra.mxu0 0.0
    %1896 = vmatprep.subr.mxu0 0.0
    %1897 = vmatpush1.xpose.msra.mxu0 0.0
    %1898 = vmatprep.subr.mxu0 0.0
    %1899 = vmatpush1.xpose.msra.mxu0 0.0
    %1900 = vmatprep.subr.mxu0 0.0
    %1901 = vmatpush1.xpose.msra.mxu0 0.0
    %1902 = vmatprep.subr.mxu0 0.0
    %1903 = vmatpush1.xpose.msra.mxu0 0.0
    %1904 = vmatprep.subr.mxu0 0.0
    %1905 = vmatpush1.xpose.msra.mxu0 0.0
    %1906 = vmatprep.subr.mxu0 0.0
    %1907 = vmatpush1.xpose.msra.mxu0 0.0
    %1908 = vmatprep.subr.mxu0 0.0
    %1909 = vmatpush1.xpose.msra.mxu0 0.0
    %1910 = vmatprep.subr.mxu0 0.0
    %1911 = vmatpush1.xpose.msra.mxu0 0.0
    %1912 = vmatprep.subr.mxu0 0.0
    %1913 = vmatpush1.xpose.msra.mxu0 0.0
    %1914 = vmatprep.subr.mxu0 0.0
    %1915 = vmatpush1.xpose.msra.mxu0 0.0
    %1916 = vmatprep.subr.mxu0 0.0
    %1917 = vmatpush1.xpose.msra.mxu0 0.0
    %1918 = vmatprep.subr.mxu0 0.0
    %1919 = vmatpush1.xpose.msra.mxu0 0.0
    %1920 = vmatprep.subr.mxu0 0.0
    %1921 = vmatpush1.xpose.msra.mxu0 0.0
    %1922 = vmatprep.subr.mxu0 0.0
    %1923 = vmatpush1.xpose.msra.mxu0 0.0
    %1924 = vmatprep.mubr.f32.mxu0 0.0
    %1925 = vmatmul.mubr.f32.gmra.mrb[0].mxu0 %v1856
    %v1926 = vpop.f32.mrb[0].mxu0
    %v1927 = vadd.f32 0.0, %v1926
    %v1928 = vpop.f32.mrb[0].mxu0
    %1929 = vdwg.mxu0
    %v1930 = vmul.f32 %v1927, 0.25
    %v1931 = vadd.f32 %v1930, %v602
    %v1932 = vsel %vm259, %v1931, -inf
    %1933 = vmax.xlane.f32.xlu0 %v1932
    %v1934 = vpop.xlane.xlu0 %1933
    %v1935 = vsub.f32 %v1931, %v1934
    %v1936 = vmul.f32 %v1935, 1.442695
    %v1937 = vpow.pop %v1936
    %v1938 = vsel %vm259, %v1937, 0.0
    %1939 = vadd.xlane.f32.xlu0 %v1938
    %v1940 = vpop.xlane.xlu0 %1939
    %v1941 = vrcp.pop %v1940
    %v1942 = vmul.f32 %v1937, %v1941
    %1943 = vrot.lane.b32.xlu0 %v1511, 64
    %v1944 = vpop.permute.xlu0 %1943
    %v1947 = vsel %vm259, %v1942, 0
    %1949 = vmatprep.subr.mxu0 0.0
    %1950 = vmatpush1.msra.mxu0 %v1944
    %1951 = vmatprep.subr.mxu0 0.0
    %1952 = vmatpush1.msra.mxu0 0.0
    %1953 = vmatprep.subr.mxu0 0.0
    %1954 = vmatpush1.msra.mxu0 0.0
    %1955 = vmatprep.subr.mxu0 0.0
    %1956 = vmatpush1.msra.mxu0 0.0
    %1957 = vmatprep.subr.mxu0 0.0
    %1958 = vmatpush1.msra.mxu0 0.0
    %1959 = vmatprep.subr.mxu0 0.0
    %1960 = vmatpush1.msra.mxu0 0.0
    %1961 = vmatprep.subr.mxu0 0.0
    %1962 = vmatpush1.msra.mxu0 0.0
    %1963 = vmatprep.subr.mxu0 0.0
    %1964 = vmatpush1.msra.mxu0 0.0
    %1965 = vmatprep.subr.mxu0 0.0
    %1966 = vmatpush1.msra.mxu0 0.0
    %1967 = vmatprep.subr.mxu0 0.0
    %1968 = vmatpush1.msra.mxu0 0.0
    %1969 = vmatprep.subr.mxu0 0.0
    %1970 = vmatpush1.msra.mxu0 0.0
    %1971 = vmatprep.subr.mxu0 0.0
    %1972 = vmatpush1.msra.mxu0 0.0
    %1973 = vmatprep.subr.mxu0 0.0
    %1974 = vmatpush1.msra.mxu0 0.0
    %1975 = vmatprep.subr.mxu0 0.0
    %1976 = vmatpush1.msra.mxu0 0.0
    %1977 = vmatprep.subr.mxu0 0.0
    %1978 = vmatpush1.msra.mxu0 0.0
    %1979 = vmatprep.subr.mxu0 0.0
    %1980 = vmatpush1.msra.mxu0 0.0
    %1981 = vmatprep.subr.mxu0 0.0
    %1982 = vmatpush1.msra.mxu0 0.0
    %1983 = vmatprep.subr.mxu0 0.0
    %1984 = vmatpush1.msra.mxu0 0.0
    %1985 = vmatprep.subr.mxu0 0.0
    %1986 = vmatpush1.msra.mxu0 0.0
    %1987 = vmatprep.subr.mxu0 0.0
    %1988 = vmatpush1.msra.mxu0 0.0
    %1989 = vmatprep.subr.mxu0 0.0
    %1990 = vmatpush1.msra.mxu0 0.0
    %1991 = vmatprep.subr.mxu0 0.0
    %1992 = vmatpush1.msra.mxu0 0.0
    %1993 = vmatprep.subr.mxu0 0.0
    %1994 = vmatpush1.msra.mxu0 0.0
    %1995 = vmatprep.subr.mxu0 0.0
    %1996 = vmatpush1.msra.mxu0 0.0
    %1997 = vmatprep.subr.mxu0 0.0
    %1998 = vmatpush1.msra.mxu0 0.0
    %1999 = vmatprep.subr.mxu0 0.0
    %2000 = vmatpush1.msra.mxu0 0.0
    %2001 = vmatprep.subr.mxu0 0.0
    %2002 = vmatpush1.msra.mxu0 0.0
    %2003 = vmatprep.subr.mxu0 0.0
    %2004 = vmatpush1.msra.mxu0 0.0
    %2005 = vmatprep.subr.mxu0 0.0
    %2006 = vmatpush1.msra.mxu0 0.0
    %2007 = vmatprep.subr.mxu0 0.0
    %2008 = vmatpush1.msra.mxu0 0.0
    %2009 = vmatprep.subr.mxu0 0.0
    %2010 = vmatpush1.msra.mxu0 0.0
    %2011 = vmatprep.subr.mxu0 0.0
    %2012 = vmatpush1.msra.mxu0 0.0
    %2013 = vmatprep.mubr.f32.mxu0 0.0
    %2014 = vmatmul.mubr.f32.gmra.mrb[0].mxu0 %v1947
    %v2015 = vpop.f32.mrb[0].mxu0
    %v2016 = vadd.f32 0.0, %v2015
    %v2017 = vpop.f32.mrb[0].mxu0
    %2018 = vdwg.mxu0
    %2019 = vst.msk [vmem:[#allocation2 + $0x8] sm:$0xff] %vm178, %v2016
    %2020 = vrot.lane.b32.xlu0 %v1511, 112
    %v2021 = vpop.permute.xlu0 %2020
    %2022 = vrot.lane.b32.xlu0 %v1511, 80
    %v2023 = vpop.permute.xlu0 %2022
    %v2024 = vsel %vm178, %v2021, 0
    %v2026 = vsel %vm178, %v2023, 0
    %2028 = vmatprep.subr.mxu0 0.0
    %2029 = vmatpush1.xpose.msra.mxu0 %v2026
    %2030 = vmatprep.subr.mxu0 0.0
    %2031 = vmatpush1.xpose.msra.mxu0 0.0
    %2032 = vmatprep.subr.mxu0 0.0
    %2033 = vmatpush1.xpose.msra.mxu0 0.0
    %2034 = vmatprep.subr.mxu0 0.0
    %2035 = vmatpush1.xpose.msra.mxu0 0.0
    %2036 = vmatprep.subr.mxu0 0.0
    %2037 = vmatpush1.xpose.msra.mxu0 0.0
    %2038 = vmatprep.subr.mxu0 0.0
    %2039 = vmatpush1.xpose.msra.mxu0 0.0
    %2040 = vmatprep.subr.mxu0 0.0
    %2041 = vmatpush1.xpose.msra.mxu0 0.0
    %2042 = vmatprep.subr.mxu0 0.0
    %2043 = vmatpush1.xpose.msra.mxu0 0.0
    %2044 = vmatprep.subr.mxu0 0.0
    %2045 = vmatpush1.xpose.msra.mxu0 0.0
    %2046 = vmatprep.subr.mxu0 0.0
    %2047 = vmatpush1.xpose.msra.mxu0 0.0
    %2048 = vmatprep.subr.mxu0 0.0
    %2049 = vmatpush1.xpose.msra.mxu0 0.0
    %2050 = vmatprep.subr.mxu0 0.0
    %2051 = vmatpush1.xpose.msra.mxu0 0.0
    %2052 = vmatprep.subr.mxu0 0.0
    %2053 = vmatpush1.xpose.msra.mxu0 0.0
    %2054 = vmatprep.subr.mxu0 0.0
    %2055 = vmatpush1.xpose.msra.mxu0 0.0
    %2056 = vmatprep.subr.mxu0 0.0
    %2057 = vmatpush1.xpose.msra.mxu0 0.0
    %2058 = vmatprep.subr.mxu0 0.0
    %2059 = vmatpush1.xpose.msra.mxu0 0.0
    %2060 = vmatprep.subr.mxu0 0.0
    %2061 = vmatpush1.xpose.msra.mxu0 0.0
    %2062 = vmatprep.subr.mxu0 0.0
    %2063 = vmatpush1.xpose.msra.mxu0 0.0
    %2064 = vmatprep.subr.mxu0 0.0
    %2065 = vmatpush1.xpose.msra.mxu0 0.0
    %2066 = vmatprep.subr.mxu0 0.0
    %2067 = vmatpush1.xpose.msra.mxu0 0.0
    %2068 = vmatprep.subr.mxu0 0.0
    %2069 = vmatpush1.xpose.msra.mxu0 0.0
    %2070 = vmatprep.subr.mxu0 0.0
    %2071 = vmatpush1.xpose.msra.mxu0 0.0
    %2072 = vmatprep.subr.mxu0 0.0
    %2073 = vmatpush1.xpose.msra.mxu0 0.0
    %2074 = vmatprep.subr.mxu0 0.0
    %2075 = vmatpush1.xpose.msra.mxu0 0.0
    %2076 = vmatprep.subr.mxu0 0.0
    %2077 = vmatpush1.xpose.msra.mxu0 0.0
    %2078 = vmatprep.subr.mxu0 0.0
    %2079 = vmatpush1.xpose.msra.mxu0 0.0
    %2080 = vmatprep.subr.mxu0 0.0
    %2081 = vmatpush1.xpose.msra.mxu0 0.0
    %2082 = vmatprep.subr.mxu0 0.0
    %2083 = vmatpush1.xpose.msra.mxu0 0.0
    %2084 = vmatprep.subr.mxu0 0.0
    %2085 = vmatpush1.xpose.msra.mxu0 0.0
    %2086 = vmatprep.subr.mxu0 0.0
    %2087 = vmatpush1.xpose.msra.mxu0 0.0
    %2088 = vmatprep.subr.mxu0 0.0
    %2089 = vmatpush1.xpose.msra.mxu0 0.0
    %2090 = vmatprep.subr.mxu0 0.0
    %2091 = vmatpush1.xpose.msra.mxu0 0.0
    %2092 = vmatprep.mubr.f32.mxu0 0.0
    %2093 = vmatmul.mubr.f32.gmra.mrb[0].mxu0 %v2024
    %v2094 = vpop.f32.mrb[0].mxu0
    %v2095 = vadd.f32 0.0, %v2094
    %v2096 = vpop.f32.mrb[0].mxu0
    %2097 = vdwg.mxu0
    %v2098 = vmul.f32 %v2095, 0.25
    %v2099 = vadd.f32 %v2098, %v602
    %v2100 = vsel %vm259, %v2099, -inf
    %2101 = vmax.xlane.f32.xlu0 %v2100
    %v2102 = vpop.xlane.xlu0 %2101
    %v2103 = vsub.f32 %v2099, %v2102
    %v2104 = vmul.f32 %v2103, 1.442695
    %v2105 = vpow.pop %v2104
    %v2106 = vsel %vm259, %v2105, 0.0
    %2107 = vadd.xlane.f32.xlu0 %v2106
    %v2108 = vpop.xlane.xlu0 %2107
    %v2109 = vrcp.pop %v2108
    %v2110 = vmul.f32 %v2105, %v2109
    %2111 = vrot.lane.b32.xlu0 %v1511, 48
    %v2112 = vpop.permute.xlu0 %2111
    %v2115 = vsel %vm259, %v2110, 0
    %2117 = vmatprep.subr.mxu0 0.0
    %2118 = vmatpush1.msra.mxu0 %v2112
    %2119 = vmatprep.subr.mxu0 0.0
    %2120 = vmatpush1.msra.mxu0 0.0
    %2121 = vmatprep.subr.mxu0 0.0
    %2122 = vmatpush1.msra.mxu0 0.0
    %2123 = vmatprep.subr.mxu0 0.0
    %2124 = vmatpush1.msra.mxu0 0.0
    %2125 = vmatprep.subr.mxu0 0.0
    %2126 = vmatpush1.msra.mxu0 0.0
    %2127 = vmatprep.subr.mxu0 0.0
    %2128 = vmatpush1.msra.mxu0 0.0
    %2129 = vmatprep.subr.mxu0 0.0
    %2130 = vmatpush1.msra.mxu0 0.0
    %2131 = vmatprep.subr.mxu0 0.0
    %2132 = vmatpush1.msra.mxu0 0.0
    %2133 = vmatprep.subr.mxu0 0.0
    %2134 = vmatpush1.msra.mxu0 0.0
    %2135 = vmatprep.subr.mxu0 0.0
    %2136 = vmatpush1.msra.mxu0 0.0
    %2137 = vmatprep.subr.mxu0 0.0
    %2138 = vmatpush1.msra.mxu0 0.0
    %2139 = vmatprep.subr.mxu0 0.0
    %2140 = vmatpush1.msra.mxu0 0.0
    %2141 = vmatprep.subr.mxu0 0.0
    %2142 = vmatpush1.msra.mxu0 0.0
    %2143 = vmatprep.subr.mxu0 0.0
    %2144 = vmatpush1.msra.mxu0 0.0
    %2145 = vmatprep.subr.mxu0 0.0
    %2146 = vmatpush1.msra.mxu0 0.0
    %2147 = vmatprep.subr.mxu0 0.0
    %2148 = vmatpush1.msra.mxu0 0.0
    %2149 = vmatprep.subr.mxu0 0.0
    %2150 = vmatpush1.msra.mxu0 0.0
    %2151 = vmatprep.subr.mxu0 0.0
    %2152 = vmatpush1.msra.mxu0 0.0
    %2153 = vmatprep.subr.mxu0 0.0
    %2154 = vmatpush1.msra.mxu0 0.0
    %2155 = vmatprep.subr.mxu0 0.0
    %2156 = vmatpush1.msra.mxu0 0.0
    %2157 = vmatprep.subr.mxu0 0.0
    %2158 = vmatpush1.msra.mxu0 0.0
    %2159 = vmatprep.subr.mxu0 0.0
    %2160 = vmatpush1.msra.mxu0 0.0
    %2161 = vmatprep.subr.mxu0 0.0
    %2162 = vmatpush1.msra.mxu0 0.0
    %2163 = vmatprep.subr.mxu0 0.0
    %2164 = vmatpush1.msra.mxu0 0.0
    %2165 = vmatprep.subr.mxu0 0.0
    %2166 = vmatpush1.msra.mxu0 0.0
    %2167 = vmatprep.subr.mxu0 0.0
    %2168 = vmatpush1.msra.mxu0 0.0
    %2169 = vmatprep.subr.mxu0 0.0
    %2170 = vmatpush1.msra.mxu0 0.0
    %2171 = vmatprep.subr.mxu0 0.0
    %2172 = vmatpush1.msra.mxu0 0.0
    %2173 = vmatprep.subr.mxu0 0.0
    %2174 = vmatpush1.msra.mxu0 0.0
    %2175 = vmatprep.subr.mxu0 0.0
    %2176 = vmatpush1.msra.mxu0 0.0
    %2177 = vmatprep.subr.mxu0 0.0
    %2178 = vmatpush1.msra.mxu0 0.0
    %2179 = vmatprep.subr.mxu0 0.0
    %2180 = vmatpush1.msra.mxu0 0.0
    %2181 = vmatprep.mubr.f32.mxu0 0.0
    %2182 = vmatmul.mubr.f32.gmra.mrb[0].mxu0 %v2115
    %v2183 = vpop.f32.mrb[0].mxu0
    %v2184 = vadd.f32 0.0, %v2183
    %v2185 = vpop.f32.mrb[0].mxu0
    %2186 = vdwg.mxu0
    %2188 = vrot.lane.b32.xlu0 %v2184, 16
    %v2189 = vpop.permute.xlu0 %2188
    %2191 = vst.msk [vmem:[#allocation2 + $0x8] sm:$0xff] %vm519, %v2189
    %v2192 = vld [vmem:[#allocation2] sm:$0xff]
    %v2193 = vld [vmem:[#allocation2 + $0x8] sm:$0xff]
    %v2194 = vld [vmem:[%s6 + $0xc0] sm:$0xff]
    %v2195 = vld [vmem:[%s6 + $0xc8] sm:$0xff]
    %v2196 = vld [vmem:[%s6 + $0xd0] sm:$0xff]
    %v2197 = vld [vmem:[%s6 + $0xd8] sm:$0xff]
    %v2198 = vld [vmem:[%s7 + $0xb] sm:$0x1]
    %v2199 = vlaneseq
    %v2200 = vshrl.u32 %v2199, 7
    %v2201 = vsub.s32 0, %v2200
    %v2202 = vrot.slane %v2198, %v2201
    %v2204 = vsel %vm45, %v2192, 0
    %v2207 = vsel %vm45, %v2193, 0
    %2209 = vmatprep.subr.mxu0 0.0
    %2210 = vmatpush1.msra.mxu0 %v2194
    %2211 = vmatprep.subr.mxu0 0.0
    %2212 = vmatpush1.msra.mxu0 %v2195
    %2213 = vmatprep.subr.mxu0 0.0
    %2214 = vmatpush1.msra.mxu0 %v2196
    %2215 = vmatprep.subr.mxu0 0.0
    %2216 = vmatpush1.msra.mxu0 %v2197
    %2217 = vmatprep.subr.mxu0 0.0
    %2218 = vmatpush1.msra.mxu0 0.0
    %2219 = vmatprep.subr.mxu0 0.0
    %2220 = vmatpush1.msra.mxu0 0.0
    %2221 = vmatprep.subr.mxu0 0.0
    %2222 = vmatpush1.msra.mxu0 0.0
    %2223 = vmatprep.subr.mxu0 0.0
    %2224 = vmatpush1.msra.mxu0 0.0
    %2225 = vmatprep.subr.mxu0 0.0
    %2226 = vmatpush1.msra.mxu0 0.0
    %2227 = vmatprep.subr.mxu0 0.0
    %2228 = vmatpush1.msra.mxu0 0.0
    %2229 = vmatprep.subr.mxu0 0.0
    %2230 = vmatpush1.msra.mxu0 0.0
    %2231 = vmatprep.subr.mxu0 0.0
    %2232 = vmatpush1.msra.mxu0 0.0
    %2233 = vmatprep.subr.mxu0 0.0
    %2234 = vmatpush1.msra.mxu0 0.0
    %2235 = vmatprep.subr.mxu0 0.0
    %2236 = vmatpush1.msra.mxu0 0.0
    %2237 = vmatprep.subr.mxu0 0.0
    %2238 = vmatpush1.msra.mxu0 0.0
    %2239 = vmatprep.subr.mxu0 0.0
    %2240 = vmatpush1.msra.mxu0 0.0
    %2241 = vmatprep.subr.mxu0 0.0
    %2242 = vmatpush1.msra.mxu0 0.0
    %2243 = vmatprep.subr.mxu0 0.0
    %2244 = vmatpush1.msra.mxu0 0.0
    %2245 = vmatprep.subr.mxu0 0.0
    %2246 = vmatpush1.msra.mxu0 0.0
    %2247 = vmatprep.subr.mxu0 0.0
    %2248 = vmatpush1.msra.mxu0 0.0
    %2249 = vmatprep.subr.mxu0 0.0
    %2250 = vmatpush1.msra.mxu0 0.0
    %2251 = vmatprep.subr.mxu0 0.0
    %2252 = vmatpush1.msra.mxu0 0.0
    %2253 = vmatprep.subr.mxu0 0.0
    %2254 = vmatpush1.msra.mxu0 0.0
    %2255 = vmatprep.subr.mxu0 0.0
    %2256 = vmatpush1.msra.mxu0 0.0
    %2257 = vmatprep.subr.mxu0 0.0
    %2258 = vmatpush1.msra.mxu0 0.0
    %2259 = vmatprep.subr.mxu0 0.0
    %2260 = vmatpush1.msra.mxu0 0.0
    %2261 = vmatprep.subr.mxu0 0.0
    %2262 = vmatpush1.msra.mxu0 0.0
    %2263 = vmatprep.subr.mxu0 0.0
    %2264 = vmatpush1.msra.mxu0 0.0
    %2265 = vmatprep.subr.mxu0 0.0
    %2266 = vmatpush1.msra.mxu0 0.0
    %2267 = vmatprep.subr.mxu0 0.0
    %2268 = vmatpush1.msra.mxu0 0.0
    %2269 = vmatprep.subr.mxu0 0.0
    %2270 = vmatpush1.msra.mxu0 0.0
    %2271 = vmatprep.subr.mxu0 0.0
    %2272 = vmatpush1.msra.mxu0 0.0
    %2273 = vmatprep.mubr.f32.mxu0 0.0
    %2274 = vmatmul.mubr.f32.gmra.mrb[0].mxu0 %v2204
    %v2275 = vpop.f32.mrb[0].mxu0
    %v2276 = vadd.f32 %v2202, %v2275
    %v2277 = vpop.f32.mrb[0].mxu0
    %2278 = vmatprep.mubr.f32.mxu0 0.0
    %2279 = vmatmul.mubr.f32.gmra.mrb[0].mxu0 %v2207
    %v2280 = vpop.f32.mrb[0].mxu0
    %v2281 = vadd.f32 %v2202, %v2280
    %v2282 = vpop.f32.mrb[0].mxu0
    %2283 = vdwg.mxu0
    %v2284 = vadd.f32 %v2276, %v1277
    %v2285 = vadd.f32 %v2281, %v1278
    %v2286 = vld [vmem:[%s7 + $0xc] sm:$0x1]
    %v2287 = vld [vmem:[%s7 + $0xd] sm:$0x1]
    %v2288 = vsel %vm45, %v2284, 0.0
    %2289 = vadd.xlane.f32.xlu0 %v2288
    %v2290 = vpop.xlane.xlu0 %2289
    %v2291 = vsel %vm45, %v2285, 0.0
    %2292 = vadd.xlane.f32.xlu0 %v2291
    %v2293 = vpop.xlane.xlu0 %2292
    %v2294 = vmul.f32 %v2290, %v52
    %v2295 = vmul.f32 %v2293, %v52
    %v2296 = vsub.f32 %v2284, %v2294
    %v2297 = vsub.f32 %v2285, %v2295
    %v2298 = vmul.f32 %v2296, %v2296
    %v2299 = vmul.f32 %v2297, %v2297
    %v2300 = vsel %vm45, %v2298, 0.0
    %2301 = vadd.xlane.f32.xlu0 %v2300
    %v2302 = vpop.xlane.xlu0 %2301
    %v2303 = vsel %vm45, %v2299, 0.0
    %2304 = vadd.xlane.f32.xlu0 %v2303
    %v2305 = vpop.xlane.xlu0 %2304
    %v2306 = vmul.f32 %v2302, %v52
    %v2307 = vmul.f32 %v2305, %v52
    %v2308 = vadd.f32 %v2306, 1e-12
    %v2309 = vadd.f32 %v2307, 1e-12
    %v2310 = vrsqrt.pop %v2308
    %v2311 = vrsqrt.pop %v2309
    %v2312 = vmul.f32 %v2296, %v2310
    %v2313 = vmul.f32 %v2297, %v2311
    %v2314 = vlaneseq
    %v2315 = vshrl.u32 %v2314, 7
    %v2316 = vsub.s32 0, %v2315
    %v2317 = vrot.slane %v2286, %v2316
    %v2318 = vmul.f32 %v2312, %v2317
    %v2319 = vmul.f32 %v2313, %v2317
    %v2320 = vlaneseq
    %v2321 = vshrl.u32 %v2320, 7
    %v2322 = vsub.s32 0, %v2321
    %v2323 = vrot.slane %v2287, %v2322
    %v2324 = vadd.f32 %v2318, %v2323
    %v2325 = vadd.f32 %v2319, %v2323
    %v2326 = vld [vmem:[%s6 + $0xe0] sm:$0xff]
    %v2327 = vld [vmem:[%s6 + $0xe8] sm:$0xff]
    %v2328 = vld [vmem:[%s6 + $0xf0] sm:$0xff]
    %v2329 = vld [vmem:[%s6 + $0xf8] sm:$0xff]
    %v2330 = vld [vmem:[%s7 + $0xe] sm:$0x1]
    %v2331 = vlaneseq
    %v2332 = vshrl.u32 %v2331, 7
    %v2333 = vsub.s32 0, %v2332
    %v2334 = vrot.slane %v2330, %v2333
    %v2336 = vsel %vm45, %v2324, 0
    %v2339 = vsel %vm45, %v2325, 0
    %2341 = vmatprep.subr.mxu0 0.0
    %2342 = vmatpush1.msra.mxu0 %v2326
    %2343 = vmatprep.subr.mxu0 0.0
    %2344 = vmatpush1.msra.mxu0 %v2327
    %2345 = vmatprep.subr.mxu0 0.0
    %2346 = vmatpush1.msra.mxu0 %v2328
    %2347 = vmatprep.subr.mxu0 0.0
    %2348 = vmatpush1.msra.mxu0 %v2329
    %2349 = vmatprep.subr.mxu0 0.0
    %2350 = vmatpush1.msra.mxu0 0.0
    %2351 = vmatprep.subr.mxu0 0.0
    %2352 = vmatpush1.msra.mxu0 0.0
    %2353 = vmatprep.subr.mxu0 0.0
    %2354 = vmatpush1.msra.mxu0 0.0
    %2355 = vmatprep.subr.mxu0 0.0
    %2356 = vmatpush1.msra.mxu0 0.0
    %2357 = vmatprep.subr.mxu0 0.0
    %2358 = vmatpush1.msra.mxu0 0.0
    %2359 = vmatprep.subr.mxu0 0.0
    %2360 = vmatpush1.msra.mxu0 0.0
    %2361 = vmatprep.subr.mxu0 0.0
    %2362 = vmatpush1.msra.mxu0 0.0
    %2363 = vmatprep.subr.mxu0 0.0
    %2364 = vmatpush1.msra.mxu0 0.0
    %2365 = vmatprep.subr.mxu0 0.0
    %2366 = vmatpush1.msra.mxu0 0.0
    %2367 = vmatprep.subr.mxu0 0.0
    %2368 = vmatpush1.msra.mxu0 0.0
    %2369 = vmatprep.subr.mxu0 0.0
    %2370 = vmatpush1.msra.mxu0 0.0
    %2371 = vmatprep.subr.mxu0 0.0
    %2372 = vmatpush1.msra.mxu0 0.0
    %2373 = vmatprep.subr.mxu0 0.0
    %2374 = vmatpush1.msra.mxu0 0.0
    %2375 = vmatprep.subr.mxu0 0.0
    %2376 = vmatpush1.msra.mxu0 0.0
    %2377 = vmatprep.subr.mxu0 0.0
    %2378 = vmatpush1.msra.mxu0 0.0
    %2379 = vmatprep.subr.mxu0 0.0
    %2380 = vmatpush1.msra.mxu0 0.0
    %2381 = vmatprep.subr.mxu0 0.0
    %2382 = vmatpush1.msra.mxu0 0.0
    %2383 = vmatprep.subr.mxu0 0.0
    %2384 = vmatpush1.msra.mxu0 0.0
    %2385 = vmatprep.subr.mxu0 0.0
    %2386 = vmatpush1.msra.mxu0 0.0
    %2387 = vmatprep.subr.mxu0 0.0
    %2388 = vmatpush1.msra.mxu0 0.0
    %2389 = vmatprep.subr.mxu0 0.0
    %2390 = vmatpush1.msra.mxu0 0.0
    %2391 = vmatprep.subr.mxu0 0.0
    %2392 = vmatpush1.msra.mxu0 0.0
    %2393 = vmatprep.subr.mxu0 0.0
    %2394 = vmatpush1.msra.mxu0 0.0
    %2395 = vmatprep.subr.mxu0 0.0
    %2396 = vmatpush1.msra.mxu0 0.0
    %2397 = vmatprep.subr.mxu0 0.0
    %2398 = vmatpush1.msra.mxu0 0.0
    %2399 = vmatprep.subr.mxu0 0.0
    %2400 = vmatpush1.msra.mxu0 0.0
    %2401 = vmatprep.subr.mxu0 0.0
    %2402 = vmatpush1.msra.mxu0 0.0
    %2403 = vmatprep.subr.mxu0 0.0
    %2404 = vmatpush1.msra.mxu0 0.0
    %2405 = vmatprep.mubr.f32.mxu0 0.0
    %2406 = vmatmul.mubr.f32.gmra.mrb[0].mxu0 %v2336
    %v2407 = vpop.f32.mrb[0].mxu0
    %v2408 = vadd.f32 %v2334, %v2407
    %v2409 = vpop.f32.mrb[0].mxu0
    %2410 = vmatprep.mubr.f32.mxu0 0.0
    %2411 = vmatmul.mubr.f32.gmra.mrb[0].mxu0 %v2339
    %v2412 = vpop.f32.mrb[0].mxu0
    %v2413 = vadd.f32 %v2334, %v2412
    %v2414 = vpop.f32.mrb[0].mxu0
    %2415 = vdwg.mxu0
    %v2416 = vmul.f32 %v2408, 0.5
    %v2417 = vmul.f32 %v2413, 0.5
    %v2418 = vmul.f32 %v2408, 0.70710677
    %v2419 = vmul.f32 %v2413, 0.70710677
    %vm2420 = vcmp.ge.f32.partialorder %v2418, 0.0
    %vm2421 = vcmp.ge.f32.partialorder %v2419, 0.0
    %v2422 = vsel %vm2420, 1.0, -1.0
    %v2423 = vsel %vm2421, 1.0, -1.0
    %v2424 = vand.u32 2147483647, %v2418
    %v2425 = vand.u32 2147483647, %v2419
    %v2426 = vmul.f32 %v2424, 0.3275911
    %v2427 = vmul.f32 %v2425, 0.3275911
    %v2428 = vadd.f32 %v2426, 1.0
    %v2429 = vadd.f32 %v2427, 1.0
    %v2430 = vrcp.pop %v2428
    %v2431 = vmul.f32 1.0, %v2430
    %v2432 = vrcp.pop %v2429
    %v2433 = vmul.f32 1.0, %v2432
    %v2434 = vmul.f32 %v2431, 1.0614054
    %v2435 = vmul.f32 %v2433, 1.0614054
    %v2436 = vadd.f32 %v2434, -1.4531521
    %v2437 = vadd.f32 %v2435, -1.4531521
    %v2438 = vmul.f32 %v2436, %v2431
    %v2439 = vmul.f32 %v2437, %v2433
    %v2440 = vadd.f32 %v2438, 1.4214138
    %v2441 = vadd.f32 %v2439, 1.4214138
    %v2442 = vmul.f32 %v2440, %v2431
    %v2443 = vmul.f32 %v2441, %v2433
    %v2444 = vadd.f32 %v2442, -0.28449672
    %v2445 = vadd.f32 %v2443, -0.28449672
    %v2446 = vmul.f32 %v2444, %v2431
    %v2447 = vmul.f32 %v2445, %v2433
    %v2448 = vadd.f32 %v2446, 0.2548296
    %v2449 = vadd.f32 %v2447, 0.2548296
    %v2450 = vmul.f32 %v2448, %v2431
    %v2451 = vmul.f32 %v2449, %v2433
    %v2452 = vsub.f32 0.0, %v2424
    %v2453 = vsub.f32 0.0, %v2425
    %v2454 = vmul.f32 %v2452, %v2424
    %v2455 = vmul.f32 %v2453, %v2425
    %v2456 = vmul.f32 %v2454, 1.442695
    %v2457 = vpow.pop %v2456
    %v2458 = vmul.f32 %v2455, 1.442695
    %v2459 = vpow.pop %v2458
    %v2460 = vmul.f32 %v2450, %v2457
    %v2461 = vmul.f32 %v2451, %v2459
    %v2462 = vsub.f32 1.0, %v2460
    %v2463 = vsub.f32 1.0, %v2461
    %v2464 = vmul.f32 %v2422, %v2462
    %v2465 = vmul.f32 %v2423, %v2463
    %v2466 = vadd.f32 %v2464, 1.0
    %v2467 = vadd.f32 %v2465, 1.0
    %v2468 = vmul.f32 %v2416, %v2466
    %v2469 = vmul.f32 %v2417, %v2467
    %v2470 = vld [vmem:[%s6 + $0x100] sm:$0xff]
    %v2471 = vld [vmem:[%s6 + $0x108] sm:$0xff]
    %v2472 = vld [vmem:[%s6 + $0x110] sm:$0xff]
    %v2473 = vld [vmem:[%s6 + $0x118] sm:$0xff]
    %v2474 = vld [vmem:[%s6 + $0x120] sm:$0xff]
    %v2475 = vld [vmem:[%s6 + $0x128] sm:$0xff]
    %v2476 = vld [vmem:[%s6 + $0x130] sm:$0xff]
    %v2477 = vld [vmem:[%s6 + $0x138] sm:$0xff]
    %v2478 = vld [vmem:[%s7 + $0xf] sm:$0x1]
    %v2479 = vlaneseq
    %v2480 = vshrl.u32 %v2479, 7
    %v2481 = vsub.s32 0, %v2480
    %v2482 = vrot.slane %v2478, %v2481
    %v2484 = vsel %vm1155, %v2468, 0
    %v2487 = vsel %vm1155, %v2469, 0
    %2489 = vmatprep.subr.mxu0 0.0
    %2490 = vmatpush1.msra.mxu0 %v2470
    %2491 = vmatprep.subr.mxu0 0.0
    %2492 = vmatpush1.msra.mxu0 %v2471
    %2493 = vmatprep.subr.mxu0 0.0
    %2494 = vmatpush1.msra.mxu0 %v2472
    %2495 = vmatprep.subr.mxu0 0.0
    %2496 = vmatpush1.msra.mxu0 %v2473
    %2497 = vmatprep.subr.mxu0 0.0
    %2498 = vmatpush1.msra.mxu0 %v2474
    %2499 = vmatprep.subr.mxu0 0.0
    %2500 = vmatpush1.msra.mxu0 %v2475
    %2501 = vmatprep.subr.mxu0 0.0
    %2502 = vmatpush1.msra.mxu0 %v2476
    %2503 = vmatprep.subr.mxu0 0.0
    %2504 = vmatpush1.msra.mxu0 %v2477
    %2505 = vmatprep.subr.mxu0 0.0
    %2506 = vmatpush1.msra.mxu0 0.0
    %2507 = vmatprep.subr.mxu0 0.0
    %2508 = vmatpush1.msra.mxu0 0.0
    %2509 = vmatprep.subr.mxu0 0.0
    %2510 = vmatpush1.msra.mxu0 0.0
    %2511 = vmatprep.subr.mxu0 0.0
    %2512 = vmatpush1.msra.mxu0 0.0
    %2513 = vmatprep.subr.mxu0 0.0
    %2514 = vmatpush1.msra.mxu0 0.0
    %2515 = vmatprep.subr.mxu0 0.0
    %2516 = vmatpush1.msra.mxu0 0.0
    %2517 = vmatprep.subr.mxu0 0.0
    %2518 = vmatpush1.msra.mxu0 0.0
    %2519 = vmatprep.subr.mxu0 0.0
    %2520 = vmatpush1.msra.mxu0 0.0
    %2521 = vmatprep.subr.mxu0 0.0
    %2522 = vmatpush1.msra.mxu0 0.0
    %2523 = vmatprep.subr.mxu0 0.0
    %2524 = vmatpush1.msra.mxu0 0.0
    %2525 = vmatprep.subr.mxu0 0.0
    %2526 = vmatpush1.msra.mxu0 0.0
    %2527 = vmatprep.subr.mxu0 0.0
    %2528 = vmatpush1.msra.mxu0 0.0
    %2529 = vmatprep.subr.mxu0 0.0
    %2530 = vmatpush1.msra.mxu0 0.0
    %2531 = vmatprep.subr.mxu0 0.0
    %2532 = vmatpush1.msra.mxu0 0.0
    %2533 = vmatprep.subr.mxu0 0.0
    %2534 = vmatpush1.msra.mxu0 0.0
    %2535 = vmatprep.subr.mxu0 0.0
    %2536 = vmatpush1.msra.mxu0 0.0
    %2537 = vmatprep.subr.mxu0 0.0
    %2538 = vmatpush1.msra.mxu0 0.0
    %2539 = vmatprep.subr.mxu0 0.0
    %2540 = vmatpush1.msra.mxu0 0.0
    %2541 = vmatprep.subr.mxu0 0.0
    %2542 = vmatpush1.msra.mxu0 0.0
    %2543 = vmatprep.subr.mxu0 0.0
    %2544 = vmatpush1.msra.mxu0 0.0
    %2545 = vmatprep.subr.mxu0 0.0
    %2546 = vmatpush1.msra.mxu0 0.0
    %2547 = vmatprep.subr.mxu0 0.0
    %2548 = vmatpush1.msra.mxu0 0.0
    %2549 = vmatprep.subr.mxu0 0.0
    %2550 = vmatpush1.msra.mxu0 0.0
    %2551 = vmatprep.subr.mxu0 0.0
    %2552 = vmatpush1.msra.mxu0 0.0
    %2553 = vmatprep.mubr.f32.mxu0 0.0
    %2554 = vmatmul.mubr.f32.gmra.mrb[0].mxu0 %v2484
    %v2555 = vpop.f32.mrb[0].mxu0
    %v2556 = vadd.f32 %v2482, %v2555
    %v2557 = vpop.f32.mrb[0].mxu0
    %2558 = vmatprep.mubr.f32.mxu0 0.0
    %2559 = vmatmul.mubr.f32.gmra.mrb[0].mxu0 %v2487
    %v2560 = vpop.f32.mrb[0].mxu0
    %v2561 = vadd.f32 %v2482, %v2560
    %v2562 = vpop.f32.mrb[0].mxu0
    %2563 = vdwg.mxu0
    %v2564 = vadd.f32 %v2556, %v2324
    %v2565 = vadd.f32 %v2561, %v2325
    %v2566 = vld [vmem:[%s7 + $0x10] sm:$0x1]
    %v2567 = vld [vmem:[%s7 + $0x11] sm:$0x1]
    %v2568 = vsel %vm45, %v2564, 0.0
    %2569 = vadd.xlane.f32.xlu0 %v2568
    %v2570 = vpop.xlane.xlu0 %2569
    %v2571 = vsel %vm45, %v2565, 0.0
    %2572 = vadd.xlane.f32.xlu0 %v2571
    %v2573 = vpop.xlane.xlu0 %2572
    %v2574 = vmul.f32 %v2570, %v52
    %v2575 = vmul.f32 %v2573, %v52
    %v2576 = vsub.f32 %v2564, %v2574
    %v2577 = vsub.f32 %v2565, %v2575
    %v2578 = vmul.f32 %v2576, %v2576
    %v2579 = vmul.f32 %v2577, %v2577
    %v2580 = vsel %vm45, %v2578, 0.0
    %2581 = vadd.xlane.f32.xlu0 %v2580
    %v2582 = vpop.xlane.xlu0 %2581
    %v2583 = vsel %vm45, %v2579, 0.0
    %2584 = vadd.xlane.f32.xlu0 %v2583
    %v2585 = vpop.xlane.xlu0 %2584
    %v2586 = vmul.f32 %v2582, %v52
    %v2587 = vmul.f32 %v2585, %v52
    %v2588 = vadd.f32 %v2586, 1e-12
    %v2589 = vadd.f32 %v2587, 1e-12
    %v2590 = vrsqrt.pop %v2588
    %v2591 = vrsqrt.pop %v2589
    %v2592 = vmul.f32 %v2576, %v2590
    %v2593 = vmul.f32 %v2577, %v2591
    %v2594 = vlaneseq
    %v2595 = vshrl.u32 %v2594, 7
    %v2596 = vsub.s32 0, %v2595
    %v2597 = vrot.slane %v2566, %v2596
    %v2598 = vmul.f32 %v2592, %v2597
    %v2599 = vmul.f32 %v2593, %v2597
    %v2600 = vlaneseq
    %v2601 = vshrl.u32 %v2600, 7
    %v2602 = vsub.s32 0, %v2601
    %v2603 = vrot.slane %v2567, %v2602
    %v2604 = vadd.f32 %v2598, %v2603
    %v2605 = vadd.f32 %v2599, %v2603
    %v2606 = vld [vmem:[%s2] sm:$0xff]
    %v2607 = vld [vmem:[%s2 + $0x8] sm:$0xff]
    %v2608 = vlaneseq
    %v2609 = vand.u32 %v2608, 127
    %v2610 = vcvt.s32.f32 %v2609
    %2612 = vset.pattern.permute.xlu0 0
    %2613 = vperm.xlu0 %2612, %v2606
    %v2614 = vpop.permute.xlu0 %2613
    %vm2616 = vcmp.eq.f32.partialorder %v2614, %v2610
    %v2617 = vsel %vm2616, 1, 0
    %v2618 = vcvt.s32.f32 %v2617
    %vm2619 = vcmp.eq.f32.partialorder %v38, 1.0
    %2621 = vset.pattern.permute.xlu0 0
    %2622 = vperm.xlu0 %2621, %v2607
    %v2623 = vpop.permute.xlu0 %2622
    %vm2625 = vcmp.eq.f32.partialorder %v2623, %v2610
    %v2626 = vsel %vm2625, 1, 0
    %v2627 = vcvt.s32.f32 %v2626
    %v2628 = vld [vmem:[%s9 + $0x2] sm:$0x1]
    %v2629 = vld [vmem:[%s9 + $0x3] sm:$0x1]
    %v2630 = vld [vmem:[%s3] sm:$0x3f]
    %v2631 = vlaneseq
    %v2632 = vshrl.u32 %v2631, 7
    %v2633 = vsub.s32 0, %v2632
    %v2634 = vrot.slane %v1354, %v2633
    %v2635 = vlaneseq
    %v2636 = vshrl.u32 %v2635, 7
    %v2637 = vsub.s32 0, %v2636
    %v2638 = vrot.slane %v1427, %v2637
    %vm2639 = vcmask 1042432
    %v2640 = vsel %vm2639, %v2634, %v2638
    %v2641 = vld [vmem:[%s8] sm:$0xff]
    %v2642 = vld [vmem:[%s8 + $0x8] sm:$0xff]
    %v2643 = vld [vmem:[%s8 + $0x10] sm:$0xff]
    %v2644 = vld [vmem:[%s8 + $0x18] sm:$0xff]
    %v2645 = vld [vmem:[%s9] sm:$0x1]
    %v2646 = vlaneseq
    %v2647 = vshrl.u32 %v2646, 7
    %v2648 = vsub.s32 0, %v2647
    %v2649 = vrot.slane %v2645, %v2648
    %v2651 = vsel %vm45, %v2630, 0
    %2653 = vmatprep.subr.mxu0 0.0
    %2654 = vmatpush1.msra.mxu0 %v2641
    %2655 = vmatprep.subr.mxu0 0.0
    %2656 = vmatpush1.msra.mxu0 %v2642
    %2657 = vmatprep.subr.mxu0 0.0
    %2658 = vmatpush1.msra.mxu0 %v2643
    %2659 = vmatprep.subr.mxu0 0.0
    %2660 = vmatpush1.msra.mxu0 %v2644
    %2661 = vmatprep.subr.mxu0 0.0
    %2662 = vmatpush1.msra.mxu0 0.0
    %2663 = vmatprep.subr.mxu0 0.0
    %2664 = vmatpush1.msra.mxu0 0.0
    %2665 = vmatprep.subr.mxu0 0.0
    %2666 = vmatpush1.msra.mxu0 0.0
    %2667 = vmatprep.subr.mxu0 0.0
    %2668 = vmatpush1.msra.mxu0 0.0
    %2669 = vmatprep.subr.mxu0 0.0
    %2670 = vmatpush1.msra.mxu0 0.0
    %2671 = vmatprep.subr.mxu0 0.0
    %2672 = vmatpush1.msra.mxu0 0.0
    %2673 = vmatprep.subr.mxu0 0.0
    %2674 = vmatpush1.msra.mxu0 0.0
    %2675 = vmatprep.subr.mxu0 0.0
    %2676 = vmatpush1.msra.mxu0 0.0
    %2677 = vmatprep.subr.mxu0 0.0
    %2678 = vmatpush1.msra.mxu0 0.0
    %2679 = vmatprep.subr.mxu0 0.0
    %2680 = vmatpush1.msra.mxu0 0.0
    %2681 = vmatprep.subr.mxu0 0.0
    %2682 = vmatpush1.msra.mxu0 0.0
    %2683 = vmatprep.subr.mxu0 0.0
    %2684 = vmatpush1.msra.mxu0 0.0
    %2685 = vmatprep.subr.mxu0 0.0
    %2686 = vmatpush1.msra.mxu0 0.0
    %2687 = vmatprep.subr.mxu0 0.0
    %2688 = vmatpush1.msra.mxu0 0.0
    %2689 = vmatprep.subr.mxu0 0.0
    %2690 = vmatpush1.msra.mxu0 0.0
    %2691 = vmatprep.subr.mxu0 0.0
    %2692 = vmatpush1.msra.mxu0 0.0
    %2693 = vmatprep.subr.mxu0 0.0
    %2694 = vmatpush1.msra.mxu0 0.0
    %2695 = vmatprep.subr.mxu0 0.0
    %2696 = vmatpush1.msra.mxu0 0.0
    %2697 = vmatprep.subr.mxu0 0.0
    %2698 = vmatpush1.msra.mxu0 0.0
    %2699 = vmatprep.subr.mxu0 0.0
    %2700 = vmatpush1.msra.mxu0 0.0
    %2701 = vmatprep.subr.mxu0 0.0
    %2702 = vmatpush1.msra.mxu0 0.0
    %2703 = vmatprep.subr.mxu0 0.0
    %2704 = vmatpush1.msra.mxu0 0.0
    %2705 = vmatprep.subr.mxu0 0.0
    %2706 = vmatpush1.msra.mxu0 0.0
    %2707 = vmatprep.subr.mxu0 0.0
    %2708 = vmatpush1.msra.mxu0 0.0
    %2709 = vmatprep.subr.mxu0 0.0
    %2710 = vmatpush1.msra.mxu0 0.0
    %2711 = vmatprep.subr.mxu0 0.0
    %2712 = vmatpush1.msra.mxu0 0.0
    %2713 = vmatprep.subr.mxu0 0.0
    %2714 = vmatpush1.msra.mxu0 0.0
    %2715 = vmatprep.subr.mxu0 0.0
    %2716 = vmatpush1.msra.mxu0 0.0
    %2717 = vmatprep.mubr.f32.mxu0 0.0
    %2718 = vmatmul.mubr.f32.gmra.mrb[0].mxu0 %v2651
    %v2719 = vpop.f32.mrb[0].mxu0
    %v2720 = vadd.f32 %v2649, %v2719
    %v2721 = vpop.f32.mrb[0].mxu0
    %2722 = vdwg.mxu0
    %v2723 = vld [vmem:[%s8 + $0x20] sm:$0xff]
    %v2724 = vld [vmem:[%s8 + $0x28] sm:$0xff]
    %v2725 = vld [vmem:[%s8 + $0x30] sm:$0xff]
    %v2726 = vld [vmem:[%s8 + $0x38] sm:$0xff]
    %v2727 = vld [vmem:[%s9 + $0x1] sm:$0x1]
    %v2728 = vlaneseq
    %v2729 = vshrl.u32 %v2728, 7
    %v2730 = vsub.s32 0, %v2729
    %v2731 = vrot.slane %v2727, %v2730
    %v2733 = vsel %vm45, %v2640, 0
    %2735 = vmatprep.subr.mxu0 0.0
    %2736 = vmatpush1.msra.mxu0 %v2723
    %2737 = vmatprep.subr.mxu0 0.0
    %2738 = vmatpush1.msra.mxu0 %v2724
    %2739 = vmatprep.subr.mxu0 0.0
    %2740 = vmatpush1.msra.mxu0 %v2725
    %2741 = vmatprep.subr.mxu0 0.0
    %2742 = vmatpush1.msra.mxu0 %v2726
    %2743 = vmatprep.subr.mxu0 0.0
    %2744 = vmatpush1.msra.mxu0 0.0
    %2745 = vmatprep.subr.mxu0 0.0
    %2746 = vmatpush1.msra.mxu0 0.0
    %2747 = vmatprep.subr.mxu0 0.0
    %2748 = vmatpush1.msra.mxu0 0.0
    %2749 = vmatprep.subr.mxu0 0.0
    %2750 = vmatpush1.msra.mxu0 0.0
    %2751 = vmatprep.subr.mxu0 0.0
    %2752 = vmatpush1.msra.mxu0 0.0
    %2753 = vmatprep.subr.mxu0 0.0
    %2754 = vmatpush1.msra.mxu0 0.0
    %2755 = vmatprep.subr.mxu0 0.0
    %2756 = vmatpush1.msra.mxu0 0.0
    %2757 = vmatprep.subr.mxu0 0.0
    %2758 = vmatpush1.msra.mxu0 0.0
    %2759 = vmatprep.subr.mxu0 0.0
    %2760 = vmatpush1.msra.mxu0 0.0
    %2761 = vmatprep.subr.mxu0 0.0
    %2762 = vmatpush1.msra.mxu0 0.0
    %2763 = vmatprep.subr.mxu0 0.0
    %2764 = vmatpush1.msra.mxu0 0.0
    %2765 = vmatprep.subr.mxu0 0.0
    %2766 = vmatpush1.msra.mxu0 0.0
    %2767 = vmatprep.subr.mxu0 0.0
    %2768 = vmatpush1.msra.mxu0 0.0
    %2769 = vmatprep.subr.mxu0 0.0
    %2770 = vmatpush1.msra.mxu0 0.0
    %2771 = vmatprep.subr.mxu0 0.0
    %2772 = vmatpush1.msra.mxu0 0.0
    %2773 = vmatprep.subr.mxu0 0.0
    %2774 = vmatpush1.msra.mxu0 0.0
    %2775 = vmatprep.subr.mxu0 0.0
    %2776 = vmatpush1.msra.mxu0 0.0
    %2777 = vmatprep.subr.mxu0 0.0
    %2778 = vmatpush1.msra.mxu0 0.0
    %2779 = vmatprep.subr.mxu0 0.0
    %2780 = vmatpush1.msra.mxu0 0.0
    %2781 = vmatprep.subr.mxu0 0.0
    %2782 = vmatpush1.msra.mxu0 0.0
    %2783 = vmatprep.subr.mxu0 0.0
    %2784 = vmatpush1.msra.mxu0 0.0
    %2785 = vmatprep.subr.mxu0 0.0
    %2786 = vmatpush1.msra.mxu0 0.0
    %2787 = vmatprep.subr.mxu0 0.0
    %2788 = vmatpush1.msra.mxu0 0.0
    %2789 = vmatprep.subr.mxu0 0.0
    %2790 = vmatpush1.msra.mxu0 0.0
    %2791 = vmatprep.subr.mxu0 0.0
    %2792 = vmatpush1.msra.mxu0 0.0
    %2793 = vmatprep.subr.mxu0 0.0
    %2794 = vmatpush1.msra.mxu0 0.0
    %2795 = vmatprep.subr.mxu0 0.0
    %2796 = vmatpush1.msra.mxu0 0.0
    %2797 = vmatprep.subr.mxu0 0.0
    %2798 = vmatpush1.msra.mxu0 0.0
    %2799 = vmatprep.mubr.f32.mxu0 0.0
    %2800 = vmatmul.mubr.f32.gmra.mrb[0].mxu0 %v2733
    %v2801 = vpop.f32.mrb[0].mxu0
    %v2802 = vadd.f32 %v2731, %v2801
    %v2803 = vpop.f32.mrb[0].mxu0
    %2804 = vdwg.mxu0
    %v2805 = vadd.f32 %v2720, %v2802
    %v2806 = vxor.u32 %v2805, 2147483648
    %v2807 = vmul.f32 %v2806, 1.442695
    %v2808 = vpow.pop %v2807
    %v2809 = vadd.f32 %v2808, 1.0
    %v2810 = vrcp.pop %v2809
    %v2811 = vmul.f32 1.0, %v2810
    %2813 = vrot.lane.b32.xlu0 %v2802, 64
    %v2814 = vpop.permute.xlu0 %2813
    %v2816 = vmul.f32 %v2811, %v2814
    %2818 = vrot.lane.b32.xlu0 %v2816, 64
    %v2819 = vpop.permute.xlu0 %2818
    %v2821 = vadd.f32 %v2720, %v2819
    %v2822 = vtanh.pop %v2821
    %v2823 = vsub.f32 1.0, %v2811
    %2825 = vrot.lane.b32.xlu0 %v2822, 96
    %v2826 = vpop.permute.xlu0 %2825
    %v2828 = vmul.f32 %v2823, %v2826
    %2829 = vrot.lane.b32.xlu0 %v2640, 32
    %v2830 = vpop.permute.xlu0 %2829
    %v2832 = vmul.f32 %v2811, %v2830
    %v2833 = vadd.f32 %v2828, %v2832
    %v2834 = vld [vmem:[%s5] sm:$0xff]
    %v2835 = vld [vmem:[%s5 + $0x8] sm:$0xff]
    %v2836 = vld [vmem:[%s5 + $0x10] sm:$0xff]
    %v2837 = vld [vmem:[%s5 + $0x18] sm:$0xff]
    %2839 = vrot.lane.b32.xlu0 %v2833, 96
    %v2840 = vpop.permute.xlu0 %2839
    %v2841 = vsel %vm45, %v2840, 0
    %2843 = vmatprep.subr.mxu0 0.0
    %2844 = vmatpush1.msra.mxu0 %v2834
    %2845 = vmatprep.subr.mxu0 0.0
    %2846 = vmatpush1.msra.mxu0 %v2835
    %2847 = vmatprep.subr.mxu0 0.0
    %2848 = vmatpush1.msra.mxu0 %v2836
    %2849 = vmatprep.subr.mxu0 0.0
    %2850 = vmatpush1.msra.mxu0 %v2837
    %2851 = vmatprep.subr.mxu0 0.0
    %2852 = vmatpush1.msra.mxu0 0.0
    %2853 = vmatprep.subr.mxu0 0.0
    %2854 = vmatpush1.msra.mxu0 0.0
    %2855 = vmatprep.subr.mxu0 0.0
    %2856 = vmatpush1.msra.mxu0 0.0
    %2857 = vmatprep.subr.mxu0 0.0
    %2858 = vmatpush1.msra.mxu0 0.0
    %2859 = vmatprep.subr.mxu0 0.0
    %2860 = vmatpush1.msra.mxu0 0.0
    %2861 = vmatprep.subr.mxu0 0.0
    %2862 = vmatpush1.msra.mxu0 0.0
    %2863 = vmatprep.subr.mxu0 0.0
    %2864 = vmatpush1.msra.mxu0 0.0
    %2865 = vmatprep.subr.mxu0 0.0
    %2866 = vmatpush1.msra.mxu0 0.0
    %2867 = vmatprep.subr.mxu0 0.0
    %2868 = vmatpush1.msra.mxu0 0.0
    %2869 = vmatprep.subr.mxu0 0.0
    %2870 = vmatpush1.msra.mxu0 0.0
    %2871 = vmatprep.subr.mxu0 0.0
    %2872 = vmatpush1.msra.mxu0 0.0
    %2873 = vmatprep.subr.mxu0 0.0
    %2874 = vmatpush1.msra.mxu0 0.0
    %2875 = vmatprep.subr.mxu0 0.0
    %2876 = vmatpush1.msra.mxu0 0.0
    %2877 = vmatprep.subr.mxu0 0.0
    %2878 = vmatpush1.msra.mxu0 0.0
    %2879 = vmatprep.subr.mxu0 0.0
    %2880 = vmatpush1.msra.mxu0 0.0
    %2881 = vmatprep.subr.mxu0 0.0
    %2882 = vmatpush1.msra.mxu0 0.0
    %2883 = vmatprep.subr.mxu0 0.0
    %2884 = vmatpush1.msra.mxu0 0.0
    %2885 = vmatprep.subr.mxu0 0.0
    %2886 = vmatpush1.msra.mxu0 0.0
    %2887 = vmatprep.subr.mxu0 0.0
    %2888 = vmatpush1.msra.mxu0 0.0
    %2889 = vmatprep.subr.mxu0 0.0
    %2890 = vmatpush1.msra.mxu0 0.0
    %2891 = vmatprep.subr.mxu0 0.0
    %2892 = vmatpush1.msra.mxu0 0.0
    %2893 = vmatprep.subr.mxu0 0.0
    %2894 = vmatpush1.msra.mxu0 0.0
    %2895 = vmatprep.subr.mxu0 0.0
    %2896 = vmatpush1.msra.mxu0 0.0
    %2897 = vmatprep.subr.mxu0 0.0
    %2898 = vmatpush1.msra.mxu0 0.0
    %2899 = vmatprep.subr.mxu0 0.0
    %2900 = vmatpush1.msra.mxu0 0.0
    %2901 = vmatprep.subr.mxu0 0.0
    %2902 = vmatpush1.msra.mxu0 0.0
    %2903 = vmatprep.subr.mxu0 0.0
    %2904 = vmatpush1.msra.mxu0 0.0
    %2905 = vmatprep.subr.mxu0 0.0
    %2906 = vmatpush1.msra.mxu0 0.0
    %2907 = vmatprep.mubr.f32.mxu0 0.0
    %2908 = vmatmul.mubr.f32.gmra.mrb[0].mxu0 %v2841
    %v2909 = vpop.f32.mrb[0].mxu0
    %v2910 = vadd.f32 0.0, %v2909
    %v2911 = vpop.f32.mrb[0].mxu0
    %2912 = vdwg.mxu0
    %vm2913 = vcmask 1045504
    %v2914 = vsel %vm2913, %v2910, -inf
    %2915 = vmax.xlane.f32.xlu0 %v2914
    %v2916 = vpop.xlane.xlu0 %2915
    %v2917 = vsub.f32 %v2910, %v2916
    %v2918 = vmul.f32 %v2917, 1.442695
    %v2919 = vpow.pop %v2918
    %v2920 = vsel %vm2913, %v2919, 0.0
    %2921 = vadd.xlane.f32.xlu0 %v2920
    %v2922 = vpop.xlane.xlu0 %2921
    %v2923 = vrcp.pop %v2922
    %v2924 = vmul.f32 %v2919, %v2923
    %v2925 = vlaneseq
    %v2926 = vshrl.u32 %v2925, 7
    %v2927 = vsub.s32 0, %v2926
    %v2928 = vrot.slane %v2628, %v2927
    %v2929 = vmul.f32 %v2630, %v2928
    %vm2930 = vcmask 259072
    %v2931 = vsel %vm2930, %v2929, 0.0
    %2932 = vadd.xlane.f32.xlu0 %v2931
    %v2933 = vpop.xlane.xlu0 %2932
    %v2934 = vmul.f32 %v2833, %v2928
    %2936 = vrot.lane.b32.xlu0 %v2934, 96
    %v2937 = vpop.permute.xlu0 %2936
    %v2939 = vsel %vm2930, %v2937, 0.0
    %2940 = vadd.xlane.f32.xlu0 %v2939
    %v2941 = vpop.xlane.xlu0 %2940
    %v2942 = vadd.f32 %v2933, %v2941
    %v2943 = vlaneseq
    %v2944 = vshrl.u32 %v2943, 7
    %v2945 = vsub.s32 0, %v2944
    %v2946 = vrot.slane %v2629, %v2945
    %v2947 = vadd.f32 %v2942, %v2946
    %v2949 = vsel %vm45, %v2604, 0
    %2951 = vmatprep.subr.mxu0 0.0
    %2952 = vmatpush1.xpose.msra.mxu0 %v2949
    %2953 = vmatprep.subr.mxu0 0.0
    %2954 = vmatpush1.xpose.msra.mxu0 0.0
    %2955 = vmatprep.subr.mxu0 0.0
    %2956 = vmatpush1.xpose.msra.mxu0 0.0
    %2957 = vmatprep.subr.mxu0 0.0
    %2958 = vmatpush1.xpose.msra.mxu0 0.0
    %2959 = vmatprep.subr.mxu0 0.0
    %2960 = vmatpush1.xpose.msra.mxu0 0.0
    %2961 = vmatprep.subr.mxu0 0.0
    %2962 = vmatpush1.xpose.msra.mxu0 0.0
    %2963 = vmatprep.subr.mxu0 0.0
    %2964 = vmatpush1.xpose.msra.mxu0 0.0
    %2965 = vmatprep.subr.mxu0 0.0
    %2966 = vmatpush1.xpose.msra.mxu0 0.0
    %2967 = vmatprep.subr.mxu0 0.0
    %2968 = vmatpush1.xpose.msra.mxu0 0.0
    %2969 = vmatprep.subr.mxu0 0.0
    %2970 = vmatpush1.xpose.msra.mxu0 0.0
    %2971 = vmatprep.subr.mxu0 0.0
    %2972 = vmatpush1.xpose.msra.mxu0 0.0
    %2973 = vmatprep.subr.mxu0 0.0
    %2974 = vmatpush1.xpose.msra.mxu0 0.0
    %2975 = vmatprep.subr.mxu0 0.0
    %2976 = vmatpush1.xpose.msra.mxu0 0.0
    %2977 = vmatprep.subr.mxu0 0.0
    %2978 = vmatpush1.xpose.msra.mxu0 0.0
    %2979 = vmatprep.subr.mxu0 0.0
    %2980 = vmatpush1.xpose.msra.mxu0 0.0
    %2981 = vmatprep.subr.mxu0 0.0
    %2982 = vmatpush1.xpose.msra.mxu0 0.0
    %2983 = vmatprep.subr.mxu0 0.0
    %2984 = vmatpush1.xpose.msra.mxu0 0.0
    %2985 = vmatprep.subr.mxu0 0.0
    %2986 = vmatpush1.xpose.msra.mxu0 0.0
    %2987 = vmatprep.subr.mxu0 0.0
    %2988 = vmatpush1.xpose.msra.mxu0 0.0
    %2989 = vmatprep.subr.mxu0 0.0
    %2990 = vmatpush1.xpose.msra.mxu0 0.0
    %2991 = vmatprep.subr.mxu0 0.0
    %2992 = vmatpush1.xpose.msra.mxu0 0.0
    %2993 = vmatprep.subr.mxu0 0.0
    %2994 = vmatpush1.xpose.msra.mxu0 0.0
    %2995 = vmatprep.subr.mxu0 0.0
    %2996 = vmatpush1.xpose.msra.mxu0 0.0
    %2997 = vmatprep.subr.mxu0 0.0
    %2998 = vmatpush1.xpose.msra.mxu0 0.0
    %2999 = vmatprep.subr.mxu0 0.0
    %3000 = vmatpush1.xpose.msra.mxu0 0.0
    %3001 = vmatprep.subr.mxu0 0.0
    %3002 = vmatpush1.xpose.msra.mxu0 0.0
    %3003 = vmatprep.subr.mxu0 0.0
    %3004 = vmatpush1.xpose.msra.mxu0 0.0
    %3005 = vmatprep.subr.mxu0 0.0
    %3006 = vmatpush1.xpose.msra.mxu0 0.0
    %3007 = vmatprep.subr.mxu0 0.0
    %3008 = vmatpush1.xpose.msra.mxu0 0.0
    %3009 = vmatprep.subr.mxu0 0.0
    %3010 = vmatpush1.xpose.msra.mxu0 0.0
    %3011 = vmatprep.subr.mxu0 0.0
    %3012 = vmatpush1.xpose.msra.mxu0 0.0
    %3013 = vmatprep.subr.mxu0 0.0
    %3014 = vmatpush1.xpose.msra.mxu0 0.0
    %3015 = vmatprep.mubr.f32.mxu0 0.0
    %3016 = vmatmul.mubr.f32.gmra.mrb[0].mxu0 %v2841
    %v3017 = vpop.f32.mrb[0].mxu0
    %v3018 = vadd.f32 0.0, %v3017
    %v3019 = vpop.f32.mrb[0].mxu0
    %3020 = vdwg.mxu0
    %v3021 = vsel %vm2619, 1, 0
    %v3022 = vlaneseq
    %v3023 = vshrl.u32 %v3022, 7
    %v3024 = vsub.s32 0, %v3023
    %v3025 = vrot.slane %v3021, %v3024
    %vm3026 = vcmp.eq.s32.totalorder %v3025, 1
    %v3027 = vsel %vm3026, %v3018, -10000.0
    %vm3028 = vcmask 59392
    %v3029 = vsel %vm3028, %v3027, -inf
    %3030 = vmax.xlane.f32.xlu0 %v3029
    %v3031 = vpop.xlane.xlu0 %3030
    %v3032 = vsub.f32 %v3027, %v3031
    %v3033 = vmul.f32 %v3032, 1.442695
    %v3034 = vpow.pop %v3033
    %v3035 = vsel %vm3028, %v3034, 0.0
    %3036 = vadd.xlane.f32.xlu0 %v3035
    %v3037 = vpop.xlane.xlu0 %3036
    %v3038 = vrcp.pop %v3037
    %v3039 = vmul.f32 %v3034, %v3038
    %v3041 = vsel %vm259, %v3039, 0
    %3043 = vmatprep.subr.mxu0 0.0
    %3044 = vmatpush1.msra.mxu0 %v2604
    %3045 = vmatprep.subr.mxu0 0.0
    %3046 = vmatpush1.msra.mxu0 0.0
    %3047 = vmatprep.subr.mxu0 0.0
    %3048 = vmatpush1.msra.mxu0 0.0
    %3049 = vmatprep.subr.mxu0 0.0
    %3050 = vmatpush1.msra.mxu0 0.0
    %3051 = vmatprep.subr.mxu0 0.0
    %3052 = vmatpush1.msra.mxu0 0.0
    %3053 = vmatprep.subr.mxu0 0.0
    %3054 = vmatpush1.msra.mxu0 0.0
    %3055 = vmatprep.subr.mxu0 0.0
    %3056 = vmatpush1.msra.mxu0 0.0
    %3057 = vmatprep.subr.mxu0 0.0
    %3058 = vmatpush1.msra.mxu0 0.0
    %3059 = vmatprep.subr.mxu0 0.0
    %3060 = vmatpush1.msra.mxu0 0.0
    %3061 = vmatprep.subr.mxu0 0.0
    %3062 = vmatpush1.msra.mxu0 0.0
    %3063 = vmatprep.subr.mxu0 0.0
    %3064 = vmatpush1.msra.mxu0 0.0
    %3065 = vmatprep.subr.mxu0 0.0
    %3066 = vmatpush1.msra.mxu0 0.0
    %3067 = vmatprep.subr.mxu0 0.0
    %3068 = vmatpush1.msra.mxu0 0.0
    %3069 = vmatprep.subr.mxu0 0.0
    %3070 = vmatpush1.msra.mxu0 0.0
    %3071 = vmatprep.subr.mxu0 0.0
    %3072 = vmatpush1.msra.mxu0 0.0
    %3073 = vmatprep.subr.mxu0 0.0
    %3074 = vmatpush1.msra.mxu0 0.0
    %3075 = vmatprep.subr.mxu0 0.0
    %3076 = vmatpush1.msra.mxu0 0.0
    %3077 = vmatprep.subr.mxu0 0.0
    %3078 = vmatpush1.msra.mxu0 0.0
    %3079 = vmatprep.subr.mxu0 0.0
    %3080 = vmatpush1.msra.mxu0 0.0
    %3081 = vmatprep.subr.mxu0 0.0
    %3082 = vmatpush1.msra.mxu0 0.0
    %3083 = vmatprep.subr.mxu0 0.0
    %3084 = vmatpush1.msra.mxu0 0.0
    %3085 = vmatprep.subr.mxu0 0.0
    %3086 = vmatpush1.msra.mxu0 0.0
    %3087 = vmatprep.subr.mxu0 0.0
    %3088 = vmatpush1.msra.mxu0 0.0
    %3089 = vmatprep.subr.mxu0 0.0
    %3090 = vmatpush1.msra.mxu0 0.0
    %3091 = vmatprep.subr.mxu0 0.0
    %3092 = vmatpush1.msra.mxu0 0.0
    %3093 = vmatprep.subr.mxu0 0.0
    %3094 = vmatpush1.msra.mxu0 0.0
    %3095 = vmatprep.subr.mxu0 0.0
    %3096 = vmatpush1.msra.mxu0 0.0
    %3097 = vmatprep.subr.mxu0 0.0
    %3098 = vmatpush1.msra.mxu0 0.0
    %3099 = vmatprep.subr.mxu0 0.0
    %3100 = vmatpush1.msra.mxu0 0.0
    %3101 = vmatprep.subr.mxu0 0.0
    %3102 = vmatpush1.msra.mxu0 0.0
    %3103 = vmatprep.subr.mxu0 0.0
    %3104 = vmatpush1.msra.mxu0 0.0
    %3105 = vmatprep.subr.mxu0 0.0
    %3106 = vmatpush1.msra.mxu0 0.0
    %3107 = vmatprep.mubr.f32.mxu0 0.0
    %3108 = vmatmul.mubr.f32.gmra.mrb[0].mxu0 %v3041
    %v3109 = vpop.f32.mrb[0].mxu0
    %v3110 = vadd.f32 0.0, %v3109
    %v3111 = vpop.f32.mrb[0].mxu0
    %3112 = vdwg.mxu0
    %v3113 = vlaneseq
    %v3114 = vshrl.u32 %v3113, 7
    %v3115 = vsub.s32 0, %v3114
    %v3116 = vrot.slane %v3039, %v3115
    %3118 = vbcast.lane.b32.xlu0 %v3116, 256
    %v3119 = vpop.permute.xlu0 %3118
    %v3120 = vlaneseq
    %v3121 = vshrl.u32 %v3120, 7
    %v3122 = vsub.s32 1, %v3121
    %v3123 = vrot.slane %v3039, %v3122
    %3125 = vbcast.lane.b32.xlu0 %v3123, 256
    %v3126 = vpop.permute.xlu0 %3125
    %v3127 = vlaneseq
    %v3128 = vshrl.u32 %v3127, 7
    %v3129 = vsub.s32 2, %v3128
    %v3130 = vrot.slane %v3039, %v3129
    %3132 = vbcast.lane.b32.xlu0 %v3130, 256
    %v3133 = vpop.permute.xlu0 %3132
    %v3134 = vmul.f32 %v3119, %v2618
    %v3135 = vmul.f32 %v3126, %v2618
    %v3136 = vmul.f32 %v3133, %v2618
    %v3137 = vrot.slane %v3134, 4
    %v3138 = vadd.f32 %v3134, %v3137
    %v3139 = vrot.slane %v3138, 2
    %v3140 = vadd.f32 %v3138, %v3139
    %v3141 = vrot.slane %v3140, 1
    %v3142 = vadd.f32 %v3140, %v3141
    %v3143 = vrot.slane %v3135, 4
    %v3144 = vadd.f32 %v3135, %v3143
    %v3145 = vrot.slane %v3144, 2
    %v3146 = vadd.f32 %v3144, %v3145
    %v3147 = vrot.slane %v3146, 1
    %v3148 = vadd.f32 %v3146, %v3147
    %v3149 = vrot.slane %v3136, 4
    %v3150 = vadd.f32 %v3136, %v3149
    %v3151 = vrot.slane %v3150, 2
    %v3152 = vadd.f32 %v3150, %v3151
    %v3153 = vrot.slane %v3152, 1
    %v3154 = vadd.f32 %v3152, %v3153
    %3156 = vrot.lane.b32.xlu0 %v2928, 64
    %v3157 = vpop.permute.xlu0 %3156
    %v3159 = vmul.f32 %v3110, %v3157
    %vm3160 = vcmask 256000
    %v3161 = vsel %vm3160, %v3159, 0.0
    %3162 = vadd.xlane.f32.xlu0 %v3161
    %v3163 = vpop.xlane.xlu0 %3162
    %v3164 = vadd.f32 %v2947, %v3163
    %v3165 = vxor.u32 %v3164, 2147483648
    %v3166 = vmul.f32 %v3165, 1.442695
    %v3167 = vpow.pop %v3166
    %v3168 = vadd.f32 %v3167, 1.0
    %v3169 = vrcp.pop %v3168
    %v3170 = vmul.f32 1.0, %v3169
    %3172 = vset.pattern.permute.xlu0 0
    %3173 = vperm.xlu0 %3172, %v3170
    %v3174 = vpop.permute.xlu0 %3173
    %v3176 = vmul.f32 %v3174, %v2924
    %v3177 = vsub.f32 1.0, %v3170
    %3179 = vset.pattern.permute.xlu0 0
    %3180 = vperm.xlu0 %3179, %v3177
    %v3181 = vpop.permute.xlu0 %3180
    %vm3186 = vcmask 1041409
    %v3187 = vsel %vm3186, %v3148, %v3142
    %vm3188 = vcmask 1042434
    %v3189 = vsel %vm3188, %v3154, %v3187
    %v3191 = vmul.f32 %v3181, %v3189
    %v3192 = vadd.f32 %v3176, %v3191
    %v3195 = vunpack.c.l.s4 1966171168
    %v3196 = vunpack.c.0.s8 %v3195
    %v3197 = vlaneseq
    %v3198 = vshrl.u32 %v3197, 7
    %v3199 = vsub.s32 %v3196, %v3198
    %v3200 = vrot.slane %v3192, %v3199
    %v3201 = vcombine.high %v3200, %v3200
    %v3203 = vunpack.c.l.s4 1966171168
    %v3204 = vunpack.c.0.s8 %v3203
    %v3205 = vlaneseq
    %v3206 = vshrl.u32 %v3205, 7
    %v3207 = vsub.s32 %v3204, %v3206
    %v3208 = vrot.slane %v3200, %v3207
    %v3210 = vunpack.c.l.s4 1966171168
    %v3211 = vunpack.c.0.s8 %v3210
    %v3212 = vlaneseq
    %v3213 = vshrl.u32 %v3212, 7
    %v3214 = vsub.s32 %v3211, %v3213
    %v3215 = vrot.slane %v3201, %v3214
    %v3216 = vcombine.high %v3208, %v3208
    %3220 = vst [vmem:[#allocation3] sm:$0x1] %v3208
    %3221 = vst [vmem:[#allocation3 + $0x4] sm:$0x1] %v3215
    %3222 = vst [vmem:[#allocation3 + $0x8] sm:$0x1] %v3216
    %v3223 = vld [vmem:[%s8 + $0x40] sm:$0xff]
    %v3224 = vld [vmem:[%s8 + $0x48] sm:$0xff]
    %v3225 = vld [vmem:[%s8 + $0x50] sm:$0xff]
    %v3226 = vld [vmem:[%s8 + $0x58] sm:$0xff]
    %3228 = vrot.lane.b32.xlu0 %v2946, 127
    %v3229 = vpop.permute.xlu0 %3228
    %v3232 = vsel %vm45, %v3110, 0
    %3234 = vmatprep.subr.mxu0 0.0
    %3235 = vmatpush1.msra.mxu0 %v3223
    %3236 = vmatprep.subr.mxu0 0.0
    %3237 = vmatpush1.msra.mxu0 %v3224
    %3238 = vmatprep.subr.mxu0 0.0
    %3239 = vmatpush1.msra.mxu0 %v3225
    %3240 = vmatprep.subr.mxu0 0.0
    %3241 = vmatpush1.msra.mxu0 %v3226
    %3242 = vmatprep.subr.mxu0 0.0
    %3243 = vmatpush1.msra.mxu0 0.0
    %3244 = vmatprep.subr.mxu0 0.0
    %3245 = vmatpush1.msra.mxu0 0.0
    %3246 = vmatprep.subr.mxu0 0.0
    %3247 = vmatpush1.msra.mxu0 0.0
    %3248 = vmatprep.subr.mxu0 0.0
    %3249 = vmatpush1.msra.mxu0 0.0
    %3250 = vmatprep.subr.mxu0 0.0
    %3251 = vmatpush1.msra.mxu0 0.0
    %3252 = vmatprep.subr.mxu0 0.0
    %3253 = vmatpush1.msra.mxu0 0.0
    %3254 = vmatprep.subr.mxu0 0.0
    %3255 = vmatpush1.msra.mxu0 0.0
    %3256 = vmatprep.subr.mxu0 0.0
    %3257 = vmatpush1.msra.mxu0 0.0
    %3258 = vmatprep.subr.mxu0 0.0
    %3259 = vmatpush1.msra.mxu0 0.0
    %3260 = vmatprep.subr.mxu0 0.0
    %3261 = vmatpush1.msra.mxu0 0.0
    %3262 = vmatprep.subr.mxu0 0.0
    %3263 = vmatpush1.msra.mxu0 0.0
    %3264 = vmatprep.subr.mxu0 0.0
    %3265 = vmatpush1.msra.mxu0 0.0
    %3266 = vmatprep.subr.mxu0 0.0
    %3267 = vmatpush1.msra.mxu0 0.0
    %3268 = vmatprep.subr.mxu0 0.0
    %3269 = vmatpush1.msra.mxu0 0.0
    %3270 = vmatprep.subr.mxu0 0.0
    %3271 = vmatpush1.msra.mxu0 0.0
    %3272 = vmatprep.subr.mxu0 0.0
    %3273 = vmatpush1.msra.mxu0 0.0
    %3274 = vmatprep.subr.mxu0 0.0
    %3275 = vmatpush1.msra.mxu0 0.0
    %3276 = vmatprep.subr.mxu0 0.0
    %3277 = vmatpush1.msra.mxu0 0.0
    %3278 = vmatprep.subr.mxu0 0.0
    %3279 = vmatpush1.msra.mxu0 0.0
    %3280 = vmatprep.subr.mxu0 0.0
    %3281 = vmatpush1.msra.mxu0 0.0
    %3282 = vmatprep.subr.mxu0 0.0
    %3283 = vmatpush1.msra.mxu0 0.0
    %3284 = vmatprep.subr.mxu0 0.0
    %3285 = vmatpush1.msra.mxu0 0.0
    %3286 = vmatprep.subr.mxu0 0.0
    %3287 = vmatpush1.msra.mxu0 0.0
    %3288 = vmatprep.subr.mxu0 0.0
    %3289 = vmatpush1.msra.mxu0 0.0
    %3290 = vmatprep.subr.mxu0 0.0
    %3291 = vmatpush1.msra.mxu0 0.0
    %3292 = vmatprep.subr.mxu0 0.0
    %3293 = vmatpush1.msra.mxu0 0.0
    %3294 = vmatprep.subr.mxu0 0.0
    %3295 = vmatpush1.msra.mxu0 0.0
    %3296 = vmatprep.subr.mxu0 0.0
    %3297 = vmatpush1.msra.mxu0 0.0
    %3298 = vmatprep.mubr.f32.mxu0 0.0
    %3299 = vmatmul.mubr.f32.gmra.mrb[0].mxu0 %v3232
    %v3300 = vpop.f32.mrb[0].mxu0
    %v3301 = vadd.f32 %v3229, %v3300
    %v3302 = vpop.f32.mrb[0].mxu0
    %3303 = vdwg.mxu0
    %vm3304 = vcmask 18432
    %3305 = vst.msk [vmem:[%s11] sm:$0x7] %vm3304, %v3301
    %v3306 = vsel %vm2639, %v3192, -inf
    %3307 = vmax.xlane.f32.xlu0 %v3306
    %v3308 = vpop.xlane.xlu0 %3307
    %vm3309 = vcmp.eq.f32.partialorder %v3192, %v3308
    %v3310 = vsel %vm3309, %v2609, 128
    %v3311 = vsel %vm2639, %v3310, 2147483647
    %v3312 = vand.u32 %v3311, 65535
    %v3313 = vshra.s32 %v3311, 16
    %v3314 = vcvt.s32.f32 %v3312
    %v3315 = vcvt.s32.f32 %v3313
    %3316 = vmin.xlane.f32.xlu0 %v3315
    %v3317 = vpop.xlane.xlu0 %3316
    %vm3318 = vcmp.eq.f32.partialorder %v3315, %v3317
    %v3319 = vsel %vm3318, %v3314, inf
    %3320 = vmin.xlane.f32.xlu0 %v3319
    %v3321 = vpop.xlane.xlu0 %3320
    %v3322 = vcvt.f32.s32 %v3321
    %v3323 = vcvt.f32.s32 %v3317
    %v3324 = vshll.u32 %v3323, 16
    %v3325 = vadd.s32 %v3324, %v3322
    %vm3326 = vcmp.eq.s32.totalorder %v2609, %v3325
    %v3327 = vsel %vm3326, 1, 0
    %v3328 = vcvt.s32.f32 %v3327
    %v3329 = vrot.slane %v2833, 3
    %3330 = vrot.lane.b32.xlu0 %v3329, 96
    %v3331 = vpop.permute.xlu0 %3330
    %v3332 = vsel %vm45, %v3331, 0
    %v3335 = vsel %vm45, %v2605, 0
    %3337 = vmatprep.subr.mxu0 0.0
    %3338 = vmatpush1.xpose.msra.mxu0 %v3335
    %3339 = vmatprep.subr.mxu0 0.0
    %3340 = vmatpush1.xpose.msra.mxu0 0.0
    %3341 = vmatprep.subr.mxu0 0.0
    %3342 = vmatpush1.xpose.msra.mxu0 0.0
    %3343 = vmatprep.subr.mxu0 0.0
    %3344 = vmatpush1.xpose.msra.mxu0 0.0
    %3345 = vmatprep.subr.mxu0 0.0
    %3346 = vmatpush1.xpose.msra.mxu0 0.0
    %3347 = vmatprep.subr.mxu0 0.0
    %3348 = vmatpush1.xpose.msra.mxu0 0.0
    %3349 = vmatprep.subr.mxu0 0.0
    %3350 = vmatpush1.xpose.msra.mxu0 0.0
    %3351 = vmatprep.subr.mxu0 0.0
    %3352 = vmatpush1.xpose.msra.mxu0 0.0
    %3353 = vmatprep.subr.mxu0 0.0
    %3354 = vmatpush1.xpose.msra.mxu0 0.0
    %3355 = vmatprep.subr.mxu0 0.0
    %3356 = vmatpush1.xpose.msra.mxu0 0.0
    %3357 = vmatprep.subr.mxu0 0.0
    %3358 = vmatpush1.xpose.msra.mxu0 0.0
    %3359 = vmatprep.subr.mxu0 0.0
    %3360 = vmatpush1.xpose.msra.mxu0 0.0
    %3361 = vmatprep.subr.mxu0 0.0
    %3362 = vmatpush1.xpose.msra.mxu0 0.0
    %3363 = vmatprep.subr.mxu0 0.0
    %3364 = vmatpush1.xpose.msra.mxu0 0.0
    %3365 = vmatprep.subr.mxu0 0.0
    %3366 = vmatpush1.xpose.msra.mxu0 0.0
    %3367 = vmatprep.subr.mxu0 0.0
    %3368 = vmatpush1.xpose.msra.mxu0 0.0
    %3369 = vmatprep.subr.mxu0 0.0
    %3370 = vmatpush1.xpose.msra.mxu0 0.0
    %3371 = vmatprep.subr.mxu0 0.0
    %3372 = vmatpush1.xpose.msra.mxu0 0.0
    %3373 = vmatprep.subr.mxu0 0.0
    %3374 = vmatpush1.xpose.msra.mxu0 0.0
    %3375 = vmatprep.subr.mxu0 0.0
    %3376 = vmatpush1.xpose.msra.mxu0 0.0
    %3377 = vmatprep.subr.mxu0 0.0
    %3378 = vmatpush1.xpose.msra.mxu0 0.0
    %3379 = vmatprep.subr.mxu0 0.0
    %3380 = vmatpush1.xpose.msra.mxu0 0.0
    %3381 = vmatprep.subr.mxu0 0.0
    %3382 = vmatpush1.xpose.msra.mxu0 0.0
    %3383 = vmatprep.subr.mxu0 0.0
    %3384 = vmatpush1.xpose.msra.mxu0 0.0
    %3385 = vmatprep.subr.mxu0 0.0
    %3386 = vmatpush1.xpose.msra.mxu0 0.0
    %3387 = vmatprep.subr.mxu0 0.0
    %3388 = vmatpush1.xpose.msra.mxu0 0.0
    %3389 = vmatprep.subr.mxu0 0.0
    %3390 = vmatpush1.xpose.msra.mxu0 0.0
    %3391 = vmatprep.subr.mxu0 0.0
    %3392 = vmatpush1.xpose.msra.mxu0 0.0
    %3393 = vmatprep.subr.mxu0 0.0
    %3394 = vmatpush1.xpose.msra.mxu0 0.0
    %3395 = vmatprep.subr.mxu0 0.0
    %3396 = vmatpush1.xpose.msra.mxu0 0.0
    %3397 = vmatprep.subr.mxu0 0.0
    %3398 = vmatpush1.xpose.msra.mxu0 0.0
    %3399 = vmatprep.subr.mxu0 0.0
    %3400 = vmatpush1.xpose.msra.mxu0 0.0
    %3401 = vmatprep.mubr.f32.mxu0 0.0
    %3402 = vmatmul.mubr.f32.gmra.mrb[0].mxu0 %v3332
    %v3403 = vpop.f32.mrb[0].mxu0
    %v3404 = vadd.f32 0.0, %v3403
    %v3405 = vpop.f32.mrb[0].mxu0
    %3406 = vdwg.mxu0
    %v3407 = vlaneseq
    %v3408 = vshrl.u32 %v3407, 7
    %v3409 = vsub.s32 1, %v3408
    %v3410 = vrot.slane %v3021, %v3409
    %vm3411 = vcmp.eq.s32.totalorder %v3410, 1
    %v3412 = vsel %vm3411, %v3404, -10000.0
    %v3413 = vsel %vm3028, %v3412, -inf
    %3414 = vmax.xlane.f32.xlu0 %v3413
    %v3415 = vpop.xlane.xlu0 %3414
    %v3416 = vsub.f32 %v3412, %v3415
    %v3417 = vmul.f32 %v3416, 1.442695
    %v3418 = vpow.pop %v3417
    %v3419 = vsel %vm3028, %v3418, 0.0
    %3420 = vadd.xlane.f32.xlu0 %v3419
    %v3421 = vpop.xlane.xlu0 %3420
    %v3422 = vrcp.pop %v3421
    %v3423 = vmul.f32 %v3418, %v3422
    %v3425 = vsel %vm259, %v3423, 0
    %3427 = vmatprep.subr.mxu0 0.0
    %3428 = vmatpush1.msra.mxu0 %v2605
    %3429 = vmatprep.subr.mxu0 0.0
    %3430 = vmatpush1.msra.mxu0 0.0
    %3431 = vmatprep.subr.mxu0 0.0
    %3432 = vmatpush1.msra.mxu0 0.0
    %3433 = vmatprep.subr.mxu0 0.0
    %3434 = vmatpush1.msra.mxu0 0.0
    %3435 = vmatprep.subr.mxu0 0.0
    %3436 = vmatpush1.msra.mxu0 0.0
    %3437 = vmatprep.subr.mxu0 0.0
    %3438 = vmatpush1.msra.mxu0 0.0
    %3439 = vmatprep.subr.mxu0 0.0
    %3440 = vmatpush1.msra.mxu0 0.0
    %3441 = vmatprep.subr.mxu0 0.0
    %3442 = vmatpush1.msra.mxu0 0.0
    %3443 = vmatprep.subr.mxu0 0.0
    %3444 = vmatpush1.msra.mxu0 0.0
    %3445 = vmatprep.subr.mxu0 0.0
    %3446 = vmatpush1.msra.mxu0 0.0
    %3447 = vmatprep.subr.mxu0 0.0
    %3448 = vmatpush1.msra.mxu0 0.0
    %3449 = vmatprep.subr.mxu0 0.0
    %3450 = vmatpush1.msra.mxu0 0.0
    %3451 = vmatprep.subr.mxu0 0.0
    %3452 = vmatpush1.msra.mxu0 0.0
    %3453 = vmatprep.subr.mxu0 0.0
    %3454 = vmatpush1.msra.mxu0 0.0
    %3455 = vmatprep.subr.mxu0 0.0
    %3456 = vmatpush1.msra.mxu0 0.0
    %3457 = vmatprep.subr.mxu0 0.0
    %3458 = vmatpush1.msra.mxu0 0.0
    %3459 = vmatprep.subr.mxu0 0.0
    %3460 = vmatpush1.msra.mxu0 0.0
    %3461 = vmatprep.subr.mxu0 0.0
    %3462 = vmatpush1.msra.mxu0 0.0
    %3463 = vmatprep.subr.mxu0 0.0
    %3464 = vmatpush1.msra.mxu0 0.0
    %3465 = vmatprep.subr.mxu0 0.0
    %3466 = vmatpush1.msra.mxu0 0.0
    %3467 = vmatprep.subr.mxu0 0.0
    %3468 = vmatpush1.msra.mxu0 0.0
    %3469 = vmatprep.subr.mxu0 0.0
    %3470 = vmatpush1.msra.mxu0 0.0
    %3471 = vmatprep.subr.mxu0 0.0
    %3472 = vmatpush1.msra.mxu0 0.0
    %3473 = vmatprep.subr.mxu0 0.0
    %3474 = vmatpush1.msra.mxu0 0.0
    %3475 = vmatprep.subr.mxu0 0.0
    %3476 = vmatpush1.msra.mxu0 0.0
    %3477 = vmatprep.subr.mxu0 0.0
    %3478 = vmatpush1.msra.mxu0 0.0
    %3479 = vmatprep.subr.mxu0 0.0
    %3480 = vmatpush1.msra.mxu0 0.0
    %3481 = vmatprep.subr.mxu0 0.0
    %3482 = vmatpush1.msra.mxu0 0.0
    %3483 = vmatprep.subr.mxu0 0.0
    %3484 = vmatpush1.msra.mxu0 0.0
    %3485 = vmatprep.subr.mxu0 0.0
    %3486 = vmatpush1.msra.mxu0 0.0
    %3487 = vmatprep.subr.mxu0 0.0
    %3488 = vmatpush1.msra.mxu0 0.0
    %3489 = vmatprep.subr.mxu0 0.0
    %3490 = vmatpush1.msra.mxu0 0.0
    %3491 = vmatprep.mubr.f32.mxu0 0.0
    %3492 = vmatmul.mubr.f32.gmra.mrb[0].mxu0 %v3425
    %v3493 = vpop.f32.mrb[0].mxu0
    %v3494 = vadd.f32 0.0, %v3493
    %v3495 = vpop.f32.mrb[0].mxu0
    %3496 = vdwg.mxu0
    %v3497 = vlaneseq
    %v3498 = vshrl.u32 %v3497, 7
    %v3499 = vsub.s32 0, %v3498
    %v3500 = vrot.slane %v3423, %v3499
    %3502 = vbcast.lane.b32.xlu0 %v3500, 256
    %v3503 = vpop.permute.xlu0 %3502
    %v3504 = vlaneseq
    %v3505 = vshrl.u32 %v3504, 7
    %v3506 = vsub.s32 1, %v3505
    %v3507 = vrot.slane %v3423, %v3506
    %3509 = vbcast.lane.b32.xlu0 %v3507, 256
    %v3510 = vpop.permute.xlu0 %3509
    %v3511 = vlaneseq
    %v3512 = vshrl.u32 %v3511, 7
    %v3513 = vsub.s32 2, %v3512
    %v3514 = vrot.slane %v3423, %v3513
    %3516 = vbcast.lane.b32.xlu0 %v3514, 256
    %v3517 = vpop.permute.xlu0 %3516
    %v3518 = vmul.f32 %v3503, %v2627
    %v3519 = vmul.f32 %v3510, %v2627
    %v3520 = vmul.f32 %v3517, %v2627
    %v3521 = vrot.slane %v3518, 4
    %v3522 = vadd.f32 %v3518, %v3521
    %v3523 = vrot.slane %v3522, 2
    %v3524 = vadd.f32 %v3522, %v3523
    %v3525 = vrot.slane %v3524, 1
    %v3526 = vadd.f32 %v3524, %v3525
    %v3527 = vrot.slane %v3519, 4
    %v3528 = vadd.f32 %v3519, %v3527
    %v3529 = vrot.slane %v3528, 2
    %v3530 = vadd.f32 %v3528, %v3529
    %v3531 = vrot.slane %v3530, 1
    %v3532 = vadd.f32 %v3530, %v3531
    %v3533 = vrot.slane %v3520, 4
    %v3534 = vadd.f32 %v3520, %v3533
    %v3535 = vrot.slane %v3534, 2
    %v3536 = vadd.f32 %v3534, %v3535
    %v3537 = vrot.slane %v3536, 1
    %v3538 = vadd.f32 %v3536, %v3537
    %v3539 = vmul.f32 %v3494, %v3157
    %v3540 = vsel %vm3160, %v3539, 0.0
    %3541 = vadd.xlane.f32.xlu0 %v3540
    %v3542 = vpop.xlane.xlu0 %3541
    %v3544 = vrot.slane %v3542, 5
    %v3546 = vadd.f32 %v2947, %v3544
    %v3547 = vxor.u32 %v3546, 2147483648
    %v3548 = vmul.f32 %v3547, 1.442695
    %v3549 = vpow.pop %v3548
    %v3550 = vadd.f32 %v3549, 1.0
    %v3551 = vrcp.pop %v3550
    %v3552 = vmul.f32 1.0, %v3551
    %3554 = vset.pattern.permute.xlu0 0
    %3555 = vperm.xlu0 %3554, %v3552
    %v3556 = vpop.permute.xlu0 %3555
    %v3558 = vmul.f32 %v3556, %v2924
    %v3559 = vsub.f32 1.0, %v3552
    %3561 = vset.pattern.permute.xlu0 0
    %3562 = vperm.xlu0 %3561, %v3559
    %v3563 = vpop.permute.xlu0 %3562
    %vm3568 = vcmask 1044484
    %v3569 = vsel %vm3568, %v3532, %v3526
    %vm3570 = vcmask 1045509
    %v3571 = vsel %vm3570, %v3538, %v3569
    %v3573 = vmul.f32 %v3563, %v3571
    %v3574 = vadd.f32 %v3558, %v3573
    %v3576 = vcombine.high %v3574, %v3574
    %v3578 = vunpack.c.l.s4 1966171168
    %v3579 = vunpack.c.0.s8 %v3578
    %v3580 = vlaneseq
    %v3581 = vshrl.u32 %v3580, 7
    %v3582 = vsub.s32 %v3579, %v3581
    %v3583 = vrot.slane %v3574, %v3582
    %v3585 = vunpack.c.l.s4 1966171168
    %v3586 = vunpack.c.0.s8 %v3585
    %v3587 = vlaneseq
    %v3588 = vshrl.u32 %v3587, 7
    %v3589 = vsub.s32 %v3586, %v3588
    %v3590 = vrot.slane %v3576, %v3589
    %v3591 = vcombine.high %v3583, %v3583
    %v3592 = vcombine.high %v3590, %v3590
    %v3594 = vunpack.c.l.s4 1966171168
    %v3595 = vunpack.c.0.s8 %v3594
    %v3596 = vlaneseq
    %v3597 = vshrl.u32 %v3596, 7
    %v3598 = vsub.s32 %v3595, %v3597
    %v3599 = vrot.slane %v3590, %v3598
    %v3601 = vunpack.c.l.s4 1966171168
    %v3602 = vunpack.c.0.s8 %v3601
    %v3603 = vlaneseq
    %v3604 = vshrl.u32 %v3603, 7
    %v3605 = vsub.s32 %v3602, %v3604
    %v3606 = vrot.slane %v3591, %v3605
    %v3608 = vunpack.c.l.s4 1966171168
    %v3609 = vunpack.c.0.s8 %v3608
    %v3610 = vlaneseq
    %v3611 = vshrl.u32 %v3610, 7
    %v3612 = vsub.s32 %v3609, %v3611
    %v3613 = vrot.slane %v3592, %v3612
    %v3614 = vcombine.high %v3606, %v3606
    %s3618 = scalar_lea.vmem [#allocation3], 12
    %3619 = vst [vmem:[%s3618] sm:$0x1] %v3614
    %3620 = vst [vmem:[%s3618 + $0x4] sm:$0x1] %v3599
    %3621 = vst [vmem:[%s3618 + $0x8] sm:$0x1] %v3613
    %v3622 = vld [vmem:[%s8 + $0x40] sm:$0xff]
    %v3623 = vld [vmem:[%s8 + $0x48] sm:$0xff]
    %v3624 = vld [vmem:[%s8 + $0x50] sm:$0xff]
    %v3625 = vld [vmem:[%s8 + $0x58] sm:$0xff]
    %v3627 = vsel %vm45, %v3494, 0
    %3629 = vmatprep.subr.mxu0 0.0
    %3630 = vmatpush1.msra.mxu0 %v3622
    %3631 = vmatprep.subr.mxu0 0.0
    %3632 = vmatpush1.msra.mxu0 %v3623
    %3633 = vmatprep.subr.mxu0 0.0
    %3634 = vmatpush1.msra.mxu0 %v3624
    %3635 = vmatprep.subr.mxu0 0.0
    %3636 = vmatpush1.msra.mxu0 %v3625
    %3637 = vmatprep.subr.mxu0 0.0
    %3638 = vmatpush1.msra.mxu0 0.0
    %3639 = vmatprep.subr.mxu0 0.0
    %3640 = vmatpush1.msra.mxu0 0.0
    %3641 = vmatprep.subr.mxu0 0.0
    %3642 = vmatpush1.msra.mxu0 0.0
    %3643 = vmatprep.subr.mxu0 0.0
    %3644 = vmatpush1.msra.mxu0 0.0
    %3645 = vmatprep.subr.mxu0 0.0
    %3646 = vmatpush1.msra.mxu0 0.0
    %3647 = vmatprep.subr.mxu0 0.0
    %3648 = vmatpush1.msra.mxu0 0.0
    %3649 = vmatprep.subr.mxu0 0.0
    %3650 = vmatpush1.msra.mxu0 0.0
    %3651 = vmatprep.subr.mxu0 0.0
    %3652 = vmatpush1.msra.mxu0 0.0
    %3653 = vmatprep.subr.mxu0 0.0
    %3654 = vmatpush1.msra.mxu0 0.0
    %3655 = vmatprep.subr.mxu0 0.0
    %3656 = vmatpush1.msra.mxu0 0.0
    %3657 = vmatprep.subr.mxu0 0.0
    %3658 = vmatpush1.msra.mxu0 0.0
    %3659 = vmatprep.subr.mxu0 0.0
    %3660 = vmatpush1.msra.mxu0 0.0
    %3661 = vmatprep.subr.mxu0 0.0
    %3662 = vmatpush1.msra.mxu0 0.0
    %3663 = vmatprep.subr.mxu0 0.0
    %3664 = vmatpush1.msra.mxu0 0.0
    %3665 = vmatprep.subr.mxu0 0.0
    %3666 = vmatpush1.msra.mxu0 0.0
    %3667 = vmatprep.subr.mxu0 0.0
    %3668 = vmatpush1.msra.mxu0 0.0
    %3669 = vmatprep.subr.mxu0 0.0
    %3670 = vmatpush1.msra.mxu0 0.0
    %3671 = vmatprep.subr.mxu0 0.0
    %3672 = vmatpush1.msra.mxu0 0.0
    %3673 = vmatprep.subr.mxu0 0.0
    %3674 = vmatpush1.msra.mxu0 0.0
    %3675 = vmatprep.subr.mxu0 0.0
    %3676 = vmatpush1.msra.mxu0 0.0
    %3677 = vmatprep.subr.mxu0 0.0
    %3678 = vmatpush1.msra.mxu0 0.0
    %3679 = vmatprep.subr.mxu0 0.0
    %3680 = vmatpush1.msra.mxu0 0.0
    %3681 = vmatprep.subr.mxu0 0.0
    %3682 = vmatpush1.msra.mxu0 0.0
    %3683 = vmatprep.subr.mxu0 0.0
    %3684 = vmatpush1.msra.mxu0 0.0
    %3685 = vmatprep.subr.mxu0 0.0
    %3686 = vmatpush1.msra.mxu0 0.0
    %3687 = vmatprep.subr.mxu0 0.0
    %3688 = vmatpush1.msra.mxu0 0.0
    %3689 = vmatprep.subr.mxu0 0.0
    %3690 = vmatpush1.msra.mxu0 0.0
    %3691 = vmatprep.subr.mxu0 0.0
    %3692 = vmatpush1.msra.mxu0 0.0
    %3693 = vmatprep.mubr.f32.mxu0 0.0
    %3694 = vmatmul.mubr.f32.gmra.mrb[0].mxu0 %v3627
    %v3695 = vpop.f32.mrb[0].mxu0
    %v3696 = vadd.f32 %v3229, %v3695
    %v3697 = vpop.f32.mrb[0].mxu0
    %3698 = vdwg.mxu0
    %s3699 = scalar_lea.vmem %s11, 4
    %3700 = vst.msk [vmem:[%s3699] sm:$0x7] %vm3304, %v3696
    %vm3701 = vcmask 1045507
    %v3702 = vsel %vm3701, %v3574, -inf
    %3703 = vmax.xlane.f32.xlu0 %v3702
    %v3704 = vpop.xlane.xlu0 %3703
    %vm3705 = vcmp.eq.f32.partialorder %v3574, %v3704
    %v3706 = vsel %vm3705, %v2609, 128
    %v3707 = vsel %vm3701, %v3706, 2147483647
    %v3708 = vand.u32 %v3707, 65535
    %v3709 = vshra.s32 %v3707, 16
    %v3710 = vcvt.s32.f32 %v3708
    %v3711 = vcvt.s32.f32 %v3709
    %3712 = vmin.xlane.f32.xlu0 %v3711
    %v3713 = vpop.xlane.xlu0 %3712
    %vm3714 = vcmp.eq.f32.partialorder %v3711, %v3713
    %v3715 = vsel %vm3714, %v3710, inf
    %3716 = vmin.xlane.f32.xlu0 %v3715
    %v3717 = vpop.xlane.xlu0 %3716
    %v3718 = vcvt.f32.s32 %v3717
    %v3719 = vcvt.f32.s32 %v3713
    %v3720 = vshll.u32 %v3719, 16
    %v3721 = vadd.s32 %v3720, %v3718
    %vm3722 = vcmp.eq.s32.totalorder %v2609, %v3721
    %v3723 = vsel %vm3722, 1, 0
    %v3724 = vcvt.s32.f32 %v3723
    %v3725 = vsel %vm2639, %v3328, %v3724
    %v3726 = vld [vmem:[%s4] sm:$0xff]
    %v3727 = vld [vmem:[%s4 + $0x8] sm:$0xff]
    %v3728 = vld [vmem:[%s4 + $0x10] sm:$0xff]
    %v3729 = vld [vmem:[%s4 + $0x18] sm:$0xff]
    %v3730 = vld [vmem:[%s4 + $0x20] sm:$0xff]
    %v3731 = vld [vmem:[%s4 + $0x28] sm:$0xff]
    %v3732 = vld [vmem:[%s4 + $0x30] sm:$0xff]
    %v3733 = vld [vmem:[%s4 + $0x38] sm:$0xff]
    %v3734 = vld [vmem:[%s4 + $0x40] sm:$0xff]
    %v3735 = vld [vmem:[%s4 + $0x48] sm:$0xff]
    %v3736 = vld [vmem:[%s4 + $0x50] sm:$0xff]
    %v3737 = vld [vmem:[%s4 + $0x58] sm:$0xff]
    %v3738 = vld [vmem:[%s4 + $0x60] sm:$0xff]
    %v3739 = vld [vmem:[%s4 + $0x68] sm:$0xff]
    %v3740 = vld [vmem:[%s4 + $0x70] sm:$0xff]
    %v3741 = vld [vmem:[%s4 + $0x78] sm:$0xff]
    %3742 = vmatprep.subr.mxu0 0.0
    %3743 = vmatpush1.msra.mxu0 %v3726
    %3744 = vmatprep.subr.mxu0 0.0
    %3745 = vmatpush1.msra.mxu0 %v3727
    %3746 = vmatprep.subr.mxu0 0.0
    %3747 = vmatpush1.msra.mxu0 %v3728
    %3748 = vmatprep.subr.mxu0 0.0
    %3749 = vmatpush1.msra.mxu0 %v3729
    %3750 = vmatprep.subr.mxu0 0.0
    %3751 = vmatpush1.msra.mxu0 %v3730
    %3752 = vmatprep.subr.mxu0 0.0
    %3753 = vmatpush1.msra.mxu0 %v3731
    %3754 = vmatprep.subr.mxu0 0.0
    %3755 = vmatpush1.msra.mxu0 %v3732
    %3756 = vmatprep.subr.mxu0 0.0
    %3757 = vmatpush1.msra.mxu0 %v3733
    %3758 = vmatprep.subr.mxu0 0.0
    %3759 = vmatpush1.msra.mxu0 %v3734
    %3760 = vmatprep.subr.mxu0 0.0
    %3761 = vmatpush1.msra.mxu0 %v3735
    %3762 = vmatprep.subr.mxu0 0.0
    %3763 = vmatpush1.msra.mxu0 %v3736
    %3764 = vmatprep.subr.mxu0 0.0
    %3765 = vmatpush1.msra.mxu0 %v3737
    %3766 = vmatprep.subr.mxu0 0.0
    %3767 = vmatpush1.msra.mxu0 %v3738
    %3768 = vmatprep.subr.mxu0 0.0
    %3769 = vmatpush1.msra.mxu0 %v3739
    %3770 = vmatprep.subr.mxu0 0.0
    %3771 = vmatpush1.msra.mxu0 %v3740
    %3772 = vmatprep.subr.mxu0 0.0
    %3773 = vmatpush1.msra.mxu0 %v3741
    %3774 = vmatprep.subr.mxu0 0.0
    %3775 = vmatpush1.msra.mxu0 0.0
    %3776 = vmatprep.subr.mxu0 0.0
    %3777 = vmatpush1.msra.mxu0 0.0
    %3778 = vmatprep.subr.mxu0 0.0
    %3779 = vmatpush1.msra.mxu0 0.0
    %3780 = vmatprep.subr.mxu0 0.0
    %3781 = vmatpush1.msra.mxu0 0.0
    %3782 = vmatprep.subr.mxu0 0.0
    %3783 = vmatpush1.msra.mxu0 0.0
    %3784 = vmatprep.subr.mxu0 0.0
    %3785 = vmatpush1.msra.mxu0 0.0
    %3786 = vmatprep.subr.mxu0 0.0
    %3787 = vmatpush1.msra.mxu0 0.0
    %3788 = vmatprep.subr.mxu0 0.0
    %3789 = vmatpush1.msra.mxu0 0.0
    %3790 = vmatprep.subr.mxu0 0.0
    %3791 = vmatpush1.msra.mxu0 0.0
    %3792 = vmatprep.subr.mxu0 0.0
    %3793 = vmatpush1.msra.mxu0 0.0
    %3794 = vmatprep.subr.mxu0 0.0
    %3795 = vmatpush1.msra.mxu0 0.0
    %3796 = vmatprep.subr.mxu0 0.0
    %3797 = vmatpush1.msra.mxu0 0.0
    %3798 = vmatprep.subr.mxu0 0.0
    %3799 = vmatpush1.msra.mxu0 0.0
    %3800 = vmatprep.subr.mxu0 0.0
    %3801 = vmatpush1.msra.mxu0 0.0
    %3802 = vmatprep.subr.mxu0 0.0
    %3803 = vmatpush1.msra.mxu0 0.0
    %3804 = vmatprep.subr.mxu0 0.0
    %3805 = vmatpush1.msra.mxu0 0.0
    %3806 = vmatprep.mubr.f32.mxu0 0.0
    %3807 = vmatmul.mubr.f32.gmra.mrb[0].mxu0 %v3725
    %v3808 = vpop.f32.mrb[0].mxu0
    %v3809 = vadd.f32 0.0, %v3808
    %v3810 = vpop.f32.mrb[0].mxu0
    %3811 = vdwg.mxu0
    %v3812 = vld [vmem:[%s8] sm:$0xff]
    %v3813 = vld [vmem:[%s8 + $0x8] sm:$0xff]
    %v3814 = vld [vmem:[%s8 + $0x10] sm:$0xff]
    %v3815 = vld [vmem:[%s8 + $0x18] sm:$0xff]
    %v3816 = vld [vmem:[%s9] sm:$0x1]
    %v3817 = vlaneseq
    %v3818 = vshrl.u32 %v3817, 7
    %v3819 = vsub.s32 0, %v3818
    %v3820 = vrot.slane %v3816, %v3819
    %v3822 = vsel %vm45, %v3809, 0
    %3824 = vmatprep.subr.mxu0 0.0
    %3825 = vmatpush1.msra.mxu0 %v3812
    %3826 = vmatprep.subr.mxu0 0.0
    %3827 = vmatpush1.msra.mxu0 %v3813
    %3828 = vmatprep.subr.mxu0 0.0
    %3829 = vmatpush1.msra.mxu0 %v3814
    %3830 = vmatprep.subr.mxu0 0.0
    %3831 = vmatpush1.msra.mxu0 %v3815
    %3832 = vmatprep.subr.mxu0 0.0
    %3833 = vmatpush1.msra.mxu0 0.0
    %3834 = vmatprep.subr.mxu0 0.0
    %3835 = vmatpush1.msra.mxu0 0.0
    %3836 = vmatprep.subr.mxu0 0.0
    %3837 = vmatpush1.msra.mxu0 0.0
    %3838 = vmatprep.subr.mxu0 0.0
    %3839 = vmatpush1.msra.mxu0 0.0
    %3840 = vmatprep.subr.mxu0 0.0
    %3841 = vmatpush1.msra.mxu0 0.0
    %3842 = vmatprep.subr.mxu0 0.0
    %3843 = vmatpush1.msra.mxu0 0.0
    %3844 = vmatprep.subr.mxu0 0.0
    %3845 = vmatpush1.msra.mxu0 0.0
    %3846 = vmatprep.subr.mxu0 0.0
    %3847 = vmatpush1.msra.mxu0 0.0
    %3848 = vmatprep.subr.mxu0 0.0
    %3849 = vmatpush1.msra.mxu0 0.0
    %3850 = vmatprep.subr.mxu0 0.0
    %3851 = vmatpush1.msra.mxu0 0.0
    %3852 = vmatprep.subr.mxu0 0.0
    %3853 = vmatpush1.msra.mxu0 0.0
    %3854 = vmatprep.subr.mxu0 0.0
    %3855 = vmatpush1.msra.mxu0 0.0
    %3856 = vmatprep.subr.mxu0 0.0
    %3857 = vmatpush1.msra.mxu0 0.0
    %3858 = vmatprep.subr.mxu0 0.0
    %3859 = vmatpush1.msra.mxu0 0.0
    %3860 = vmatprep.subr.mxu0 0.0
    %3861 = vmatpush1.msra.mxu0 0.0
    %3862 = vmatprep.subr.mxu0 0.0
    %3863 = vmatpush1.msra.mxu0 0.0
    %3864 = vmatprep.subr.mxu0 0.0
    %3865 = vmatpush1.msra.mxu0 0.0
    %3866 = vmatprep.subr.mxu0 0.0
    %3867 = vmatpush1.msra.mxu0 0.0
    %3868 = vmatprep.subr.mxu0 0.0
    %3869 = vmatpush1.msra.mxu0 0.0
    %3870 = vmatprep.subr.mxu0 0.0
    %3871 = vmatpush1.msra.mxu0 0.0
    %3872 = vmatprep.subr.mxu0 0.0
    %3873 = vmatpush1.msra.mxu0 0.0
    %3874 = vmatprep.subr.mxu0 0.0
    %3875 = vmatpush1.msra.mxu0 0.0
    %3876 = vmatprep.subr.mxu0 0.0
    %3877 = vmatpush1.msra.mxu0 0.0
    %3878 = vmatprep.subr.mxu0 0.0
    %3879 = vmatpush1.msra.mxu0 0.0
    %3880 = vmatprep.subr.mxu0 0.0
    %3881 = vmatpush1.msra.mxu0 0.0
    %3882 = vmatprep.subr.mxu0 0.0
    %3883 = vmatpush1.msra.mxu0 0.0
    %3884 = vmatprep.subr.mxu0 0.0
    %3885 = vmatpush1.msra.mxu0 0.0
    %3886 = vmatprep.subr.mxu0 0.0
    %3887 = vmatpush1.msra.mxu0 0.0
    %3888 = vmatprep.mubr.f32.mxu0 0.0
    %3889 = vmatmul.mubr.f32.gmra.mrb[0].mxu0 %v3822
    %v3890 = vpop.f32.mrb[0].mxu0
    %v3891 = vadd.f32 %v3820, %v3890
    %v3892 = vpop.f32.mrb[0].mxu0
    %3893 = vdwg.mxu0
    %v3894 = vld [vmem:[%s8 + $0x20] sm:$0xff]
    %v3895 = vld [vmem:[%s8 + $0x28] sm:$0xff]
    %v3896 = vld [vmem:[%s8 + $0x30] sm:$0xff]
    %v3897 = vld [vmem:[%s8 + $0x38] sm:$0xff]
    %v3898 = vld [vmem:[%s9 + $0x1] sm:$0x1]
    %v3899 = vlaneseq
    %v3900 = vshrl.u32 %v3899, 7
    %v3901 = vsub.s32 0, %v3900
    %v3902 = vrot.slane %v3898, %v3901
    %3903 = vmatprep.subr.mxu0 0.0
    %3904 = vmatpush1.msra.mxu0 %v3894
    %3905 = vmatprep.subr.mxu0 0.0
    %3906 = vmatpush1.msra.mxu0 %v3895
    %3907 = vmatprep.subr.mxu0 0.0
    %3908 = vmatpush1.msra.mxu0 %v3896
    %3909 = vmatprep.subr.mxu0 0.0
    %3910 = vmatpush1.msra.mxu0 %v3897
    %3911 = vmatprep.subr.mxu0 0.0
    %3912 = vmatpush1.msra.mxu0 0.0
    %3913 = vmatprep.subr.mxu0 0.0
    %3914 = vmatpush1.msra.mxu0 0.0
    %3915 = vmatprep.subr.mxu0 0.0
    %3916 = vmatpush1.msra.mxu0 0.0
    %3917 = vmatprep.subr.mxu0 0.0
    %3918 = vmatpush1.msra.mxu0 0.0
    %3919 = vmatprep.subr.mxu0 0.0
    %3920 = vmatpush1.msra.mxu0 0.0
    %3921 = vmatprep.subr.mxu0 0.0
    %3922 = vmatpush1.msra.mxu0 0.0
    %3923 = vmatprep.subr.mxu0 0.0
    %3924 = vmatpush1.msra.mxu0 0.0
    %3925 = vmatprep.subr.mxu0 0.0
    %3926 = vmatpush1.msra.mxu0 0.0
    %3927 = vmatprep.subr.mxu0 0.0
    %3928 = vmatpush1.msra.mxu0 0.0
    %3929 = vmatprep.subr.mxu0 0.0
    %3930 = vmatpush1.msra.mxu0 0.0
    %3931 = vmatprep.subr.mxu0 0.0
    %3932 = vmatpush1.msra.mxu0 0.0
    %3933 = vmatprep.subr.mxu0 0.0
    %3934 = vmatpush1.msra.mxu0 0.0
    %3935 = vmatprep.subr.mxu0 0.0
    %3936 = vmatpush1.msra.mxu0 0.0
    %3937 = vmatprep.subr.mxu0 0.0
    %3938 = vmatpush1.msra.mxu0 0.0
    %3939 = vmatprep.subr.mxu0 0.0
    %3940 = vmatpush1.msra.mxu0 0.0
    %3941 = vmatprep.subr.mxu0 0.0
    %3942 = vmatpush1.msra.mxu0 0.0
    %3943 = vmatprep.subr.mxu0 0.0
    %3944 = vmatpush1.msra.mxu0 0.0
    %3945 = vmatprep.subr.mxu0 0.0
    %3946 = vmatpush1.msra.mxu0 0.0
    %3947 = vmatprep.subr.mxu0 0.0
    %3948 = vmatpush1.msra.mxu0 0.0
    %3949 = vmatprep.subr.mxu0 0.0
    %3950 = vmatpush1.msra.mxu0 0.0
    %3951 = vmatprep.subr.mxu0 0.0
    %3952 = vmatpush1.msra.mxu0 0.0
    %3953 = vmatprep.subr.mxu0 0.0
    %3954 = vmatpush1.msra.mxu0 0.0
    %3955 = vmatprep.subr.mxu0 0.0
    %3956 = vmatpush1.msra.mxu0 0.0
    %3957 = vmatprep.subr.mxu0 0.0
    %3958 = vmatpush1.msra.mxu0 0.0
    %3959 = vmatprep.subr.mxu0 0.0
    %3960 = vmatpush1.msra.mxu0 0.0
    %3961 = vmatprep.subr.mxu0 0.0
    %3962 = vmatpush1.msra.mxu0 0.0
    %3963 = vmatprep.subr.mxu0 0.0
    %3964 = vmatpush1.msra.mxu0 0.0
    %3965 = vmatprep.subr.mxu0 0.0
    %3966 = vmatpush1.msra.mxu0 0.0
    %3967 = vmatprep.mubr.f32.mxu0 0.0
    %3968 = vmatmul.mubr.f32.gmra.mrb[0].mxu0 %v2841
    %v3969 = vpop.f32.mrb[0].mxu0
    %v3970 = vadd.f32 %v3902, %v3969
    %v3971 = vpop.f32.mrb[0].mxu0
    %3972 = vdwg.mxu0
    %v3973 = vadd.f32 %v3891, %v3970
    %v3974 = vxor.u32 %v3973, 2147483648
    %v3975 = vmul.f32 %v3974, 1.442695
    %v3976 = vpow.pop %v3975
    %v3977 = vadd.f32 %v3976, 1.0
    %v3978 = vrcp.pop %v3977
    %v3979 = vmul.f32 1.0, %v3978
    %3981 = vrot.lane.b32.xlu0 %v3970, 64
    %v3982 = vpop.permute.xlu0 %3981
    %v3984 = vmul.f32 %v3979, %v3982
    %3986 = vrot.lane.b32.xlu0 %v3984, 64
    %v3987 = vpop.permute.xlu0 %3986
    %v3989 = vadd.f32 %v3891, %v3987
    %v3990 = vtanh.pop %v3989
    %v3991 = vsub.f32 1.0, %v3979
    %3993 = vrot.lane.b32.xlu0 %v3990, 96
    %v3994 = vpop.permute.xlu0 %3993
    %v3996 = vmul.f32 %v3991, %v3994
    %v3997 = vmul.f32 %v3979, %v2833
    %v3998 = vadd.f32 %v3996, %v3997
    %v3999 = vld [vmem:[%s5] sm:$0xff]
    %v4000 = vld [vmem:[%s5 + $0x8] sm:$0xff]
    %v4001 = vld [vmem:[%s5 + $0x10] sm:$0xff]
    %v4002 = vld [vmem:[%s5 + $0x18] sm:$0xff]
    %4004 = vrot.lane.b32.xlu0 %v3998, 96
    %v4005 = vpop.permute.xlu0 %4004
    %v4006 = vsel %vm45, %v4005, 0
    %4008 = vmatprep.subr.mxu0 0.0
    %4009 = vmatpush1.msra.mxu0 %v3999
    %4010 = vmatprep.subr.mxu0 0.0
    %4011 = vmatpush1.msra.mxu0 %v4000
    %4012 = vmatprep.subr.mxu0 0.0
    %4013 = vmatpush1.msra.mxu0 %v4001
    %4014 = vmatprep.subr.mxu0 0.0
    %4015 = vmatpush1.msra.mxu0 %v4002
    %4016 = vmatprep.subr.mxu0 0.0
    %4017 = vmatpush1.msra.mxu0 0.0
    %4018 = vmatprep.subr.mxu0 0.0
    %4019 = vmatpush1.msra.mxu0 0.0
    %4020 = vmatprep.subr.mxu0 0.0
    %4021 = vmatpush1.msra.mxu0 0.0
    %4022 = vmatprep.subr.mxu0 0.0
    %4023 = vmatpush1.msra.mxu0 0.0
    %4024 = vmatprep.subr.mxu0 0.0
    %4025 = vmatpush1.msra.mxu0 0.0
    %4026 = vmatprep.subr.mxu0 0.0
    %4027 = vmatpush1.msra.mxu0 0.0
    %4028 = vmatprep.subr.mxu0 0.0
    %4029 = vmatpush1.msra.mxu0 0.0
    %4030 = vmatprep.subr.mxu0 0.0
    %4031 = vmatpush1.msra.mxu0 0.0
    %4032 = vmatprep.subr.mxu0 0.0
    %4033 = vmatpush1.msra.mxu0 0.0
    %4034 = vmatprep.subr.mxu0 0.0
    %4035 = vmatpush1.msra.mxu0 0.0
    %4036 = vmatprep.subr.mxu0 0.0
    %4037 = vmatpush1.msra.mxu0 0.0
    %4038 = vmatprep.subr.mxu0 0.0
    %4039 = vmatpush1.msra.mxu0 0.0
    %4040 = vmatprep.subr.mxu0 0.0
    %4041 = vmatpush1.msra.mxu0 0.0
    %4042 = vmatprep.subr.mxu0 0.0
    %4043 = vmatpush1.msra.mxu0 0.0
    %4044 = vmatprep.subr.mxu0 0.0
    %4045 = vmatpush1.msra.mxu0 0.0
    %4046 = vmatprep.subr.mxu0 0.0
    %4047 = vmatpush1.msra.mxu0 0.0
    %4048 = vmatprep.subr.mxu0 0.0
    %4049 = vmatpush1.msra.mxu0 0.0
    %4050 = vmatprep.subr.mxu0 0.0
    %4051 = vmatpush1.msra.mxu0 0.0
    %4052 = vmatprep.subr.mxu0 0.0
    %4053 = vmatpush1.msra.mxu0 0.0
    %4054 = vmatprep.subr.mxu0 0.0
    %4055 = vmatpush1.msra.mxu0 0.0
    %4056 = vmatprep.subr.mxu0 0.0
    %4057 = vmatpush1.msra.mxu0 0.0
    %4058 = vmatprep.subr.mxu0 0.0
    %4059 = vmatpush1.msra.mxu0 0.0
    %4060 = vmatprep.subr.mxu0 0.0
    %4061 = vmatpush1.msra.mxu0 0.0
    %4062 = vmatprep.subr.mxu0 0.0
    %4063 = vmatpush1.msra.mxu0 0.0
    %4064 = vmatprep.subr.mxu0 0.0
    %4065 = vmatpush1.msra.mxu0 0.0
    %4066 = vmatprep.subr.mxu0 0.0
    %4067 = vmatpush1.msra.mxu0 0.0
    %4068 = vmatprep.subr.mxu0 0.0
    %4069 = vmatpush1.msra.mxu0 0.0
    %4070 = vmatprep.subr.mxu0 0.0
    %4071 = vmatpush1.msra.mxu0 0.0
    %4072 = vmatprep.mubr.f32.mxu0 0.0
    %4073 = vmatmul.mubr.f32.gmra.mrb[0].mxu0 %v4006
    %v4074 = vpop.f32.mrb[0].mxu0
    %v4075 = vadd.f32 0.0, %v4074
    %v4076 = vpop.f32.mrb[0].mxu0
    %4077 = vdwg.mxu0
    %v4078 = vsel %vm2913, %v4075, -inf
    %4079 = vmax.xlane.f32.xlu0 %v4078
    %v4080 = vpop.xlane.xlu0 %4079
    %v4081 = vsub.f32 %v4075, %v4080
    %v4082 = vmul.f32 %v4081, 1.442695
    %v4083 = vpow.pop %v4082
    %v4084 = vsel %vm2913, %v4083, 0.0
    %4085 = vadd.xlane.f32.xlu0 %v4084
    %v4086 = vpop.xlane.xlu0 %4085
    %v4087 = vrcp.pop %v4086
    %v4088 = vmul.f32 %v4083, %v4087
    %v4089 = vmul.f32 %v3809, %v2928
    %v4090 = vsel %vm2930, %v4089, 0.0
    %4091 = vadd.xlane.f32.xlu0 %v4090
    %v4092 = vpop.xlane.xlu0 %4091
    %v4093 = vmul.f32 %v3998, %v2928
    %4095 = vrot.lane.b32.xlu0 %v4093, 96
    %v4096 = vpop.permute.xlu0 %4095
    %v4098 = vsel %vm2930, %v4096, 0.0
    %4099 = vadd.xlane.f32.xlu0 %v4098
    %v4100 = vpop.xlane.xlu0 %4099
    %v4101 = vadd.f32 %v4092, %v4100
    %v4102 = vadd.f32 %v4101, %v2946
    %4103 = vmatprep.subr.mxu0 0.0
    %4104 = vmatpush1.xpose.msra.mxu0 %v2949
    %4105 = vmatprep.subr.mxu0 0.0
    %4106 = vmatpush1.xpose.msra.mxu0 0.0
    %4107 = vmatprep.subr.mxu0 0.0
    %4108 = vmatpush1.xpose.msra.mxu0 0.0
    %4109 = vmatprep.subr.mxu0 0.0
    %4110 = vmatpush1.xpose.msra.mxu0 0.0
    %4111 = vmatprep.subr.mxu0 0.0
    %4112 = vmatpush1.xpose.msra.mxu0 0.0
    %4113 = vmatprep.subr.mxu0 0.0
    %4114 = vmatpush1.xpose.msra.mxu0 0.0
    %4115 = vmatprep.subr.mxu0 0.0
    %4116 = vmatpush1.xpose.msra.mxu0 0.0
    %4117 = vmatprep.subr.mxu0 0.0
    %4118 = vmatpush1.xpose.msra.mxu0 0.0
    %4119 = vmatprep.subr.mxu0 0.0
    %4120 = vmatpush1.xpose.msra.mxu0 0.0
    %4121 = vmatprep.subr.mxu0 0.0
    %4122 = vmatpush1.xpose.msra.mxu0 0.0
    %4123 = vmatprep.subr.mxu0 0.0
    %4124 = vmatpush1.xpose.msra.mxu0 0.0
    %4125 = vmatprep.subr.mxu0 0.0
    %4126 = vmatpush1.xpose.msra.mxu0 0.0
    %4127 = vmatprep.subr.mxu0 0.0
    %4128 = vmatpush1.xpose.msra.mxu0 0.0
    %4129 = vmatprep.subr.mxu0 0.0
    %4130 = vmatpush1.xpose.msra.mxu0 0.0
    %4131 = vmatprep.subr.mxu0 0.0
    %4132 = vmatpush1.xpose.msra.mxu0 0.0
    %4133 = vmatprep.subr.mxu0 0.0
    %4134 = vmatpush1.xpose.msra.mxu0 0.0
    %4135 = vmatprep.subr.mxu0 0.0
    %4136 = vmatpush1.xpose.msra.mxu0 0.0
    %4137 = vmatprep.subr.mxu0 0.0
    %4138 = vmatpush1.xpose.msra.mxu0 0.0
    %4139 = vmatprep.subr.mxu0 0.0
    %4140 = vmatpush1.xpose.msra.mxu0 0.0
    %4141 = vmatprep.subr.mxu0 0.0
    %4142 = vmatpush1.xpose.msra.mxu0 0.0
    %4143 = vmatprep.subr.mxu0 0.0
    %4144 = vmatpush1.xpose.msra.mxu0 0.0
    %4145 = vmatprep.subr.mxu0 0.0
    %4146 = vmatpush1.xpose.msra.mxu0 0.0
    %4147 = vmatprep.subr.mxu0 0.0
    %4148 = vmatpush1.xpose.msra.mxu0 0.0
    %4149 = vmatprep.subr.mxu0 0.0
    %4150 = vmatpush1.xpose.msra.mxu0 0.0
    %4151 = vmatprep.subr.mxu0 0.0
    %4152 = vmatpush1.xpose.msra.mxu0 0.0
    %4153 = vmatprep.subr.mxu0 0.0
    %4154 = vmatpush1.xpose.msra.mxu0 0.0
    %4155 = vmatprep.subr.mxu0 0.0
    %4156 = vmatpush1.xpose.msra.mxu0 0.0
    %4157 = vmatprep.subr.mxu0 0.0
    %4158 = vmatpush1.xpose.msra.mxu0 0.0
    %4159 = vmatprep.subr.mxu0 0.0
    %4160 = vmatpush1.xpose.msra.mxu0 0.0
    %4161 = vmatprep.subr.mxu0 0.0
    %4162 = vmatpush1.xpose.msra.mxu0 0.0
    %4163 = vmatprep.subr.mxu0 0.0
    %4164 = vmatpush1.xpose.msra.mxu0 0.0
    %4165 = vmatprep.subr.mxu0 0.0
    %4166 = vmatpush1.xpose.msra.mxu0 0.0
    %4167 = vmatprep.mubr.f32.mxu0 0.0
    %4168 = vmatmul.mubr.f32.gmra.mrb[0].mxu0 %v4006
    %v4169 = vpop.f32.mrb[0].mxu0
    %v4170 = vadd.f32 0.0, %v4169
    %v4171 = vpop.f32.mrb[0].mxu0
    %4172 = vdwg.mxu0
    %v4173 = vsel %vm3026, %v4170, -10000.0
    %v4174 = vsel %vm3028, %v4173, -inf
    %4175 = vmax.xlane.f32.xlu0 %v4174
    %v4176 = vpop.xlane.xlu0 %4175
    %v4177 = vsub.f32 %v4173, %v4176
    %v4178 = vmul.f32 %v4177, 1.442695
    %v4179 = vpow.pop %v4178
    %v4180 = vsel %vm3028, %v4179, 0.0
    %4181 = vadd.xlane.f32.xlu0 %v4180
    %v4182 = vpop.xlane.xlu0 %4181
    %v4183 = vrcp.pop %v4182
    %v4184 = vmul.f32 %v4179, %v4183
    %v4186 = vsel %vm259, %v4184, 0
    %4188 = vmatprep.subr.mxu0 0.0
    %4189 = vmatpush1.msra.mxu0 %v2604
    %4190 = vmatprep.subr.mxu0 0.0
    %4191 = vmatpush1.msra.mxu0 0.0
    %4192 = vmatprep.subr.mxu0 0.0
    %4193 = vmatpush1.msra.mxu0 0.0
    %4194 = vmatprep.subr.mxu0 0.0
    %4195 = vmatpush1.msra.mxu0 0.0
    %4196 = vmatprep.subr.mxu0 0.0
    %4197 = vmatpush1.msra.mxu0 0.0
    %4198 = vmatprep.subr.mxu0 0.0
    %4199 = vmatpush1.msra.mxu0 0.0
    %4200 = vmatprep.subr.mxu0 0.0
    %4201 = vmatpush1.msra.mxu0 0.0
    %4202 = vmatprep.subr.mxu0 0.0
    %4203 = vmatpush1.msra.mxu0 0.0
    %4204 = vmatprep.subr.mxu0 0.0
    %4205 = vmatpush1.msra.mxu0 0.0
    %4206 = vmatprep.subr.mxu0 0.0
    %4207 = vmatpush1.msra.mxu0 0.0
    %4208 = vmatprep.subr.mxu0 0.0
    %4209 = vmatpush1.msra.mxu0 0.0
    %4210 = vmatprep.subr.mxu0 0.0
    %4211 = vmatpush1.msra.mxu0 0.0
    %4212 = vmatprep.subr.mxu0 0.0
    %4213 = vmatpush1.msra.mxu0 0.0
    %4214 = vmatprep.subr.mxu0 0.0
    %4215 = vmatpush1.msra.mxu0 0.0
    %4216 = vmatprep.subr.mxu0 0.0
    %4217 = vmatpush1.msra.mxu0 0.0
    %4218 = vmatprep.subr.mxu0 0.0
    %4219 = vmatpush1.msra.mxu0 0.0
    %4220 = vmatprep.subr.mxu0 0.0
    %4221 = vmatpush1.msra.mxu0 0.0
    %4222 = vmatprep.subr.mxu0 0.0
    %4223 = vmatpush1.msra.mxu0 0.0
    %4224 = vmatprep.subr.mxu0 0.0
    %4225 = vmatpush1.msra.mxu0 0.0
    %4226 = vmatprep.subr.mxu0 0.0
    %4227 = vmatpush1.msra.mxu0 0.0
    %4228 = vmatprep.subr.mxu0 0.0
    %4229 = vmatpush1.msra.mxu0 0.0
    %4230 = vmatprep.subr.mxu0 0.0
    %4231 = vmatpush1.msra.mxu0 0.0
    %4232 = vmatprep.subr.mxu0 0.0
    %4233 = vmatpush1.msra.mxu0 0.0
    %4234 = vmatprep.subr.mxu0 0.0
    %4235 = vmatpush1.msra.mxu0 0.0
    %4236 = vmatprep.subr.mxu0 0.0
    %4237 = vmatpush1.msra.mxu0 0.0
    %4238 = vmatprep.subr.mxu0 0.0
    %4239 = vmatpush1.msra.mxu0 0.0
    %4240 = vmatprep.subr.mxu0 0.0
    %4241 = vmatpush1.msra.mxu0 0.0
    %4242 = vmatprep.subr.mxu0 0.0
    %4243 = vmatpush1.msra.mxu0 0.0
    %4244 = vmatprep.subr.mxu0 0.0
    %4245 = vmatpush1.msra.mxu0 0.0
    %4246 = vmatprep.subr.mxu0 0.0
    %4247 = vmatpush1.msra.mxu0 0.0
    %4248 = vmatprep.subr.mxu0 0.0
    %4249 = vmatpush1.msra.mxu0 0.0
    %4250 = vmatprep.subr.mxu0 0.0
    %4251 = vmatpush1.msra.mxu0 0.0
    %4252 = vmatprep.mubr.f32.mxu0 0.0
    %4253 = vmatmul.mubr.f32.gmra.mrb[0].mxu0 %v4186
    %v4254 = vpop.f32.mrb[0].mxu0
    %v4255 = vadd.f32 0.0, %v4254
    %v4256 = vpop.f32.mrb[0].mxu0
    %4257 = vdwg.mxu0
    %v4258 = vlaneseq
    %v4259 = vshrl.u32 %v4258, 7
    %v4260 = vsub.s32 0, %v4259
    %v4261 = vrot.slane %v4184, %v4260
    %4263 = vbcast.lane.b32.xlu0 %v4261, 256
    %v4264 = vpop.permute.xlu0 %4263
    %v4265 = vlaneseq
    %v4266 = vshrl.u32 %v4265, 7
    %v4267 = vsub.s32 1, %v4266
    %v4268 = vrot.slane %v4184, %v4267
    %4270 = vbcast.lane.b32.xlu0 %v4268, 256
    %v4271 = vpop.permute.xlu0 %4270
    %v4272 = vlaneseq
    %v4273 = vshrl.u32 %v4272, 7
    %v4274 = vsub.s32 2, %v4273
    %v4275 = vrot.slane %v4184, %v4274
    %4277 = vbcast.lane.b32.xlu0 %v4275, 256
    %v4278 = vpop.permute.xlu0 %4277
    %v4279 = vmul.f32 %v4264, %v2618
    %v4280 = vmul.f32 %v4271, %v2618
    %v4281 = vmul.f32 %v4278, %v2618
    %v4282 = vrot.slane %v4279, 4
    %v4283 = vadd.f32 %v4279, %v4282
    %v4284 = vrot.slane %v4283, 2
    %v4285 = vadd.f32 %v4283, %v4284
    %v4286 = vrot.slane %v4285, 1
    %v4287 = vadd.f32 %v4285, %v4286
    %v4288 = vrot.slane %v4280, 4
    %v4289 = vadd.f32 %v4280, %v4288
    %v4290 = vrot.slane %v4289, 2
    %v4291 = vadd.f32 %v4289, %v4290
    %v4292 = vrot.slane %v4291, 1
    %v4293 = vadd.f32 %v4291, %v4292
    %v4294 = vrot.slane %v4281, 4
    %v4295 = vadd.f32 %v4281, %v4294
    %v4296 = vrot.slane %v4295, 2
    %v4297 = vadd.f32 %v4295, %v4296
    %v4298 = vrot.slane %v4297, 1
    %v4299 = vadd.f32 %v4297, %v4298
    %v4300 = vmul.f32 %v4255, %v3157
    %v4301 = vsel %vm3160, %v4300, 0.0
    %4302 = vadd.xlane.f32.xlu0 %v4301
    %v4303 = vpop.xlane.xlu0 %4302
    %v4304 = vadd.f32 %v4102, %v4303
    %v4305 = vxor.u32 %v4304, 2147483648
    %v4306 = vmul.f32 %v4305, 1.442695
    %v4307 = vpow.pop %v4306
    %v4308 = vadd.f32 %v4307, 1.0
    %v4309 = vrcp.pop %v4308
    %v4310 = vmul.f32 1.0, %v4309
    %4312 = vset.pattern.permute.xlu0 0
    %4313 = vperm.xlu0 %4312, %v4310
    %v4314 = vpop.permute.xlu0 %4313
    %v4316 = vmul.f32 %v4314, %v4088
    %v4317 = vsub.f32 1.0, %v4310
    %4319 = vset.pattern.permute.xlu0 0
    %4320 = vperm.xlu0 %4319, %v4317
    %v4321 = vpop.permute.xlu0 %4320
    %v4326 = vsel %vm3186, %v4293, %v4287
    %v4327 = vsel %vm3188, %v4299, %v4326
    %v4329 = vmul.f32 %v4321, %v4327
    %v4330 = vadd.f32 %v4316, %v4329
    %v4333 = vunpack.c.l.s4 1966171168
    %v4334 = vunpack.c.0.s8 %v4333
    %v4335 = vlaneseq
    %v4336 = vshrl.u32 %v4335, 7
    %v4337 = vsub.s32 %v4334, %v4336
    %v4338 = vrot.slane %v4330, %v4337
    %v4339 = vcombine.high %v4338, %v4338
    %v4341 = vunpack.c.l.s4 1966171168
    %v4342 = vunpack.c.0.s8 %v4341
    %v4343 = vlaneseq
    %v4344 = vshrl.u32 %v4343, 7
    %v4345 = vsub.s32 %v4342, %v4344
    %v4346 = vrot.slane %v4338, %v4345
    %v4348 = vunpack.c.l.s4 1966171168
    %v4349 = vunpack.c.0.s8 %v4348
    %v4350 = vlaneseq
    %v4351 = vshrl.u32 %v4350, 7
    %v4352 = vsub.s32 %v4349, %v4351
    %v4353 = vrot.slane %v4339, %v4352
    %v4354 = vcombine.high %v4346, %v4346
    %4358 = vst [vmem:[#allocation3 + $0x1] sm:$0x1] %v4346
    %4359 = vst [vmem:[#allocation3 + $0x5] sm:$0x1] %v4353
    %4360 = vst [vmem:[#allocation3 + $0x9] sm:$0x1] %v4354
    %v4361 = vsel %vm2639, %v4330, -inf
    %4362 = vmax.xlane.f32.xlu0 %v4361
    %v4363 = vpop.xlane.xlu0 %4362
    %vm4364 = vcmp.eq.f32.partialorder %v4330, %v4363
    %v4365 = vsel %vm4364, %v2609, 128
    %v4366 = vsel %vm2639, %v4365, 2147483647
    %v4367 = vand.u32 %v4366, 65535
    %v4368 = vshra.s32 %v4366, 16
    %v4369 = vcvt.s32.f32 %v4367
    %v4370 = vcvt.s32.f32 %v4368
    %4371 = vmin.xlane.f32.xlu0 %v4370
    %v4372 = vpop.xlane.xlu0 %4371
    %vm4373 = vcmp.eq.f32.partialorder %v4370, %v4372
    %v4374 = vsel %vm4373, %v4369, inf
    %4375 = vmin.xlane.f32.xlu0 %v4374
    %v4376 = vpop.xlane.xlu0 %4375
    %v4377 = vcvt.f32.s32 %v4376
    %v4378 = vcvt.f32.s32 %v4372
    %v4379 = vshll.u32 %v4378, 16
    %v4380 = vadd.s32 %v4379, %v4377
    %vm4381 = vcmp.eq.s32.totalorder %v2609, %v4380
    %v4382 = vsel %vm4381, 1, 0
    %v4383 = vcvt.s32.f32 %v4382
    %v4384 = vrot.slane %v3998, 3
    %4385 = vrot.lane.b32.xlu0 %v4384, 96
    %v4386 = vpop.permute.xlu0 %4385
    %v4387 = vsel %vm45, %v4386, 0
    %4389 = vmatprep.subr.mxu0 0.0
    %4390 = vmatpush1.xpose.msra.mxu0 %v3335
    %4391 = vmatprep.subr.mxu0 0.0
    %4392 = vmatpush1.xpose.msra.mxu0 0.0
    %4393 = vmatprep.subr.mxu0 0.0
    %4394 = vmatpush1.xpose.msra.mxu0 0.0
    %4395 = vmatprep.subr.mxu0 0.0
    %4396 = vmatpush1.xpose.msra.mxu0 0.0
    %4397 = vmatprep.subr.mxu0 0.0
    %4398 = vmatpush1.xpose.msra.mxu0 0.0
    %4399 = vmatprep.subr.mxu0 0.0
    %4400 = vmatpush1.xpose.msra.mxu0 0.0
    %4401 = vmatprep.subr.mxu0 0.0
    %4402 = vmatpush1.xpose.msra.mxu0 0.0
    %4403 = vmatprep.subr.mxu0 0.0
    %4404 = vmatpush1.xpose.msra.mxu0 0.0
    %4405 = vmatprep.subr.mxu0 0.0
    %4406 = vmatpush1.xpose.msra.mxu0 0.0
    %4407 = vmatprep.subr.mxu0 0.0
    %4408 = vmatpush1.xpose.msra.mxu0 0.0
    %4409 = vmatprep.subr.mxu0 0.0
    %4410 = vmatpush1.xpose.msra.mxu0 0.0
    %4411 = vmatprep.subr.mxu0 0.0
    %4412 = vmatpush1.xpose.msra.mxu0 0.0
    %4413 = vmatprep.subr.mxu0 0.0
    %4414 = vmatpush1.xpose.msra.mxu0 0.0
    %4415 = vmatprep.subr.mxu0 0.0
    %4416 = vmatpush1.xpose.msra.mxu0 0.0
    %4417 = vmatprep.subr.mxu0 0.0
    %4418 = vmatpush1.xpose.msra.mxu0 0.0
    %4419 = vmatprep.subr.mxu0 0.0
    %4420 = vmatpush1.xpose.msra.mxu0 0.0
    %4421 = vmatprep.subr.mxu0 0.0
    %4422 = vmatpush1.xpose.msra.mxu0 0.0
    %4423 = vmatprep.subr.mxu0 0.0
    %4424 = vmatpush1.xpose.msra.mxu0 0.0
    %4425 = vmatprep.subr.mxu0 0.0
    %4426 = vmatpush1.xpose.msra.mxu0 0.0
    %4427 = vmatprep.subr.mxu0 0.0
    %4428 = vmatpush1.xpose.msra.mxu0 0.0
    %4429 = vmatprep.subr.mxu0 0.0
    %4430 = vmatpush1.xpose.msra.mxu0 0.0
    %4431 = vmatprep.subr.mxu0 0.0
    %4432 = vmatpush1.xpose.msra.mxu0 0.0
    %4433 = vmatprep.subr.mxu0 0.0
    %4434 = vmatpush1.xpose.msra.mxu0 0.0
    %4435 = vmatprep.subr.mxu0 0.0
    %4436 = vmatpush1.xpose.msra.mxu0 0.0
    %4437 = vmatprep.subr.mxu0 0.0
    %4438 = vmatpush1.xpose.msra.mxu0 0.0
    %4439 = vmatprep.subr.mxu0 0.0
    %4440 = vmatpush1.xpose.msra.mxu0 0.0
    %4441 = vmatprep.subr.mxu0 0.0
    %4442 = vmatpush1.xpose.msra.mxu0 0.0
    %4443 = vmatprep.subr.mxu0 0.0
    %4444 = vmatpush1.xpose.msra.mxu0 0.0
    %4445 = vmatprep.subr.mxu0 0.0
    %4446 = vmatpush1.xpose.msra.mxu0 0.0
    %4447 = vmatprep.subr.mxu0 0.0
    %4448 = vmatpush1.xpose.msra.mxu0 0.0
    %4449 = vmatprep.subr.mxu0 0.0
    %4450 = vmatpush1.xpose.msra.mxu0 0.0
    %4451 = vmatprep.subr.mxu0 0.0
    %4452 = vmatpush1.xpose.msra.mxu0 0.0
    %4453 = vmatprep.mubr.f32.mxu0 0.0
    %4454 = vmatmul.mubr.f32.gmra.mrb[0].mxu0 %v4387
    %v4455 = vpop.f32.mrb[0].mxu0
    %v4456 = vadd.f32 0.0, %v4455
    %v4457 = vpop.f32.mrb[0].mxu0
    %4458 = vdwg.mxu0
    %v4459 = vsel %vm3411, %v4456, -10000.0
    %v4460 = vsel %vm3028, %v4459, -inf
    %4461 = vmax.xlane.f32.xlu0 %v4460
    %v4462 = vpop.xlane.xlu0 %4461
    %v4463 = vsub.f32 %v4459, %v4462
    %v4464 = vmul.f32 %v4463, 1.442695
    %v4465 = vpow.pop %v4464
    %v4466 = vsel %vm3028, %v4465, 0.0
    %4467 = vadd.xlane.f32.xlu0 %v4466
    %v4468 = vpop.xlane.xlu0 %4467
    %v4469 = vrcp.pop %v4468
    %v4470 = vmul.f32 %v4465, %v4469
    %v4472 = vsel %vm259, %v4470, 0
    %4474 = vmatprep.subr.mxu0 0.0
    %4475 = vmatpush1.msra.mxu0 %v2605
    %4476 = vmatprep.subr.mxu0 0.0
    %4477 = vmatpush1.msra.mxu0 0.0
    %4478 = vmatprep.subr.mxu0 0.0
    %4479 = vmatpush1.msra.mxu0 0.0
    %4480 = vmatprep.subr.mxu0 0.0
    %4481 = vmatpush1.msra.mxu0 0.0
    %4482 = vmatprep.subr.mxu0 0.0
    %4483 = vmatpush1.msra.mxu0 0.0
    %4484 = vmatprep.subr.mxu0 0.0
    %4485 = vmatpush1.msra.mxu0 0.0
    %4486 = vmatprep.subr.mxu0 0.0
    %4487 = vmatpush1.msra.mxu0 0.0
    %4488 = vmatprep.subr.mxu0 0.0
    %4489 = vmatpush1.msra.mxu0 0.0
    %4490 = vmatprep.subr.mxu0 0.0
    %4491 = vmatpush1.msra.mxu0 0.0
    %4492 = vmatprep.subr.mxu0 0.0
    %4493 = vmatpush1.msra.mxu0 0.0
    %4494 = vmatprep.subr.mxu0 0.0
    %4495 = vmatpush1.msra.mxu0 0.0
    %4496 = vmatprep.subr.mxu0 0.0
    %4497 = vmatpush1.msra.mxu0 0.0
    %4498 = vmatprep.subr.mxu0 0.0
    %4499 = vmatpush1.msra.mxu0 0.0
    %4500 = vmatprep.subr.mxu0 0.0
    %4501 = vmatpush1.msra.mxu0 0.0
    %4502 = vmatprep.subr.mxu0 0.0
    %4503 = vmatpush1.msra.mxu0 0.0
    %4504 = vmatprep.subr.mxu0 0.0
    %4505 = vmatpush1.msra.mxu0 0.0
    %4506 = vmatprep.subr.mxu0 0.0
    %4507 = vmatpush1.msra.mxu0 0.0
    %4508 = vmatprep.subr.mxu0 0.0
    %4509 = vmatpush1.msra.mxu0 0.0
    %4510 = vmatprep.subr.mxu0 0.0
    %4511 = vmatpush1.msra.mxu0 0.0
    %4512 = vmatprep.subr.mxu0 0.0
    %4513 = vmatpush1.msra.mxu0 0.0
    %4514 = vmatprep.subr.mxu0 0.0
    %4515 = vmatpush1.msra.mxu0 0.0
    %4516 = vmatprep.subr.mxu0 0.0
    %4517 = vmatpush1.msra.mxu0 0.0
    %4518 = vmatprep.subr.mxu0 0.0
    %4519 = vmatpush1.msra.mxu0 0.0
    %4520 = vmatprep.subr.mxu0 0.0
    %4521 = vmatpush1.msra.mxu0 0.0
    %4522 = vmatprep.subr.mxu0 0.0
    %4523 = vmatpush1.msra.mxu0 0.0
    %4524 = vmatprep.subr.mxu0 0.0
    %4525 = vmatpush1.msra.mxu0 0.0
    %4526 = vmatprep.subr.mxu0 0.0
    %4527 = vmatpush1.msra.mxu0 0.0
    %4528 = vmatprep.subr.mxu0 0.0
    %4529 = vmatpush1.msra.mxu0 0.0
    %4530 = vmatprep.subr.mxu0 0.0
    %4531 = vmatpush1.msra.mxu0 0.0
    %4532 = vmatprep.subr.mxu0 0.0
    %4533 = vmatpush1.msra.mxu0 0.0
    %4534 = vmatprep.subr.mxu0 0.0
    %4535 = vmatpush1.msra.mxu0 0.0
    %4536 = vmatprep.subr.mxu0 0.0
    %4537 = vmatpush1.msra.mxu0 0.0
    %4538 = vmatprep.mubr.f32.mxu0 0.0
    %4539 = vmatmul.mubr.f32.gmra.mrb[0].mxu0 %v4472
    %v4540 = vpop.f32.mrb[0].mxu0
    %v4541 = vadd.f32 0.0, %v4540
    %v4542 = vpop.f32.mrb[0].mxu0
    %4543 = vdwg.mxu0
    %v4544 = vlaneseq
    %v4545 = vshrl.u32 %v4544, 7
    %v4546 = vsub.s32 0, %v4545
    %v4547 = vrot.slane %v4470, %v4546
    %4549 = vbcast.lane.b32.xlu0 %v4547, 256
    %v4550 = vpop.permute.xlu0 %4549
    %v4551 = vlaneseq
    %v4552 = vshrl.u32 %v4551, 7
    %v4553 = vsub.s32 1, %v4552
    %v4554 = vrot.slane %v4470, %v4553
    %4556 = vbcast.lane.b32.xlu0 %v4554, 256
    %v4557 = vpop.permute.xlu0 %4556
    %v4558 = vlaneseq
    %v4559 = vshrl.u32 %v4558, 7
    %v4560 = vsub.s32 2, %v4559
    %v4561 = vrot.slane %v4470, %v4560
    %4563 = vbcast.lane.b32.xlu0 %v4561, 256
    %v4564 = vpop.permute.xlu0 %4563
    %v4565 = vmul.f32 %v4550, %v2627
    %v4566 = vmul.f32 %v4557, %v2627
    %v4567 = vmul.f32 %v4564, %v2627
    %v4568 = vrot.slane %v4565, 4
    %v4569 = vadd.f32 %v4565, %v4568
    %v4570 = vrot.slane %v4569, 2
    %v4571 = vadd.f32 %v4569, %v4570
    %v4572 = vrot.slane %v4571, 1
    %v4573 = vadd.f32 %v4571, %v4572
    %v4574 = vrot.slane %v4566, 4
    %v4575 = vadd.f32 %v4566, %v4574
    %v4576 = vrot.slane %v4575, 2
    %v4577 = vadd.f32 %v4575, %v4576
    %v4578 = vrot.slane %v4577, 1
    %v4579 = vadd.f32 %v4577, %v4578
    %v4580 = vrot.slane %v4567, 4
    %v4581 = vadd.f32 %v4567, %v4580
    %v4582 = vrot.slane %v4581, 2
    %v4583 = vadd.f32 %v4581, %v4582
    %v4584 = vrot.slane %v4583, 1
    %v4585 = vadd.f32 %v4583, %v4584
    %v4586 = vmul.f32 %v4541, %v3157
    %v4587 = vsel %vm3160, %v4586, 0.0
    %4588 = vadd.xlane.f32.xlu0 %v4587
    %v4589 = vpop.xlane.xlu0 %4588
    %v4591 = vrot.slane %v4589, 5
    %v4593 = vadd.f32 %v4102, %v4591
    %v4594 = vxor.u32 %v4593, 2147483648
    %v4595 = vmul.f32 %v4594, 1.442695
    %v4596 = vpow.pop %v4595
    %v4597 = vadd.f32 %v4596, 1.0
    %v4598 = vrcp.pop %v4597
    %v4599 = vmul.f32 1.0, %v4598
    %4601 = vset.pattern.permute.xlu0 0
    %4602 = vperm.xlu0 %4601, %v4599
    %v4603 = vpop.permute.xlu0 %4602
    %v4605 = vmul.f32 %v4603, %v4088
    %v4606 = vsub.f32 1.0, %v4599
    %4608 = vset.pattern.permute.xlu0 0
    %4609 = vperm.xlu0 %4608, %v4606
    %v4610 = vpop.permute.xlu0 %4609
    %v4615 = vsel %vm3568, %v4579, %v4573
    %v4616 = vsel %vm3570, %v4585, %v4615
    %v4618 = vmul.f32 %v4610, %v4616
    %v4619 = vadd.f32 %v4605, %v4618
    %v4621 = vcombine.high %v4619, %v4619
    %v4623 = vunpack.c.l.s4 1966171168
    %v4624 = vunpack.c.0.s8 %v4623
    %v4625 = vlaneseq
    %v4626 = vshrl.u32 %v4625, 7
    %v4627 = vsub.s32 %v4624, %v4626
    %v4628 = vrot.slane %v4619, %v4627
    %v4630 = vunpack.c.l.s4 1966171168
    %v4631 = vunpack.c.0.s8 %v4630
    %v4632 = vlaneseq
    %v4633 = vshrl.u32 %v4632, 7
    %v4634 = vsub.s32 %v4631, %v4633
    %v4635 = vrot.slane %v4621, %v4634
    %v4636 = vcombine.high %v4628, %v4628
    %v4637 = vcombine.high %v4635, %v4635
    %v4639 = vunpack.c.l.s4 1966171168
    %v4640 = vunpack.c.0.s8 %v4639
    %v4641 = vlaneseq
    %v4642 = vshrl.u32 %v4641, 7
    %v4643 = vsub.s32 %v4640, %v4642
    %v4644 = vrot.slane %v4635, %v4643
    %v4646 = vunpack.c.l.s4 1966171168
    %v4647 = vunpack.c.0.s8 %v4646
    %v4648 = vlaneseq
    %v4649 = vshrl.u32 %v4648, 7
    %v4650 = vsub.s32 %v4647, %v4649
    %v4651 = vrot.slane %v4636, %v4650
    %v4653 = vunpack.c.l.s4 1966171168
    %v4654 = vunpack.c.0.s8 %v4653
    %v4655 = vlaneseq
    %v4656 = vshrl.u32 %v4655, 7
    %v4657 = vsub.s32 %v4654, %v4656
    %v4658 = vrot.slane %v4637, %v4657
    %v4659 = vcombine.high %v4651, %v4651
    %4663 = vst [vmem:[%s3618 + $0x1] sm:$0x1] %v4659
    %4664 = vst [vmem:[%s3618 + $0x5] sm:$0x1] %v4644
    %4665 = vst [vmem:[%s3618 + $0x9] sm:$0x1] %v4658
    %v4666 = vsel %vm3701, %v4619, -inf
    %4667 = vmax.xlane.f32.xlu0 %v4666
    %v4668 = vpop.xlane.xlu0 %4667
    %vm4669 = vcmp.eq.f32.partialorder %v4619, %v4668
    %v4670 = vsel %vm4669, %v2609, 128
    %v4671 = vsel %vm3701, %v4670, 2147483647
    %v4672 = vand.u32 %v4671, 65535
    %v4673 = vshra.s32 %v4671, 16
    %v4674 = vcvt.s32.f32 %v4672
    %v4675 = vcvt.s32.f32 %v4673
    %4676 = vmin.xlane.f32.xlu0 %v4675
    %v4677 = vpop.xlane.xlu0 %4676
    %vm4678 = vcmp.eq.f32.partialorder %v4675, %v4677
    %v4679 = vsel %vm4678, %v4674, inf
    %4680 = vmin.xlane.f32.xlu0 %v4679
    %v4681 = vpop.xlane.xlu0 %4680
    %v4682 = vcvt.f32.s32 %v4681
    %v4683 = vcvt.f32.s32 %v4677
    %v4684 = vshll.u32 %v4683, 16
    %v4685 = vadd.s32 %v4684, %v4682
    %vm4686 = vcmp.eq.s32.totalorder %v2609, %v4685
    %v4687 = vsel %vm4686, 1, 0
    %v4688 = vcvt.s32.f32 %v4687
    %v4689 = vsel %vm2639, %v4383, %v4688
    %v4690 = vld [vmem:[%s4] sm:$0xff]
    %v4691 = vld [vmem:[%s4 + $0x8] sm:$0xff]
    %v4692 = vld [vmem:[%s4 + $0x10] sm:$0xff]
    %v4693 = vld [vmem:[%s4 + $0x18] sm:$0xff]
    %v4694 = vld [vmem:[%s4 + $0x20] sm:$0xff]
    %v4695 = vld [vmem:[%s4 + $0x28] sm:$0xff]
    %v4696 = vld [vmem:[%s4 + $0x30] sm:$0xff]
    %v4697 = vld [vmem:[%s4 + $0x38] sm:$0xff]
    %v4698 = vld [vmem:[%s4 + $0x40] sm:$0xff]
    %v4699 = vld [vmem:[%s4 + $0x48] sm:$0xff]
    %v4700 = vld [vmem:[%s4 + $0x50] sm:$0xff]
    %v4701 = vld [vmem:[%s4 + $0x58] sm:$0xff]
    %v4702 = vld [vmem:[%s4 + $0x60] sm:$0xff]
    %v4703 = vld [vmem:[%s4 + $0x68] sm:$0xff]
    %v4704 = vld [vmem:[%s4 + $0x70] sm:$0xff]
    %v4705 = vld [vmem:[%s4 + $0x78] sm:$0xff]
    %4706 = vmatprep.subr.mxu0 0.0
    %4707 = vmatpush1.msra.mxu0 %v4690
    %4708 = vmatprep.subr.mxu0 0.0
    %4709 = vmatpush1.msra.mxu0 %v4691
    %4710 = vmatprep.subr.mxu0 0.0
    %4711 = vmatpush1.msra.mxu0 %v4692
    %4712 = vmatprep.subr.mxu0 0.0
    %4713 = vmatpush1.msra.mxu0 %v4693
    %4714 = vmatprep.subr.mxu0 0.0
    %4715 = vmatpush1.msra.mxu0 %v4694
    %4716 = vmatprep.subr.mxu0 0.0
    %4717 = vmatpush1.msra.mxu0 %v4695
    %4718 = vmatprep.subr.mxu0 0.0
    %4719 = vmatpush1.msra.mxu0 %v4696
    %4720 = vmatprep.subr.mxu0 0.0
    %4721 = vmatpush1.msra.mxu0 %v4697
    %4722 = vmatprep.subr.mxu0 0.0
    %4723 = vmatpush1.msra.mxu0 %v4698
    %4724 = vmatprep.subr.mxu0 0.0
    %4725 = vmatpush1.msra.mxu0 %v4699
    %4726 = vmatprep.subr.mxu0 0.0
    %4727 = vmatpush1.msra.mxu0 %v4700
    %4728 = vmatprep.subr.mxu0 0.0
    %4729 = vmatpush1.msra.mxu0 %v4701
    %4730 = vmatprep.subr.mxu0 0.0
    %4731 = vmatpush1.msra.mxu0 %v4702
    %4732 = vmatprep.subr.mxu0 0.0
    %4733 = vmatpush1.msra.mxu0 %v4703
    %4734 = vmatprep.subr.mxu0 0.0
    %4735 = vmatpush1.msra.mxu0 %v4704
    %4736 = vmatprep.subr.mxu0 0.0
    %4737 = vmatpush1.msra.mxu0 %v4705
    %4738 = vmatprep.subr.mxu0 0.0
    %4739 = vmatpush1.msra.mxu0 0.0
    %4740 = vmatprep.subr.mxu0 0.0
    %4741 = vmatpush1.msra.mxu0 0.0
    %4742 = vmatprep.subr.mxu0 0.0
    %4743 = vmatpush1.msra.mxu0 0.0
    %4744 = vmatprep.subr.mxu0 0.0
    %4745 = vmatpush1.msra.mxu0 0.0
    %4746 = vmatprep.subr.mxu0 0.0
    %4747 = vmatpush1.msra.mxu0 0.0
    %4748 = vmatprep.subr.mxu0 0.0
    %4749 = vmatpush1.msra.mxu0 0.0
    %4750 = vmatprep.subr.mxu0 0.0
    %4751 = vmatpush1.msra.mxu0 0.0
    %4752 = vmatprep.subr.mxu0 0.0
    %4753 = vmatpush1.msra.mxu0 0.0
    %4754 = vmatprep.subr.mxu0 0.0
    %4755 = vmatpush1.msra.mxu0 0.0
    %4756 = vmatprep.subr.mxu0 0.0
    %4757 = vmatpush1.msra.mxu0 0.0
    %4758 = vmatprep.subr.mxu0 0.0
    %4759 = vmatpush1.msra.mxu0 0.0
    %4760 = vmatprep.subr.mxu0 0.0
    %4761 = vmatpush1.msra.mxu0 0.0
    %4762 = vmatprep.subr.mxu0 0.0
    %4763 = vmatpush1.msra.mxu0 0.0
    %4764 = vmatprep.subr.mxu0 0.0
    %4765 = vmatpush1.msra.mxu0 0.0
    %4766 = vmatprep.subr.mxu0 0.0
    %4767 = vmatpush1.msra.mxu0 0.0
    %4768 = vmatprep.subr.mxu0 0.0
    %4769 = vmatpush1.msra.mxu0 0.0
    %4770 = vmatprep.mubr.f32.mxu0 0.0
    %4771 = vmatmul.mubr.f32.gmra.mrb[0].mxu0 %v4689
    %v4772 = vpop.f32.mrb[0].mxu0
    %v4773 = vadd.f32 0.0, %v4772
    %v4774 = vpop.f32.mrb[0].mxu0
    %4775 = vdwg.mxu0
    %v4776 = vld [vmem:[%s8] sm:$0xff]
    %v4777 = vld [vmem:[%s8 + $0x8] sm:$0xff]
    %v4778 = vld [vmem:[%s8 + $0x10] sm:$0xff]
    %v4779 = vld [vmem:[%s8 + $0x18] sm:$0xff]
    %v4780 = vld [vmem:[%s9] sm:$0x1]
    %v4781 = vlaneseq
    %v4782 = vshrl.u32 %v4781, 7
    %v4783 = vsub.s32 0, %v4782
    %v4784 = vrot.slane %v4780, %v4783
    %v4786 = vsel %vm45, %v4773, 0
    %4788 = vmatprep.subr.mxu0 0.0
    %4789 = vmatpush1.msra.mxu0 %v4776
    %4790 = vmatprep.subr.mxu0 0.0
    %4791 = vmatpush1.msra.mxu0 %v4777
    %4792 = vmatprep.subr.mxu0 0.0
    %4793 = vmatpush1.msra.mxu0 %v4778
    %4794 = vmatprep.subr.mxu0 0.0
    %4795 = vmatpush1.msra.mxu0 %v4779
    %4796 = vmatprep.subr.mxu0 0.0
    %4797 = vmatpush1.msra.mxu0 0.0
    %4798 = vmatprep.subr.mxu0 0.0
    %4799 = vmatpush1.msra.mxu0 0.0
    %4800 = vmatprep.subr.mxu0 0.0
    %4801 = vmatpush1.msra.mxu0 0.0
    %4802 = vmatprep.subr.mxu0 0.0
    %4803 = vmatpush1.msra.mxu0 0.0
    %4804 = vmatprep.subr.mxu0 0.0
    %4805 = vmatpush1.msra.mxu0 0.0
    %4806 = vmatprep.subr.mxu0 0.0
    %4807 = vmatpush1.msra.mxu0 0.0
    %4808 = vmatprep.subr.mxu0 0.0
    %4809 = vmatpush1.msra.mxu0 0.0
    %4810 = vmatprep.subr.mxu0 0.0
    %4811 = vmatpush1.msra.mxu0 0.0
    %4812 = vmatprep.subr.mxu0 0.0
    %4813 = vmatpush1.msra.mxu0 0.0
    %4814 = vmatprep.subr.mxu0 0.0
    %4815 = vmatpush1.msra.mxu0 0.0
    %4816 = vmatprep.subr.mxu0 0.0
    %4817 = vmatpush1.msra.mxu0 0.0
    %4818 = vmatprep.subr.mxu0 0.0
    %4819 = vmatpush1.msra.mxu0 0.0
    %4820 = vmatprep.subr.mxu0 0.0
    %4821 = vmatpush1.msra.mxu0 0.0
    %4822 = vmatprep.subr.mxu0 0.0
    %4823 = vmatpush1.msra.mxu0 0.0
    %4824 = vmatprep.subr.mxu0 0.0
    %4825 = vmatpush1.msra.mxu0 0.0
    %4826 = vmatprep.subr.mxu0 0.0
    %4827 = vmatpush1.msra.mxu0 0.0
    %4828 = vmatprep.subr.mxu0 0.0
    %4829 = vmatpush1.msra.mxu0 0.0
    %4830 = vmatprep.subr.mxu0 0.0
    %4831 = vmatpush1.msra.mxu0 0.0
    %4832 = vmatprep.subr.mxu0 0.0
    %4833 = vmatpush1.msra.mxu0 0.0
    %4834 = vmatprep.subr.mxu0 0.0
    %4835 = vmatpush1.msra.mxu0 0.0
    %4836 = vmatprep.subr.mxu0 0.0
    %4837 = vmatpush1.msra.mxu0 0.0
    %4838 = vmatprep.subr.mxu0 0.0
    %4839 = vmatpush1.msra.mxu0 0.0
    %4840 = vmatprep.subr.mxu0 0.0
    %4841 = vmatpush1.msra.mxu0 0.0
    %4842 = vmatprep.subr.mxu0 0.0
    %4843 = vmatpush1.msra.mxu0 0.0
    %4844 = vmatprep.subr.mxu0 0.0
    %4845 = vmatpush1.msra.mxu0 0.0
    %4846 = vmatprep.subr.mxu0 0.0
    %4847 = vmatpush1.msra.mxu0 0.0
    %4848 = vmatprep.subr.mxu0 0.0
    %4849 = vmatpush1.msra.mxu0 0.0
    %4850 = vmatprep.subr.mxu0 0.0
    %4851 = vmatpush1.msra.mxu0 0.0
    %4852 = vmatprep.mubr.f32.mxu0 0.0
    %4853 = vmatmul.mubr.f32.gmra.mrb[0].mxu0 %v4786
    %v4854 = vpop.f32.mrb[0].mxu0
    %v4855 = vadd.f32 %v4784, %v4854
    %v4856 = vpop.f32.mrb[0].mxu0
    %4857 = vdwg.mxu0
    %v4858 = vld [vmem:[%s8 + $0x20] sm:$0xff]
    %v4859 = vld [vmem:[%s8 + $0x28] sm:$0xff]
    %v4860 = vld [vmem:[%s8 + $0x30] sm:$0xff]
    %v4861 = vld [vmem:[%s8 + $0x38] sm:$0xff]
    %v4862 = vld [vmem:[%s9 + $0x1] sm:$0x1]
    %v4863 = vlaneseq
    %v4864 = vshrl.u32 %v4863, 7
    %v4865 = vsub.s32 0, %v4864
    %v4866 = vrot.slane %v4862, %v4865
    %4867 = vmatprep.subr.mxu0 0.0
    %4868 = vmatpush1.msra.mxu0 %v4858
    %4869 = vmatprep.subr.mxu0 0.0
    %4870 = vmatpush1.msra.mxu0 %v4859
    %4871 = vmatprep.subr.mxu0 0.0
    %4872 = vmatpush1.msra.mxu0 %v4860
    %4873 = vmatprep.subr.mxu0 0.0
    %4874 = vmatpush1.msra.mxu0 %v4861
    %4875 = vmatprep.subr.mxu0 0.0
    %4876 = vmatpush1.msra.mxu0 0.0
    %4877 = vmatprep.subr.mxu0 0.0
    %4878 = vmatpush1.msra.mxu0 0.0
    %4879 = vmatprep.subr.mxu0 0.0
    %4880 = vmatpush1.msra.mxu0 0.0
    %4881 = vmatprep.subr.mxu0 0.0
    %4882 = vmatpush1.msra.mxu0 0.0
    %4883 = vmatprep.subr.mxu0 0.0
    %4884 = vmatpush1.msra.mxu0 0.0
    %4885 = vmatprep.subr.mxu0 0.0
    %4886 = vmatpush1.msra.mxu0 0.0
    %4887 = vmatprep.subr.mxu0 0.0
    %4888 = vmatpush1.msra.mxu0 0.0
    %4889 = vmatprep.subr.mxu0 0.0
    %4890 = vmatpush1.msra.mxu0 0.0
    %4891 = vmatprep.subr.mxu0 0.0
    %4892 = vmatpush1.msra.mxu0 0.0
    %4893 = vmatprep.subr.mxu0 0.0
    %4894 = vmatpush1.msra.mxu0 0.0
    %4895 = vmatprep.subr.mxu0 0.0
    %4896 = vmatpush1.msra.mxu0 0.0
    %4897 = vmatprep.subr.mxu0 0.0
    %4898 = vmatpush1.msra.mxu0 0.0
    %4899 = vmatprep.subr.mxu0 0.0
    %4900 = vmatpush1.msra.mxu0 0.0
    %4901 = vmatprep.subr.mxu0 0.0
    %4902 = vmatpush1.msra.mxu0 0.0
    %4903 = vmatprep.subr.mxu0 0.0
    %4904 = vmatpush1.msra.mxu0 0.0
    %4905 = vmatprep.subr.mxu0 0.0
    %4906 = vmatpush1.msra.mxu0 0.0
    %4907 = vmatprep.subr.mxu0 0.0
    %4908 = vmatpush1.msra.mxu0 0.0
    %4909 = vmatprep.subr.mxu0 0.0
    %4910 = vmatpush1.msra.mxu0 0.0
    %4911 = vmatprep.subr.mxu0 0.0
    %4912 = vmatpush1.msra.mxu0 0.0
    %4913 = vmatprep.subr.mxu0 0.0
    %4914 = vmatpush1.msra.mxu0 0.0
    %4915 = vmatprep.subr.mxu0 0.0
    %4916 = vmatpush1.msra.mxu0 0.0
    %4917 = vmatprep.subr.mxu0 0.0
    %4918 = vmatpush1.msra.mxu0 0.0
    %4919 = vmatprep.subr.mxu0 0.0
    %4920 = vmatpush1.msra.mxu0 0.0
    %4921 = vmatprep.subr.mxu0 0.0
    %4922 = vmatpush1.msra.mxu0 0.0
    %4923 = vmatprep.subr.mxu0 0.0
    %4924 = vmatpush1.msra.mxu0 0.0
    %4925 = vmatprep.subr.mxu0 0.0
    %4926 = vmatpush1.msra.mxu0 0.0
    %4927 = vmatprep.subr.mxu0 0.0
    %4928 = vmatpush1.msra.mxu0 0.0
    %4929 = vmatprep.subr.mxu0 0.0
    %4930 = vmatpush1.msra.mxu0 0.0
    %4931 = vmatprep.mubr.f32.mxu0 0.0
    %4932 = vmatmul.mubr.f32.gmra.mrb[0].mxu0 %v4006
    %v4933 = vpop.f32.mrb[0].mxu0
    %v4934 = vadd.f32 %v4866, %v4933
    %v4935 = vpop.f32.mrb[0].mxu0
    %4936 = vdwg.mxu0
    %v4937 = vadd.f32 %v4855, %v4934
    %v4938 = vxor.u32 %v4937, 2147483648
    %v4939 = vmul.f32 %v4938, 1.442695
    %v4940 = vpow.pop %v4939
    %v4941 = vadd.f32 %v4940, 1.0
    %v4942 = vrcp.pop %v4941
    %v4943 = vmul.f32 1.0, %v4942
    %4945 = vrot.lane.b32.xlu0 %v4934, 64
    %v4946 = vpop.permute.xlu0 %4945
    %v4948 = vmul.f32 %v4943, %v4946
    %4950 = vrot.lane.b32.xlu0 %v4948, 64
    %v4951 = vpop.permute.xlu0 %4950
    %v4953 = vadd.f32 %v4855, %v4951
    %v4954 = vtanh.pop %v4953
    %v4955 = vsub.f32 1.0, %v4943
    %4957 = vrot.lane.b32.xlu0 %v4954, 96
    %v4958 = vpop.permute.xlu0 %4957
    %v4960 = vmul.f32 %v4955, %v4958
    %v4961 = vmul.f32 %v4943, %v3998
    %v4962 = vadd.f32 %v4960, %v4961
    %v4963 = vld [vmem:[%s5] sm:$0xff]
    %v4964 = vld [vmem:[%s5 + $0x8] sm:$0xff]
    %v4965 = vld [vmem:[%s5 + $0x10] sm:$0xff]
    %v4966 = vld [vmem:[%s5 + $0x18] sm:$0xff]
    %4968 = vrot.lane.b32.xlu0 %v4962, 96
    %v4969 = vpop.permute.xlu0 %4968
    %v4970 = vsel %vm45, %v4969, 0
    %4972 = vmatprep.subr.mxu0 0.0
    %4973 = vmatpush1.msra.mxu0 %v4963
    %4974 = vmatprep.subr.mxu0 0.0
    %4975 = vmatpush1.msra.mxu0 %v4964
    %4976 = vmatprep.subr.mxu0 0.0
    %4977 = vmatpush1.msra.mxu0 %v4965
    %4978 = vmatprep.subr.mxu0 0.0
    %4979 = vmatpush1.msra.mxu0 %v4966
    %4980 = vmatprep.subr.mxu0 0.0
    %4981 = vmatpush1.msra.mxu0 0.0
    %4982 = vmatprep.subr.mxu0 0.0
    %4983 = vmatpush1.msra.mxu0 0.0
    %4984 = vmatprep.subr.mxu0 0.0
    %4985 = vmatpush1.msra.mxu0 0.0
    %4986 = vmatprep.subr.mxu0 0.0
    %4987 = vmatpush1.msra.mxu0 0.0
    %4988 = vmatprep.subr.mxu0 0.0
    %4989 = vmatpush1.msra.mxu0 0.0
    %4990 = vmatprep.subr.mxu0 0.0
    %4991 = vmatpush1.msra.mxu0 0.0
    %4992 = vmatprep.subr.mxu0 0.0
    %4993 = vmatpush1.msra.mxu0 0.0
    %4994 = vmatprep.subr.mxu0 0.0
    %4995 = vmatpush1.msra.mxu0 0.0
    %4996 = vmatprep.subr.mxu0 0.0
    %4997 = vmatpush1.msra.mxu0 0.0
    %4998 = vmatprep.subr.mxu0 0.0
    %4999 = vmatpush1.msra.mxu0 0.0
    %5000 = vmatprep.subr.mxu0 0.0
    %5001 = vmatpush1.msra.mxu0 0.0
    %5002 = vmatprep.subr.mxu0 0.0
    %5003 = vmatpush1.msra.mxu0 0.0
    %5004 = vmatprep.subr.mxu0 0.0
    %5005 = vmatpush1.msra.mxu0 0.0
    %5006 = vmatprep.subr.mxu0 0.0
    %5007 = vmatpush1.msra.mxu0 0.0
    %5008 = vmatprep.subr.mxu0 0.0
    %5009 = vmatpush1.msra.mxu0 0.0
    %5010 = vmatprep.subr.mxu0 0.0
    %5011 = vmatpush1.msra.mxu0 0.0
    %5012 = vmatprep.subr.mxu0 0.0
    %5013 = vmatpush1.msra.mxu0 0.0
    %5014 = vmatprep.subr.mxu0 0.0
    %5015 = vmatpush1.msra.mxu0 0.0
    %5016 = vmatprep.subr.mxu0 0.0
    %5017 = vmatpush1.msra.mxu0 0.0
    %5018 = vmatprep.subr.mxu0 0.0
    %5019 = vmatpush1.msra.mxu0 0.0
    %5020 = vmatprep.subr.mxu0 0.0
    %5021 = vmatpush1.msra.mxu0 0.0
    %5022 = vmatprep.subr.mxu0 0.0
    %5023 = vmatpush1.msra.mxu0 0.0
    %5024 = vmatprep.subr.mxu0 0.0
    %5025 = vmatpush1.msra.mxu0 0.0
    %5026 = vmatprep.subr.mxu0 0.0
    %5027 = vmatpush1.msra.mxu0 0.0
    %5028 = vmatprep.subr.mxu0 0.0
    %5029 = vmatpush1.msra.mxu0 0.0
    %5030 = vmatprep.subr.mxu0 0.0
    %5031 = vmatpush1.msra.mxu0 0.0
    %5032 = vmatprep.subr.mxu0 0.0
    %5033 = vmatpush1.msra.mxu0 0.0
    %5034 = vmatprep.subr.mxu0 0.0
    %5035 = vmatpush1.msra.mxu0 0.0
    %5036 = vmatprep.mubr.f32.mxu0 0.0
    %5037 = vmatmul.mubr.f32.gmra.mrb[0].mxu0 %v4970
    %v5038 = vpop.f32.mrb[0].mxu0
    %v5039 = vadd.f32 0.0, %v5038
    %v5040 = vpop.f32.mrb[0].mxu0
    %5041 = vdwg.mxu0
    %v5042 = vsel %vm2913, %v5039, -inf
    %5043 = vmax.xlane.f32.xlu0 %v5042
    %v5044 = vpop.xlane.xlu0 %5043
    %v5045 = vsub.f32 %v5039, %v5044
    %v5046 = vmul.f32 %v5045, 1.442695
    %v5047 = vpow.pop %v5046
    %v5048 = vsel %vm2913, %v5047, 0.0
    %5049 = vadd.xlane.f32.xlu0 %v5048
    %v5050 = vpop.xlane.xlu0 %5049
    %v5051 = vrcp.pop %v5050
    %v5052 = vmul.f32 %v5047, %v5051
    %v5053 = vmul.f32 %v4773, %v2928
    %v5054 = vsel %vm2930, %v5053, 0.0
    %5055 = vadd.xlane.f32.xlu0 %v5054
    %v5056 = vpop.xlane.xlu0 %5055
    %v5057 = vmul.f32 %v4962, %v2928
    %5059 = vrot.lane.b32.xlu0 %v5057, 96
    %v5060 = vpop.permute.xlu0 %5059
    %v5062 = vsel %vm2930, %v5060, 0.0
    %5063 = vadd.xlane.f32.xlu0 %v5062
    %v5064 = vpop.xlane.xlu0 %5063
    %v5065 = vadd.f32 %v5056, %v5064
    %v5066 = vadd.f32 %v5065, %v2946
    %5067 = vmatprep.subr.mxu0 0.0
    %5068 = vmatpush1.xpose.msra.mxu0 %v2949
    %5069 = vmatprep.subr.mxu0 0.0
    %5070 = vmatpush1.xpose.msra.mxu0 0.0
    %5071 = vmatprep.subr.mxu0 0.0
    %5072 = vmatpush1.xpose.msra.mxu0 0.0
    %5073 = vmatprep.subr.mxu0 0.0
    %5074 = vmatpush1.xpose.msra.mxu0 0.0
    %5075 = vmatprep.subr.mxu0 0.0
    %5076 = vmatpush1.xpose.msra.mxu0 0.0
    %5077 = vmatprep.subr.mxu0 0.0
    %5078 = vmatpush1.xpose.msra.mxu0 0.0
    %5079 = vmatprep.subr.mxu0 0.0
    %5080 = vmatpush1.xpose.msra.mxu0 0.0
    %5081 = vmatprep.subr.mxu0 0.0
    %5082 = vmatpush1.xpose.msra.mxu0 0.0
    %5083 = vmatprep.subr.mxu0 0.0
    %5084 = vmatpush1.xpose.msra.mxu0 0.0
    %5085 = vmatprep.subr.mxu0 0.0
    %5086 = vmatpush1.xpose.msra.mxu0 0.0
    %5087 = vmatprep.subr.mxu0 0.0
    %5088 = vmatpush1.xpose.msra.mxu0 0.0
    %5089 = vmatprep.subr.mxu0 0.0
    %5090 = vmatpush1.xpose.msra.mxu0 0.0
    %5091 = vmatprep.subr.mxu0 0.0
    %5092 = vmatpush1.xpose.msra.mxu0 0.0
    %5093 = vmatprep.subr.mxu0 0.0
    %5094 = vmatpush1.xpose.msra.mxu0 0.0
    %5095 = vmatprep.subr.mxu0 0.0
    %5096 = vmatpush1.xpose.msra.mxu0 0.0
    %5097 = vmatprep.subr.mxu0 0.0
    %5098 = vmatpush1.xpose.msra.mxu0 0.0
    %5099 = vmatprep.subr.mxu0 0.0
    %5100 = vmatpush1.xpose.msra.mxu0 0.0
    %5101 = vmatprep.subr.mxu0 0.0
    %5102 = vmatpush1.xpose.msra.mxu0 0.0
    %5103 = vmatprep.subr.mxu0 0.0
    %5104 = vmatpush1.xpose.msra.mxu0 0.0
    %5105 = vmatprep.subr.mxu0 0.0
    %5106 = vmatpush1.xpose.msra.mxu0 0.0
    %5107 = vmatprep.subr.mxu0 0.0
    %5108 = vmatpush1.xpose.msra.mxu0 0.0
    %5109 = vmatprep.subr.mxu0 0.0
    %5110 = vmatpush1.xpose.msra.mxu0 0.0
    %5111 = vmatprep.subr.mxu0 0.0
    %5112 = vmatpush1.xpose.msra.mxu0 0.0
    %5113 = vmatprep.subr.mxu0 0.0
    %5114 = vmatpush1.xpose.msra.mxu0 0.0
    %5115 = vmatprep.subr.mxu0 0.0
    %5116 = vmatpush1.xpose.msra.mxu0 0.0
    %5117 = vmatprep.subr.mxu0 0.0
    %5118 = vmatpush1.xpose.msra.mxu0 0.0
    %5119 = vmatprep.subr.mxu0 0.0
    %5120 = vmatpush1.xpose.msra.mxu0 0.0
    %5121 = vmatprep.subr.mxu0 0.0
    %5122 = vmatpush1.xpose.msra.mxu0 0.0
    %5123 = vmatprep.subr.mxu0 0.0
    %5124 = vmatpush1.xpose.msra.mxu0 0.0
    %5125 = vmatprep.subr.mxu0 0.0
    %5126 = vmatpush1.xpose.msra.mxu0 0.0
    %5127 = vmatprep.subr.mxu0 0.0
    %5128 = vmatpush1.xpose.msra.mxu0 0.0
    %5129 = vmatprep.subr.mxu0 0.0
    %5130 = vmatpush1.xpose.msra.mxu0 0.0
    %5131 = vmatprep.mubr.f32.mxu0 0.0
    %5132 = vmatmul.mubr.f32.gmra.mrb[0].mxu0 %v4970
    %v5133 = vpop.f32.mrb[0].mxu0
    %v5134 = vadd.f32 0.0, %v5133
    %v5135 = vpop.f32.mrb[0].mxu0
    %5136 = vdwg.mxu0
    %v5137 = vsel %vm3026, %v5134, -10000.0
    %v5138 = vsel %vm3028, %v5137, -inf
    %5139 = vmax.xlane.f32.xlu0 %v5138
    %v5140 = vpop.xlane.xlu0 %5139
    %v5141 = vsub.f32 %v5137, %v5140
    %v5142 = vmul.f32 %v5141, 1.442695
    %v5143 = vpow.pop %v5142
    %v5144 = vsel %vm3028, %v5143, 0.0
    %5145 = vadd.xlane.f32.xlu0 %v5144
    %v5146 = vpop.xlane.xlu0 %5145
    %v5147 = vrcp.pop %v5146
    %v5148 = vmul.f32 %v5143, %v5147
    %v5150 = vsel %vm259, %v5148, 0
    %5152 = vmatprep.subr.mxu0 0.0
    %5153 = vmatpush1.msra.mxu0 %v2604
    %5154 = vmatprep.subr.mxu0 0.0
    %5155 = vmatpush1.msra.mxu0 0.0
    %5156 = vmatprep.subr.mxu0 0.0
    %5157 = vmatpush1.msra.mxu0 0.0
    %5158 = vmatprep.subr.mxu0 0.0
    %5159 = vmatpush1.msra.mxu0 0.0
    %5160 = vmatprep.subr.mxu0 0.0
    %5161 = vmatpush1.msra.mxu0 0.0
    %5162 = vmatprep.subr.mxu0 0.0
    %5163 = vmatpush1.msra.mxu0 0.0
    %5164 = vmatprep.subr.mxu0 0.0
    %5165 = vmatpush1.msra.mxu0 0.0
    %5166 = vmatprep.subr.mxu0 0.0
    %5167 = vmatpush1.msra.mxu0 0.0
    %5168 = vmatprep.subr.mxu0 0.0
    %5169 = vmatpush1.msra.mxu0 0.0
    %5170 = vmatprep.subr.mxu0 0.0
    %5171 = vmatpush1.msra.mxu0 0.0
    %5172 = vmatprep.subr.mxu0 0.0
    %5173 = vmatpush1.msra.mxu0 0.0
    %5174 = vmatprep.subr.mxu0 0.0
    %5175 = vmatpush1.msra.mxu0 0.0
    %5176 = vmatprep.subr.mxu0 0.0
    %5177 = vmatpush1.msra.mxu0 0.0
    %5178 = vmatprep.subr.mxu0 0.0
    %5179 = vmatpush1.msra.mxu0 0.0
    %5180 = vmatprep.subr.mxu0 0.0
    %5181 = vmatpush1.msra.mxu0 0.0
    %5182 = vmatprep.subr.mxu0 0.0
    %5183 = vmatpush1.msra.mxu0 0.0
    %5184 = vmatprep.subr.mxu0 0.0
    %5185 = vmatpush1.msra.mxu0 0.0
    %5186 = vmatprep.subr.mxu0 0.0
    %5187 = vmatpush1.msra.mxu0 0.0
    %5188 = vmatprep.subr.mxu0 0.0
    %5189 = vmatpush1.msra.mxu0 0.0
    %5190 = vmatprep.subr.mxu0 0.0
    %5191 = vmatpush1.msra.mxu0 0.0
    %5192 = vmatprep.subr.mxu0 0.0
    %5193 = vmatpush1.msra.mxu0 0.0
    %5194 = vmatprep.subr.mxu0 0.0
    %5195 = vmatpush1.msra.mxu0 0.0
    %5196 = vmatprep.subr.mxu0 0.0
    %5197 = vmatpush1.msra.mxu0 0.0
    %5198 = vmatprep.subr.mxu0 0.0
    %5199 = vmatpush1.msra.mxu0 0.0
    %5200 = vmatprep.subr.mxu0 0.0
    %5201 = vmatpush1.msra.mxu0 0.0
    %5202 = vmatprep.subr.mxu0 0.0
    %5203 = vmatpush1.msra.mxu0 0.0
    %5204 = vmatprep.subr.mxu0 0.0
    %5205 = vmatpush1.msra.mxu0 0.0
    %5206 = vmatprep.subr.mxu0 0.0
    %5207 = vmatpush1.msra.mxu0 0.0
    %5208 = vmatprep.subr.mxu0 0.0
    %5209 = vmatpush1.msra.mxu0 0.0
    %5210 = vmatprep.subr.mxu0 0.0
    %5211 = vmatpush1.msra.mxu0 0.0
    %5212 = vmatprep.subr.mxu0 0.0
    %5213 = vmatpush1.msra.mxu0 0.0
    %5214 = vmatprep.subr.mxu0 0.0
    %5215 = vmatpush1.msra.mxu0 0.0
    %5216 = vmatprep.mubr.f32.mxu0 0.0
    %5217 = vmatmul.mubr.f32.gmra.mrb[0].mxu0 %v5150
    %v5218 = vpop.f32.mrb[0].mxu0
    %v5219 = vadd.f32 0.0, %v5218
    %v5220 = vpop.f32.mrb[0].mxu0
    %5221 = vdwg.mxu0
    %v5222 = vlaneseq
    %v5223 = vshrl.u32 %v5222, 7
    %v5224 = vsub.s32 0, %v5223
    %v5225 = vrot.slane %v5148, %v5224
    %5227 = vbcast.lane.b32.xlu0 %v5225, 256
    %v5228 = vpop.permute.xlu0 %5227
    %v5229 = vlaneseq
    %v5230 = vshrl.u32 %v5229, 7
    %v5231 = vsub.s32 1, %v5230
    %v5232 = vrot.slane %v5148, %v5231
    %5234 = vbcast.lane.b32.xlu0 %v5232, 256
    %v5235 = vpop.permute.xlu0 %5234
    %v5236 = vlaneseq
    %v5237 = vshrl.u32 %v5236, 7
    %v5238 = vsub.s32 2, %v5237
    %v5239 = vrot.slane %v5148, %v5238
    %5241 = vbcast.lane.b32.xlu0 %v5239, 256
    %v5242 = vpop.permute.xlu0 %5241
    %v5243 = vmul.f32 %v5228, %v2618
    %v5244 = vmul.f32 %v5235, %v2618
    %v5245 = vmul.f32 %v5242, %v2618
    %v5246 = vrot.slane %v5243, 4
    %v5247 = vadd.f32 %v5243, %v5246
    %v5248 = vrot.slane %v5247, 2
    %v5249 = vadd.f32 %v5247, %v5248
    %v5250 = vrot.slane %v5249, 1
    %v5251 = vadd.f32 %v5249, %v5250
    %v5252 = vrot.slane %v5244, 4
    %v5253 = vadd.f32 %v5244, %v5252
    %v5254 = vrot.slane %v5253, 2
    %v5255 = vadd.f32 %v5253, %v5254
    %v5256 = vrot.slane %v5255, 1
    %v5257 = vadd.f32 %v5255, %v5256
    %v5258 = vrot.slane %v5245, 4
    %v5259 = vadd.f32 %v5245, %v5258
    %v5260 = vrot.slane %v5259, 2
    %v5261 = vadd.f32 %v5259, %v5260
    %v5262 = vrot.slane %v5261, 1
    %v5263 = vadd.f32 %v5261, %v5262
    %v5264 = vmul.f32 %v5219, %v3157
    %v5265 = vsel %vm3160, %v5264, 0.0
    %5266 = vadd.xlane.f32.xlu0 %v5265
    %v5267 = vpop.xlane.xlu0 %5266
    %v5268 = vadd.f32 %v5066, %v5267
    %v5269 = vxor.u32 %v5268, 2147483648
    %v5270 = vmul.f32 %v5269, 1.442695
    %v5271 = vpow.pop %v5270
    %v5272 = vadd.f32 %v5271, 1.0
    %v5273 = vrcp.pop %v5272
    %v5274 = vmul.f32 1.0, %v5273
    %5276 = vset.pattern.permute.xlu0 0
    %5277 = vperm.xlu0 %5276, %v5274
    %v5278 = vpop.permute.xlu0 %5277
    %v5280 = vmul.f32 %v5278, %v5052
    %v5281 = vsub.f32 1.0, %v5274
    %5283 = vset.pattern.permute.xlu0 0
    %5284 = vperm.xlu0 %5283, %v5281
    %v5285 = vpop.permute.xlu0 %5284
    %v5290 = vsel %vm3186, %v5257, %v5251
    %v5291 = vsel %vm3188, %v5263, %v5290
    %v5293 = vmul.f32 %v5285, %v5291
    %v5294 = vadd.f32 %v5280, %v5293
    %v5297 = vunpack.c.l.s4 1966171168
    %v5298 = vunpack.c.0.s8 %v5297
    %v5299 = vlaneseq
    %v5300 = vshrl.u32 %v5299, 7
    %v5301 = vsub.s32 %v5298, %v5300
    %v5302 = vrot.slane %v5294, %v5301
    %v5303 = vcombine.high %v5302, %v5302
    %v5305 = vunpack.c.l.s4 1966171168
    %v5306 = vunpack.c.0.s8 %v5305
    %v5307 = vlaneseq
    %v5308 = vshrl.u32 %v5307, 7
    %v5309 = vsub.s32 %v5306, %v5308
    %v5310 = vrot.slane %v5302, %v5309
    %v5312 = vunpack.c.l.s4 1966171168
    %v5313 = vunpack.c.0.s8 %v5312
    %v5314 = vlaneseq
    %v5315 = vshrl.u32 %v5314, 7
    %v5316 = vsub.s32 %v5313, %v5315
    %v5317 = vrot.slane %v5303, %v5316
    %v5318 = vcombine.high %v5310, %v5310
    %5322 = vst [vmem:[#allocation3 + $0x2] sm:$0x1] %v5310
    %5323 = vst [vmem:[#allocation3 + $0x6] sm:$0x1] %v5317
    %5324 = vst [vmem:[#allocation3 + $0xa] sm:$0x1] %v5318
    %v5325 = vsel %vm2639, %v5294, -inf
    %5326 = vmax.xlane.f32.xlu0 %v5325
    %v5327 = vpop.xlane.xlu0 %5326
    %vm5328 = vcmp.eq.f32.partialorder %v5294, %v5327
    %v5329 = vsel %vm5328, %v2609, 128
    %v5330 = vsel %vm2639, %v5329, 2147483647
    %v5331 = vand.u32 %v5330, 65535
    %v5332 = vshra.s32 %v5330, 16
    %v5333 = vcvt.s32.f32 %v5331
    %v5334 = vcvt.s32.f32 %v5332
    %5335 = vmin.xlane.f32.xlu0 %v5334
    %v5336 = vpop.xlane.xlu0 %5335
    %vm5337 = vcmp.eq.f32.partialorder %v5334, %v5336
    %v5338 = vsel %vm5337, %v5333, inf
    %5339 = vmin.xlane.f32.xlu0 %v5338
    %v5340 = vpop.xlane.xlu0 %5339
    %v5341 = vcvt.f32.s32 %v5340
    %v5342 = vcvt.f32.s32 %v5336
    %v5343 = vshll.u32 %v5342, 16
    %v5344 = vadd.s32 %v5343, %v5341
    %vm5345 = vcmp.eq.s32.totalorder %v2609, %v5344
    %v5346 = vsel %vm5345, 1, 0
    %v5347 = vcvt.s32.f32 %v5346
    %v5348 = vrot.slane %v4962, 3
    %5349 = vrot.lane.b32.xlu0 %v5348, 96
    %v5350 = vpop.permute.xlu0 %5349
    %v5351 = vsel %vm45, %v5350, 0
    %5353 = vmatprep.subr.mxu0 0.0
    %5354 = vmatpush1.xpose.msra.mxu0 %v3335
    %5355 = vmatprep.subr.mxu0 0.0
    %5356 = vmatpush1.xpose.msra.mxu0 0.0
    %5357 = vmatprep.subr.mxu0 0.0
    %5358 = vmatpush1.xpose.msra.mxu0 0.0
    %5359 = vmatprep.subr.mxu0 0.0
    %5360 = vmatpush1.xpose.msra.mxu0 0.0
    %5361 = vmatprep.subr.mxu0 0.0
    %5362 = vmatpush1.xpose.msra.mxu0 0.0
    %5363 = vmatprep.subr.mxu0 0.0
    %5364 = vmatpush1.xpose.msra.mxu0 0.0
    %5365 = vmatprep.subr.mxu0 0.0
    %5366 = vmatpush1.xpose.msra.mxu0 0.0
    %5367 = vmatprep.subr.mxu0 0.0
    %5368 = vmatpush1.xpose.msra.mxu0 0.0
    %5369 = vmatprep.subr.mxu0 0.0
    %5370 = vmatpush1.xpose.msra.mxu0 0.0
    %5371 = vmatprep.subr.mxu0 0.0
    %5372 = vmatpush1.xpose.msra.mxu0 0.0
    %5373 = vmatprep.subr.mxu0 0.0
    %5374 = vmatpush1.xpose.msra.mxu0 0.0
    %5375 = vmatprep.subr.mxu0 0.0
    %5376 = vmatpush1.xpose.msra.mxu0 0.0
    %5377 = vmatprep.subr.mxu0 0.0
    %5378 = vmatpush1.xpose.msra.mxu0 0.0
    %5379 = vmatprep.subr.mxu0 0.0
    %5380 = vmatpush1.xpose.msra.mxu0 0.0
    %5381 = vmatprep.subr.mxu0 0.0
    %5382 = vmatpush1.xpose.msra.mxu0 0.0
    %5383 = vmatprep.subr.mxu0 0.0
    %5384 = vmatpush1.xpose.msra.mxu0 0.0
    %5385 = vmatprep.subr.mxu0 0.0
    %5386 = vmatpush1.xpose.msra.mxu0 0.0
    %5387 = vmatprep.subr.mxu0 0.0
    %5388 = vmatpush1.xpose.msra.mxu0 0.0
    %5389 = vmatprep.subr.mxu0 0.0
    %5390 = vmatpush1.xpose.msra.mxu0 0.0
    %5391 = vmatprep.subr.mxu0 0.0
    %5392 = vmatpush1.xpose.msra.mxu0 0.0
    %5393 = vmatprep.subr.mxu0 0.0
    %5394 = vmatpush1.xpose.msra.mxu0 0.0
    %5395 = vmatprep.subr.mxu0 0.0
    %5396 = vmatpush1.xpose.msra.mxu0 0.0
    %5397 = vmatprep.subr.mxu0 0.0
    %5398 = vmatpush1.xpose.msra.mxu0 0.0
    %5399 = vmatprep.subr.mxu0 0.0
    %5400 = vmatpush1.xpose.msra.mxu0 0.0
    %5401 = vmatprep.subr.mxu0 0.0
    %5402 = vmatpush1.xpose.msra.mxu0 0.0
    %5403 = vmatprep.subr.mxu0 0.0
    %5404 = vmatpush1.xpose.msra.mxu0 0.0
    %5405 = vmatprep.subr.mxu0 0.0
    %5406 = vmatpush1.xpose.msra.mxu0 0.0
    %5407 = vmatprep.subr.mxu0 0.0
    %5408 = vmatpush1.xpose.msra.mxu0 0.0
    %5409 = vmatprep.subr.mxu0 0.0
    %5410 = vmatpush1.xpose.msra.mxu0 0.0
    %5411 = vmatprep.subr.mxu0 0.0
    %5412 = vmatpush1.xpose.msra.mxu0 0.0
    %5413 = vmatprep.subr.mxu0 0.0
    %5414 = vmatpush1.xpose.msra.mxu0 0.0
    %5415 = vmatprep.subr.mxu0 0.0
    %5416 = vmatpush1.xpose.msra.mxu0 0.0
    %5417 = vmatprep.mubr.f32.mxu0 0.0
    %5418 = vmatmul.mubr.f32.gmra.mrb[0].mxu0 %v5351
    %v5419 = vpop.f32.mrb[0].mxu0
    %v5420 = vadd.f32 0.0, %v5419
    %v5421 = vpop.f32.mrb[0].mxu0
    %5422 = vdwg.mxu0
    %v5423 = vsel %vm3411, %v5420, -10000.0
    %v5424 = vsel %vm3028, %v5423, -inf
    %5425 = vmax.xlane.f32.xlu0 %v5424
    %v5426 = vpop.xlane.xlu0 %5425
    %v5427 = vsub.f32 %v5423, %v5426
    %v5428 = vmul.f32 %v5427, 1.442695
    %v5429 = vpow.pop %v5428
    %v5430 = vsel %vm3028, %v5429, 0.0
    %5431 = vadd.xlane.f32.xlu0 %v5430
    %v5432 = vpop.xlane.xlu0 %5431
    %v5433 = vrcp.pop %v5432
    %v5434 = vmul.f32 %v5429, %v5433
    %v5436 = vsel %vm259, %v5434, 0
    %5438 = vmatprep.subr.mxu0 0.0
    %5439 = vmatpush1.msra.mxu0 %v2605
    %5440 = vmatprep.subr.mxu0 0.0
    %5441 = vmatpush1.msra.mxu0 0.0
    %5442 = vmatprep.subr.mxu0 0.0
    %5443 = vmatpush1.msra.mxu0 0.0
    %5444 = vmatprep.subr.mxu0 0.0
    %5445 = vmatpush1.msra.mxu0 0.0
    %5446 = vmatprep.subr.mxu0 0.0
    %5447 = vmatpush1.msra.mxu0 0.0
    %5448 = vmatprep.subr.mxu0 0.0
    %5449 = vmatpush1.msra.mxu0 0.0
    %5450 = vmatprep.subr.mxu0 0.0
    %5451 = vmatpush1.msra.mxu0 0.0
    %5452 = vmatprep.subr.mxu0 0.0
    %5453 = vmatpush1.msra.mxu0 0.0
    %5454 = vmatprep.subr.mxu0 0.0
    %5455 = vmatpush1.msra.mxu0 0.0
    %5456 = vmatprep.subr.mxu0 0.0
    %5457 = vmatpush1.msra.mxu0 0.0
    %5458 = vmatprep.subr.mxu0 0.0
    %5459 = vmatpush1.msra.mxu0 0.0
    %5460 = vmatprep.subr.mxu0 0.0
    %5461 = vmatpush1.msra.mxu0 0.0
    %5462 = vmatprep.subr.mxu0 0.0
    %5463 = vmatpush1.msra.mxu0 0.0
    %5464 = vmatprep.subr.mxu0 0.0
    %5465 = vmatpush1.msra.mxu0 0.0
    %5466 = vmatprep.subr.mxu0 0.0
    %5467 = vmatpush1.msra.mxu0 0.0
    %5468 = vmatprep.subr.mxu0 0.0
    %5469 = vmatpush1.msra.mxu0 0.0
    %5470 = vmatprep.subr.mxu0 0.0
    %5471 = vmatpush1.msra.mxu0 0.0
    %5472 = vmatprep.subr.mxu0 0.0
    %5473 = vmatpush1.msra.mxu0 0.0
    %5474 = vmatprep.subr.mxu0 0.0
    %5475 = vmatpush1.msra.mxu0 0.0
    %5476 = vmatprep.subr.mxu0 0.0
    %5477 = vmatpush1.msra.mxu0 0.0
    %5478 = vmatprep.subr.mxu0 0.0
    %5479 = vmatpush1.msra.mxu0 0.0
    %5480 = vmatprep.subr.mxu0 0.0
    %5481 = vmatpush1.msra.mxu0 0.0
    %5482 = vmatprep.subr.mxu0 0.0
    %5483 = vmatpush1.msra.mxu0 0.0
    %5484 = vmatprep.subr.mxu0 0.0
    %5485 = vmatpush1.msra.mxu0 0.0
    %5486 = vmatprep.subr.mxu0 0.0
    %5487 = vmatpush1.msra.mxu0 0.0
    %5488 = vmatprep.subr.mxu0 0.0
    %5489 = vmatpush1.msra.mxu0 0.0
    %5490 = vmatprep.subr.mxu0 0.0
    %5491 = vmatpush1.msra.mxu0 0.0
    %5492 = vmatprep.subr.mxu0 0.0
    %5493 = vmatpush1.msra.mxu0 0.0
    %5494 = vmatprep.subr.mxu0 0.0
    %5495 = vmatpush1.msra.mxu0 0.0
    %5496 = vmatprep.subr.mxu0 0.0
    %5497 = vmatpush1.msra.mxu0 0.0
    %5498 = vmatprep.subr.mxu0 0.0
    %5499 = vmatpush1.msra.mxu0 0.0
    %5500 = vmatprep.subr.mxu0 0.0
    %5501 = vmatpush1.msra.mxu0 0.0
    %5502 = vmatprep.mubr.f32.mxu0 0.0
    %5503 = vmatmul.mubr.f32.gmra.mrb[0].mxu0 %v5436
    %v5504 = vpop.f32.mrb[0].mxu0
    %v5505 = vadd.f32 0.0, %v5504
    %v5506 = vpop.f32.mrb[0].mxu0
    %5507 = vdwg.mxu0
    %v5508 = vlaneseq
    %v5509 = vshrl.u32 %v5508, 7
    %v5510 = vsub.s32 0, %v5509
    %v5511 = vrot.slane %v5434, %v5510
    %5513 = vbcast.lane.b32.xlu0 %v5511, 256
    %v5514 = vpop.permute.xlu0 %5513
    %v5515 = vlaneseq
    %v5516 = vshrl.u32 %v5515, 7
    %v5517 = vsub.s32 1, %v5516
    %v5518 = vrot.slane %v5434, %v5517
    %5520 = vbcast.lane.b32.xlu0 %v5518, 256
    %v5521 = vpop.permute.xlu0 %5520
    %v5522 = vlaneseq
    %v5523 = vshrl.u32 %v5522, 7
    %v5524 = vsub.s32 2, %v5523
    %v5525 = vrot.slane %v5434, %v5524
    %5527 = vbcast.lane.b32.xlu0 %v5525, 256
    %v5528 = vpop.permute.xlu0 %5527
    %v5529 = vmul.f32 %v5514, %v2627
    %v5530 = vmul.f32 %v5521, %v2627
    %v5531 = vmul.f32 %v5528, %v2627
    %v5532 = vrot.slane %v5529, 4
    %v5533 = vadd.f32 %v5529, %v5532
    %v5534 = vrot.slane %v5533, 2
    %v5535 = vadd.f32 %v5533, %v5534
    %v5536 = vrot.slane %v5535, 1
    %v5537 = vadd.f32 %v5535, %v5536
    %v5538 = vrot.slane %v5530, 4
    %v5539 = vadd.f32 %v5530, %v5538
    %v5540 = vrot.slane %v5539, 2
    %v5541 = vadd.f32 %v5539, %v5540
    %v5542 = vrot.slane %v5541, 1
    %v5543 = vadd.f32 %v5541, %v5542
    %v5544 = vrot.slane %v5531, 4
    %v5545 = vadd.f32 %v5531, %v5544
    %v5546 = vrot.slane %v5545, 2
    %v5547 = vadd.f32 %v5545, %v5546
    %v5548 = vrot.slane %v5547, 1
    %v5549 = vadd.f32 %v5547, %v5548
    %v5550 = vmul.f32 %v5505, %v3157
    %v5551 = vsel %vm3160, %v5550, 0.0
    %5552 = vadd.xlane.f32.xlu0 %v5551
    %v5553 = vpop.xlane.xlu0 %5552
    %v5555 = vrot.slane %v5553, 5
    %v5557 = vadd.f32 %v5066, %v5555
    %v5558 = vxor.u32 %v5557, 2147483648
    %v5559 = vmul.f32 %v5558, 1.442695
    %v5560 = vpow.pop %v5559
    %v5561 = vadd.f32 %v5560, 1.0
    %v5562 = vrcp.pop %v5561
    %v5563 = vmul.f32 1.0, %v5562
    %5565 = vset.pattern.permute.xlu0 0
    %5566 = vperm.xlu0 %5565, %v5563
    %v5567 = vpop.permute.xlu0 %5566
    %v5569 = vmul.f32 %v5567, %v5052
    %v5570 = vsub.f32 1.0, %v5563
    %5572 = vset.pattern.permute.xlu0 0
    %5573 = vperm.xlu0 %5572, %v5570
    %v5574 = vpop.permute.xlu0 %5573
    %v5579 = vsel %vm3568, %v5543, %v5537
    %v5580 = vsel %vm3570, %v5549, %v5579
    %v5582 = vmul.f32 %v5574, %v5580
    %v5583 = vadd.f32 %v5569, %v5582
    %v5585 = vcombine.high %v5583, %v5583
    %v5587 = vunpack.c.l.s4 1966171168
    %v5588 = vunpack.c.0.s8 %v5587
    %v5589 = vlaneseq
    %v5590 = vshrl.u32 %v5589, 7
    %v5591 = vsub.s32 %v5588, %v5590
    %v5592 = vrot.slane %v5583, %v5591
    %v5594 = vunpack.c.l.s4 1966171168
    %v5595 = vunpack.c.0.s8 %v5594
    %v5596 = vlaneseq
    %v5597 = vshrl.u32 %v5596, 7
    %v5598 = vsub.s32 %v5595, %v5597
    %v5599 = vrot.slane %v5585, %v5598
    %v5600 = vcombine.high %v5592, %v5592
    %v5601 = vcombine.high %v5599, %v5599
    %v5603 = vunpack.c.l.s4 1966171168
    %v5604 = vunpack.c.0.s8 %v5603
    %v5605 = vlaneseq
    %v5606 = vshrl.u32 %v5605, 7
    %v5607 = vsub.s32 %v5604, %v5606
    %v5608 = vrot.slane %v5599, %v5607
    %v5610 = vunpack.c.l.s4 1966171168
    %v5611 = vunpack.c.0.s8 %v5610
    %v5612 = vlaneseq
    %v5613 = vshrl.u32 %v5612, 7
    %v5614 = vsub.s32 %v5611, %v5613
    %v5615 = vrot.slane %v5600, %v5614
    %v5617 = vunpack.c.l.s4 1966171168
    %v5618 = vunpack.c.0.s8 %v5617
    %v5619 = vlaneseq
    %v5620 = vshrl.u32 %v5619, 7
    %v5621 = vsub.s32 %v5618, %v5620
    %v5622 = vrot.slane %v5601, %v5621
    %v5623 = vcombine.high %v5615, %v5615
    %5627 = vst [vmem:[%s3618 + $0x2] sm:$0x1] %v5623
    %5628 = vst [vmem:[%s3618 + $0x6] sm:$0x1] %v5608
    %5629 = vst [vmem:[%s3618 + $0xa] sm:$0x1] %v5622
    %v5630 = vsel %vm3701, %v5583, -inf
    %5631 = vmax.xlane.f32.xlu0 %v5630
    %v5632 = vpop.xlane.xlu0 %5631
    %vm5633 = vcmp.eq.f32.partialorder %v5583, %v5632
    %v5634 = vsel %vm5633, %v2609, 128
    %v5635 = vsel %vm3701, %v5634, 2147483647
    %v5636 = vand.u32 %v5635, 65535
    %v5637 = vshra.s32 %v5635, 16
    %v5638 = vcvt.s32.f32 %v5636
    %v5639 = vcvt.s32.f32 %v5637
    %5640 = vmin.xlane.f32.xlu0 %v5639
    %v5641 = vpop.xlane.xlu0 %5640
    %vm5642 = vcmp.eq.f32.partialorder %v5639, %v5641
    %v5643 = vsel %vm5642, %v5638, inf
    %5644 = vmin.xlane.f32.xlu0 %v5643
    %v5645 = vpop.xlane.xlu0 %5644
    %v5646 = vcvt.f32.s32 %v5645
    %v5647 = vcvt.f32.s32 %v5641
    %v5648 = vshll.u32 %v5647, 16
    %v5649 = vadd.s32 %v5648, %v5646
    %vm5650 = vcmp.eq.s32.totalorder %v2609, %v5649
    %v5651 = vsel %vm5650, 1, 0
    %v5652 = vcvt.s32.f32 %v5651
    %v5653 = vsel %vm2639, %v5347, %v5652
    %v5654 = vld [vmem:[%s4] sm:$0xff]
    %v5655 = vld [vmem:[%s4 + $0x8] sm:$0xff]
    %v5656 = vld [vmem:[%s4 + $0x10] sm:$0xff]
    %v5657 = vld [vmem:[%s4 + $0x18] sm:$0xff]
    %v5658 = vld [vmem:[%s4 + $0x20] sm:$0xff]
    %v5659 = vld [vmem:[%s4 + $0x28] sm:$0xff]
    %v5660 = vld [vmem:[%s4 + $0x30] sm:$0xff]
    %v5661 = vld [vmem:[%s4 + $0x38] sm:$0xff]
    %v5662 = vld [vmem:[%s4 + $0x40] sm:$0xff]
    %v5663 = vld [vmem:[%s4 + $0x48] sm:$0xff]
    %v5664 = vld [vmem:[%s4 + $0x50] sm:$0xff]
    %v5665 = vld [vmem:[%s4 + $0x58] sm:$0xff]
    %v5666 = vld [vmem:[%s4 + $0x60] sm:$0xff]
    %v5667 = vld [vmem:[%s4 + $0x68] sm:$0xff]
    %v5668 = vld [vmem:[%s4 + $0x70] sm:$0xff]
    %v5669 = vld [vmem:[%s4 + $0x78] sm:$0xff]
    %5670 = vmatprep.subr.mxu0 0.0
    %5671 = vmatpush1.msra.mxu0 %v5654
    %5672 = vmatprep.subr.mxu0 0.0
    %5673 = vmatpush1.msra.mxu0 %v5655
    %5674 = vmatprep.subr.mxu0 0.0
    %5675 = vmatpush1.msra.mxu0 %v5656
    %5676 = vmatprep.subr.mxu0 0.0
    %5677 = vmatpush1.msra.mxu0 %v5657
    %5678 = vmatprep.subr.mxu0 0.0
    %5679 = vmatpush1.msra.mxu0 %v5658
    %5680 = vmatprep.subr.mxu0 0.0
    %5681 = vmatpush1.msra.mxu0 %v5659
    %5682 = vmatprep.subr.mxu0 0.0
    %5683 = vmatpush1.msra.mxu0 %v5660
    %5684 = vmatprep.subr.mxu0 0.0
    %5685 = vmatpush1.msra.mxu0 %v5661
    %5686 = vmatprep.subr.mxu0 0.0
    %5687 = vmatpush1.msra.mxu0 %v5662
    %5688 = vmatprep.subr.mxu0 0.0
    %5689 = vmatpush1.msra.mxu0 %v5663
    %5690 = vmatprep.subr.mxu0 0.0
    %5691 = vmatpush1.msra.mxu0 %v5664
    %5692 = vmatprep.subr.mxu0 0.0
    %5693 = vmatpush1.msra.mxu0 %v5665
    %5694 = vmatprep.subr.mxu0 0.0
    %5695 = vmatpush1.msra.mxu0 %v5666
    %5696 = vmatprep.subr.mxu0 0.0
    %5697 = vmatpush1.msra.mxu0 %v5667
    %5698 = vmatprep.subr.mxu0 0.0
    %5699 = vmatpush1.msra.mxu0 %v5668
    %5700 = vmatprep.subr.mxu0 0.0
    %5701 = vmatpush1.msra.mxu0 %v5669
    %5702 = vmatprep.subr.mxu0 0.0
    %5703 = vmatpush1.msra.mxu0 0.0
    %5704 = vmatprep.subr.mxu0 0.0
    %5705 = vmatpush1.msra.mxu0 0.0
    %5706 = vmatprep.subr.mxu0 0.0
    %5707 = vmatpush1.msra.mxu0 0.0
    %5708 = vmatprep.subr.mxu0 0.0
    %5709 = vmatpush1.msra.mxu0 0.0
    %5710 = vmatprep.subr.mxu0 0.0
    %5711 = vmatpush1.msra.mxu0 0.0
    %5712 = vmatprep.subr.mxu0 0.0
    %5713 = vmatpush1.msra.mxu0 0.0
    %5714 = vmatprep.subr.mxu0 0.0
    %5715 = vmatpush1.msra.mxu0 0.0
    %5716 = vmatprep.subr.mxu0 0.0
    %5717 = vmatpush1.msra.mxu0 0.0
    %5718 = vmatprep.subr.mxu0 0.0
    %5719 = vmatpush1.msra.mxu0 0.0
    %5720 = vmatprep.subr.mxu0 0.0
    %5721 = vmatpush1.msra.mxu0 0.0
    %5722 = vmatprep.subr.mxu0 0.0
    %5723 = vmatpush1.msra.mxu0 0.0
    %5724 = vmatprep.subr.mxu0 0.0
    %5725 = vmatpush1.msra.mxu0 0.0
    %5726 = vmatprep.subr.mxu0 0.0
    %5727 = vmatpush1.msra.mxu0 0.0
    %5728 = vmatprep.subr.mxu0 0.0
    %5729 = vmatpush1.msra.mxu0 0.0
    %5730 = vmatprep.subr.mxu0 0.0
    %5731 = vmatpush1.msra.mxu0 0.0
    %5732 = vmatprep.subr.mxu0 0.0
    %5733 = vmatpush1.msra.mxu0 0.0
    %5734 = vmatprep.mubr.f32.mxu0 0.0
    %5735 = vmatmul.mubr.f32.gmra.mrb[0].mxu0 %v5653
    %v5736 = vpop.f32.mrb[0].mxu0
    %v5737 = vadd.f32 0.0, %v5736
    %v5738 = vpop.f32.mrb[0].mxu0
    %5739 = vdwg.mxu0
    %v5740 = vld [vmem:[%s8] sm:$0xff]
    %v5741 = vld [vmem:[%s8 + $0x8] sm:$0xff]
    %v5742 = vld [vmem:[%s8 + $0x10] sm:$0xff]
    %v5743 = vld [vmem:[%s8 + $0x18] sm:$0xff]
    %v5744 = vld [vmem:[%s9] sm:$0x1]
    %v5745 = vlaneseq
    %v5746 = vshrl.u32 %v5745, 7
    %v5747 = vsub.s32 0, %v5746
    %v5748 = vrot.slane %v5744, %v5747
    %v5750 = vsel %vm45, %v5737, 0
    %5752 = vmatprep.subr.mxu0 0.0
    %5753 = vmatpush1.msra.mxu0 %v5740
    %5754 = vmatprep.subr.mxu0 0.0
    %5755 = vmatpush1.msra.mxu0 %v5741
    %5756 = vmatprep.subr.mxu0 0.0
    %5757 = vmatpush1.msra.mxu0 %v5742
    %5758 = vmatprep.subr.mxu0 0.0
    %5759 = vmatpush1.msra.mxu0 %v5743
    %5760 = vmatprep.subr.mxu0 0.0
    %5761 = vmatpush1.msra.mxu0 0.0
    %5762 = vmatprep.subr.mxu0 0.0
    %5763 = vmatpush1.msra.mxu0 0.0
    %5764 = vmatprep.subr.mxu0 0.0
    %5765 = vmatpush1.msra.mxu0 0.0
    %5766 = vmatprep.subr.mxu0 0.0
    %5767 = vmatpush1.msra.mxu0 0.0
    %5768 = vmatprep.subr.mxu0 0.0
    %5769 = vmatpush1.msra.mxu0 0.0
    %5770 = vmatprep.subr.mxu0 0.0
    %5771 = vmatpush1.msra.mxu0 0.0
    %5772 = vmatprep.subr.mxu0 0.0
    %5773 = vmatpush1.msra.mxu0 0.0
    %5774 = vmatprep.subr.mxu0 0.0
    %5775 = vmatpush1.msra.mxu0 0.0
    %5776 = vmatprep.subr.mxu0 0.0
    %5777 = vmatpush1.msra.mxu0 0.0
    %5778 = vmatprep.subr.mxu0 0.0
    %5779 = vmatpush1.msra.mxu0 0.0
    %5780 = vmatprep.subr.mxu0 0.0
    %5781 = vmatpush1.msra.mxu0 0.0
    %5782 = vmatprep.subr.mxu0 0.0
    %5783 = vmatpush1.msra.mxu0 0.0
    %5784 = vmatprep.subr.mxu0 0.0
    %5785 = vmatpush1.msra.mxu0 0.0
    %5786 = vmatprep.subr.mxu0 0.0
    %5787 = vmatpush1.msra.mxu0 0.0
    %5788 = vmatprep.subr.mxu0 0.0
    %5789 = vmatpush1.msra.mxu0 0.0
    %5790 = vmatprep.subr.mxu0 0.0
    %5791 = vmatpush1.msra.mxu0 0.0
    %5792 = vmatprep.subr.mxu0 0.0
    %5793 = vmatpush1.msra.mxu0 0.0
    %5794 = vmatprep.subr.mxu0 0.0
    %5795 = vmatpush1.msra.mxu0 0.0
    %5796 = vmatprep.subr.mxu0 0.0
    %5797 = vmatpush1.msra.mxu0 0.0
    %5798 = vmatprep.subr.mxu0 0.0
    %5799 = vmatpush1.msra.mxu0 0.0
    %5800 = vmatprep.subr.mxu0 0.0
    %5801 = vmatpush1.msra.mxu0 0.0
    %5802 = vmatprep.subr.mxu0 0.0
    %5803 = vmatpush1.msra.mxu0 0.0
    %5804 = vmatprep.subr.mxu0 0.0
    %5805 = vmatpush1.msra.mxu0 0.0
    %5806 = vmatprep.subr.mxu0 0.0
    %5807 = vmatpush1.msra.mxu0 0.0
    %5808 = vmatprep.subr.mxu0 0.0
    %5809 = vmatpush1.msra.mxu0 0.0
    %5810 = vmatprep.subr.mxu0 0.0
    %5811 = vmatpush1.msra.mxu0 0.0
    %5812 = vmatprep.subr.mxu0 0.0
    %5813 = vmatpush1.msra.mxu0 0.0
    %5814 = vmatprep.subr.mxu0 0.0
    %5815 = vmatpush1.msra.mxu0 0.0
    %5816 = vmatprep.mubr.f32.mxu0 0.0
    %5817 = vmatmul.mubr.f32.gmra.mrb[0].mxu0 %v5750
    %v5818 = vpop.f32.mrb[0].mxu0
    %v5819 = vadd.f32 %v5748, %v5818
    %v5820 = vpop.f32.mrb[0].mxu0
    %5821 = vdwg.mxu0
    %v5822 = vld [vmem:[%s8 + $0x20] sm:$0xff]
    %v5823 = vld [vmem:[%s8 + $0x28] sm:$0xff]
    %v5824 = vld [vmem:[%s8 + $0x30] sm:$0xff]
    %v5825 = vld [vmem:[%s8 + $0x38] sm:$0xff]
    %v5826 = vld [vmem:[%s9 + $0x1] sm:$0x1]
    %v5827 = vlaneseq
    %v5828 = vshrl.u32 %v5827, 7
    %v5829 = vsub.s32 0, %v5828
    %v5830 = vrot.slane %v5826, %v5829
    %5831 = vmatprep.subr.mxu0 0.0
    %5832 = vmatpush1.msra.mxu0 %v5822
    %5833 = vmatprep.subr.mxu0 0.0
    %5834 = vmatpush1.msra.mxu0 %v5823
    %5835 = vmatprep.subr.mxu0 0.0
    %5836 = vmatpush1.msra.mxu0 %v5824
    %5837 = vmatprep.subr.mxu0 0.0
    %5838 = vmatpush1.msra.mxu0 %v5825
    %5839 = vmatprep.subr.mxu0 0.0
    %5840 = vmatpush1.msra.mxu0 0.0
    %5841 = vmatprep.subr.mxu0 0.0
    %5842 = vmatpush1.msra.mxu0 0.0
    %5843 = vmatprep.subr.mxu0 0.0
    %5844 = vmatpush1.msra.mxu0 0.0
    %5845 = vmatprep.subr.mxu0 0.0
    %5846 = vmatpush1.msra.mxu0 0.0
    %5847 = vmatprep.subr.mxu0 0.0
    %5848 = vmatpush1.msra.mxu0 0.0
    %5849 = vmatprep.subr.mxu0 0.0
    %5850 = vmatpush1.msra.mxu0 0.0
    %5851 = vmatprep.subr.mxu0 0.0
    %5852 = vmatpush1.msra.mxu0 0.0
    %5853 = vmatprep.subr.mxu0 0.0
    %5854 = vmatpush1.msra.mxu0 0.0
    %5855 = vmatprep.subr.mxu0 0.0
    %5856 = vmatpush1.msra.mxu0 0.0
    %5857 = vmatprep.subr.mxu0 0.0
    %5858 = vmatpush1.msra.mxu0 0.0
    %5859 = vmatprep.subr.mxu0 0.0
    %5860 = vmatpush1.msra.mxu0 0.0
    %5861 = vmatprep.subr.mxu0 0.0
    %5862 = vmatpush1.msra.mxu0 0.0
    %5863 = vmatprep.subr.mxu0 0.0
    %5864 = vmatpush1.msra.mxu0 0.0
    %5865 = vmatprep.subr.mxu0 0.0
    %5866 = vmatpush1.msra.mxu0 0.0
    %5867 = vmatprep.subr.mxu0 0.0
    %5868 = vmatpush1.msra.mxu0 0.0
    %5869 = vmatprep.subr.mxu0 0.0
    %5870 = vmatpush1.msra.mxu0 0.0
    %5871 = vmatprep.subr.mxu0 0.0
    %5872 = vmatpush1.msra.mxu0 0.0
    %5873 = vmatprep.subr.mxu0 0.0
    %5874 = vmatpush1.msra.mxu0 0.0
    %5875 = vmatprep.subr.mxu0 0.0
    %5876 = vmatpush1.msra.mxu0 0.0
    %5877 = vmatprep.subr.mxu0 0.0
    %5878 = vmatpush1.msra.mxu0 0.0
    %5879 = vmatprep.subr.mxu0 0.0
    %5880 = vmatpush1.msra.mxu0 0.0
    %5881 = vmatprep.subr.mxu0 0.0
    %5882 = vmatpush1.msra.mxu0 0.0
    %5883 = vmatprep.subr.mxu0 0.0
    %5884 = vmatpush1.msra.mxu0 0.0
    %5885 = vmatprep.subr.mxu0 0.0
    %5886 = vmatpush1.msra.mxu0 0.0
    %5887 = vmatprep.subr.mxu0 0.0
    %5888 = vmatpush1.msra.mxu0 0.0
    %5889 = vmatprep.subr.mxu0 0.0
    %5890 = vmatpush1.msra.mxu0 0.0
    %5891 = vmatprep.subr.mxu0 0.0
    %5892 = vmatpush1.msra.mxu0 0.0
    %5893 = vmatprep.subr.mxu0 0.0
    %5894 = vmatpush1.msra.mxu0 0.0
    %5895 = vmatprep.mubr.f32.mxu0 0.0
    %5896 = vmatmul.mubr.f32.gmra.mrb[0].mxu0 %v4970
    %v5897 = vpop.f32.mrb[0].mxu0
    %v5898 = vadd.f32 %v5830, %v5897
    %v5899 = vpop.f32.mrb[0].mxu0
    %5900 = vdwg.mxu0
    %v5901 = vadd.f32 %v5819, %v5898
    %v5902 = vxor.u32 %v5901, 2147483648
    %v5903 = vmul.f32 %v5902, 1.442695
    %v5904 = vpow.pop %v5903
    %v5905 = vadd.f32 %v5904, 1.0
    %v5906 = vrcp.pop %v5905
    %v5907 = vmul.f32 1.0, %v5906
    %5909 = vrot.lane.b32.xlu0 %v5898, 64
    %v5910 = vpop.permute.xlu0 %5909
    %v5912 = vmul.f32 %v5907, %v5910
    %5914 = vrot.lane.b32.xlu0 %v5912, 64
    %v5915 = vpop.permute.xlu0 %5914
    %v5917 = vadd.f32 %v5819, %v5915
    %v5918 = vtanh.pop %v5917
    %v5919 = vsub.f32 1.0, %v5907
    %5921 = vrot.lane.b32.xlu0 %v5918, 96
    %v5922 = vpop.permute.xlu0 %5921
    %v5924 = vmul.f32 %v5919, %v5922
    %v5925 = vmul.f32 %v5907, %v4962
    %v5926 = vadd.f32 %v5924, %v5925
    %v5927 = vld [vmem:[%s5] sm:$0xff]
    %v5928 = vld [vmem:[%s5 + $0x8] sm:$0xff]
    %v5929 = vld [vmem:[%s5 + $0x10] sm:$0xff]
    %v5930 = vld [vmem:[%s5 + $0x18] sm:$0xff]
    %5932 = vrot.lane.b32.xlu0 %v5926, 96
    %v5933 = vpop.permute.xlu0 %5932
    %v5934 = vsel %vm45, %v5933, 0
    %5936 = vmatprep.subr.mxu0 0.0
    %5937 = vmatpush1.msra.mxu0 %v5927
    %5938 = vmatprep.subr.mxu0 0.0
    %5939 = vmatpush1.msra.mxu0 %v5928
    %5940 = vmatprep.subr.mxu0 0.0
    %5941 = vmatpush1.msra.mxu0 %v5929
    %5942 = vmatprep.subr.mxu0 0.0
    %5943 = vmatpush1.msra.mxu0 %v5930
    %5944 = vmatprep.subr.mxu0 0.0
    %5945 = vmatpush1.msra.mxu0 0.0
    %5946 = vmatprep.subr.mxu0 0.0
    %5947 = vmatpush1.msra.mxu0 0.0
    %5948 = vmatprep.subr.mxu0 0.0
    %5949 = vmatpush1.msra.mxu0 0.0
    %5950 = vmatprep.subr.mxu0 0.0
    %5951 = vmatpush1.msra.mxu0 0.0
    %5952 = vmatprep.subr.mxu0 0.0
    %5953 = vmatpush1.msra.mxu0 0.0
    %5954 = vmatprep.subr.mxu0 0.0
    %5955 = vmatpush1.msra.mxu0 0.0
    %5956 = vmatprep.subr.mxu0 0.0
    %5957 = vmatpush1.msra.mxu0 0.0
    %5958 = vmatprep.subr.mxu0 0.0
    %5959 = vmatpush1.msra.mxu0 0.0
    %5960 = vmatprep.subr.mxu0 0.0
    %5961 = vmatpush1.msra.mxu0 0.0
    %5962 = vmatprep.subr.mxu0 0.0
    %5963 = vmatpush1.msra.mxu0 0.0
    %5964 = vmatprep.subr.mxu0 0.0
    %5965 = vmatpush1.msra.mxu0 0.0
    %5966 = vmatprep.subr.mxu0 0.0
    %5967 = vmatpush1.msra.mxu0 0.0
    %5968 = vmatprep.subr.mxu0 0.0
    %5969 = vmatpush1.msra.mxu0 0.0
    %5970 = vmatprep.subr.mxu0 0.0
    %5971 = vmatpush1.msra.mxu0 0.0
    %5972 = vmatprep.subr.mxu0 0.0
    %5973 = vmatpush1.msra.mxu0 0.0
    %5974 = vmatprep.subr.mxu0 0.0
    %5975 = vmatpush1.msra.mxu0 0.0
    %5976 = vmatprep.subr.mxu0 0.0
    %5977 = vmatpush1.msra.mxu0 0.0
    %5978 = vmatprep.subr.mxu0 0.0
    %5979 = vmatpush1.msra.mxu0 0.0
    %5980 = vmatprep.subr.mxu0 0.0
    %5981 = vmatpush1.msra.mxu0 0.0
    %5982 = vmatprep.subr.mxu0 0.0
    %5983 = vmatpush1.msra.mxu0 0.0
    %5984 = vmatprep.subr.mxu0 0.0
    %5985 = vmatpush1.msra.mxu0 0.0
    %5986 = vmatprep.subr.mxu0 0.0
    %5987 = vmatpush1.msra.mxu0 0.0
    %5988 = vmatprep.subr.mxu0 0.0
    %5989 = vmatpush1.msra.mxu0 0.0
    %5990 = vmatprep.subr.mxu0 0.0
    %5991 = vmatpush1.msra.mxu0 0.0
    %5992 = vmatprep.subr.mxu0 0.0
    %5993 = vmatpush1.msra.mxu0 0.0
    %5994 = vmatprep.subr.mxu0 0.0
    %5995 = vmatpush1.msra.mxu0 0.0
    %5996 = vmatprep.subr.mxu0 0.0
    %5997 = vmatpush1.msra.mxu0 0.0
    %5998 = vmatprep.subr.mxu0 0.0
    %5999 = vmatpush1.msra.mxu0 0.0
    %6000 = vmatprep.mubr.f32.mxu0 0.0
    %6001 = vmatmul.mubr.f32.gmra.mrb[0].mxu0 %v5934
    %v6002 = vpop.f32.mrb[0].mxu0
    %v6003 = vadd.f32 0.0, %v6002
    %v6004 = vpop.f32.mrb[0].mxu0
    %6005 = vdwg.mxu0
    %v6006 = vsel %vm2913, %v6003, -inf
    %6007 = vmax.xlane.f32.xlu0 %v6006
    %v6008 = vpop.xlane.xlu0 %6007
    %v6009 = vsub.f32 %v6003, %v6008
    %v6010 = vmul.f32 %v6009, 1.442695
    %v6011 = vpow.pop %v6010
    %v6012 = vsel %vm2913, %v6011, 0.0
    %6013 = vadd.xlane.f32.xlu0 %v6012
    %v6014 = vpop.xlane.xlu0 %6013
    %v6015 = vrcp.pop %v6014
    %v6016 = vmul.f32 %v6011, %v6015
    %v6017 = vmul.f32 %v5737, %v2928
    %v6018 = vsel %vm2930, %v6017, 0.0
    %6019 = vadd.xlane.f32.xlu0 %v6018
    %v6020 = vpop.xlane.xlu0 %6019
    %v6021 = vmul.f32 %v5926, %v2928
    %6023 = vrot.lane.b32.xlu0 %v6021, 96
    %v6024 = vpop.permute.xlu0 %6023
    %v6026 = vsel %vm2930, %v6024, 0.0
    %6027 = vadd.xlane.f32.xlu0 %v6026
    %v6028 = vpop.xlane.xlu0 %6027
    %v6029 = vadd.f32 %v6020, %v6028
    %v6030 = vadd.f32 %v6029, %v2946
    %6031 = vmatprep.subr.mxu0 0.0
    %6032 = vmatpush1.xpose.msra.mxu0 %v2949
    %6033 = vmatprep.subr.mxu0 0.0
    %6034 = vmatpush1.xpose.msra.mxu0 0.0
    %6035 = vmatprep.subr.mxu0 0.0
    %6036 = vmatpush1.xpose.msra.mxu0 0.0
    %6037 = vmatprep.subr.mxu0 0.0
    %6038 = vmatpush1.xpose.msra.mxu0 0.0
    %6039 = vmatprep.subr.mxu0 0.0
    %6040 = vmatpush1.xpose.msra.mxu0 0.0
    %6041 = vmatprep.subr.mxu0 0.0
    %6042 = vmatpush1.xpose.msra.mxu0 0.0
    %6043 = vmatprep.subr.mxu0 0.0
    %6044 = vmatpush1.xpose.msra.mxu0 0.0
    %6045 = vmatprep.subr.mxu0 0.0
    %6046 = vmatpush1.xpose.msra.mxu0 0.0
    %6047 = vmatprep.subr.mxu0 0.0
    %6048 = vmatpush1.xpose.msra.mxu0 0.0
    %6049 = vmatprep.subr.mxu0 0.0
    %6050 = vmatpush1.xpose.msra.mxu0 0.0
    %6051 = vmatprep.subr.mxu0 0.0
    %6052 = vmatpush1.xpose.msra.mxu0 0.0
    %6053 = vmatprep.subr.mxu0 0.0
    %6054 = vmatpush1.xpose.msra.mxu0 0.0
    %6055 = vmatprep.subr.mxu0 0.0
    %6056 = vmatpush1.xpose.msra.mxu0 0.0
    %6057 = vmatprep.subr.mxu0 0.0
    %6058 = vmatpush1.xpose.msra.mxu0 0.0
    %6059 = vmatprep.subr.mxu0 0.0
    %6060 = vmatpush1.xpose.msra.mxu0 0.0
    %6061 = vmatprep.subr.mxu0 0.0
    %6062 = vmatpush1.xpose.msra.mxu0 0.0
    %6063 = vmatprep.subr.mxu0 0.0
    %6064 = vmatpush1.xpose.msra.mxu0 0.0
    %6065 = vmatprep.subr.mxu0 0.0
    %6066 = vmatpush1.xpose.msra.mxu0 0.0
    %6067 = vmatprep.subr.mxu0 0.0
    %6068 = vmatpush1.xpose.msra.mxu0 0.0
    %6069 = vmatprep.subr.mxu0 0.0
    %6070 = vmatpush1.xpose.msra.mxu0 0.0
    %6071 = vmatprep.subr.mxu0 0.0
    %6072 = vmatpush1.xpose.msra.mxu0 0.0
    %6073 = vmatprep.subr.mxu0 0.0
    %6074 = vmatpush1.xpose.msra.mxu0 0.0
    %6075 = vmatprep.subr.mxu0 0.0
    %6076 = vmatpush1.xpose.msra.mxu0 0.0
    %6077 = vmatprep.subr.mxu0 0.0
    %6078 = vmatpush1.xpose.msra.mxu0 0.0
    %6079 = vmatprep.subr.mxu0 0.0
    %6080 = vmatpush1.xpose.msra.mxu0 0.0
    %6081 = vmatprep.subr.mxu0 0.0
    %6082 = vmatpush1.xpose.msra.mxu0 0.0
    %6083 = vmatprep.subr.mxu0 0.0
    %6084 = vmatpush1.xpose.msra.mxu0 0.0
    %6085 = vmatprep.subr.mxu0 0.0
    %6086 = vmatpush1.xpose.msra.mxu0 0.0
    %6087 = vmatprep.subr.mxu0 0.0
    %6088 = vmatpush1.xpose.msra.mxu0 0.0
    %6089 = vmatprep.subr.mxu0 0.0
    %6090 = vmatpush1.xpose.msra.mxu0 0.0
    %6091 = vmatprep.subr.mxu0 0.0
    %6092 = vmatpush1.xpose.msra.mxu0 0.0
    %6093 = vmatprep.subr.mxu0 0.0
    %6094 = vmatpush1.xpose.msra.mxu0 0.0
    %6095 = vmatprep.mubr.f32.mxu0 0.0
    %6096 = vmatmul.mubr.f32.gmra.mrb[0].mxu0 %v5934
    %v6097 = vpop.f32.mrb[0].mxu0
    %v6098 = vadd.f32 0.0, %v6097
    %v6099 = vpop.f32.mrb[0].mxu0
    %6100 = vdwg.mxu0
    %v6101 = vsel %vm3026, %v6098, -10000.0
    %v6102 = vsel %vm3028, %v6101, -inf
    %6103 = vmax.xlane.f32.xlu0 %v6102
    %v6104 = vpop.xlane.xlu0 %6103
    %v6105 = vsub.f32 %v6101, %v6104
    %v6106 = vmul.f32 %v6105, 1.442695
    %v6107 = vpow.pop %v6106
    %v6108 = vsel %vm3028, %v6107, 0.0
    %6109 = vadd.xlane.f32.xlu0 %v6108
    %v6110 = vpop.xlane.xlu0 %6109
    %v6111 = vrcp.pop %v6110
    %v6112 = vmul.f32 %v6107, %v6111
    %v6114 = vsel %vm259, %v6112, 0
    %6116 = vmatprep.subr.mxu0 0.0
    %6117 = vmatpush1.msra.mxu0 %v2604
    %6118 = vmatprep.subr.mxu0 0.0
    %6119 = vmatpush1.msra.mxu0 0.0
    %6120 = vmatprep.subr.mxu0 0.0
    %6121 = vmatpush1.msra.mxu0 0.0
    %6122 = vmatprep.subr.mxu0 0.0
    %6123 = vmatpush1.msra.mxu0 0.0
    %6124 = vmatprep.subr.mxu0 0.0
    %6125 = vmatpush1.msra.mxu0 0.0
    %6126 = vmatprep.subr.mxu0 0.0
    %6127 = vmatpush1.msra.mxu0 0.0
    %6128 = vmatprep.subr.mxu0 0.0
    %6129 = vmatpush1.msra.mxu0 0.0
    %6130 = vmatprep.subr.mxu0 0.0
    %6131 = vmatpush1.msra.mxu0 0.0
    %6132 = vmatprep.subr.mxu0 0.0
    %6133 = vmatpush1.msra.mxu0 0.0
    %6134 = vmatprep.subr.mxu0 0.0
    %6135 = vmatpush1.msra.mxu0 0.0
    %6136 = vmatprep.subr.mxu0 0.0
    %6137 = vmatpush1.msra.mxu0 0.0
    %6138 = vmatprep.subr.mxu0 0.0
    %6139 = vmatpush1.msra.mxu0 0.0
    %6140 = vmatprep.subr.mxu0 0.0
    %6141 = vmatpush1.msra.mxu0 0.0
    %6142 = vmatprep.subr.mxu0 0.0
    %6143 = vmatpush1.msra.mxu0 0.0
    %6144 = vmatprep.subr.mxu0 0.0
    %6145 = vmatpush1.msra.mxu0 0.0
    %6146 = vmatprep.subr.mxu0 0.0
    %6147 = vmatpush1.msra.mxu0 0.0
    %6148 = vmatprep.subr.mxu0 0.0
    %6149 = vmatpush1.msra.mxu0 0.0
    %6150 = vmatprep.subr.mxu0 0.0
    %6151 = vmatpush1.msra.mxu0 0.0
    %6152 = vmatprep.subr.mxu0 0.0
    %6153 = vmatpush1.msra.mxu0 0.0
    %6154 = vmatprep.subr.mxu0 0.0
    %6155 = vmatpush1.msra.mxu0 0.0
    %6156 = vmatprep.subr.mxu0 0.0
    %6157 = vmatpush1.msra.mxu0 0.0
    %6158 = vmatprep.subr.mxu0 0.0
    %6159 = vmatpush1.msra.mxu0 0.0
    %6160 = vmatprep.subr.mxu0 0.0
    %6161 = vmatpush1.msra.mxu0 0.0
    %6162 = vmatprep.subr.mxu0 0.0
    %6163 = vmatpush1.msra.mxu0 0.0
    %6164 = vmatprep.subr.mxu0 0.0
    %6165 = vmatpush1.msra.mxu0 0.0
    %6166 = vmatprep.subr.mxu0 0.0
    %6167 = vmatpush1.msra.mxu0 0.0
    %6168 = vmatprep.subr.mxu0 0.0
    %6169 = vmatpush1.msra.mxu0 0.0
    %6170 = vmatprep.subr.mxu0 0.0
    %6171 = vmatpush1.msra.mxu0 0.0
    %6172 = vmatprep.subr.mxu0 0.0
    %6173 = vmatpush1.msra.mxu0 0.0
    %6174 = vmatprep.subr.mxu0 0.0
    %6175 = vmatpush1.msra.mxu0 0.0
    %6176 = vmatprep.subr.mxu0 0.0
    %6177 = vmatpush1.msra.mxu0 0.0
    %6178 = vmatprep.subr.mxu0 0.0
    %6179 = vmatpush1.msra.mxu0 0.0
    %6180 = vmatprep.mubr.f32.mxu0 0.0
    %6181 = vmatmul.mubr.f32.gmra.mrb[0].mxu0 %v6114
    %v6182 = vpop.f32.mrb[0].mxu0
    %v6183 = vadd.f32 0.0, %v6182
    %v6184 = vpop.f32.mrb[0].mxu0
    %6185 = vdwg.mxu0
    %v6186 = vlaneseq
    %v6187 = vshrl.u32 %v6186, 7
    %v6188 = vsub.s32 0, %v6187
    %v6189 = vrot.slane %v6112, %v6188
    %6191 = vbcast.lane.b32.xlu0 %v6189, 256
    %v6192 = vpop.permute.xlu0 %6191
    %v6193 = vlaneseq
    %v6194 = vshrl.u32 %v6193, 7
    %v6195 = vsub.s32 1, %v6194
    %v6196 = vrot.slane %v6112, %v6195
    %6198 = vbcast.lane.b32.xlu0 %v6196, 256
    %v6199 = vpop.permute.xlu0 %6198
    %v6200 = vlaneseq
    %v6201 = vshrl.u32 %v6200, 7
    %v6202 = vsub.s32 2, %v6201
    %v6203 = vrot.slane %v6112, %v6202
    %6205 = vbcast.lane.b32.xlu0 %v6203, 256
    %v6206 = vpop.permute.xlu0 %6205
    %v6207 = vmul.f32 %v6192, %v2618
    %v6208 = vmul.f32 %v6199, %v2618
    %v6209 = vmul.f32 %v6206, %v2618
    %v6210 = vrot.slane %v6207, 4
    %v6211 = vadd.f32 %v6207, %v6210
    %v6212 = vrot.slane %v6211, 2
    %v6213 = vadd.f32 %v6211, %v6212
    %v6214 = vrot.slane %v6213, 1
    %v6215 = vadd.f32 %v6213, %v6214
    %v6216 = vrot.slane %v6208, 4
    %v6217 = vadd.f32 %v6208, %v6216
    %v6218 = vrot.slane %v6217, 2
    %v6219 = vadd.f32 %v6217, %v6218
    %v6220 = vrot.slane %v6219, 1
    %v6221 = vadd.f32 %v6219, %v6220
    %v6222 = vrot.slane %v6209, 4
    %v6223 = vadd.f32 %v6209, %v6222
    %v6224 = vrot.slane %v6223, 2
    %v6225 = vadd.f32 %v6223, %v6224
    %v6226 = vrot.slane %v6225, 1
    %v6227 = vadd.f32 %v6225, %v6226
    %v6228 = vmul.f32 %v6183, %v3157
    %v6229 = vsel %vm3160, %v6228, 0.0
    %6230 = vadd.xlane.f32.xlu0 %v6229
    %v6231 = vpop.xlane.xlu0 %6230
    %v6232 = vadd.f32 %v6030, %v6231
    %v6233 = vxor.u32 %v6232, 2147483648
    %v6234 = vmul.f32 %v6233, 1.442695
    %v6235 = vpow.pop %v6234
    %v6236 = vadd.f32 %v6235, 1.0
    %v6237 = vrcp.pop %v6236
    %v6238 = vmul.f32 1.0, %v6237
    %6240 = vset.pattern.permute.xlu0 0
    %6241 = vperm.xlu0 %6240, %v6238
    %v6242 = vpop.permute.xlu0 %6241
    %v6244 = vmul.f32 %v6242, %v6016
    %v6245 = vsub.f32 1.0, %v6238
    %6247 = vset.pattern.permute.xlu0 0
    %6248 = vperm.xlu0 %6247, %v6245
    %v6249 = vpop.permute.xlu0 %6248
    %v6254 = vsel %vm3186, %v6221, %v6215
    %v6255 = vsel %vm3188, %v6227, %v6254
    %v6257 = vmul.f32 %v6249, %v6255
    %v6258 = vadd.f32 %v6244, %v6257
    %v6261 = vunpack.c.l.s4 1966171168
    %v6262 = vunpack.c.0.s8 %v6261
    %v6263 = vlaneseq
    %v6264 = vshrl.u32 %v6263, 7
    %v6265 = vsub.s32 %v6262, %v6264
    %v6266 = vrot.slane %v6258, %v6265
    %v6267 = vcombine.high %v6266, %v6266
    %v6269 = vunpack.c.l.s4 1966171168
    %v6270 = vunpack.c.0.s8 %v6269
    %v6271 = vlaneseq
    %v6272 = vshrl.u32 %v6271, 7
    %v6273 = vsub.s32 %v6270, %v6272
    %v6274 = vrot.slane %v6266, %v6273
    %v6276 = vunpack.c.l.s4 1966171168
    %v6277 = vunpack.c.0.s8 %v6276
    %v6278 = vlaneseq
    %v6279 = vshrl.u32 %v6278, 7
    %v6280 = vsub.s32 %v6277, %v6279
    %v6281 = vrot.slane %v6267, %v6280
    %v6282 = vcombine.high %v6274, %v6274
    %6286 = vst [vmem:[#allocation3 + $0x3] sm:$0x1] %v6274
    %6287 = vst [vmem:[#allocation3 + $0x7] sm:$0x1] %v6281
    %6288 = vst [vmem:[#allocation3 + $0xb] sm:$0x1] %v6282
    %v6289 = vrot.slane %v5926, 3
    %6290 = vrot.lane.b32.xlu0 %v6289, 96
    %v6291 = vpop.permute.xlu0 %6290
    %v6292 = vsel %vm45, %v6291, 0
    %6294 = vmatprep.subr.mxu0 0.0
    %6295 = vmatpush1.xpose.msra.mxu0 %v3335
    %6296 = vmatprep.subr.mxu0 0.0
    %6297 = vmatpush1.xpose.msra.mxu0 0.0
    %6298 = vmatprep.subr.mxu0 0.0
    %6299 = vmatpush1.xpose.msra.mxu0 0.0
    %6300 = vmatprep.subr.mxu0 0.0
    %6301 = vmatpush1.xpose.msra.mxu0 0.0
    %6302 = vmatprep.subr.mxu0 0.0
    %6303 = vmatpush1.xpose.msra.mxu0 0.0
    %6304 = vmatprep.subr.mxu0 0.0
    %6305 = vmatpush1.xpose.msra.mxu0 0.0
    %6306 = vmatprep.subr.mxu0 0.0
    %6307 = vmatpush1.xpose.msra.mxu0 0.0
    %6308 = vmatprep.subr.mxu0 0.0
    %6309 = vmatpush1.xpose.msra.mxu0 0.0
    %6310 = vmatprep.subr.mxu0 0.0
    %6311 = vmatpush1.xpose.msra.mxu0 0.0
    %6312 = vmatprep.subr.mxu0 0.0
    %6313 = vmatpush1.xpose.msra.mxu0 0.0
    %6314 = vmatprep.subr.mxu0 0.0
    %6315 = vmatpush1.xpose.msra.mxu0 0.0
    %6316 = vmatprep.subr.mxu0 0.0
    %6317 = vmatpush1.xpose.msra.mxu0 0.0
    %6318 = vmatprep.subr.mxu0 0.0
    %6319 = vmatpush1.xpose.msra.mxu0 0.0
    %6320 = vmatprep.subr.mxu0 0.0
    %6321 = vmatpush1.xpose.msra.mxu0 0.0
    %6322 = vmatprep.subr.mxu0 0.0
    %6323 = vmatpush1.xpose.msra.mxu0 0.0
    %6324 = vmatprep.subr.mxu0 0.0
    %6325 = vmatpush1.xpose.msra.mxu0 0.0
    %6326 = vmatprep.subr.mxu0 0.0
    %6327 = vmatpush1.xpose.msra.mxu0 0.0
    %6328 = vmatprep.subr.mxu0 0.0
    %6329 = vmatpush1.xpose.msra.mxu0 0.0
    %6330 = vmatprep.subr.mxu0 0.0
    %6331 = vmatpush1.xpose.msra.mxu0 0.0
    %6332 = vmatprep.subr.mxu0 0.0
    %6333 = vmatpush1.xpose.msra.mxu0 0.0
    %6334 = vmatprep.subr.mxu0 0.0
    %6335 = vmatpush1.xpose.msra.mxu0 0.0
    %6336 = vmatprep.subr.mxu0 0.0
    %6337 = vmatpush1.xpose.msra.mxu0 0.0
    %6338 = vmatprep.subr.mxu0 0.0
    %6339 = vmatpush1.xpose.msra.mxu0 0.0
    %6340 = vmatprep.subr.mxu0 0.0
    %6341 = vmatpush1.xpose.msra.mxu0 0.0
    %6342 = vmatprep.subr.mxu0 0.0
    %6343 = vmatpush1.xpose.msra.mxu0 0.0
    %6344 = vmatprep.subr.mxu0 0.0
    %6345 = vmatpush1.xpose.msra.mxu0 0.0
    %6346 = vmatprep.subr.mxu0 0.0
    %6347 = vmatpush1.xpose.msra.mxu0 0.0
    %6348 = vmatprep.subr.mxu0 0.0
    %6349 = vmatpush1.xpose.msra.mxu0 0.0
    %6350 = vmatprep.subr.mxu0 0.0
    %6351 = vmatpush1.xpose.msra.mxu0 0.0
    %6352 = vmatprep.subr.mxu0 0.0
    %6353 = vmatpush1.xpose.msra.mxu0 0.0
    %6354 = vmatprep.subr.mxu0 0.0
    %6355 = vmatpush1.xpose.msra.mxu0 0.0
    %6356 = vmatprep.subr.mxu0 0.0
    %6357 = vmatpush1.xpose.msra.mxu0 0.0
    %6358 = vmatprep.mubr.f32.mxu0 0.0
    %6359 = vmatmul.mubr.f32.gmra.mrb[0].mxu0 %v6292
    %v6360 = vpop.f32.mrb[0].mxu0
    %v6361 = vadd.f32 0.0, %v6360
    %v6362 = vpop.f32.mrb[0].mxu0
    %6363 = vdwg.mxu0
    %v6364 = vsel %vm3411, %v6361, -10000.0
    %v6365 = vsel %vm3028, %v6364, -inf
    %6366 = vmax.xlane.f32.xlu0 %v6365
    %v6367 = vpop.xlane.xlu0 %6366
    %v6368 = vsub.f32 %v6364, %v6367
    %v6369 = vmul.f32 %v6368, 1.442695
    %v6370 = vpow.pop %v6369
    %v6371 = vsel %vm3028, %v6370, 0.0
    %6372 = vadd.xlane.f32.xlu0 %v6371
    %v6373 = vpop.xlane.xlu0 %6372
    %v6374 = vrcp.pop %v6373
    %v6375 = vmul.f32 %v6370, %v6374
    %v6377 = vsel %vm259, %v6375, 0
    %6379 = vmatprep.subr.mxu0 0.0
    %6380 = vmatpush1.msra.mxu0 %v2605
    %6381 = vmatprep.subr.mxu0 0.0
    %6382 = vmatpush1.msra.mxu0 0.0
    %6383 = vmatprep.subr.mxu0 0.0
    %6384 = vmatpush1.msra.mxu0 0.0
    %6385 = vmatprep.subr.mxu0 0.0
    %6386 = vmatpush1.msra.mxu0 0.0
    %6387 = vmatprep.subr.mxu0 0.0
    %6388 = vmatpush1.msra.mxu0 0.0
    %6389 = vmatprep.subr.mxu0 0.0
    %6390 = vmatpush1.msra.mxu0 0.0
    %6391 = vmatprep.subr.mxu0 0.0
    %6392 = vmatpush1.msra.mxu0 0.0
    %6393 = vmatprep.subr.mxu0 0.0
    %6394 = vmatpush1.msra.mxu0 0.0
    %6395 = vmatprep.subr.mxu0 0.0
    %6396 = vmatpush1.msra.mxu0 0.0
    %6397 = vmatprep.subr.mxu0 0.0
    %6398 = vmatpush1.msra.mxu0 0.0
    %6399 = vmatprep.subr.mxu0 0.0
    %6400 = vmatpush1.msra.mxu0 0.0
    %6401 = vmatprep.subr.mxu0 0.0
    %6402 = vmatpush1.msra.mxu0 0.0
    %6403 = vmatprep.subr.mxu0 0.0
    %6404 = vmatpush1.msra.mxu0 0.0
    %6405 = vmatprep.subr.mxu0 0.0
    %6406 = vmatpush1.msra.mxu0 0.0
    %6407 = vmatprep.subr.mxu0 0.0
    %6408 = vmatpush1.msra.mxu0 0.0
    %6409 = vmatprep.subr.mxu0 0.0
    %6410 = vmatpush1.msra.mxu0 0.0
    %6411 = vmatprep.subr.mxu0 0.0
    %6412 = vmatpush1.msra.mxu0 0.0
    %6413 = vmatprep.subr.mxu0 0.0
    %6414 = vmatpush1.msra.mxu0 0.0
    %6415 = vmatprep.subr.mxu0 0.0
    %6416 = vmatpush1.msra.mxu0 0.0
    %6417 = vmatprep.subr.mxu0 0.0
    %6418 = vmatpush1.msra.mxu0 0.0
    %6419 = vmatprep.subr.mxu0 0.0
    %6420 = vmatpush1.msra.mxu0 0.0
    %6421 = vmatprep.subr.mxu0 0.0
    %6422 = vmatpush1.msra.mxu0 0.0
    %6423 = vmatprep.subr.mxu0 0.0
    %6424 = vmatpush1.msra.mxu0 0.0
    %6425 = vmatprep.subr.mxu0 0.0
    %6426 = vmatpush1.msra.mxu0 0.0
    %6427 = vmatprep.subr.mxu0 0.0
    %6428 = vmatpush1.msra.mxu0 0.0
    %6429 = vmatprep.subr.mxu0 0.0
    %6430 = vmatpush1.msra.mxu0 0.0
    %6431 = vmatprep.subr.mxu0 0.0
    %6432 = vmatpush1.msra.mxu0 0.0
    %6433 = vmatprep.subr.mxu0 0.0
    %6434 = vmatpush1.msra.mxu0 0.0
    %6435 = vmatprep.subr.mxu0 0.0
    %6436 = vmatpush1.msra.mxu0 0.0
    %6437 = vmatprep.subr.mxu0 0.0
    %6438 = vmatpush1.msra.mxu0 0.0
    %6439 = vmatprep.subr.mxu0 0.0
    %6440 = vmatpush1.msra.mxu0 0.0
    %6441 = vmatprep.subr.mxu0 0.0
    %6442 = vmatpush1.msra.mxu0 0.0
    %6443 = vmatprep.mubr.f32.mxu0 0.0
    %6444 = vmatmul.mubr.f32.gmra.mrb[0].mxu0 %v6377
    %v6445 = vpop.f32.mrb[0].mxu0
    %v6446 = vadd.f32 0.0, %v6445
    %v6447 = vpop.f32.mrb[0].mxu0
    %6448 = vdwg.mxu0
    %v6449 = vlaneseq
    %v6450 = vshrl.u32 %v6449, 7
    %v6451 = vsub.s32 0, %v6450
    %v6452 = vrot.slane %v6375, %v6451
    %6454 = vbcast.lane.b32.xlu0 %v6452, 256
    %v6455 = vpop.permute.xlu0 %6454
    %v6456 = vlaneseq
    %v6457 = vshrl.u32 %v6456, 7
    %v6458 = vsub.s32 1, %v6457
    %v6459 = vrot.slane %v6375, %v6458
    %6461 = vbcast.lane.b32.xlu0 %v6459, 256
    %v6462 = vpop.permute.xlu0 %6461
    %v6463 = vlaneseq
    %v6464 = vshrl.u32 %v6463, 7
    %v6465 = vsub.s32 2, %v6464
    %v6466 = vrot.slane %v6375, %v6465
    %6468 = vbcast.lane.b32.xlu0 %v6466, 256
    %v6469 = vpop.permute.xlu0 %6468
    %v6470 = vmul.f32 %v6455, %v2627
    %v6471 = vmul.f32 %v6462, %v2627
    %v6472 = vmul.f32 %v6469, %v2627
    %v6473 = vrot.slane %v6470, 4
    %v6474 = vadd.f32 %v6470, %v6473
    %v6475 = vrot.slane %v6474, 2
    %v6476 = vadd.f32 %v6474, %v6475
    %v6477 = vrot.slane %v6476, 1
    %v6478 = vadd.f32 %v6476, %v6477
    %v6479 = vrot.slane %v6471, 4
    %v6480 = vadd.f32 %v6471, %v6479
    %v6481 = vrot.slane %v6480, 2
    %v6482 = vadd.f32 %v6480, %v6481
    %v6483 = vrot.slane %v6482, 1
    %v6484 = vadd.f32 %v6482, %v6483
    %v6485 = vrot.slane %v6472, 4
    %v6486 = vadd.f32 %v6472, %v6485
    %v6487 = vrot.slane %v6486, 2
    %v6488 = vadd.f32 %v6486, %v6487
    %v6489 = vrot.slane %v6488, 1
    %v6490 = vadd.f32 %v6488, %v6489
    %v6491 = vmul.f32 %v6446, %v3157
    %v6492 = vsel %vm3160, %v6491, 0.0
    %6493 = vadd.xlane.f32.xlu0 %v6492
    %v6494 = vpop.xlane.xlu0 %6493
    %v6496 = vrot.slane %v6494, 5
    %v6498 = vadd.f32 %v6030, %v6496
    %v6499 = vxor.u32 %v6498, 2147483648
    %v6500 = vmul.f32 %v6499, 1.442695
    %v6501 = vpow.pop %v6500
    %v6502 = vadd.f32 %v6501, 1.0
    %v6503 = vrcp.pop %v6502
    %v6504 = vmul.f32 1.0, %v6503
    %6506 = vset.pattern.permute.xlu0 0
    %6507 = vperm.xlu0 %6506, %v6504
    %v6508 = vpop.permute.xlu0 %6507
    %v6510 = vmul.f32 %v6508, %v6016
    %v6511 = vsub.f32 1.0, %v6504
    %6513 = vset.pattern.permute.xlu0 0
    %6514 = vperm.xlu0 %6513, %v6511
    %v6515 = vpop.permute.xlu0 %6514
    %v6520 = vsel %vm3568, %v6484, %v6478
    %v6521 = vsel %vm3570, %v6490, %v6520
    %v6523 = vmul.f32 %v6515, %v6521
    %v6524 = vadd.f32 %v6510, %v6523
    %v6526 = vcombine.high %v6524, %v6524
    %v6528 = vunpack.c.l.s4 1966171168
    %v6529 = vunpack.c.0.s8 %v6528
    %v6530 = vlaneseq
    %v6531 = vshrl.u32 %v6530, 7
    %v6532 = vsub.s32 %v6529, %v6531
    %v6533 = vrot.slane %v6524, %v6532
    %v6535 = vunpack.c.l.s4 1966171168
    %v6536 = vunpack.c.0.s8 %v6535
    %v6537 = vlaneseq
    %v6538 = vshrl.u32 %v6537, 7
    %v6539 = vsub.s32 %v6536, %v6538
    %v6540 = vrot.slane %v6526, %v6539
    %v6541 = vcombine.high %v6533, %v6533
    %v6542 = vcombine.high %v6540, %v6540
    %v6544 = vunpack.c.l.s4 1966171168
    %v6545 = vunpack.c.0.s8 %v6544
    %v6546 = vlaneseq
    %v6547 = vshrl.u32 %v6546, 7
    %v6548 = vsub.s32 %v6545, %v6547
    %v6549 = vrot.slane %v6540, %v6548
    %v6551 = vunpack.c.l.s4 1966171168
    %v6552 = vunpack.c.0.s8 %v6551
    %v6553 = vlaneseq
    %v6554 = vshrl.u32 %v6553, 7
    %v6555 = vsub.s32 %v6552, %v6554
    %v6556 = vrot.slane %v6541, %v6555
    %v6558 = vunpack.c.l.s4 1966171168
    %v6559 = vunpack.c.0.s8 %v6558
    %v6560 = vlaneseq
    %v6561 = vshrl.u32 %v6560, 7
    %v6562 = vsub.s32 %v6559, %v6561
    %v6563 = vrot.slane %v6542, %v6562
    %v6564 = vcombine.high %v6556, %v6556
    %6568 = vst [vmem:[%s3618 + $0x3] sm:$0x1] %v6564
    %6569 = vst [vmem:[%s3618 + $0x7] sm:$0x1] %v6549
    %6570 = vst [vmem:[%s3618 + $0xb] sm:$0x1] %v6563
    // Predicated region
    $region42: #{trade_bert_forward.1} parent=1 // pred_check
      _
    $region43: #{trade_bert_forward.1} parent=1 // pred_check_branch
      %6572 = sbr.rel (0) target = $region45
    $region44: #{trade_bert_forward.1} parent=1 // pred_region
      %s6574 = ssub.s32 384, 384
      %6575 = vsyncadd [#allocation4], %s6574
      %s6576 = sshll.u32 [#allocation3], 4
      %s6577 = int_to_ptr.vmem [resolvable:$true] %s6576
      %6582 = dma.vmem_to_hbm [thread:$0]  %s6577, 384, %s10, [#allocation4], 64, 64, 4
    $region45: #{trade_bert_forward.1} parent=1 // pred_fallthru
      _
    // Predicated region
    $region46: #{trade_bert_forward.1} parent=1 // pred_check
      _
    $region47: #{trade_bert_forward.1} parent=1 // pred_check_branch
      %6584 = sbr.rel (0) target = $region49
    $region48: #{trade_bert_forward.1} parent=1 // pred_region
      _
    $region49: #{trade_bert_forward.1} parent=1 // pred_fallthru
      _
    // Predicated region
    $region50: #{trade_bert_forward.1} parent=1 // pred_check
      _
    $region51: #{trade_bert_forward.1} parent=1 // pred_check_branch
      %6586 = sbr.rel (0) target = $region53
    $region52: #{trade_bert_forward.1} parent=1 // pred_region
      %6587 = dma.done [#allocation4], 384
    $region53: #{trade_bert_forward.1} parent=1 // pred_fallthru
      _
    // Predicated region
    $region54: #{trade_bert_forward.1} parent=1 // pred_check
      _
    $region55: #{trade_bert_forward.1} parent=1 // pred_check_branch
      %6589 = sbr.rel (0) target = $region57
    $region56: #{trade_bert_forward.1} parent=1 // pred_region
      _
    $region57: #{trade_bert_forward.1} parent=1 // pred_fallthru
      _
    %6590 = vsyncpa [#allocation4], 1

</llo_original>
